<compile_context>
chip_gen: v7x
topology: tpu7x:2x2x1
jax: 0.10.0
libtpu: 0.0.40
codegen_flags: <defaults>
</compile_context>

<pallas_src>
import math

import jax
import jax.numpy as jnp
from jax.experimental import pallas as pl
from jax.experimental.pallas import tpu as pltpu

# ---------------- scaled-down BERT config ----------------
VOCAB = 100
B = 2
S = 8
HIDDEN = 128
HEADS = 4
HEAD_DIM = HIDDEN // HEADS
INTER = 512
LAYERS = 2                 # hidden_states has LAYERS + 1 entries
NUM_HS = LAYERS + 1
CLS_HIDDEN = 256
NUM_CLASSES = 2
LN_EPS = 1e-12


# ---------------- in-kernel helpers ----------------
def _gelu(x):
    # TODO(synk): tanh approximation; HF BERT "gelu" uses the erf form (~1e-3 diff).
    c = math.sqrt(2.0 / math.pi)
    return 0.5 * x * (1.0 + jnp.tanh(c * (x + 0.044715 * x * x * x)))


def _layernorm(x, g, b):
    mean = jnp.mean(x, axis=-1, keepdims=True)
    xc = x - mean
    var = jnp.mean(xc * xc, axis=-1, keepdims=True)
    return xc * jax.lax.rsqrt(var + LN_EPS) * g + b


def _matmul_bias(x, w_bf16, b_f32):
    # bf16 MXU inputs, f32 accumulation, bias folded into the epilogue.
    return jnp.dot(x.astype(jnp.bfloat16), w_bf16,
                   preferred_element_type=jnp.float32) + b_f32


# ---------------- fused whole-model kernel ----------------
def _bert_fused_kernel(emb_ref, mask_ref,
                       emb_ln_g_ref, emb_ln_b_ref,
                       wqkv_ref, bqkv_ref, wo_ref, bo_ref,
                       ln1_g_ref, ln1_b_ref,
                       wi_ref, bi_ref, wf_ref, bf_ref,
                       ln2_g_ref, ln2_b_ref,
                       cls_w1_ref, cls_b1_ref, cls_w2_ref, cls_b2_ref,
                       out_ref):
    scale = 1.0 / math.sqrt(HEAD_DIM)

    # Embedding LayerNorm (f32).
    h = _layernorm(emb_ref[...], emb_ln_g_ref[...], emb_ln_b_ref[...])

    # Additive attention bias built in-kernel from the (B, S) mask.
    neg = (1.0 - mask_ref[...]) * -10000.0                      # (B, S)

    hiddens = [h]
    for l in range(LAYERS):                                     # static unrolled loop
        x = hiddens[-1]                                          # (B*S, H) f32

        # Fused QKV projection: one (H, 3H) matmul.
        qkv = _matmul_bias(x, wqkv_ref[l], bqkv_ref[l])          # (B*S, 3H)
        q = qkv[:, :HIDDEN]
        k = qkv[:, HIDDEN:2 * HIDDEN]
        v = qkv[:, 2 * HIDDEN:]

        # Attention: static in-kernel slicing over batch & heads (no transposes
        # between kernels; all 8 (batch, head) slices in one basic block).
        ctx_rows = []
        for bi_ in range(B):
            rows = slice(bi_ * S, (bi_ + 1) * S)
            bias_b = neg[bi_:bi_ + 1, :]                         # (1, S)
            head_out = []
            for hd in range(HEADS):
                cols = slice(hd * HEAD_DIM, (hd + 1) * HEAD_DIM)
                qh = q[rows, cols]                               # (S, D) f32
                kh = k[rows, cols]
                vh = v[rows, cols]
                s = jnp.dot(qh, kh.T, preferred_element_type=jnp.float32)
                s = s * scale + bias_b
                s = s - jnp.max(s, axis=-1, keepdims=True)
                p = jnp.exp(s)
                denom = jnp.sum(p, axis=-1, keepdims=True)
                p = p * pl.reciprocal(denom, approx=True)
                head_out.append(jnp.dot(p, vh, preferred_element_type=jnp.float32))
            ctx_rows.append(jnp.concatenate(head_out, axis=-1))  # (S, H)
        ctx = jnp.concatenate(ctx_rows, axis=0)                  # (B*S, H)

        attn_out = _matmul_bias(ctx, wo_ref[l], bo_ref[l])
        h1 = _layernorm(attn_out + x, ln1_g_ref[l], ln1_b_ref[l])
        inter = _gelu(_matmul_bias(h1, wi_ref[l], bi_ref[l]))
        ffn = _matmul_bias(inter, wf_ref[l], bf_ref[l])
        h2 = _layernorm(ffn + h1, ln2_g_ref[l], ln2_b_ref[l])
        hiddens.append(h2)

    # Classifier head applied to all LAYERS+1 hidden states at once (M = 48).
    hs_all = jnp.concatenate(hiddens, axis=0)                    # ((L+1)*B*S, H)
    l1 = _matmul_bias(hs_all, cls_w1_ref[...], cls_b1_ref[...])
    # TODO(synk): nn.Dropout(0.5) treated as identity (eval-mode forward).
    logits = _matmul_bias(l1, cls_w2_ref[...], cls_b2_ref[...])  # ((L+1)*B*S, 2)
    out_ref[...] = logits.astype(out_ref.dtype)


def _full_spec(shape):
    nd = len(shape)
    return pl.BlockSpec(shape, lambda i, _nd=nd: (0,) * _nd)


# ---------------- deterministic parameter init ----------------
def init_params(key):
    keys = iter(jax.random.split(key, 256))

    def nrm(shape, std=0.02):
        return (std * jax.random.normal(next(keys), shape)).astype(jnp.float32)

    def lin_init(fan_in, fan_out):
        bound = 1.0 / math.sqrt(fan_in)
        w = jax.random.uniform(next(keys), (fan_in, fan_out), jnp.float32, -bound, bound)
        b = jax.random.uniform(next(keys), (fan_out,), jnp.float32, -bound, bound)
        return w, b

    wqkv, bqkv, wo, bo = [], [], [], []
    wi, bi, wf, bf = [], [], [], []
    ones = jnp.ones((1, HIDDEN), jnp.float32)
    zeros = jnp.zeros((1, HIDDEN), jnp.float32)
    for _ in range(LAYERS):
        wq, bq = lin_init(HIDDEN, HIDDEN)
        wk, bk = lin_init(HIDDEN, HIDDEN)
        wv, bv = lin_init(HIDDEN, HIDDEN)
        wqkv.append(jnp.concatenate([wq, wk, wv], axis=1))           # (H, 3H)
        bqkv.append(jnp.concatenate([bq, bk, bv])[None, :])          # (1, 3H)
        w, b_ = lin_init(HIDDEN, HIDDEN); wo.append(w); bo.append(b_[None, :])
        w, b_ = lin_init(HIDDEN, INTER);  wi.append(w); bi.append(b_[None, :])
        w, b_ = lin_init(INTER, HIDDEN);  wf.append(w); bf.append(b_[None, :])

    cls_w1, cls_b1 = lin_init(HIDDEN, CLS_HIDDEN)
    cls_w2, cls_b2 = lin_init(CLS_HIDDEN, NUM_CLASSES)

    return {
        "word_emb": nrm((VOCAB, HIDDEN)),
        "pos_emb": nrm((S, HIDDEN)),
        "type_emb": nrm((2, HIDDEN)),
        "emb_ln_g": ones, "emb_ln_b": zeros,
        # matmul weights stored in bf16 (MXU inputs); biases / LN params in f32
        "wqkv": jnp.stack(wqkv).astype(jnp.bfloat16), "bqkv": jnp.stack(bqkv),
        "wo": jnp.stack(wo).astype(jnp.bfloat16),     "bo": jnp.stack(bo),
        "ln1_g": jnp.stack([ones] * LAYERS),  "ln1_b": jnp.stack([zeros] * LAYERS),
        "wi": jnp.stack(wi).astype(jnp.bfloat16),     "bi": jnp.stack(bi),
        "wf": jnp.stack(wf).astype(jnp.bfloat16),     "bf": jnp.stack(bf),
        "ln2_g": jnp.stack([ones] * LAYERS),  "ln2_b": jnp.stack([zeros] * LAYERS),
        "cls_w1": cls_w1.astype(jnp.bfloat16), "cls_b1": cls_b1[None, :],
        "cls_w2": cls_w2.astype(jnp.bfloat16), "cls_b2": cls_b2[None, :],
    }


# ---------------- model forward ----------------
@jax.jit
def bert_for_classification(params, input_ids, attention_mask):
    """Mirrors BertForClassification.forward: classifier head on every hidden state."""
    # Embedding gather + sum stays in plain JAX (no tidy Pallas gather at this size).
    flat_ids = input_ids.reshape(-1)
    word = jnp.take(params["word_emb"], flat_ids, axis=0)            # (B*S, H)
    pos = jnp.tile(params["pos_emb"], (B, 1))                         # (B*S, H)
    typ = jnp.broadcast_to(params["type_emb"][0], (B * S, HIDDEN))    # token_type_ids == 0
    emb = word + pos + typ
    mask = attention_mask.astype(jnp.float32)                         # (B, S)

    args = (
        emb, mask,
        params["emb_ln_g"], params["emb_ln_b"],
        params["wqkv"], params["bqkv"], params["wo"], params["bo"],
        params["ln1_g"], params["ln1_b"],
        params["wi"], params["bi"], params["wf"], params["bf"],
        params["ln2_g"], params["ln2_b"],
        params["cls_w1"], params["cls_b1"], params["cls_w2"], params["cls_b2"],
    )
    out_shape = (NUM_HS * B * S, NUM_CLASSES)

    logits = pl.pallas_call(
        _bert_fused_kernel,
        out_shape=jax.ShapeDtypeStruct(out_shape, jnp.float32),
        grid=(1,),
        in_specs=[_full_spec(a.shape) for a in args],
        out_specs=_full_spec(out_shape),
        compiler_params=pltpu.CompilerParams(
            dimension_semantics=("arbitrary",)),
    )(*args)

    logits = logits.reshape(NUM_HS, B, S, NUM_CLASSES)
    return [logits[i] for i in range(NUM_HS)]


if __name__ == "__main__":
    key = jax.random.PRNGKey(0)
    k_param, k_ids = jax.random.split(key)
    params = init_params(k_param)

    input_ids = jax.random.randint(k_ids, (B, S), 0, VOCAB, dtype=jnp.int32)
    attention_mask = jnp.ones((B, S), jnp.int32).at[1, 6:].set(0)

    outs = bert_for_classification(params, input_ids, attention_mask)
    outs = [jax.block_until_ready(o) for o in outs]

    assert len(outs) == NUM_HS
    for o in outs:
        assert o.shape == (B, S, NUM_CLASSES)
        assert o.dtype == jnp.float32
        assert bool(jnp.all(jnp.isfinite(o)))
    print("KERNEL_OK")
</pallas_src>

<mosaic_0001>
module attributes {stable_mosaic.version = 11 : i64} {
  func.func @_bert_fused_kernel(%arg0: i32, %arg1: memref<16x128xf32, #tpu.memory_space<vmem>>, %arg2: memref<2x8xf32, #tpu.memory_space<vmem>>, %arg3: memref<1x128xf32, #tpu.memory_space<vmem>>, %arg4: memref<1x128xf32, #tpu.memory_space<vmem>>, %arg5: memref<2x128x384xbf16, #tpu.memory_space<vmem>>, %arg6: memref<2x1x384xf32, #tpu.memory_space<vmem>>, %arg7: memref<2x128x128xbf16, #tpu.memory_space<vmem>>, %arg8: memref<2x1x128xf32, #tpu.memory_space<vmem>>, %arg9: memref<2x1x128xf32, #tpu.memory_space<vmem>>, %arg10: memref<2x1x128xf32, #tpu.memory_space<vmem>>, %arg11: memref<2x128x512xbf16, #tpu.memory_space<vmem>>, %arg12: memref<2x1x512xf32, #tpu.memory_space<vmem>>, %arg13: memref<2x512x128xbf16, #tpu.memory_space<vmem>>, %arg14: memref<2x1x128xf32, #tpu.memory_space<vmem>>, %arg15: memref<2x1x128xf32, #tpu.memory_space<vmem>>, %arg16: memref<2x1x128xf32, #tpu.memory_space<vmem>>, %arg17: memref<128x256xbf16, #tpu.memory_space<vmem>>, %arg18: memref<1x256xf32, #tpu.memory_space<vmem>>, %arg19: memref<256x2xbf16, #tpu.memory_space<vmem>>, %arg20: memref<1x2xf32, #tpu.memory_space<vmem>>, %arg21: memref<48x2xf32, #tpu.memory_space<vmem>>) attributes {dimension_semantics = [#tpu.dimension_semantics<arbitrary>], iteration_bounds = array<i64: 1>, scalar_prefetch = 0 : i64, scratch_operands = 0 : i64, tpu.core_type = #tpu.core_type<tc>, window_params = [{pipeline_mode = #tpu.pipeline_mode<synchronous>, transform_indices = @transform_0, window_bounds = array<i64: 16, 128>}, {pipeline_mode = #tpu.pipeline_mode<synchronous>, transform_indices = @transform_1, window_bounds = array<i64: 2, 8>}, {pipeline_mode = #tpu.pipeline_mode<synchronous>, transform_indices = @transform_2, window_bounds = array<i64: 1, 128>}, {pipeline_mode = #tpu.pipeline_mode<synchronous>, transform_indices = @transform_3, window_bounds = array<i64: 1, 128>}, {pipeline_mode = #tpu.pipeline_mode<synchronous>, transform_indices = @transform_4, window_bounds = array<i64: 2, 128, 384>}, {pipeline_mode = #tpu.pipeline_mode<synchronous>, transform_indices = @transform_5, window_bounds = array<i64: 2, 1, 384>}, {pipeline_mode = #tpu.pipeline_mode<synchronous>, transform_indices = @transform_6, window_bounds = array<i64: 2, 128, 128>}, {pipeline_mode = #tpu.pipeline_mode<synchronous>, transform_indices = @transform_7, window_bounds = array<i64: 2, 1, 128>}, {pipeline_mode = #tpu.pipeline_mode<synchronous>, transform_indices = @transform_8, window_bounds = array<i64: 2, 1, 128>}, {pipeline_mode = #tpu.pipeline_mode<synchronous>, transform_indices = @transform_9, window_bounds = array<i64: 2, 1, 128>}, {pipeline_mode = #tpu.pipeline_mode<synchronous>, transform_indices = @transform_10, window_bounds = array<i64: 2, 128, 512>}, {pipeline_mode = #tpu.pipeline_mode<synchronous>, transform_indices = @transform_11, window_bounds = array<i64: 2, 1, 512>}, {pipeline_mode = #tpu.pipeline_mode<synchronous>, transform_indices = @transform_12, window_bounds = array<i64: 2, 512, 128>}, {pipeline_mode = #tpu.pipeline_mode<synchronous>, transform_indices = @transform_13, window_bounds = array<i64: 2, 1, 128>}, {pipeline_mode = #tpu.pipeline_mode<synchronous>, transform_indices = @transform_14, window_bounds = array<i64: 2, 1, 128>}, {pipeline_mode = #tpu.pipeline_mode<synchronous>, transform_indices = @transform_15, window_bounds = array<i64: 2, 1, 128>}, {pipeline_mode = #tpu.pipeline_mode<synchronous>, transform_indices = @transform_16, window_bounds = array<i64: 128, 256>}, {pipeline_mode = #tpu.pipeline_mode<synchronous>, transform_indices = @transform_17, window_bounds = array<i64: 1, 256>}, {pipeline_mode = #tpu.pipeline_mode<synchronous>, transform_indices = @transform_18, window_bounds = array<i64: 256, 2>}, {pipeline_mode = #tpu.pipeline_mode<synchronous>, transform_indices = @transform_19, window_bounds = array<i64: 1, 2>}, {pipeline_mode = #tpu.pipeline_mode<synchronous>, transform_indices = @transform_20, window_bounds = array<i64: 48, 2>}]} {
    %c0 = arith.constant 0 : index
    %c0_0 = arith.constant 0 : index
    %0 = vector.load %arg1[%c0, %c0_0] : memref<16x128xf32, #tpu.memory_space<vmem>>, vector<16x128xf32>
    %c0_1 = arith.constant 0 : index
    %c0_2 = arith.constant 0 : index
    %1 = vector.load %arg3[%c0_1, %c0_2] : memref<1x128xf32, #tpu.memory_space<vmem>>, vector<1x128xf32>
    %c0_3 = arith.constant 0 : index
    %c0_4 = arith.constant 0 : index
    %2 = vector.load %arg4[%c0_3, %c0_4] : memref<1x128xf32, #tpu.memory_space<vmem>>, vector<1x128xf32>
    %cst = arith.constant dense<0.000000e+00> : vector<16xf32>
    %3 = vector.multi_reduction <add>, %0, %cst [1] : vector<16x128xf32> to vector<16xf32>
    %4 = vector.shape_cast %3 : vector<16xf32> to vector<16x1xf32>
    %cst_5 = arith.constant 1.280000e+02 : f32
    %5 = vector.broadcast %cst_5 : f32 to vector<16x1xf32>
    %6 = arith.divf %4, %5 : vector<16x1xf32>
    %7 = vector.broadcast %6 : vector<16x1xf32> to vector<16x128xf32>
    %8 = arith.subf %0, %7 : vector<16x128xf32>
    %9 = arith.mulf %8, %8 : vector<16x128xf32>
    %cst_6 = arith.constant dense<0.000000e+00> : vector<16xf32>
    %10 = vector.multi_reduction <add>, %9, %cst_6 [1] : vector<16x128xf32> to vector<16xf32>
    %11 = vector.shape_cast %10 : vector<16xf32> to vector<16x1xf32>
    %cst_7 = arith.constant 1.280000e+02 : f32
    %12 = vector.broadcast %cst_7 : f32 to vector<16x1xf32>
    %13 = arith.divf %11, %12 : vector<16x1xf32>
    %cst_8 = arith.constant 9.99999996E-13 : f32
    %14 = vector.broadcast %cst_8 : f32 to vector<16x1xf32>
    %15 = arith.addf %13, %14 : vector<16x1xf32>
    %16 = math.rsqrt %15 : vector<16x1xf32>
    %17 = vector.broadcast %16 : vector<16x1xf32> to vector<16x128xf32>
    %18 = arith.mulf %8, %17 : vector<16x128xf32>
    %19 = vector.broadcast %1 : vector<1x128xf32> to vector<16x128xf32>
    %20 = arith.mulf %18, %19 : vector<16x128xf32>
    %21 = vector.broadcast %2 : vector<1x128xf32> to vector<16x128xf32>
    %22 = arith.addf %20, %21 : vector<16x128xf32>
    %c0_9 = arith.constant 0 : index
    %c0_10 = arith.constant 0 : index
    %23 = vector.load %arg2[%c0_9, %c0_10] : memref<2x8xf32, #tpu.memory_space<vmem>>, vector<2x8xf32>
    %cst_11 = arith.constant 1.000000e+00 : f32
    %24 = vector.broadcast %cst_11 : f32 to vector<2x8xf32>
    %25 = arith.subf %24, %23 : vector<2x8xf32>
    %cst_12 = arith.constant -1.000000e+04 : f32
    %26 = vector.broadcast %cst_12 : f32 to vector<2x8xf32>
    %27 = arith.mulf %25, %26 : vector<2x8xf32>
    %c0_13 = arith.constant 0 : index
    %c0_14 = arith.constant 0 : index
    %c0_15 = arith.constant 0 : index
    %28 = vector.load %arg5[%c0_13, %c0_14, %c0_15] : memref<2x128x384xbf16, #tpu.memory_space<vmem>>, vector<1x128x384xbf16>
    %29 = vector.shape_cast %28 : vector<1x128x384xbf16> to vector<128x384xbf16>
    %c0_16 = arith.constant 0 : index
    %c0_17 = arith.constant 0 : index
    %c0_18 = arith.constant 0 : index
    %30 = vector.load %arg6[%c0_16, %c0_17, %c0_18] : memref<2x1x384xf32, #tpu.memory_space<vmem>>, vector<1x1x384xf32>
    %31 = vector.shape_cast %30 : vector<1x1x384xf32> to vector<1x384xf32>
    %32 = arith.truncf %22 : vector<16x128xf32> to vector<16x128xbf16>
    %cst_19 = arith.constant dense<0.000000e+00> : vector<16x384xf32>
    %33 = tpu.matmul %32, %29, %cst_19 {dimension_numbers = #tpu.dot_dimension_numbers<[1], [0], [0], [1], [0, 0, 1, 1], [], []>} : vector<16x128xbf16>, vector<128x384xbf16>, vector<16x384xf32> -> vector<16x384xf32>
    %34 = vector.broadcast %31 : vector<1x384xf32> to vector<16x384xf32>
    %35 = arith.addf %33, %34 : vector<16x384xf32>
    %36 = vector.extract_strided_slice %35 {offsets = [0, 0], sizes = [16, 128], strides = [1, 1]} : vector<16x384xf32> to vector<16x128xf32>
    %37 = vector.extract_strided_slice %35 {offsets = [0, 128], sizes = [16, 128], strides = [1, 1]} : vector<16x384xf32> to vector<16x128xf32>
    %38 = vector.extract_strided_slice %35 {offsets = [0, 256], sizes = [16, 128], strides = [1, 1]} : vector<16x384xf32> to vector<16x128xf32>
    %39 = vector.extract_strided_slice %27 {offsets = [0, 0], sizes = [1, 8], strides = [1, 1]} : vector<2x8xf32> to vector<1x8xf32>
    %40 = vector.extract_strided_slice %36 {offsets = [0, 0], sizes = [8, 32], strides = [1, 1]} : vector<16x128xf32> to vector<8x32xf32>
    %41 = vector.extract_strided_slice %37 {offsets = [0, 0], sizes = [8, 32], strides = [1, 1]} : vector<16x128xf32> to vector<8x32xf32>
    %42 = vector.extract_strided_slice %38 {offsets = [0, 0], sizes = [8, 32], strides = [1, 1]} : vector<16x128xf32> to vector<8x32xf32>
    %43 = tpu.transpose %41, [1, 0] : vector<8x32xf32> -> vector<32x8xf32>
    %cst_20 = arith.constant dense<0.000000e+00> : vector<8x8xf32>
    %44 = tpu.matmul %40, %43, %cst_20 {dimension_numbers = #tpu.dot_dimension_numbers<[1], [0], [0], [1], [0, 0, 1, 1], [], []>} : vector<8x32xf32>, vector<32x8xf32>, vector<8x8xf32> -> vector<8x8xf32>
    %cst_21 = arith.constant 0.176776692 : f32
    %45 = vector.broadcast %cst_21 : f32 to vector<8x8xf32>
    %46 = arith.mulf %44, %45 : vector<8x8xf32>
    %47 = vector.broadcast %39 : vector<1x8xf32> to vector<8x8xf32>
    %48 = arith.addf %46, %47 : vector<8x8xf32>
    %cst_22 = arith.constant dense<0xFF800000> : vector<8xf32>
    %49 = vector.multi_reduction <maximumf>, %48, %cst_22 [1] : vector<8x8xf32> to vector<8xf32>
    %50 = vector.shape_cast %49 : vector<8xf32> to vector<8x1xf32>
    %51 = vector.broadcast %50 : vector<8x1xf32> to vector<8x8xf32>
    %52 = arith.subf %48, %51 : vector<8x8xf32>
    %53 = math.exp %52 : vector<8x8xf32>
    %cst_23 = arith.constant dense<0.000000e+00> : vector<8xf32>
    %54 = vector.multi_reduction <add>, %53, %cst_23 [1] : vector<8x8xf32> to vector<8xf32>
    %55 = vector.shape_cast %54 : vector<8xf32> to vector<8x1xf32>
    %56 = tpu.reciprocal %55 {approx = true} : vector<8x1xf32> -> vector<8x1xf32>
    %57 = vector.broadcast %56 : vector<8x1xf32> to vector<8x8xf32>
    %58 = arith.mulf %53, %57 : vector<8x8xf32>
    %cst_24 = arith.constant dense<0.000000e+00> : vector<8x32xf32>
    %59 = tpu.matmul %58, %42, %cst_24 {dimension_numbers = #tpu.dot_dimension_numbers<[1], [0], [0], [1], [0, 0, 1, 1], [], []>} : vector<8x8xf32>, vector<8x32xf32>, vector<8x32xf32> -> vector<8x32xf32>
    %60 = vector.extract_strided_slice %36 {offsets = [0, 32], sizes = [8, 32], strides = [1, 1]} : vector<16x128xf32> to vector<8x32xf32>
    %61 = vector.extract_strided_slice %37 {offsets = [0, 32], sizes = [8, 32], strides = [1, 1]} : vector<16x128xf32> to vector<8x32xf32>
    %62 = vector.extract_strided_slice %38 {offsets = [0, 32], sizes = [8, 32], strides = [1, 1]} : vector<16x128xf32> to vector<8x32xf32>
    %63 = tpu.transpose %61, [1, 0] : vector<8x32xf32> -> vector<32x8xf32>
    %cst_25 = arith.constant dense<0.000000e+00> : vector<8x8xf32>
    %64 = tpu.matmul %60, %63, %cst_25 {dimension_numbers = #tpu.dot_dimension_numbers<[1], [0], [0], [1], [0, 0, 1, 1], [], []>} : vector<8x32xf32>, vector<32x8xf32>, vector<8x8xf32> -> vector<8x8xf32>
    %cst_26 = arith.constant 0.176776692 : f32
    %65 = vector.broadcast %cst_26 : f32 to vector<8x8xf32>
    %66 = arith.mulf %64, %65 : vector<8x8xf32>
    %67 = vector.broadcast %39 : vector<1x8xf32> to vector<8x8xf32>
    %68 = arith.addf %66, %67 : vector<8x8xf32>
    %cst_27 = arith.constant dense<0xFF800000> : vector<8xf32>
    %69 = vector.multi_reduction <maximumf>, %68, %cst_27 [1] : vector<8x8xf32> to vector<8xf32>
    %70 = vector.shape_cast %69 : vector<8xf32> to vector<8x1xf32>
    %71 = vector.broadcast %70 : vector<8x1xf32> to vector<8x8xf32>
    %72 = arith.subf %68, %71 : vector<8x8xf32>
    %73 = math.exp %72 : vector<8x8xf32>
    %cst_28 = arith.constant dense<0.000000e+00> : vector<8xf32>
    %74 = vector.multi_reduction <add>, %73, %cst_28 [1] : vector<8x8xf32> to vector<8xf32>
    %75 = vector.shape_cast %74 : vector<8xf32> to vector<8x1xf32>
    %76 = tpu.reciprocal %75 {approx = true} : vector<8x1xf32> -> vector<8x1xf32>
    %77 = vector.broadcast %76 : vector<8x1xf32> to vector<8x8xf32>
    %78 = arith.mulf %73, %77 : vector<8x8xf32>
    %cst_29 = arith.constant dense<0.000000e+00> : vector<8x32xf32>
    %79 = tpu.matmul %78, %62, %cst_29 {dimension_numbers = #tpu.dot_dimension_numbers<[1], [0], [0], [1], [0, 0, 1, 1], [], []>} : vector<8x8xf32>, vector<8x32xf32>, vector<8x32xf32> -> vector<8x32xf32>
    %80 = vector.extract_strided_slice %36 {offsets = [0, 64], sizes = [8, 32], strides = [1, 1]} : vector<16x128xf32> to vector<8x32xf32>
    %81 = vector.extract_strided_slice %37 {offsets = [0, 64], sizes = [8, 32], strides = [1, 1]} : vector<16x128xf32> to vector<8x32xf32>
    %82 = vector.extract_strided_slice %38 {offsets = [0, 64], sizes = [8, 32], strides = [1, 1]} : vector<16x128xf32> to vector<8x32xf32>
    %83 = tpu.transpose %81, [1, 0] : vector<8x32xf32> -> vector<32x8xf32>
    %cst_30 = arith.constant dense<0.000000e+00> : vector<8x8xf32>
    %84 = tpu.matmul %80, %83, %cst_30 {dimension_numbers = #tpu.dot_dimension_numbers<[1], [0], [0], [1], [0, 0, 1, 1], [], []>} : vector<8x32xf32>, vector<32x8xf32>, vector<8x8xf32> -> vector<8x8xf32>
    %cst_31 = arith.constant 0.176776692 : f32
    %85 = vector.broadcast %cst_31 : f32 to vector<8x8xf32>
    %86 = arith.mulf %84, %85 : vector<8x8xf32>
    %87 = vector.broadcast %39 : vector<1x8xf32> to vector<8x8xf32>
    %88 = arith.addf %86, %87 : vector<8x8xf32>
    %cst_32 = arith.constant dense<0xFF800000> : vector<8xf32>
    %89 = vector.multi_reduction <maximumf>, %88, %cst_32 [1] : vector<8x8xf32> to vector<8xf32>
    %90 = vector.shape_cast %89 : vector<8xf32> to vector<8x1xf32>
    %91 = vector.broadcast %90 : vector<8x1xf32> to vector<8x8xf32>
    %92 = arith.subf %88, %91 : vector<8x8xf32>
    %93 = math.exp %92 : vector<8x8xf32>
    %cst_33 = arith.constant dense<0.000000e+00> : vector<8xf32>
    %94 = vector.multi_reduction <add>, %93, %cst_33 [1] : vector<8x8xf32> to vector<8xf32>
    %95 = vector.shape_cast %94 : vector<8xf32> to vector<8x1xf32>
    %96 = tpu.reciprocal %95 {approx = true} : vector<8x1xf32> -> vector<8x1xf32>
    %97 = vector.broadcast %96 : vector<8x1xf32> to vector<8x8xf32>
    %98 = arith.mulf %93, %97 : vector<8x8xf32>
    %cst_34 = arith.constant dense<0.000000e+00> : vector<8x32xf32>
    %99 = tpu.matmul %98, %82, %cst_34 {dimension_numbers = #tpu.dot_dimension_numbers<[1], [0], [0], [1], [0, 0, 1, 1], [], []>} : vector<8x8xf32>, vector<8x32xf32>, vector<8x32xf32> -> vector<8x32xf32>
    %100 = vector.extract_strided_slice %36 {offsets = [0, 96], sizes = [8, 32], strides = [1, 1]} : vector<16x128xf32> to vector<8x32xf32>
    %101 = vector.extract_strided_slice %37 {offsets = [0, 96], sizes = [8, 32], strides = [1, 1]} : vector<16x128xf32> to vector<8x32xf32>
    %102 = vector.extract_strided_slice %38 {offsets = [0, 96], sizes = [8, 32], strides = [1, 1]} : vector<16x128xf32> to vector<8x32xf32>
    %103 = tpu.transpose %101, [1, 0] : vector<8x32xf32> -> vector<32x8xf32>
    %cst_35 = arith.constant dense<0.000000e+00> : vector<8x8xf32>
    %104 = tpu.matmul %100, %103, %cst_35 {dimension_numbers = #tpu.dot_dimension_numbers<[1], [0], [0], [1], [0, 0, 1, 1], [], []>} : vector<8x32xf32>, vector<32x8xf32>, vector<8x8xf32> -> vector<8x8xf32>
    %cst_36 = arith.constant 0.176776692 : f32
    %105 = vector.broadcast %cst_36 : f32 to vector<8x8xf32>
    %106 = arith.mulf %104, %105 : vector<8x8xf32>
    %107 = vector.broadcast %39 : vector<1x8xf32> to vector<8x8xf32>
    %108 = arith.addf %106, %107 : vector<8x8xf32>
    %cst_37 = arith.constant dense<0xFF800000> : vector<8xf32>
    %109 = vector.multi_reduction <maximumf>, %108, %cst_37 [1] : vector<8x8xf32> to vector<8xf32>
    %110 = vector.shape_cast %109 : vector<8xf32> to vector<8x1xf32>
    %111 = vector.broadcast %110 : vector<8x1xf32> to vector<8x8xf32>
    %112 = arith.subf %108, %111 : vector<8x8xf32>
    %113 = math.exp %112 : vector<8x8xf32>
    %cst_38 = arith.constant dense<0.000000e+00> : vector<8xf32>
    %114 = vector.multi_reduction <add>, %113, %cst_38 [1] : vector<8x8xf32> to vector<8xf32>
    %115 = vector.shape_cast %114 : vector<8xf32> to vector<8x1xf32>
    %116 = tpu.reciprocal %115 {approx = true} : vector<8x1xf32> -> vector<8x1xf32>
    %117 = vector.broadcast %116 : vector<8x1xf32> to vector<8x8xf32>
    %118 = arith.mulf %113, %117 : vector<8x8xf32>
    %cst_39 = arith.constant dense<0.000000e+00> : vector<8x32xf32>
    %119 = tpu.matmul %118, %102, %cst_39 {dimension_numbers = #tpu.dot_dimension_numbers<[1], [0], [0], [1], [0, 0, 1, 1], [], []>} : vector<8x8xf32>, vector<8x32xf32>, vector<8x32xf32> -> vector<8x32xf32>
    %120 = tpu.concatenate %59, %79, %99, %119 in 1 : vector<8x32xf32>, vector<8x32xf32>, vector<8x32xf32>, vector<8x32xf32> -> vector<8x128xf32>
    %121 = vector.extract_strided_slice %27 {offsets = [1, 0], sizes = [1, 8], strides = [1, 1]} : vector<2x8xf32> to vector<1x8xf32>
    %122 = vector.extract_strided_slice %36 {offsets = [8, 0], sizes = [8, 32], strides = [1, 1]} : vector<16x128xf32> to vector<8x32xf32>
    %123 = vector.extract_strided_slice %37 {offsets = [8, 0], sizes = [8, 32], strides = [1, 1]} : vector<16x128xf32> to vector<8x32xf32>
    %124 = vector.extract_strided_slice %38 {offsets = [8, 0], sizes = [8, 32], strides = [1, 1]} : vector<16x128xf32> to vector<8x32xf32>
    %125 = tpu.transpose %123, [1, 0] : vector<8x32xf32> -> vector<32x8xf32>
    %cst_40 = arith.constant dense<0.000000e+00> : vector<8x8xf32>
    %126 = tpu.matmul %122, %125, %cst_40 {dimension_numbers = #tpu.dot_dimension_numbers<[1], [0], [0], [1], [0, 0, 1, 1], [], []>} : vector<8x32xf32>, vector<32x8xf32>, vector<8x8xf32> -> vector<8x8xf32>
    %cst_41 = arith.constant 0.176776692 : f32
    %127 = vector.broadcast %cst_41 : f32 to vector<8x8xf32>
    %128 = arith.mulf %126, %127 : vector<8x8xf32>
    %129 = vector.broadcast %121 : vector<1x8xf32> to vector<8x8xf32>
    %130 = arith.addf %128, %129 : vector<8x8xf32>
    %cst_42 = arith.constant dense<0xFF800000> : vector<8xf32>
    %131 = vector.multi_reduction <maximumf>, %130, %cst_42 [1] : vector<8x8xf32> to vector<8xf32>
    %132 = vector.shape_cast %131 : vector<8xf32> to vector<8x1xf32>
    %133 = vector.broadcast %132 : vector<8x1xf32> to vector<8x8xf32>
    %134 = arith.subf %130, %133 : vector<8x8xf32>
    %135 = math.exp %134 : vector<8x8xf32>
    %cst_43 = arith.constant dense<0.000000e+00> : vector<8xf32>
    %136 = vector.multi_reduction <add>, %135, %cst_43 [1] : vector<8x8xf32> to vector<8xf32>
    %137 = vector.shape_cast %136 : vector<8xf32> to vector<8x1xf32>
    %138 = tpu.reciprocal %137 {approx = true} : vector<8x1xf32> -> vector<8x1xf32>
    %139 = vector.broadcast %138 : vector<8x1xf32> to vector<8x8xf32>
    %140 = arith.mulf %135, %139 : vector<8x8xf32>
    %cst_44 = arith.constant dense<0.000000e+00> : vector<8x32xf32>
    %141 = tpu.matmul %140, %124, %cst_44 {dimension_numbers = #tpu.dot_dimension_numbers<[1], [0], [0], [1], [0, 0, 1, 1], [], []>} : vector<8x8xf32>, vector<8x32xf32>, vector<8x32xf32> -> vector<8x32xf32>
    %142 = vector.extract_strided_slice %36 {offsets = [8, 32], sizes = [8, 32], strides = [1, 1]} : vector<16x128xf32> to vector<8x32xf32>
    %143 = vector.extract_strided_slice %37 {offsets = [8, 32], sizes = [8, 32], strides = [1, 1]} : vector<16x128xf32> to vector<8x32xf32>
    %144 = vector.extract_strided_slice %38 {offsets = [8, 32], sizes = [8, 32], strides = [1, 1]} : vector<16x128xf32> to vector<8x32xf32>
    %145 = tpu.transpose %143, [1, 0] : vector<8x32xf32> -> vector<32x8xf32>
    %cst_45 = arith.constant dense<0.000000e+00> : vector<8x8xf32>
    %146 = tpu.matmul %142, %145, %cst_45 {dimension_numbers = #tpu.dot_dimension_numbers<[1], [0], [0], [1], [0, 0, 1, 1], [], []>} : vector<8x32xf32>, vector<32x8xf32>, vector<8x8xf32> -> vector<8x8xf32>
    %cst_46 = arith.constant 0.176776692 : f32
    %147 = vector.broadcast %cst_46 : f32 to vector<8x8xf32>
    %148 = arith.mulf %146, %147 : vector<8x8xf32>
    %149 = vector.broadcast %121 : vector<1x8xf32> to vector<8x8xf32>
    %150 = arith.addf %148, %149 : vector<8x8xf32>
    %cst_47 = arith.constant dense<0xFF800000> : vector<8xf32>
    %151 = vector.multi_reduction <maximumf>, %150, %cst_47 [1] : vector<8x8xf32> to vector<8xf32>
    %152 = vector.shape_cast %151 : vector<8xf32> to vector<8x1xf32>
    %153 = vector.broadcast %152 : vector<8x1xf32> to vector<8x8xf32>
    %154 = arith.subf %150, %153 : vector<8x8xf32>
    %155 = math.exp %154 : vector<8x8xf32>
    %cst_48 = arith.constant dense<0.000000e+00> : vector<8xf32>
    %156 = vector.multi_reduction <add>, %155, %cst_48 [1] : vector<8x8xf32> to vector<8xf32>
    %157 = vector.shape_cast %156 : vector<8xf32> to vector<8x1xf32>
    %158 = tpu.reciprocal %157 {approx = true} : vector<8x1xf32> -> vector<8x1xf32>
    %159 = vector.broadcast %158 : vector<8x1xf32> to vector<8x8xf32>
    %160 = arith.mulf %155, %159 : vector<8x8xf32>
    %cst_49 = arith.constant dense<0.000000e+00> : vector<8x32xf32>
    %161 = tpu.matmul %160, %144, %cst_49 {dimension_numbers = #tpu.dot_dimension_numbers<[1], [0], [0], [1], [0, 0, 1, 1], [], []>} : vector<8x8xf32>, vector<8x32xf32>, vector<8x32xf32> -> vector<8x32xf32>
    %162 = vector.extract_strided_slice %36 {offsets = [8, 64], sizes = [8, 32], strides = [1, 1]} : vector<16x128xf32> to vector<8x32xf32>
    %163 = vector.extract_strided_slice %37 {offsets = [8, 64], sizes = [8, 32], strides = [1, 1]} : vector<16x128xf32> to vector<8x32xf32>
    %164 = vector.extract_strided_slice %38 {offsets = [8, 64], sizes = [8, 32], strides = [1, 1]} : vector<16x128xf32> to vector<8x32xf32>
    %165 = tpu.transpose %163, [1, 0] : vector<8x32xf32> -> vector<32x8xf32>
    %cst_50 = arith.constant dense<0.000000e+00> : vector<8x8xf32>
    %166 = tpu.matmul %162, %165, %cst_50 {dimension_numbers = #tpu.dot_dimension_numbers<[1], [0], [0], [1], [0, 0, 1, 1], [], []>} : vector<8x32xf32>, vector<32x8xf32>, vector<8x8xf32> -> vector<8x8xf32>
    %cst_51 = arith.constant 0.176776692 : f32
    %167 = vector.broadcast %cst_51 : f32 to vector<8x8xf32>
    %168 = arith.mulf %166, %167 : vector<8x8xf32>
    %169 = vector.broadcast %121 : vector<1x8xf32> to vector<8x8xf32>
    %170 = arith.addf %168, %169 : vector<8x8xf32>
    %cst_52 = arith.constant dense<0xFF800000> : vector<8xf32>
    %171 = vector.multi_reduction <maximumf>, %170, %cst_52 [1] : vector<8x8xf32> to vector<8xf32>
    %172 = vector.shape_cast %171 : vector<8xf32> to vector<8x1xf32>
    %173 = vector.broadcast %172 : vector<8x1xf32> to vector<8x8xf32>
    %174 = arith.subf %170, %173 : vector<8x8xf32>
    %175 = math.exp %174 : vector<8x8xf32>
    %cst_53 = arith.constant dense<0.000000e+00> : vector<8xf32>
    %176 = vector.multi_reduction <add>, %175, %cst_53 [1] : vector<8x8xf32> to vector<8xf32>
    %177 = vector.shape_cast %176 : vector<8xf32> to vector<8x1xf32>
    %178 = tpu.reciprocal %177 {approx = true} : vector<8x1xf32> -> vector<8x1xf32>
    %179 = vector.broadcast %178 : vector<8x1xf32> to vector<8x8xf32>
    %180 = arith.mulf %175, %179 : vector<8x8xf32>
    %cst_54 = arith.constant dense<0.000000e+00> : vector<8x32xf32>
    %181 = tpu.matmul %180, %164, %cst_54 {dimension_numbers = #tpu.dot_dimension_numbers<[1], [0], [0], [1], [0, 0, 1, 1], [], []>} : vector<8x8xf32>, vector<8x32xf32>, vector<8x32xf32> -> vector<8x32xf32>
    %182 = vector.extract_strided_slice %36 {offsets = [8, 96], sizes = [8, 32], strides = [1, 1]} : vector<16x128xf32> to vector<8x32xf32>
    %183 = vector.extract_strided_slice %37 {offsets = [8, 96], sizes = [8, 32], strides = [1, 1]} : vector<16x128xf32> to vector<8x32xf32>
    %184 = vector.extract_strided_slice %38 {offsets = [8, 96], sizes = [8, 32], strides = [1, 1]} : vector<16x128xf32> to vector<8x32xf32>
    %185 = tpu.transpose %183, [1, 0] : vector<8x32xf32> -> vector<32x8xf32>
    %cst_55 = arith.constant dense<0.000000e+00> : vector<8x8xf32>
    %186 = tpu.matmul %182, %185, %cst_55 {dimension_numbers = #tpu.dot_dimension_numbers<[1], [0], [0], [1], [0, 0, 1, 1], [], []>} : vector<8x32xf32>, vector<32x8xf32>, vector<8x8xf32> -> vector<8x8xf32>
    %cst_56 = arith.constant 0.176776692 : f32
    %187 = vector.broadcast %cst_56 : f32 to vector<8x8xf32>
    %188 = arith.mulf %186, %187 : vector<8x8xf32>
    %189 = vector.broadcast %121 : vector<1x8xf32> to vector<8x8xf32>
    %190 = arith.addf %188, %189 : vector<8x8xf32>
    %cst_57 = arith.constant dense<0xFF800000> : vector<8xf32>
    %191 = vector.multi_reduction <maximumf>, %190, %cst_57 [1] : vector<8x8xf32> to vector<8xf32>
    %192 = vector.shape_cast %191 : vector<8xf32> to vector<8x1xf32>
    %193 = vector.broadcast %192 : vector<8x1xf32> to vector<8x8xf32>
    %194 = arith.subf %190, %193 : vector<8x8xf32>
    %195 = math.exp %194 : vector<8x8xf32>
    %cst_58 = arith.constant dense<0.000000e+00> : vector<8xf32>
    %196 = vector.multi_reduction <add>, %195, %cst_58 [1] : vector<8x8xf32> to vector<8xf32>
    %197 = vector.shape_cast %196 : vector<8xf32> to vector<8x1xf32>
    %198 = tpu.reciprocal %197 {approx = true} : vector<8x1xf32> -> vector<8x1xf32>
    %199 = vector.broadcast %198 : vector<8x1xf32> to vector<8x8xf32>
    %200 = arith.mulf %195, %199 : vector<8x8xf32>
    %cst_59 = arith.constant dense<0.000000e+00> : vector<8x32xf32>
    %201 = tpu.matmul %200, %184, %cst_59 {dimension_numbers = #tpu.dot_dimension_numbers<[1], [0], [0], [1], [0, 0, 1, 1], [], []>} : vector<8x8xf32>, vector<8x32xf32>, vector<8x32xf32> -> vector<8x32xf32>
    %202 = tpu.concatenate %141, %161, %181, %201 in 1 : vector<8x32xf32>, vector<8x32xf32>, vector<8x32xf32>, vector<8x32xf32> -> vector<8x128xf32>
    %203 = tpu.concatenate %120, %202 in 0 : vector<8x128xf32>, vector<8x128xf32> -> vector<16x128xf32>
    %c0_60 = arith.constant 0 : index
    %c0_61 = arith.constant 0 : index
    %c0_62 = arith.constant 0 : index
    %204 = vector.load %arg7[%c0_60, %c0_61, %c0_62] : memref<2x128x128xbf16, #tpu.memory_space<vmem>>, vector<1x128x128xbf16>
    %205 = vector.shape_cast %204 : vector<1x128x128xbf16> to vector<128x128xbf16>
    %c0_63 = arith.constant 0 : index
    %c0_64 = arith.constant 0 : index
    %c0_65 = arith.constant 0 : index
    %206 = vector.load %arg8[%c0_63, %c0_64, %c0_65] : memref<2x1x128xf32, #tpu.memory_space<vmem>>, vector<1x1x128xf32>
    %207 = vector.shape_cast %206 : vector<1x1x128xf32> to vector<1x128xf32>
    %208 = arith.truncf %203 : vector<16x128xf32> to vector<16x128xbf16>
    %cst_66 = arith.constant dense<0.000000e+00> : vector<16x128xf32>
    %209 = tpu.matmul %208, %205, %cst_66 {dimension_numbers = #tpu.dot_dimension_numbers<[1], [0], [0], [1], [0, 0, 1, 1], [], []>} : vector<16x128xbf16>, vector<128x128xbf16>, vector<16x128xf32> -> vector<16x128xf32>
    %210 = vector.broadcast %207 : vector<1x128xf32> to vector<16x128xf32>
    %211 = arith.addf %209, %210 : vector<16x128xf32>
    %212 = arith.addf %211, %22 : vector<16x128xf32>
    %c0_67 = arith.constant 0 : index
    %c0_68 = arith.constant 0 : index
    %c0_69 = arith.constant 0 : index
    %213 = vector.load %arg9[%c0_67, %c0_68, %c0_69] : memref<2x1x128xf32, #tpu.memory_space<vmem>>, vector<1x1x128xf32>
    %214 = vector.shape_cast %213 : vector<1x1x128xf32> to vector<1x128xf32>
    %c0_70 = arith.constant 0 : index
    %c0_71 = arith.constant 0 : index
    %c0_72 = arith.constant 0 : index
    %215 = vector.load %arg10[%c0_70, %c0_71, %c0_72] : memref<2x1x128xf32, #tpu.memory_space<vmem>>, vector<1x1x128xf32>
    %216 = vector.shape_cast %215 : vector<1x1x128xf32> to vector<1x128xf32>
    %cst_73 = arith.constant dense<0.000000e+00> : vector<16xf32>
    %217 = vector.multi_reduction <add>, %212, %cst_73 [1] : vector<16x128xf32> to vector<16xf32>
    %218 = vector.shape_cast %217 : vector<16xf32> to vector<16x1xf32>
    %cst_74 = arith.constant 1.280000e+02 : f32
    %219 = vector.broadcast %cst_74 : f32 to vector<16x1xf32>
    %220 = arith.divf %218, %219 : vector<16x1xf32>
    %221 = vector.broadcast %220 : vector<16x1xf32> to vector<16x128xf32>
    %222 = arith.subf %212, %221 : vector<16x128xf32>
    %223 = arith.mulf %222, %222 : vector<16x128xf32>
    %cst_75 = arith.constant dense<0.000000e+00> : vector<16xf32>
    %224 = vector.multi_reduction <add>, %223, %cst_75 [1] : vector<16x128xf32> to vector<16xf32>
    %225 = vector.shape_cast %224 : vector<16xf32> to vector<16x1xf32>
    %cst_76 = arith.constant 1.280000e+02 : f32
    %226 = vector.broadcast %cst_76 : f32 to vector<16x1xf32>
    %227 = arith.divf %225, %226 : vector<16x1xf32>
    %cst_77 = arith.constant 9.99999996E-13 : f32
    %228 = vector.broadcast %cst_77 : f32 to vector<16x1xf32>
    %229 = arith.addf %227, %228 : vector<16x1xf32>
    %230 = math.rsqrt %229 : vector<16x1xf32>
    %231 = vector.broadcast %230 : vector<16x1xf32> to vector<16x128xf32>
    %232 = arith.mulf %222, %231 : vector<16x128xf32>
    %233 = vector.broadcast %214 : vector<1x128xf32> to vector<16x128xf32>
    %234 = arith.mulf %232, %233 : vector<16x128xf32>
    %235 = vector.broadcast %216 : vector<1x128xf32> to vector<16x128xf32>
    %236 = arith.addf %234, %235 : vector<16x128xf32>
    %c0_78 = arith.constant 0 : index
    %c0_79 = arith.constant 0 : index
    %c0_80 = arith.constant 0 : index
    %237 = vector.load %arg11[%c0_78, %c0_79, %c0_80] : memref<2x128x512xbf16, #tpu.memory_space<vmem>>, vector<1x128x512xbf16>
    %238 = vector.shape_cast %237 : vector<1x128x512xbf16> to vector<128x512xbf16>
    %c0_81 = arith.constant 0 : index
    %c0_82 = arith.constant 0 : index
    %c0_83 = arith.constant 0 : index
    %239 = vector.load %arg12[%c0_81, %c0_82, %c0_83] : memref<2x1x512xf32, #tpu.memory_space<vmem>>, vector<1x1x512xf32>
    %240 = vector.shape_cast %239 : vector<1x1x512xf32> to vector<1x512xf32>
    %241 = arith.truncf %236 : vector<16x128xf32> to vector<16x128xbf16>
    %cst_84 = arith.constant dense<0.000000e+00> : vector<16x512xf32>
    %242 = tpu.matmul %241, %238, %cst_84 {dimension_numbers = #tpu.dot_dimension_numbers<[1], [0], [0], [1], [0, 0, 1, 1], [], []>} : vector<16x128xbf16>, vector<128x512xbf16>, vector<16x512xf32> -> vector<16x512xf32>
    %243 = vector.broadcast %240 : vector<1x512xf32> to vector<16x512xf32>
    %244 = arith.addf %242, %243 : vector<16x512xf32>
    %cst_85 = arith.constant 5.000000e-01 : f32
    %245 = vector.broadcast %cst_85 : f32 to vector<16x512xf32>
    %246 = arith.mulf %245, %244 : vector<16x512xf32>
    %cst_86 = arith.constant 4.471500e-02 : f32
    %247 = vector.broadcast %cst_86 : f32 to vector<16x512xf32>
    %248 = arith.mulf %247, %244 : vector<16x512xf32>
    %249 = arith.mulf %248, %244 : vector<16x512xf32>
    %250 = arith.mulf %249, %244 : vector<16x512xf32>
    %251 = arith.addf %244, %250 : vector<16x512xf32>
    %cst_87 = arith.constant 0.797884583 : f32
    %252 = vector.broadcast %cst_87 : f32 to vector<16x512xf32>
    %253 = arith.mulf %252, %251 : vector<16x512xf32>
    %254 = math.tanh %253 : vector<16x512xf32>
    %cst_88 = arith.constant 1.000000e+00 : f32
    %255 = vector.broadcast %cst_88 : f32 to vector<16x512xf32>
    %256 = arith.addf %255, %254 : vector<16x512xf32>
    %257 = arith.mulf %246, %256 : vector<16x512xf32>
    %c0_89 = arith.constant 0 : index
    %c0_90 = arith.constant 0 : index
    %c0_91 = arith.constant 0 : index
    %258 = vector.load %arg13[%c0_89, %c0_90, %c0_91] : memref<2x512x128xbf16, #tpu.memory_space<vmem>>, vector<1x512x128xbf16>
    %259 = vector.shape_cast %258 : vector<1x512x128xbf16> to vector<512x128xbf16>
    %c0_92 = arith.constant 0 : index
    %c0_93 = arith.constant 0 : index
    %c0_94 = arith.constant 0 : index
    %260 = vector.load %arg14[%c0_92, %c0_93, %c0_94] : memref<2x1x128xf32, #tpu.memory_space<vmem>>, vector<1x1x128xf32>
    %261 = vector.shape_cast %260 : vector<1x1x128xf32> to vector<1x128xf32>
    %262 = arith.truncf %257 : vector<16x512xf32> to vector<16x512xbf16>
    %cst_95 = arith.constant dense<0.000000e+00> : vector<16x128xf32>
    %263 = tpu.matmul %262, %259, %cst_95 {dimension_numbers = #tpu.dot_dimension_numbers<[1], [0], [0], [1], [0, 0, 1, 1], [], []>} : vector<16x512xbf16>, vector<512x128xbf16>, vector<16x128xf32> -> vector<16x128xf32>
    %264 = vector.broadcast %261 : vector<1x128xf32> to vector<16x128xf32>
    %265 = arith.addf %263, %264 : vector<16x128xf32>
    %266 = arith.addf %265, %236 : vector<16x128xf32>
    %c0_96 = arith.constant 0 : index
    %c0_97 = arith.constant 0 : index
    %c0_98 = arith.constant 0 : index
    %267 = vector.load %arg15[%c0_96, %c0_97, %c0_98] : memref<2x1x128xf32, #tpu.memory_space<vmem>>, vector<1x1x128xf32>
    %268 = vector.shape_cast %267 : vector<1x1x128xf32> to vector<1x128xf32>
    %c0_99 = arith.constant 0 : index
    %c0_100 = arith.constant 0 : index
    %c0_101 = arith.constant 0 : index
    %269 = vector.load %arg16[%c0_99, %c0_100, %c0_101] : memref<2x1x128xf32, #tpu.memory_space<vmem>>, vector<1x1x128xf32>
    %270 = vector.shape_cast %269 : vector<1x1x128xf32> to vector<1x128xf32>
    %cst_102 = arith.constant dense<0.000000e+00> : vector<16xf32>
    %271 = vector.multi_reduction <add>, %266, %cst_102 [1] : vector<16x128xf32> to vector<16xf32>
    %272 = vector.shape_cast %271 : vector<16xf32> to vector<16x1xf32>
    %cst_103 = arith.constant 1.280000e+02 : f32
    %273 = vector.broadcast %cst_103 : f32 to vector<16x1xf32>
    %274 = arith.divf %272, %273 : vector<16x1xf32>
    %275 = vector.broadcast %274 : vector<16x1xf32> to vector<16x128xf32>
    %276 = arith.subf %266, %275 : vector<16x128xf32>
    %277 = arith.mulf %276, %276 : vector<16x128xf32>
    %cst_104 = arith.constant dense<0.000000e+00> : vector<16xf32>
    %278 = vector.multi_reduction <add>, %277, %cst_104 [1] : vector<16x128xf32> to vector<16xf32>
    %279 = vector.shape_cast %278 : vector<16xf32> to vector<16x1xf32>
    %cst_105 = arith.constant 1.280000e+02 : f32
    %280 = vector.broadcast %cst_105 : f32 to vector<16x1xf32>
    %281 = arith.divf %279, %280 : vector<16x1xf32>
    %cst_106 = arith.constant 9.99999996E-13 : f32
    %282 = vector.broadcast %cst_106 : f32 to vector<16x1xf32>
    %283 = arith.addf %281, %282 : vector<16x1xf32>
    %284 = math.rsqrt %283 : vector<16x1xf32>
    %285 = vector.broadcast %284 : vector<16x1xf32> to vector<16x128xf32>
    %286 = arith.mulf %276, %285 : vector<16x128xf32>
    %287 = vector.broadcast %268 : vector<1x128xf32> to vector<16x128xf32>
    %288 = arith.mulf %286, %287 : vector<16x128xf32>
    %289 = vector.broadcast %270 : vector<1x128xf32> to vector<16x128xf32>
    %290 = arith.addf %288, %289 : vector<16x128xf32>
    %c1 = arith.constant 1 : index
    %c0_107 = arith.constant 0 : index
    %c0_108 = arith.constant 0 : index
    %291 = vector.load %arg5[%c1, %c0_107, %c0_108] : memref<2x128x384xbf16, #tpu.memory_space<vmem>>, vector<1x128x384xbf16>
    %292 = vector.shape_cast %291 : vector<1x128x384xbf16> to vector<128x384xbf16>
    %c1_109 = arith.constant 1 : index
    %c0_110 = arith.constant 0 : index
    %c0_111 = arith.constant 0 : index
    %293 = vector.load %arg6[%c1_109, %c0_110, %c0_111] : memref<2x1x384xf32, #tpu.memory_space<vmem>>, vector<1x1x384xf32>
    %294 = vector.shape_cast %293 : vector<1x1x384xf32> to vector<1x384xf32>
    %295 = arith.truncf %290 : vector<16x128xf32> to vector<16x128xbf16>
    %cst_112 = arith.constant dense<0.000000e+00> : vector<16x384xf32>
    %296 = tpu.matmul %295, %292, %cst_112 {dimension_numbers = #tpu.dot_dimension_numbers<[1], [0], [0], [1], [0, 0, 1, 1], [], []>} : vector<16x128xbf16>, vector<128x384xbf16>, vector<16x384xf32> -> vector<16x384xf32>
    %297 = vector.broadcast %294 : vector<1x384xf32> to vector<16x384xf32>
    %298 = arith.addf %296, %297 : vector<16x384xf32>
    %299 = vector.extract_strided_slice %298 {offsets = [0, 0], sizes = [16, 128], strides = [1, 1]} : vector<16x384xf32> to vector<16x128xf32>
    %300 = vector.extract_strided_slice %298 {offsets = [0, 128], sizes = [16, 128], strides = [1, 1]} : vector<16x384xf32> to vector<16x128xf32>
    %301 = vector.extract_strided_slice %298 {offsets = [0, 256], sizes = [16, 128], strides = [1, 1]} : vector<16x384xf32> to vector<16x128xf32>
    %302 = vector.extract_strided_slice %27 {offsets = [0, 0], sizes = [1, 8], strides = [1, 1]} : vector<2x8xf32> to vector<1x8xf32>
    %303 = vector.extract_strided_slice %299 {offsets = [0, 0], sizes = [8, 32], strides = [1, 1]} : vector<16x128xf32> to vector<8x32xf32>
    %304 = vector.extract_strided_slice %300 {offsets = [0, 0], sizes = [8, 32], strides = [1, 1]} : vector<16x128xf32> to vector<8x32xf32>
    %305 = vector.extract_strided_slice %301 {offsets = [0, 0], sizes = [8, 32], strides = [1, 1]} : vector<16x128xf32> to vector<8x32xf32>
    %306 = tpu.transpose %304, [1, 0] : vector<8x32xf32> -> vector<32x8xf32>
    %cst_113 = arith.constant dense<0.000000e+00> : vector<8x8xf32>
    %307 = tpu.matmul %303, %306, %cst_113 {dimension_numbers = #tpu.dot_dimension_numbers<[1], [0], [0], [1], [0, 0, 1, 1], [], []>} : vector<8x32xf32>, vector<32x8xf32>, vector<8x8xf32> -> vector<8x8xf32>
    %cst_114 = arith.constant 0.176776692 : f32
    %308 = vector.broadcast %cst_114 : f32 to vector<8x8xf32>
    %309 = arith.mulf %307, %308 : vector<8x8xf32>
    %310 = vector.broadcast %302 : vector<1x8xf32> to vector<8x8xf32>
    %311 = arith.addf %309, %310 : vector<8x8xf32>
    %cst_115 = arith.constant dense<0xFF800000> : vector<8xf32>
    %312 = vector.multi_reduction <maximumf>, %311, %cst_115 [1] : vector<8x8xf32> to vector<8xf32>
    %313 = vector.shape_cast %312 : vector<8xf32> to vector<8x1xf32>
    %314 = vector.broadcast %313 : vector<8x1xf32> to vector<8x8xf32>
    %315 = arith.subf %311, %314 : vector<8x8xf32>
    %316 = math.exp %315 : vector<8x8xf32>
    %cst_116 = arith.constant dense<0.000000e+00> : vector<8xf32>
    %317 = vector.multi_reduction <add>, %316, %cst_116 [1] : vector<8x8xf32> to vector<8xf32>
    %318 = vector.shape_cast %317 : vector<8xf32> to vector<8x1xf32>
    %319 = tpu.reciprocal %318 {approx = true} : vector<8x1xf32> -> vector<8x1xf32>
    %320 = vector.broadcast %319 : vector<8x1xf32> to vector<8x8xf32>
    %321 = arith.mulf %316, %320 : vector<8x8xf32>
    %cst_117 = arith.constant dense<0.000000e+00> : vector<8x32xf32>
    %322 = tpu.matmul %321, %305, %cst_117 {dimension_numbers = #tpu.dot_dimension_numbers<[1], [0], [0], [1], [0, 0, 1, 1], [], []>} : vector<8x8xf32>, vector<8x32xf32>, vector<8x32xf32> -> vector<8x32xf32>
    %323 = vector.extract_strided_slice %299 {offsets = [0, 32], sizes = [8, 32], strides = [1, 1]} : vector<16x128xf32> to vector<8x32xf32>
    %324 = vector.extract_strided_slice %300 {offsets = [0, 32], sizes = [8, 32], strides = [1, 1]} : vector<16x128xf32> to vector<8x32xf32>
    %325 = vector.extract_strided_slice %301 {offsets = [0, 32], sizes = [8, 32], strides = [1, 1]} : vector<16x128xf32> to vector<8x32xf32>
    %326 = tpu.transpose %324, [1, 0] : vector<8x32xf32> -> vector<32x8xf32>
    %cst_118 = arith.constant dense<0.000000e+00> : vector<8x8xf32>
    %327 = tpu.matmul %323, %326, %cst_118 {dimension_numbers = #tpu.dot_dimension_numbers<[1], [0], [0], [1], [0, 0, 1, 1], [], []>} : vector<8x32xf32>, vector<32x8xf32>, vector<8x8xf32> -> vector<8x8xf32>
    %cst_119 = arith.constant 0.176776692 : f32
    %328 = vector.broadcast %cst_119 : f32 to vector<8x8xf32>
    %329 = arith.mulf %327, %328 : vector<8x8xf32>
    %330 = vector.broadcast %302 : vector<1x8xf32> to vector<8x8xf32>
    %331 = arith.addf %329, %330 : vector<8x8xf32>
    %cst_120 = arith.constant dense<0xFF800000> : vector<8xf32>
    %332 = vector.multi_reduction <maximumf>, %331, %cst_120 [1] : vector<8x8xf32> to vector<8xf32>
    %333 = vector.shape_cast %332 : vector<8xf32> to vector<8x1xf32>
    %334 = vector.broadcast %333 : vector<8x1xf32> to vector<8x8xf32>
    %335 = arith.subf %331, %334 : vector<8x8xf32>
    %336 = math.exp %335 : vector<8x8xf32>
    %cst_121 = arith.constant dense<0.000000e+00> : vector<8xf32>
    %337 = vector.multi_reduction <add>, %336, %cst_121 [1] : vector<8x8xf32> to vector<8xf32>
    %338 = vector.shape_cast %337 : vector<8xf32> to vector<8x1xf32>
    %339 = tpu.reciprocal %338 {approx = true} : vector<8x1xf32> -> vector<8x1xf32>
    %340 = vector.broadcast %339 : vector<8x1xf32> to vector<8x8xf32>
    %341 = arith.mulf %336, %340 : vector<8x8xf32>
    %cst_122 = arith.constant dense<0.000000e+00> : vector<8x32xf32>
    %342 = tpu.matmul %341, %325, %cst_122 {dimension_numbers = #tpu.dot_dimension_numbers<[1], [0], [0], [1], [0, 0, 1, 1], [], []>} : vector<8x8xf32>, vector<8x32xf32>, vector<8x32xf32> -> vector<8x32xf32>
    %343 = vector.extract_strided_slice %299 {offsets = [0, 64], sizes = [8, 32], strides = [1, 1]} : vector<16x128xf32> to vector<8x32xf32>
    %344 = vector.extract_strided_slice %300 {offsets = [0, 64], sizes = [8, 32], strides = [1, 1]} : vector<16x128xf32> to vector<8x32xf32>
    %345 = vector.extract_strided_slice %301 {offsets = [0, 64], sizes = [8, 32], strides = [1, 1]} : vector<16x128xf32> to vector<8x32xf32>
    %346 = tpu.transpose %344, [1, 0] : vector<8x32xf32> -> vector<32x8xf32>
    %cst_123 = arith.constant dense<0.000000e+00> : vector<8x8xf32>
    %347 = tpu.matmul %343, %346, %cst_123 {dimension_numbers = #tpu.dot_dimension_numbers<[1], [0], [0], [1], [0, 0, 1, 1], [], []>} : vector<8x32xf32>, vector<32x8xf32>, vector<8x8xf32> -> vector<8x8xf32>
    %cst_124 = arith.constant 0.176776692 : f32
    %348 = vector.broadcast %cst_124 : f32 to vector<8x8xf32>
    %349 = arith.mulf %347, %348 : vector<8x8xf32>
    %350 = vector.broadcast %302 : vector<1x8xf32> to vector<8x8xf32>
    %351 = arith.addf %349, %350 : vector<8x8xf32>
    %cst_125 = arith.constant dense<0xFF800000> : vector<8xf32>
    %352 = vector.multi_reduction <maximumf>, %351, %cst_125 [1] : vector<8x8xf32> to vector<8xf32>
    %353 = vector.shape_cast %352 : vector<8xf32> to vector<8x1xf32>
    %354 = vector.broadcast %353 : vector<8x1xf32> to vector<8x8xf32>
    %355 = arith.subf %351, %354 : vector<8x8xf32>
    %356 = math.exp %355 : vector<8x8xf32>
    %cst_126 = arith.constant dense<0.000000e+00> : vector<8xf32>
    %357 = vector.multi_reduction <add>, %356, %cst_126 [1] : vector<8x8xf32> to vector<8xf32>
    %358 = vector.shape_cast %357 : vector<8xf32> to vector<8x1xf32>
    %359 = tpu.reciprocal %358 {approx = true} : vector<8x1xf32> -> vector<8x1xf32>
    %360 = vector.broadcast %359 : vector<8x1xf32> to vector<8x8xf32>
    %361 = arith.mulf %356, %360 : vector<8x8xf32>
    %cst_127 = arith.constant dense<0.000000e+00> : vector<8x32xf32>
    %362 = tpu.matmul %361, %345, %cst_127 {dimension_numbers = #tpu.dot_dimension_numbers<[1], [0], [0], [1], [0, 0, 1, 1], [], []>} : vector<8x8xf32>, vector<8x32xf32>, vector<8x32xf32> -> vector<8x32xf32>
    %363 = vector.extract_strided_slice %299 {offsets = [0, 96], sizes = [8, 32], strides = [1, 1]} : vector<16x128xf32> to vector<8x32xf32>
    %364 = vector.extract_strided_slice %300 {offsets = [0, 96], sizes = [8, 32], strides = [1, 1]} : vector<16x128xf32> to vector<8x32xf32>
    %365 = vector.extract_strided_slice %301 {offsets = [0, 96], sizes = [8, 32], strides = [1, 1]} : vector<16x128xf32> to vector<8x32xf32>
    %366 = tpu.transpose %364, [1, 0] : vector<8x32xf32> -> vector<32x8xf32>
    %cst_128 = arith.constant dense<0.000000e+00> : vector<8x8xf32>
    %367 = tpu.matmul %363, %366, %cst_128 {dimension_numbers = #tpu.dot_dimension_numbers<[1], [0], [0], [1], [0, 0, 1, 1], [], []>} : vector<8x32xf32>, vector<32x8xf32>, vector<8x8xf32> -> vector<8x8xf32>
    %cst_129 = arith.constant 0.176776692 : f32
    %368 = vector.broadcast %cst_129 : f32 to vector<8x8xf32>
    %369 = arith.mulf %367, %368 : vector<8x8xf32>
    %370 = vector.broadcast %302 : vector<1x8xf32> to vector<8x8xf32>
    %371 = arith.addf %369, %370 : vector<8x8xf32>
    %cst_130 = arith.constant dense<0xFF800000> : vector<8xf32>
    %372 = vector.multi_reduction <maximumf>, %371, %cst_130 [1] : vector<8x8xf32> to vector<8xf32>
    %373 = vector.shape_cast %372 : vector<8xf32> to vector<8x1xf32>
    %374 = vector.broadcast %373 : vector<8x1xf32> to vector<8x8xf32>
    %375 = arith.subf %371, %374 : vector<8x8xf32>
    %376 = math.exp %375 : vector<8x8xf32>
    %cst_131 = arith.constant dense<0.000000e+00> : vector<8xf32>
    %377 = vector.multi_reduction <add>, %376, %cst_131 [1] : vector<8x8xf32> to vector<8xf32>
    %378 = vector.shape_cast %377 : vector<8xf32> to vector<8x1xf32>
    %379 = tpu.reciprocal %378 {approx = true} : vector<8x1xf32> -> vector<8x1xf32>
    %380 = vector.broadcast %379 : vector<8x1xf32> to vector<8x8xf32>
    %381 = arith.mulf %376, %380 : vector<8x8xf32>
    %cst_132 = arith.constant dense<0.000000e+00> : vector<8x32xf32>
    %382 = tpu.matmul %381, %365, %cst_132 {dimension_numbers = #tpu.dot_dimension_numbers<[1], [0], [0], [1], [0, 0, 1, 1], [], []>} : vector<8x8xf32>, vector<8x32xf32>, vector<8x32xf32> -> vector<8x32xf32>
    %383 = tpu.concatenate %322, %342, %362, %382 in 1 : vector<8x32xf32>, vector<8x32xf32>, vector<8x32xf32>, vector<8x32xf32> -> vector<8x128xf32>
    %384 = vector.extract_strided_slice %27 {offsets = [1, 0], sizes = [1, 8], strides = [1, 1]} : vector<2x8xf32> to vector<1x8xf32>
    %385 = vector.extract_strided_slice %299 {offsets = [8, 0], sizes = [8, 32], strides = [1, 1]} : vector<16x128xf32> to vector<8x32xf32>
    %386 = vector.extract_strided_slice %300 {offsets = [8, 0], sizes = [8, 32], strides = [1, 1]} : vector<16x128xf32> to vector<8x32xf32>
    %387 = vector.extract_strided_slice %301 {offsets = [8, 0], sizes = [8, 32], strides = [1, 1]} : vector<16x128xf32> to vector<8x32xf32>
    %388 = tpu.transpose %386, [1, 0] : vector<8x32xf32> -> vector<32x8xf32>
    %cst_133 = arith.constant dense<0.000000e+00> : vector<8x8xf32>
    %389 = tpu.matmul %385, %388, %cst_133 {dimension_numbers = #tpu.dot_dimension_numbers<[1], [0], [0], [1], [0, 0, 1, 1], [], []>} : vector<8x32xf32>, vector<32x8xf32>, vector<8x8xf32> -> vector<8x8xf32>
    %cst_134 = arith.constant 0.176776692 : f32
    %390 = vector.broadcast %cst_134 : f32 to vector<8x8xf32>
    %391 = arith.mulf %389, %390 : vector<8x8xf32>
    %392 = vector.broadcast %384 : vector<1x8xf32> to vector<8x8xf32>
    %393 = arith.addf %391, %392 : vector<8x8xf32>
    %cst_135 = arith.constant dense<0xFF800000> : vector<8xf32>
    %394 = vector.multi_reduction <maximumf>, %393, %cst_135 [1] : vector<8x8xf32> to vector<8xf32>
    %395 = vector.shape_cast %394 : vector<8xf32> to vector<8x1xf32>
    %396 = vector.broadcast %395 : vector<8x1xf32> to vector<8x8xf32>
    %397 = arith.subf %393, %396 : vector<8x8xf32>
    %398 = math.exp %397 : vector<8x8xf32>
    %cst_136 = arith.constant dense<0.000000e+00> : vector<8xf32>
    %399 = vector.multi_reduction <add>, %398, %cst_136 [1] : vector<8x8xf32> to vector<8xf32>
    %400 = vector.shape_cast %399 : vector<8xf32> to vector<8x1xf32>
    %401 = tpu.reciprocal %400 {approx = true} : vector<8x1xf32> -> vector<8x1xf32>
    %402 = vector.broadcast %401 : vector<8x1xf32> to vector<8x8xf32>
    %403 = arith.mulf %398, %402 : vector<8x8xf32>
    %cst_137 = arith.constant dense<0.000000e+00> : vector<8x32xf32>
    %404 = tpu.matmul %403, %387, %cst_137 {dimension_numbers = #tpu.dot_dimension_numbers<[1], [0], [0], [1], [0, 0, 1, 1], [], []>} : vector<8x8xf32>, vector<8x32xf32>, vector<8x32xf32> -> vector<8x32xf32>
    %405 = vector.extract_strided_slice %299 {offsets = [8, 32], sizes = [8, 32], strides = [1, 1]} : vector<16x128xf32> to vector<8x32xf32>
    %406 = vector.extract_strided_slice %300 {offsets = [8, 32], sizes = [8, 32], strides = [1, 1]} : vector<16x128xf32> to vector<8x32xf32>
    %407 = vector.extract_strided_slice %301 {offsets = [8, 32], sizes = [8, 32], strides = [1, 1]} : vector<16x128xf32> to vector<8x32xf32>
    %408 = tpu.transpose %406, [1, 0] : vector<8x32xf32> -> vector<32x8xf32>
    %cst_138 = arith.constant dense<0.000000e+00> : vector<8x8xf32>
    %409 = tpu.matmul %405, %408, %cst_138 {dimension_numbers = #tpu.dot_dimension_numbers<[1], [0], [0], [1], [0, 0, 1, 1], [], []>} : vector<8x32xf32>, vector<32x8xf32>, vector<8x8xf32> -> vector<8x8xf32>
    %cst_139 = arith.constant 0.176776692 : f32
    %410 = vector.broadcast %cst_139 : f32 to vector<8x8xf32>
    %411 = arith.mulf %409, %410 : vector<8x8xf32>
    %412 = vector.broadcast %384 : vector<1x8xf32> to vector<8x8xf32>
    %413 = arith.addf %411, %412 : vector<8x8xf32>
    %cst_140 = arith.constant dense<0xFF800000> : vector<8xf32>
    %414 = vector.multi_reduction <maximumf>, %413, %cst_140 [1] : vector<8x8xf32> to vector<8xf32>
    %415 = vector.shape_cast %414 : vector<8xf32> to vector<8x1xf32>
    %416 = vector.broadcast %415 : vector<8x1xf32> to vector<8x8xf32>
    %417 = arith.subf %413, %416 : vector<8x8xf32>
    %418 = math.exp %417 : vector<8x8xf32>
    %cst_141 = arith.constant dense<0.000000e+00> : vector<8xf32>
    %419 = vector.multi_reduction <add>, %418, %cst_141 [1] : vector<8x8xf32> to vector<8xf32>
    %420 = vector.shape_cast %419 : vector<8xf32> to vector<8x1xf32>
    %421 = tpu.reciprocal %420 {approx = true} : vector<8x1xf32> -> vector<8x1xf32>
    %422 = vector.broadcast %421 : vector<8x1xf32> to vector<8x8xf32>
    %423 = arith.mulf %418, %422 : vector<8x8xf32>
    %cst_142 = arith.constant dense<0.000000e+00> : vector<8x32xf32>
    %424 = tpu.matmul %423, %407, %cst_142 {dimension_numbers = #tpu.dot_dimension_numbers<[1], [0], [0], [1], [0, 0, 1, 1], [], []>} : vector<8x8xf32>, vector<8x32xf32>, vector<8x32xf32> -> vector<8x32xf32>
    %425 = vector.extract_strided_slice %299 {offsets = [8, 64], sizes = [8, 32], strides = [1, 1]} : vector<16x128xf32> to vector<8x32xf32>
    %426 = vector.extract_strided_slice %300 {offsets = [8, 64], sizes = [8, 32], strides = [1, 1]} : vector<16x128xf32> to vector<8x32xf32>
    %427 = vector.extract_strided_slice %301 {offsets = [8, 64], sizes = [8, 32], strides = [1, 1]} : vector<16x128xf32> to vector<8x32xf32>
    %428 = tpu.transpose %426, [1, 0] : vector<8x32xf32> -> vector<32x8xf32>
    %cst_143 = arith.constant dense<0.000000e+00> : vector<8x8xf32>
    %429 = tpu.matmul %425, %428, %cst_143 {dimension_numbers = #tpu.dot_dimension_numbers<[1], [0], [0], [1], [0, 0, 1, 1], [], []>} : vector<8x32xf32>, vector<32x8xf32>, vector<8x8xf32> -> vector<8x8xf32>
    %cst_144 = arith.constant 0.176776692 : f32
    %430 = vector.broadcast %cst_144 : f32 to vector<8x8xf32>
    %431 = arith.mulf %429, %430 : vector<8x8xf32>
    %432 = vector.broadcast %384 : vector<1x8xf32> to vector<8x8xf32>
    %433 = arith.addf %431, %432 : vector<8x8xf32>
    %cst_145 = arith.constant dense<0xFF800000> : vector<8xf32>
    %434 = vector.multi_reduction <maximumf>, %433, %cst_145 [1] : vector<8x8xf32> to vector<8xf32>
    %435 = vector.shape_cast %434 : vector<8xf32> to vector<8x1xf32>
    %436 = vector.broadcast %435 : vector<8x1xf32> to vector<8x8xf32>
    %437 = arith.subf %433, %436 : vector<8x8xf32>
    %438 = math.exp %437 : vector<8x8xf32>
    %cst_146 = arith.constant dense<0.000000e+00> : vector<8xf32>
    %439 = vector.multi_reduction <add>, %438, %cst_146 [1] : vector<8x8xf32> to vector<8xf32>
    %440 = vector.shape_cast %439 : vector<8xf32> to vector<8x1xf32>
    %441 = tpu.reciprocal %440 {approx = true} : vector<8x1xf32> -> vector<8x1xf32>
    %442 = vector.broadcast %441 : vector<8x1xf32> to vector<8x8xf32>
    %443 = arith.mulf %438, %442 : vector<8x8xf32>
    %cst_147 = arith.constant dense<0.000000e+00> : vector<8x32xf32>
    %444 = tpu.matmul %443, %427, %cst_147 {dimension_numbers = #tpu.dot_dimension_numbers<[1], [0], [0], [1], [0, 0, 1, 1], [], []>} : vector<8x8xf32>, vector<8x32xf32>, vector<8x32xf32> -> vector<8x32xf32>
    %445 = vector.extract_strided_slice %299 {offsets = [8, 96], sizes = [8, 32], strides = [1, 1]} : vector<16x128xf32> to vector<8x32xf32>
    %446 = vector.extract_strided_slice %300 {offsets = [8, 96], sizes = [8, 32], strides = [1, 1]} : vector<16x128xf32> to vector<8x32xf32>
    %447 = vector.extract_strided_slice %301 {offsets = [8, 96], sizes = [8, 32], strides = [1, 1]} : vector<16x128xf32> to vector<8x32xf32>
    %448 = tpu.transpose %446, [1, 0] : vector<8x32xf32> -> vector<32x8xf32>
    %cst_148 = arith.constant dense<0.000000e+00> : vector<8x8xf32>
    %449 = tpu.matmul %445, %448, %cst_148 {dimension_numbers = #tpu.dot_dimension_numbers<[1], [0], [0], [1], [0, 0, 1, 1], [], []>} : vector<8x32xf32>, vector<32x8xf32>, vector<8x8xf32> -> vector<8x8xf32>
    %cst_149 = arith.constant 0.176776692 : f32
    %450 = vector.broadcast %cst_149 : f32 to vector<8x8xf32>
    %451 = arith.mulf %449, %450 : vector<8x8xf32>
    %452 = vector.broadcast %384 : vector<1x8xf32> to vector<8x8xf32>
    %453 = arith.addf %451, %452 : vector<8x8xf32>
    %cst_150 = arith.constant dense<0xFF800000> : vector<8xf32>
    %454 = vector.multi_reduction <maximumf>, %453, %cst_150 [1] : vector<8x8xf32> to vector<8xf32>
    %455 = vector.shape_cast %454 : vector<8xf32> to vector<8x1xf32>
    %456 = vector.broadcast %455 : vector<8x1xf32> to vector<8x8xf32>
    %457 = arith.subf %453, %456 : vector<8x8xf32>
    %458 = math.exp %457 : vector<8x8xf32>
    %cst_151 = arith.constant dense<0.000000e+00> : vector<8xf32>
    %459 = vector.multi_reduction <add>, %458, %cst_151 [1] : vector<8x8xf32> to vector<8xf32>
    %460 = vector.shape_cast %459 : vector<8xf32> to vector<8x1xf32>
    %461 = tpu.reciprocal %460 {approx = true} : vector<8x1xf32> -> vector<8x1xf32>
    %462 = vector.broadcast %461 : vector<8x1xf32> to vector<8x8xf32>
    %463 = arith.mulf %458, %462 : vector<8x8xf32>
    %cst_152 = arith.constant dense<0.000000e+00> : vector<8x32xf32>
    %464 = tpu.matmul %463, %447, %cst_152 {dimension_numbers = #tpu.dot_dimension_numbers<[1], [0], [0], [1], [0, 0, 1, 1], [], []>} : vector<8x8xf32>, vector<8x32xf32>, vector<8x32xf32> -> vector<8x32xf32>
    %465 = tpu.concatenate %404, %424, %444, %464 in 1 : vector<8x32xf32>, vector<8x32xf32>, vector<8x32xf32>, vector<8x32xf32> -> vector<8x128xf32>
    %466 = tpu.concatenate %383, %465 in 0 : vector<8x128xf32>, vector<8x128xf32> -> vector<16x128xf32>
    %c1_153 = arith.constant 1 : index
    %c0_154 = arith.constant 0 : index
    %c0_155 = arith.constant 0 : index
    %467 = vector.load %arg7[%c1_153, %c0_154, %c0_155] : memref<2x128x128xbf16, #tpu.memory_space<vmem>>, vector<1x128x128xbf16>
    %468 = vector.shape_cast %467 : vector<1x128x128xbf16> to vector<128x128xbf16>
    %c1_156 = arith.constant 1 : index
    %c0_157 = arith.constant 0 : index
    %c0_158 = arith.constant 0 : index
    %469 = vector.load %arg8[%c1_156, %c0_157, %c0_158] : memref<2x1x128xf32, #tpu.memory_space<vmem>>, vector<1x1x128xf32>
    %470 = vector.shape_cast %469 : vector<1x1x128xf32> to vector<1x128xf32>
    %471 = arith.truncf %466 : vector<16x128xf32> to vector<16x128xbf16>
    %cst_159 = arith.constant dense<0.000000e+00> : vector<16x128xf32>
    %472 = tpu.matmul %471, %468, %cst_159 {dimension_numbers = #tpu.dot_dimension_numbers<[1], [0], [0], [1], [0, 0, 1, 1], [], []>} : vector<16x128xbf16>, vector<128x128xbf16>, vector<16x128xf32> -> vector<16x128xf32>
    %473 = vector.broadcast %470 : vector<1x128xf32> to vector<16x128xf32>
    %474 = arith.addf %472, %473 : vector<16x128xf32>
    %475 = arith.addf %474, %290 : vector<16x128xf32>
    %c1_160 = arith.constant 1 : index
    %c0_161 = arith.constant 0 : index
    %c0_162 = arith.constant 0 : index
    %476 = vector.load %arg9[%c1_160, %c0_161, %c0_162] : memref<2x1x128xf32, #tpu.memory_space<vmem>>, vector<1x1x128xf32>
    %477 = vector.shape_cast %476 : vector<1x1x128xf32> to vector<1x128xf32>
    %c1_163 = arith.constant 1 : index
    %c0_164 = arith.constant 0 : index
    %c0_165 = arith.constant 0 : index
    %478 = vector.load %arg10[%c1_163, %c0_164, %c0_165] : memref<2x1x128xf32, #tpu.memory_space<vmem>>, vector<1x1x128xf32>
    %479 = vector.shape_cast %478 : vector<1x1x128xf32> to vector<1x128xf32>
    %cst_166 = arith.constant dense<0.000000e+00> : vector<16xf32>
    %480 = vector.multi_reduction <add>, %475, %cst_166 [1] : vector<16x128xf32> to vector<16xf32>
    %481 = vector.shape_cast %480 : vector<16xf32> to vector<16x1xf32>
    %cst_167 = arith.constant 1.280000e+02 : f32
    %482 = vector.broadcast %cst_167 : f32 to vector<16x1xf32>
    %483 = arith.divf %481, %482 : vector<16x1xf32>
    %484 = vector.broadcast %483 : vector<16x1xf32> to vector<16x128xf32>
    %485 = arith.subf %475, %484 : vector<16x128xf32>
    %486 = arith.mulf %485, %485 : vector<16x128xf32>
    %cst_168 = arith.constant dense<0.000000e+00> : vector<16xf32>
    %487 = vector.multi_reduction <add>, %486, %cst_168 [1] : vector<16x128xf32> to vector<16xf32>
    %488 = vector.shape_cast %487 : vector<16xf32> to vector<16x1xf32>
    %cst_169 = arith.constant 1.280000e+02 : f32
    %489 = vector.broadcast %cst_169 : f32 to vector<16x1xf32>
    %490 = arith.divf %488, %489 : vector<16x1xf32>
    %cst_170 = arith.constant 9.99999996E-13 : f32
    %491 = vector.broadcast %cst_170 : f32 to vector<16x1xf32>
    %492 = arith.addf %490, %491 : vector<16x1xf32>
    %493 = math.rsqrt %492 : vector<16x1xf32>
    %494 = vector.broadcast %493 : vector<16x1xf32> to vector<16x128xf32>
    %495 = arith.mulf %485, %494 : vector<16x128xf32>
    %496 = vector.broadcast %477 : vector<1x128xf32> to vector<16x128xf32>
    %497 = arith.mulf %495, %496 : vector<16x128xf32>
    %498 = vector.broadcast %479 : vector<1x128xf32> to vector<16x128xf32>
    %499 = arith.addf %497, %498 : vector<16x128xf32>
    %c1_171 = arith.constant 1 : index
    %c0_172 = arith.constant 0 : index
    %c0_173 = arith.constant 0 : index
    %500 = vector.load %arg11[%c1_171, %c0_172, %c0_173] : memref<2x128x512xbf16, #tpu.memory_space<vmem>>, vector<1x128x512xbf16>
    %501 = vector.shape_cast %500 : vector<1x128x512xbf16> to vector<128x512xbf16>
    %c1_174 = arith.constant 1 : index
    %c0_175 = arith.constant 0 : index
    %c0_176 = arith.constant 0 : index
    %502 = vector.load %arg12[%c1_174, %c0_175, %c0_176] : memref<2x1x512xf32, #tpu.memory_space<vmem>>, vector<1x1x512xf32>
    %503 = vector.shape_cast %502 : vector<1x1x512xf32> to vector<1x512xf32>
    %504 = arith.truncf %499 : vector<16x128xf32> to vector<16x128xbf16>
    %cst_177 = arith.constant dense<0.000000e+00> : vector<16x512xf32>
    %505 = tpu.matmul %504, %501, %cst_177 {dimension_numbers = #tpu.dot_dimension_numbers<[1], [0], [0], [1], [0, 0, 1, 1], [], []>} : vector<16x128xbf16>, vector<128x512xbf16>, vector<16x512xf32> -> vector<16x512xf32>
    %506 = vector.broadcast %503 : vector<1x512xf32> to vector<16x512xf32>
    %507 = arith.addf %505, %506 : vector<16x512xf32>
    %cst_178 = arith.constant 5.000000e-01 : f32
    %508 = vector.broadcast %cst_178 : f32 to vector<16x512xf32>
    %509 = arith.mulf %508, %507 : vector<16x512xf32>
    %cst_179 = arith.constant 4.471500e-02 : f32
    %510 = vector.broadcast %cst_179 : f32 to vector<16x512xf32>
    %511 = arith.mulf %510, %507 : vector<16x512xf32>
    %512 = arith.mulf %511, %507 : vector<16x512xf32>
    %513 = arith.mulf %512, %507 : vector<16x512xf32>
    %514 = arith.addf %507, %513 : vector<16x512xf32>
    %cst_180 = arith.constant 0.797884583 : f32
    %515 = vector.broadcast %cst_180 : f32 to vector<16x512xf32>
    %516 = arith.mulf %515, %514 : vector<16x512xf32>
    %517 = math.tanh %516 : vector<16x512xf32>
    %cst_181 = arith.constant 1.000000e+00 : f32
    %518 = vector.broadcast %cst_181 : f32 to vector<16x512xf32>
    %519 = arith.addf %518, %517 : vector<16x512xf32>
    %520 = arith.mulf %509, %519 : vector<16x512xf32>
    %c1_182 = arith.constant 1 : index
    %c0_183 = arith.constant 0 : index
    %c0_184 = arith.constant 0 : index
    %521 = vector.load %arg13[%c1_182, %c0_183, %c0_184] : memref<2x512x128xbf16, #tpu.memory_space<vmem>>, vector<1x512x128xbf16>
    %522 = vector.shape_cast %521 : vector<1x512x128xbf16> to vector<512x128xbf16>
    %c1_185 = arith.constant 1 : index
    %c0_186 = arith.constant 0 : index
    %c0_187 = arith.constant 0 : index
    %523 = vector.load %arg14[%c1_185, %c0_186, %c0_187] : memref<2x1x128xf32, #tpu.memory_space<vmem>>, vector<1x1x128xf32>
    %524 = vector.shape_cast %523 : vector<1x1x128xf32> to vector<1x128xf32>
    %525 = arith.truncf %520 : vector<16x512xf32> to vector<16x512xbf16>
    %cst_188 = arith.constant dense<0.000000e+00> : vector<16x128xf32>
    %526 = tpu.matmul %525, %522, %cst_188 {dimension_numbers = #tpu.dot_dimension_numbers<[1], [0], [0], [1], [0, 0, 1, 1], [], []>} : vector<16x512xbf16>, vector<512x128xbf16>, vector<16x128xf32> -> vector<16x128xf32>
    %527 = vector.broadcast %524 : vector<1x128xf32> to vector<16x128xf32>
    %528 = arith.addf %526, %527 : vector<16x128xf32>
    %529 = arith.addf %528, %499 : vector<16x128xf32>
    %c1_189 = arith.constant 1 : index
    %c0_190 = arith.constant 0 : index
    %c0_191 = arith.constant 0 : index
    %530 = vector.load %arg15[%c1_189, %c0_190, %c0_191] : memref<2x1x128xf32, #tpu.memory_space<vmem>>, vector<1x1x128xf32>
    %531 = vector.shape_cast %530 : vector<1x1x128xf32> to vector<1x128xf32>
    %c1_192 = arith.constant 1 : index
    %c0_193 = arith.constant 0 : index
    %c0_194 = arith.constant 0 : index
    %532 = vector.load %arg16[%c1_192, %c0_193, %c0_194] : memref<2x1x128xf32, #tpu.memory_space<vmem>>, vector<1x1x128xf32>
    %533 = vector.shape_cast %532 : vector<1x1x128xf32> to vector<1x128xf32>
    %cst_195 = arith.constant dense<0.000000e+00> : vector<16xf32>
    %534 = vector.multi_reduction <add>, %529, %cst_195 [1] : vector<16x128xf32> to vector<16xf32>
    %535 = vector.shape_cast %534 : vector<16xf32> to vector<16x1xf32>
    %cst_196 = arith.constant 1.280000e+02 : f32
    %536 = vector.broadcast %cst_196 : f32 to vector<16x1xf32>
    %537 = arith.divf %535, %536 : vector<16x1xf32>
    %538 = vector.broadcast %537 : vector<16x1xf32> to vector<16x128xf32>
    %539 = arith.subf %529, %538 : vector<16x128xf32>
    %540 = arith.mulf %539, %539 : vector<16x128xf32>
    %cst_197 = arith.constant dense<0.000000e+00> : vector<16xf32>
    %541 = vector.multi_reduction <add>, %540, %cst_197 [1] : vector<16x128xf32> to vector<16xf32>
    %542 = vector.shape_cast %541 : vector<16xf32> to vector<16x1xf32>
    %cst_198 = arith.constant 1.280000e+02 : f32
    %543 = vector.broadcast %cst_198 : f32 to vector<16x1xf32>
    %544 = arith.divf %542, %543 : vector<16x1xf32>
    %cst_199 = arith.constant 9.99999996E-13 : f32
    %545 = vector.broadcast %cst_199 : f32 to vector<16x1xf32>
    %546 = arith.addf %544, %545 : vector<16x1xf32>
    %547 = math.rsqrt %546 : vector<16x1xf32>
    %548 = vector.broadcast %547 : vector<16x1xf32> to vector<16x128xf32>
    %549 = arith.mulf %539, %548 : vector<16x128xf32>
    %550 = vector.broadcast %531 : vector<1x128xf32> to vector<16x128xf32>
    %551 = arith.mulf %549, %550 : vector<16x128xf32>
    %552 = vector.broadcast %533 : vector<1x128xf32> to vector<16x128xf32>
    %553 = arith.addf %551, %552 : vector<16x128xf32>
    %554 = tpu.concatenate %22, %290, %553 in 0 : vector<16x128xf32>, vector<16x128xf32>, vector<16x128xf32> -> vector<48x128xf32>
    %c0_200 = arith.constant 0 : index
    %c0_201 = arith.constant 0 : index
    %555 = vector.load %arg17[%c0_200, %c0_201] : memref<128x256xbf16, #tpu.memory_space<vmem>>, vector<128x256xbf16>
    %c0_202 = arith.constant 0 : index
    %c0_203 = arith.constant 0 : index
    %556 = vector.load %arg18[%c0_202, %c0_203] : memref<1x256xf32, #tpu.memory_space<vmem>>, vector<1x256xf32>
    %557 = arith.truncf %554 : vector<48x128xf32> to vector<48x128xbf16>
    %cst_204 = arith.constant dense<0.000000e+00> : vector<48x256xf32>
    %558 = tpu.matmul %557, %555, %cst_204 {dimension_numbers = #tpu.dot_dimension_numbers<[1], [0], [0], [1], [0, 0, 1, 1], [], []>} : vector<48x128xbf16>, vector<128x256xbf16>, vector<48x256xf32> -> vector<48x256xf32>
    %559 = vector.broadcast %556 : vector<1x256xf32> to vector<48x256xf32>
    %560 = arith.addf %558, %559 : vector<48x256xf32>
    %c0_205 = arith.constant 0 : index
    %c0_206 = arith.constant 0 : index
    %561 = vector.load %arg19[%c0_205, %c0_206] : memref<256x2xbf16, #tpu.memory_space<vmem>>, vector<256x2xbf16>
    %c0_207 = arith.constant 0 : index
    %c0_208 = arith.constant 0 : index
    %562 = vector.load %arg20[%c0_207, %c0_208] : memref<1x2xf32, #tpu.memory_space<vmem>>, vector<1x2xf32>
    %563 = arith.truncf %560 : vector<48x256xf32> to vector<48x256xbf16>
    %cst_209 = arith.constant dense<0.000000e+00> : vector<48x2xf32>
    %564 = tpu.matmul %563, %561, %cst_209 {dimension_numbers = #tpu.dot_dimension_numbers<[1], [0], [0], [1], [0, 0, 1, 1], [], []>} : vector<48x256xbf16>, vector<256x2xbf16>, vector<48x2xf32> -> vector<48x2xf32>
    %565 = vector.broadcast %562 : vector<1x2xf32> to vector<48x2xf32>
    %566 = arith.addf %564, %565 : vector<48x2xf32>
    %c0_210 = arith.constant 0 : index
    %c0_211 = arith.constant 0 : index
    %567 = vector.load %arg21[%c0_210, %c0_211] : memref<48x2xf32, #tpu.memory_space<vmem>>, vector<48x2xf32>
    tpu.vector_store %arg21[%c0_210, %c0_211], %566 {strides = array<i32>} : memref<48x2xf32, #tpu.memory_space<vmem>>, vector<48x2xf32>,
    return
  }
  func.func @transform_0(%arg0: i32) -> (i32, i32) {
    %c0_i32 = arith.constant 0 : i32
    %c0_i32_0 = arith.constant 0 : i32
    %c0_i32_1 = arith.constant 0 : i32
    return %c0_i32, %c0_i32_0 : i32, i32
  }
  func.func @transform_1(%arg0: i32) -> (i32, i32) {
    %c0_i32 = arith.constant 0 : i32
    %c0_i32_0 = arith.constant 0 : i32
    %c0_i32_1 = arith.constant 0 : i32
    return %c0_i32, %c0_i32_0 : i32, i32
  }
  func.func @transform_2(%arg0: i32) -> (i32, i32) {
    %c0_i32 = arith.constant 0 : i32
    %c0_i32_0 = arith.constant 0 : i32
    %c0_i32_1 = arith.constant 0 : i32
    return %c0_i32, %c0_i32_0 : i32, i32
  }
  func.func @transform_3(%arg0: i32) -> (i32, i32) {
    %c0_i32 = arith.constant 0 : i32
    %c0_i32_0 = arith.constant 0 : i32
    %c0_i32_1 = arith.constant 0 : i32
    return %c0_i32, %c0_i32_0 : i32, i32
  }
  func.func @transform_4(%arg0: i32) -> (i32, i32, i32) {
    %c0_i32 = arith.constant 0 : i32
    %c0_i32_0 = arith.constant 0 : i32
    %c0_i32_1 = arith.constant 0 : i32
    %c0_i32_2 = arith.constant 0 : i32
    return %c0_i32, %c0_i32_0, %c0_i32_1 : i32, i32, i32
  }
  func.func @transform_5(%arg0: i32) -> (i32, i32, i32) {
    %c0_i32 = arith.constant 0 : i32
    %c0_i32_0 = arith.constant 0 : i32
    %c0_i32_1 = arith.constant 0 : i32
    %c0_i32_2 = arith.constant 0 : i32
    return %c0_i32, %c0_i32_0, %c0_i32_1 : i32, i32, i32
  }
  func.func @transform_6(%arg0: i32) -> (i32, i32, i32) {
    %c0_i32 = arith.constant 0 : i32
    %c0_i32_0 = arith.constant 0 : i32
    %c0_i32_1 = arith.constant 0 : i32
    %c0_i32_2 = arith.constant 0 : i32
    return %c0_i32, %c0_i32_0, %c0_i32_1 : i32, i32, i32
  }
  func.func @transform_7(%arg0: i32) -> (i32, i32, i32) {
    %c0_i32 = arith.constant 0 : i32
    %c0_i32_0 = arith.constant 0 : i32
    %c0_i32_1 = arith.constant 0 : i32
    %c0_i32_2 = arith.constant 0 : i32
    return %c0_i32, %c0_i32_0, %c0_i32_1 : i32, i32, i32
  }
  func.func @transform_8(%arg0: i32) -> (i32, i32, i32) {
    %c0_i32 = arith.constant 0 : i32
    %c0_i32_0 = arith.constant 0 : i32
    %c0_i32_1 = arith.constant 0 : i32
    %c0_i32_2 = arith.constant 0 : i32
    return %c0_i32, %c0_i32_0, %c0_i32_1 : i32, i32, i32
  }
  func.func @transform_9(%arg0: i32) -> (i32, i32, i32) {
    %c0_i32 = arith.constant 0 : i32
    %c0_i32_0 = arith.constant 0 : i32
    %c0_i32_1 = arith.constant 0 : i32
    %c0_i32_2 = arith.constant 0 : i32
    return %c0_i32, %c0_i32_0, %c0_i32_1 : i32, i32, i32
  }
  func.func @transform_10(%arg0: i32) -> (i32, i32, i32) {
    %c0_i32 = arith.constant 0 : i32
    %c0_i32_0 = arith.constant 0 : i32
    %c0_i32_1 = arith.constant 0 : i32
    %c0_i32_2 = arith.constant 0 : i32
    return %c0_i32, %c0_i32_0, %c0_i32_1 : i32, i32, i32
  }
  func.func @transform_11(%arg0: i32) -> (i32, i32, i32) {
    %c0_i32 = arith.constant 0 : i32
    %c0_i32_0 = arith.constant 0 : i32
    %c0_i32_1 = arith.constant 0 : i32
    %c0_i32_2 = arith.constant 0 : i32
    return %c0_i32, %c0_i32_0, %c0_i32_1 : i32, i32, i32
  }
  func.func @transform_12(%arg0: i32) -> (i32, i32, i32) {
    %c0_i32 = arith.constant 0 : i32
    %c0_i32_0 = arith.constant 0 : i32
    %c0_i32_1 = arith.constant 0 : i32
    %c0_i32_2 = arith.constant 0 : i32
    return %c0_i32, %c0_i32_0, %c0_i32_1 : i32, i32, i32
  }
  func.func @transform_13(%arg0: i32) -> (i32, i32, i32) {
    %c0_i32 = arith.constant 0 : i32
    %c0_i32_0 = arith.constant 0 : i32
    %c0_i32_1 = arith.constant 0 : i32
    %c0_i32_2 = arith.constant 0 : i32
    return %c0_i32, %c0_i32_0, %c0_i32_1 : i32, i32, i32
  }
  func.func @transform_14(%arg0: i32) -> (i32, i32, i32) {
    %c0_i32 = arith.constant 0 : i32
    %c0_i32_0 = arith.constant 0 : i32
    %c0_i32_1 = arith.constant 0 : i32
    %c0_i32_2 = arith.constant 0 : i32
    return %c0_i32, %c0_i32_0, %c0_i32_1 : i32, i32, i32
  }
  func.func @transform_15(%arg0: i32) -> (i32, i32, i32) {
    %c0_i32 = arith.constant 0 : i32
    %c0_i32_0 = arith.constant 0 : i32
    %c0_i32_1 = arith.constant 0 : i32
    %c0_i32_2 = arith.constant 0 : i32
    return %c0_i32, %c0_i32_0, %c0_i32_1 : i32, i32, i32
  }
  func.func @transform_16(%arg0: i32) -> (i32, i32) {
    %c0_i32 = arith.constant 0 : i32
    %c0_i32_0 = arith.constant 0 : i32
    %c0_i32_1 = arith.constant 0 : i32
    return %c0_i32, %c0_i32_0 : i32, i32
  }
  func.func @transform_17(%arg0: i32) -> (i32, i32) {
    %c0_i32 = arith.constant 0 : i32
    %c0_i32_0 = arith.constant 0 : i32
    %c0_i32_1 = arith.constant 0 : i32
    return %c0_i32, %c0_i32_0 : i32, i32
  }
  func.func @transform_18(%arg0: i32) -> (i32, i32) {
    %c0_i32 = arith.constant 0 : i32
    %c0_i32_0 = arith.constant 0 : i32
    %c0_i32_1 = arith.constant 0 : i32
    return %c0_i32, %c0_i32_0 : i32, i32
  }
  func.func @transform_19(%arg0: i32) -> (i32, i32) {
    %c0_i32 = arith.constant 0 : i32
    %c0_i32_0 = arith.constant 0 : i32
    %c0_i32_1 = arith.constant 0 : i32
    return %c0_i32, %c0_i32_0 : i32, i32
  }
  func.func @transform_20(%arg0: i32) -> (i32, i32) {
    %c0_i32 = arith.constant 0 : i32
    %c0_i32_0 = arith.constant 0 : i32
    %c0_i32_1 = arith.constant 0 : i32
    return %c0_i32, %c0_i32_0 : i32, i32
  }
}

</mosaic_0001>

<llo_original>
// kernel: bert_for_classification.1
$region0: #{bert_for_classification.1}
  #allocation0 [shape = 'u32[]', space=smem, size = 0x4, offset = 0x4, fixed_abs, tag = 'smem constant byte address 0x4 - core index']
  #allocation1 [shape = 'u32[144,128]{1,0:T(1,128)}', space=vmem, size = 0x12000, scoped, tag = 'internal scratch']
  %s0 = inlined_call_operand.vmem [shape: f32[16,128], index: 0, kind: input, shape index: {}]
  %s1 = inlined_call_operand.vmem [shape: f32[2,8], index: 1, kind: input, shape index: {}]
  %s2 = inlined_call_operand.vmem [shape: f32[1,128], index: 2, kind: input, shape index: {}]
  %s3 = inlined_call_operand.vmem [shape: f32[1,128], index: 3, kind: input, shape index: {}]
  %s4 = inlined_call_operand.vmem [shape: bf16[2,128,384], index: 4, kind: input, shape index: {}]
  %s5 = inlined_call_operand.vmem [shape: f32[2,1,384], index: 5, kind: input, shape index: {}]
  %s6 = inlined_call_operand.hbm [shape: bf16[2,128,128], index: 6, kind: input, shape index: {}]
  %s7 = inlined_call_operand.vmem [shape: f32[2,1,128], index: 7, kind: input, shape index: {}]
  %s8 = inlined_call_operand.vmem [shape: f32[2,1,128], index: 8, kind: input, shape index: {}]
  %s9 = inlined_call_operand.vmem [shape: f32[2,1,128], index: 9, kind: input, shape index: {}]
  %s10 = inlined_call_operand.hbm [shape: bf16[2,128,512], index: 10, kind: input, shape index: {}]
  %s11 = inlined_call_operand.vmem [shape: f32[2,1,512], index: 11, kind: input, shape index: {}]
  %s12 = inlined_call_operand.hbm [shape: bf16[2,512,128], index: 12, kind: input, shape index: {}]
  %s13 = inlined_call_operand.vmem [shape: f32[2,1,128], index: 13, kind: input, shape index: {}]
  %s14 = inlined_call_operand.vmem [shape: f32[2,1,128], index: 14, kind: input, shape index: {}]
  %s15 = inlined_call_operand.vmem [shape: f32[2,1,128], index: 15, kind: input, shape index: {}]
  %s16 = inlined_call_operand.hbm [shape: bf16[128,256], index: 16, kind: input, shape index: {}]
  %s17 = inlined_call_operand.vmem [shape: f32[1,256], index: 17, kind: input, shape index: {}]
  %s18 = inlined_call_operand.vmem [shape: bf16[256,2], index: 18, kind: input, shape index: {}]
  %s19 = inlined_call_operand.vmem [shape: f32[1,2], index: 19, kind: input, shape index: {}]
  %s20 = inlined_call_operand.vmem [shape: f32[48,2], index: 20, kind: output, shape index: {}]
  %s21 = sld [smem:[#allocation0]]
  $region106: #{bert_for_classification.1} parent=0
    _
  %s23 = ssub.s32 1, %s21
  %s24 = scalar_select 0, %s23, %s21
  $region1: #{bert_for_classification.1} parent=0
    #allocation2 [shape = 'u8[65536]{0}', space=vmem, size = 0x10000, scoped, tag = 'input window, operand 6, single buffered']
    #allocation3 [shape = 's32[1]{0}', space=sflag, size = 0x4, scoped, tag = 'scoped memory for bert_for_classification.1']
    #allocation4 [shape = 'u8[262144]{0}', space=vmem, size = 0x40000, scoped, tag = 'input window, operand 10, single buffered']
    #allocation5 [shape = 's32[1]{0}', space=sflag, size = 0x4, scoped, tag = 'scoped memory for bert_for_classification.1']
    #allocation6 [shape = 'u8[262144]{0}', space=vmem, size = 0x40000, scoped, tag = 'input window, operand 12, single buffered']
    #allocation7 [shape = 'u8[65536]{0}', space=vmem, size = 0x10000, scoped, tag = 'input window, operand 16, single buffered']
    #allocation8 [shape = 's32[1]{0}', space=sflag, size = 0x4, scoped, tag = 'scoped memory for bert_for_classification.1']
    %25 = vsyncpa [#allocation3], 0
    %26 = vsyncpa [#allocation5], 0
    %27 = vsyncpa [#allocation8], 0
    // Predicated region
    $region2: #{bert_for_classification.1} parent=1 // pred_check
      _
    $region3: #{bert_for_classification.1} parent=1 // pred_check_branch
      %29 = sbr.rel (0) target = $region5
    $region4: #{bert_for_classification.1} parent=1 // pred_region
      _
    $region5: #{bert_for_classification.1} parent=1 // pred_fallthru
      _
    // Predicated region
    $region6: #{bert_for_classification.1} parent=1 // pred_check
      _
    $region7: #{bert_for_classification.1} parent=1 // pred_check_branch
      %31 = sbr.rel (0) target = $region9
    $region8: #{bert_for_classification.1} parent=1 // pred_region
      _
    $region9: #{bert_for_classification.1} parent=1 // pred_fallthru
      _
    // Predicated region
    $region10: #{bert_for_classification.1} parent=1 // pred_check
      _
    $region11: #{bert_for_classification.1} parent=1 // pred_check_branch
      %33 = sbr.rel (0) target = $region13
    $region12: #{bert_for_classification.1} parent=1 // pred_region
      _
    $region13: #{bert_for_classification.1} parent=1 // pred_fallthru
      _
    // Predicated region
    $region14: #{bert_for_classification.1} parent=1 // pred_check
      _
    $region15: #{bert_for_classification.1} parent=1 // pred_check_branch
      %35 = sbr.rel (0) target = $region17
    $region16: #{bert_for_classification.1} parent=1 // pred_region
      _
    $region17: #{bert_for_classification.1} parent=1 // pred_fallthru
      _
    // Predicated region
    $region18: #{bert_for_classification.1} parent=1 // pred_check
      _
    $region19: #{bert_for_classification.1} parent=1 // pred_check_branch
      %37 = sbr.rel (0) target = $region21
    $region20: #{bert_for_classification.1} parent=1 // pred_region
      _
    $region21: #{bert_for_classification.1} parent=1 // pred_fallthru
      _
    // Predicated region
    $region22: #{bert_for_classification.1} parent=1 // pred_check
      _
    $region23: #{bert_for_classification.1} parent=1 // pred_check_branch
      %39 = sbr.rel (0) target = $region25
    $region24: #{bert_for_classification.1} parent=1 // pred_region
      _
    $region25: #{bert_for_classification.1} parent=1 // pred_fallthru
      _
    // Predicated region
    $region26: #{bert_for_classification.1} parent=1 // pred_check
      _
    $region27: #{bert_for_classification.1} parent=1 // pred_check_branch
      %41 = sbr.rel (0) target = $region29
    $region28: #{bert_for_classification.1} parent=1 // pred_region
      %s43 = ssub.s32 2048, 2048
      %44 = vsyncadd [#allocation3], %s43
      %s45 = sshll.u32 [#allocation2], 4
      %s46 = int_to_ptr.vmem [resolvable:$true] %s45
      %51 = dma.hbm_to_vmem [thread:$0]  %s6, 2048, %s46, [#allocation3], 64, 64, 4
    $region29: #{bert_for_classification.1} parent=1 // pred_fallthru
      _
    // Predicated region
    $region30: #{bert_for_classification.1} parent=1 // pred_check
      _
    $region31: #{bert_for_classification.1} parent=1 // pred_check_branch
      %53 = sbr.rel (0) target = $region33
    $region32: #{bert_for_classification.1} parent=1 // pred_region
      _
    $region33: #{bert_for_classification.1} parent=1 // pred_fallthru
      _
    // Predicated region
    $region34: #{bert_for_classification.1} parent=1 // pred_check
      _
    $region35: #{bert_for_classification.1} parent=1 // pred_check_branch
      %55 = sbr.rel (0) target = $region37
    $region36: #{bert_for_classification.1} parent=1 // pred_region
      _
    $region37: #{bert_for_classification.1} parent=1 // pred_fallthru
      _
    // Predicated region
    $region38: #{bert_for_classification.1} parent=1 // pred_check
      _
    $region39: #{bert_for_classification.1} parent=1 // pred_check_branch
      %57 = sbr.rel (0) target = $region41
    $region40: #{bert_for_classification.1} parent=1 // pred_region
      _
    $region41: #{bert_for_classification.1} parent=1 // pred_fallthru
      _
    // Predicated region
    $region42: #{bert_for_classification.1} parent=1 // pred_check
      _
    $region43: #{bert_for_classification.1} parent=1 // pred_check_branch
      %59 = sbr.rel (0) target = $region45
    $region44: #{bert_for_classification.1} parent=1 // pred_region
      %s61 = ssub.s32 8192, 8192
      %62 = vsyncadd [#allocation5], %s61
      %s63 = sshll.u32 [#allocation4], 4
      %s64 = int_to_ptr.vmem [resolvable:$true] %s63
      %69 = dma.hbm_to_vmem [thread:$0]  %s10, 8192, %s64, [#allocation5], 256, 256, 16
    $region45: #{bert_for_classification.1} parent=1 // pred_fallthru
      _
    // Predicated region
    $region46: #{bert_for_classification.1} parent=1 // pred_check
      _
    $region47: #{bert_for_classification.1} parent=1 // pred_check_branch
      %71 = sbr.rel (0) target = $region49
    $region48: #{bert_for_classification.1} parent=1 // pred_region
      _
    $region49: #{bert_for_classification.1} parent=1 // pred_fallthru
      _
    // Predicated region
    $region50: #{bert_for_classification.1} parent=1 // pred_check
      _
    $region51: #{bert_for_classification.1} parent=1 // pred_check_branch
      %73 = sbr.rel (0) target = $region53
    $region52: #{bert_for_classification.1} parent=1 // pred_region
      %s75 = ssub.s32 8192, 8192
      %76 = vsyncadd [#allocation5], %s75
      %s77 = sshll.u32 [#allocation6], 4
      %s78 = int_to_ptr.vmem [resolvable:$true] %s77
      %83 = dma.hbm_to_vmem [thread:$0]  %s12, 8192, %s78, [#allocation5], 64, 64, 4
    $region53: #{bert_for_classification.1} parent=1 // pred_fallthru
      _
    // Predicated region
    $region54: #{bert_for_classification.1} parent=1 // pred_check
      _
    $region55: #{bert_for_classification.1} parent=1 // pred_check_branch
      %85 = sbr.rel (0) target = $region57
    $region56: #{bert_for_classification.1} parent=1 // pred_region
      _
    $region57: #{bert_for_classification.1} parent=1 // pred_fallthru
      _
    // Predicated region
    $region58: #{bert_for_classification.1} parent=1 // pred_check
      _
    $region59: #{bert_for_classification.1} parent=1 // pred_check_branch
      %87 = sbr.rel (0) target = $region61
    $region60: #{bert_for_classification.1} parent=1 // pred_region
      _
    $region61: #{bert_for_classification.1} parent=1 // pred_fallthru
      _
    // Predicated region
    $region62: #{bert_for_classification.1} parent=1 // pred_check
      _
    $region63: #{bert_for_classification.1} parent=1 // pred_check_branch
      %89 = sbr.rel (0) target = $region65
    $region64: #{bert_for_classification.1} parent=1 // pred_region
      _
    $region65: #{bert_for_classification.1} parent=1 // pred_fallthru
      _
    // Predicated region
    $region66: #{bert_for_classification.1} parent=1 // pred_check
      _
    $region67: #{bert_for_classification.1} parent=1 // pred_check_branch
      %91 = sbr.rel (0) target = $region69
    $region68: #{bert_for_classification.1} parent=1 // pred_region
      %s93 = ssub.s32 2048, 2048
      %94 = vsyncadd [#allocation8], %s93
      %s95 = sshll.u32 [#allocation7], 4
      %s96 = int_to_ptr.vmem [resolvable:$true] %s95
      %101 = dma.hbm_to_vmem [thread:$0]  %s16, 2048, %s96, [#allocation8], 128, 128, 8
    $region69: #{bert_for_classification.1} parent=1 // pred_fallthru
      _
    // Predicated region
    $region70: #{bert_for_classification.1} parent=1 // pred_check
      _
    $region71: #{bert_for_classification.1} parent=1 // pred_check_branch
      %103 = sbr.rel (0) target = $region73
    $region72: #{bert_for_classification.1} parent=1 // pred_region
      _
    $region73: #{bert_for_classification.1} parent=1 // pred_fallthru
      _
    // Predicated region
    $region74: #{bert_for_classification.1} parent=1 // pred_check
      _
    $region75: #{bert_for_classification.1} parent=1 // pred_check_branch
      %105 = sbr.rel (0) target = $region77
    $region76: #{bert_for_classification.1} parent=1 // pred_region
      _
    $region77: #{bert_for_classification.1} parent=1 // pred_fallthru
      _
    // Predicated region
    $region78: #{bert_for_classification.1} parent=1 // pred_check
      _
    $region79: #{bert_for_classification.1} parent=1 // pred_check_branch
      %107 = sbr.rel (0) target = $region81
    $region80: #{bert_for_classification.1} parent=1 // pred_region
      _
    $region81: #{bert_for_classification.1} parent=1 // pred_fallthru
      _
    // Predicated region
    $region82: #{bert_for_classification.1} parent=1 // pred_check
      _
    $region83: #{bert_for_classification.1} parent=1 // pred_check_branch
      %109 = sbr.rel (0) target = $region85
    $region84: #{bert_for_classification.1} parent=1 // pred_region
      %110 = dma.done [#allocation3], 2048
    $region85: #{bert_for_classification.1} parent=1 // pred_fallthru
      _
    // Predicated region
    $region86: #{bert_for_classification.1} parent=1 // pred_check
      _
    $region87: #{bert_for_classification.1} parent=1 // pred_check_branch
      %112 = sbr.rel (0) target = $region89
    $region88: #{bert_for_classification.1} parent=1 // pred_region
      %113 = dma.done [#allocation5], 8192
    $region89: #{bert_for_classification.1} parent=1 // pred_fallthru
      _
    // Predicated region
    $region90: #{bert_for_classification.1} parent=1 // pred_check
      _
    $region91: #{bert_for_classification.1} parent=1 // pred_check_branch
      %115 = sbr.rel (0) target = $region93
    $region92: #{bert_for_classification.1} parent=1 // pred_region
      %116 = dma.done [#allocation5], 8192
    $region93: #{bert_for_classification.1} parent=1 // pred_fallthru
      _
    // Predicated region
    $region94: #{bert_for_classification.1} parent=1 // pred_check
      _
    $region95: #{bert_for_classification.1} parent=1 // pred_check_branch
      %118 = sbr.rel (0) target = $region97
    $region96: #{bert_for_classification.1} parent=1 // pred_region
      %119 = dma.done [#allocation8], 2048
    $region97: #{bert_for_classification.1} parent=1 // pred_fallthru
      _
    %v121 = vld [vmem:[%s0] sm:$0xff]
    %v122 = vld [vmem:[%s0 + $0x8] sm:$0xff]
    %v123 = vld [vmem:[%s2] sm:$0x1]
    %v124 = vld [vmem:[%s3] sm:$0x1]
    %125 = vadd.xlane.f32.xlu0 %v121
    %v126 = vpop.xlane.xlu0 %125
    %127 = vadd.xlane.f32.xlu0 %v122
    %v128 = vpop.xlane.xlu0 %127
    %v129 = vrcp.pop 128.0
    %v130 = vmul.f32 %v126, %v129
    %v131 = vmul.f32 %v128, %v129
    %v132 = vsub.f32 %v121, %v130
    %v133 = vsub.f32 %v122, %v131
    %v134 = vmul.f32 %v132, %v132
    %v135 = vmul.f32 %v133, %v133
    %136 = vadd.xlane.f32.xlu0 %v134
    %v137 = vpop.xlane.xlu0 %136
    %138 = vadd.xlane.f32.xlu0 %v135
    %v139 = vpop.xlane.xlu0 %138
    %v140 = vmul.f32 %v137, %v129
    %v141 = vmul.f32 %v139, %v129
    %v142 = vadd.f32 %v140, 1e-12
    %v143 = vadd.f32 %v141, 1e-12
    %v144 = vrsqrt.pop %v142
    %v145 = vrsqrt.pop %v143
    %v146 = vmul.f32 %v132, %v144
    %v147 = vmul.f32 %v133, %v145
    %v149 = vlaneseq
    %v150 = vshrl.u32 %v149, 7
    %v151 = vsub.s32 0, %v150
    %v152 = vrot.slane %v123, %v151
    %v154 = vmul.f32 %v146, %v152
    %v155 = vmul.f32 %v147, %v152
    %v157 = vlaneseq
    %v158 = vshrl.u32 %v157, 7
    %v159 = vsub.s32 0, %v158
    %v160 = vrot.slane %v124, %v159
    %v162 = vadd.f32 %v154, %v160
    %v163 = vadd.f32 %v155, %v160
    %v164 = vld [vmem:[%s1] sm:$0x3]
    %v165 = vsub.f32 1.0, %v164
    %v166 = vmul.f32 %v165, -10000.0
    %v167 = vld [vmem:[%s4] sm:$0xff]
    %v168 = vld [vmem:[%s4 + $0x8] sm:$0xf]
    %v169 = vld [vmem:[%s4 + $0xc] sm:$0xff]
    %v170 = vld [vmem:[%s4 + $0x14] sm:$0xf]
    %v171 = vld [vmem:[%s4 + $0x18] sm:$0xff]
    %v172 = vld [vmem:[%s4 + $0x20] sm:$0xf]
    %v173 = vld [vmem:[%s4 + $0x24] sm:$0xff]
    %v174 = vld [vmem:[%s4 + $0x2c] sm:$0xf]
    %v175 = vld [vmem:[%s4 + $0x30] sm:$0xff]
    %v176 = vld [vmem:[%s4 + $0x38] sm:$0xf]
    %v177 = vld [vmem:[%s4 + $0x3c] sm:$0xff]
    %v178 = vld [vmem:[%s4 + $0x44] sm:$0xf]
    %v179 = vld [vmem:[%s4 + $0x48] sm:$0xff]
    %v180 = vld [vmem:[%s4 + $0x50] sm:$0xf]
    %v181 = vld [vmem:[%s4 + $0x54] sm:$0xff]
    %v182 = vld [vmem:[%s4 + $0x5c] sm:$0xf]
    %v183 = vld [vmem:[%s4 + $0x60] sm:$0xff]
    %v184 = vld [vmem:[%s4 + $0x68] sm:$0xf]
    %v185 = vld [vmem:[%s4 + $0x6c] sm:$0xff]
    %v186 = vld [vmem:[%s4 + $0x74] sm:$0xf]
    %v187 = vld [vmem:[%s4 + $0x78] sm:$0xff]
    %v188 = vld [vmem:[%s4 + $0x80] sm:$0xf]
    %v189 = vld [vmem:[%s4 + $0x84] sm:$0xff]
    %v190 = vld [vmem:[%s4 + $0x8c] sm:$0xf]
    %v191 = vld [vmem:[%s4 + $0x90] sm:$0xff]
    %v192 = vld [vmem:[%s4 + $0x98] sm:$0xf]
    %v193 = vld [vmem:[%s4 + $0x9c] sm:$0xff]
    %v194 = vld [vmem:[%s4 + $0xa4] sm:$0xf]
    %v195 = vld [vmem:[%s4 + $0xa8] sm:$0xff]
    %v196 = vld [vmem:[%s4 + $0xb0] sm:$0xf]
    %v197 = vld [vmem:[%s4 + $0xb4] sm:$0xff]
    %v198 = vld [vmem:[%s4 + $0xbc] sm:$0xf]
    %v199 = vld [vmem:[%s5] sm:$0x7]
    %v200 = vpack.c.bf16 %v163, %v162
    %v202 = vlaneseq
    %v203 = vshrl.u32 %v202, 7
    %v204 = vsub.s32 0, %v203
    %v205 = vrot.slane %v199, %v204
    %v206 = vlaneseq
    %v207 = vshrl.u32 %v206, 7
    %v208 = vsub.s32 1, %v207
    %v209 = vrot.slane %v199, %v208
    %v210 = vlaneseq
    %v211 = vshrl.u32 %v210, 7
    %v212 = vsub.s32 2, %v211
    %v213 = vrot.slane %v199, %v212
    %v249 = vunpack.c.l.b16 %v167
    %v250 = vunpack.c.h.b16 %v167
    %v251 = vunpack.c.l.b16 %v168
    %v252 = vunpack.c.l.b16 %v169
    %v253 = vunpack.c.h.b16 %v169
    %v254 = vunpack.c.l.b16 %v170
    %v255 = vunpack.c.l.b16 %v171
    %v256 = vunpack.c.h.b16 %v171
    %v257 = vunpack.c.l.b16 %v172
    %v258 = vunpack.c.l.b16 %v173
    %v259 = vunpack.c.h.b16 %v173
    %v260 = vunpack.c.l.b16 %v174
    %v261 = vunpack.c.l.b16 %v175
    %v262 = vunpack.c.h.b16 %v175
    %v263 = vunpack.c.l.b16 %v176
    %v264 = vunpack.c.l.b16 %v177
    %v265 = vunpack.c.h.b16 %v177
    %v266 = vunpack.c.l.b16 %v178
    %v267 = vunpack.c.l.b16 %v179
    %v268 = vunpack.c.h.b16 %v179
    %v269 = vunpack.c.l.b16 %v180
    %v270 = vunpack.c.l.b16 %v181
    %v271 = vunpack.c.h.b16 %v181
    %v272 = vunpack.c.l.b16 %v182
    %v273 = vunpack.c.l.b16 %v183
    %v274 = vunpack.c.h.b16 %v183
    %v275 = vunpack.c.l.b16 %v184
    %v276 = vunpack.c.l.b16 %v185
    %v277 = vunpack.c.h.b16 %v185
    %v278 = vunpack.c.l.b16 %v186
    %v279 = vunpack.c.l.b16 %v187
    %v280 = vunpack.c.h.b16 %v187
    %v281 = vunpack.c.l.b16 %v188
    %v282 = vunpack.c.l.b16 %v189
    %v283 = vunpack.c.h.b16 %v189
    %v284 = vunpack.c.l.b16 %v190
    %v285 = vunpack.c.l.b16 %v191
    %v286 = vunpack.c.h.b16 %v191
    %v287 = vunpack.c.l.b16 %v192
    %v288 = vunpack.c.l.b16 %v193
    %v289 = vunpack.c.h.b16 %v193
    %v290 = vunpack.c.l.b16 %v194
    %v291 = vunpack.c.l.b16 %v195
    %v292 = vunpack.c.h.b16 %v195
    %v293 = vunpack.c.l.b16 %v196
    %v294 = vunpack.c.l.b16 %v197
    %v295 = vunpack.c.h.b16 %v197
    %v296 = vunpack.c.l.b16 %v198
    %v297 = vpack.c.b16 %v252, %v249
    %v298 = vpack.c.b16 %v253, %v250
    %v299 = vpack.c.b16 %v254, %v251
    %v300 = vpack.c.b16 %v258, %v255
    %v301 = vpack.c.b16 %v259, %v256
    %v302 = vpack.c.b16 %v260, %v257
    %v303 = vpack.c.b16 %v264, %v261
    %v304 = vpack.c.b16 %v265, %v262
    %v305 = vpack.c.b16 %v266, %v263
    %v306 = vpack.c.b16 %v270, %v267
    %v307 = vpack.c.b16 %v271, %v268
    %v308 = vpack.c.b16 %v272, %v269
    %v309 = vpack.c.b16 %v276, %v273
    %v310 = vpack.c.b16 %v277, %v274
    %v311 = vpack.c.b16 %v278, %v275
    %v312 = vpack.c.b16 %v282, %v279
    %v313 = vpack.c.b16 %v283, %v280
    %v314 = vpack.c.b16 %v284, %v281
    %v315 = vpack.c.b16 %v288, %v285
    %v316 = vpack.c.b16 %v289, %v286
    %v317 = vpack.c.b16 %v290, %v287
    %v318 = vpack.c.b16 %v294, %v291
    %v319 = vpack.c.b16 %v295, %v292
    %v320 = vpack.c.b16 %v296, %v293
    %345 = vmatprep.subr.bf16.mxu0 %v298
    %346 = vmatpush1.bf16.msra.mxu0 %v297
    %347 = vmatprep.subr.bf16.mxu0 %v301
    %348 = vmatpush1.bf16.msra.mxu0 %v300
    %349 = vmatprep.subr.bf16.mxu0 %v304
    %350 = vmatpush1.bf16.msra.mxu0 %v303
    %351 = vmatprep.subr.bf16.mxu0 %v307
    %352 = vmatpush1.bf16.msra.mxu0 %v306
    %353 = vmatprep.subr.bf16.mxu0 %v310
    %354 = vmatpush1.bf16.msra.mxu0 %v309
    %355 = vmatprep.subr.bf16.mxu0 %v313
    %356 = vmatpush1.bf16.msra.mxu0 %v312
    %357 = vmatprep.subr.bf16.mxu0 %v316
    %358 = vmatpush1.bf16.msra.mxu0 %v315
    %359 = vmatprep.subr.bf16.mxu0 %v319
    %360 = vmatpush1.bf16.msra.mxu0 %v318
    %361 = vmatprep.subr.bf16.mxu0 0
    %362 = vmatpush1.bf16.msra.mxu0 0
    %363 = vmatprep.subr.bf16.mxu0 0
    %364 = vmatpush1.bf16.msra.mxu0 0
    %365 = vmatprep.subr.bf16.mxu0 0
    %366 = vmatpush1.bf16.msra.mxu0 0
    %367 = vmatprep.subr.bf16.mxu0 0
    %368 = vmatpush1.bf16.msra.mxu0 0
    %369 = vmatprep.subr.bf16.mxu0 0
    %370 = vmatpush1.bf16.msra.mxu0 0
    %371 = vmatprep.subr.bf16.mxu0 0
    %372 = vmatpush1.bf16.msra.mxu0 0
    %373 = vmatprep.subr.bf16.mxu0 0
    %374 = vmatpush1.bf16.msra.mxu0 0
    %375 = vmatprep.subr.bf16.mxu0 0
    %376 = vmatpush1.bf16.msra.mxu0 0
    %377 = vmatprep.mubr.bf16.mxu0 0
    %378 = vmatmul.mubr.bf16.gmra.mrb[0].mxu0 %v200
    %v379 = vpop.f32.mrb[0].mxu0
    %v380 = vadd.f32 %v205, %v379
    %v381 = vpop.f32.mrb[0].mxu0
    %v382 = vadd.f32 %v209, %v381
    %v383 = vpop.f32.mrb[0].mxu0
    %v384 = vadd.f32 %v205, %v383
    %v385 = vpop.f32.mrb[0].mxu0
    %v386 = vadd.f32 %v209, %v385
    %387 = vdwg.mxu0
    %388 = vmatprep.subr.bf16.mxu0 0
    %389 = vmatpush1.bf16.msra.mxu0 %v299
    %390 = vmatprep.subr.bf16.mxu0 0
    %391 = vmatpush1.bf16.msra.mxu0 %v302
    %392 = vmatprep.subr.bf16.mxu0 0
    %393 = vmatpush1.bf16.msra.mxu0 %v305
    %394 = vmatprep.subr.bf16.mxu0 0
    %395 = vmatpush1.bf16.msra.mxu0 %v308
    %396 = vmatprep.subr.bf16.mxu0 0
    %397 = vmatpush1.bf16.msra.mxu0 %v311
    %398 = vmatprep.subr.bf16.mxu0 0
    %399 = vmatpush1.bf16.msra.mxu0 %v314
    %400 = vmatprep.subr.bf16.mxu0 0
    %401 = vmatpush1.bf16.msra.mxu0 %v317
    %402 = vmatprep.subr.bf16.mxu0 0
    %403 = vmatpush1.bf16.msra.mxu0 %v320
    %404 = vmatprep.subr.bf16.mxu0 0
    %405 = vmatpush1.bf16.msra.mxu0 0
    %406 = vmatprep.subr.bf16.mxu0 0
    %407 = vmatpush1.bf16.msra.mxu0 0
    %408 = vmatprep.subr.bf16.mxu0 0
    %409 = vmatpush1.bf16.msra.mxu0 0
    %410 = vmatprep.subr.bf16.mxu0 0
    %411 = vmatpush1.bf16.msra.mxu0 0
    %412 = vmatprep.subr.bf16.mxu0 0
    %413 = vmatpush1.bf16.msra.mxu0 0
    %414 = vmatprep.subr.bf16.mxu0 0
    %415 = vmatpush1.bf16.msra.mxu0 0
    %416 = vmatprep.subr.bf16.mxu0 0
    %417 = vmatpush1.bf16.msra.mxu0 0
    %418 = vmatprep.subr.bf16.mxu0 0
    %419 = vmatpush1.bf16.msra.mxu0 0
    %420 = vmatprep.mubr.bf16.mxu0 0
    %421 = vmatmul.mubr.bf16.gmra.mrb[0].mxu0 %v200
    %v422 = vpop.f32.mrb[0].mxu0
    %v423 = vadd.f32 %v213, %v422
    %v424 = vpop.f32.mrb[0].mxu0
    %v425 = vpop.f32.mrb[0].mxu0
    %v426 = vadd.f32 %v213, %v425
    %v427 = vpop.f32.mrb[0].mxu0
    %428 = vdwg.mxu0
    %vm429 = vcmask 261120
    %v431 = vsel %vm429, %v380, 0
    %v434 = vsel %vm429, %v382, 0
    %436 = vmatprep.subr.mxu0 0.0
    %437 = vmatpush1.xpose.msra.mxu0 %v434
    %438 = vmatprep.subr.mxu0 0.0
    %439 = vmatpush1.xpose.msra.mxu0 0.0
    %440 = vmatprep.subr.mxu0 0.0
    %441 = vmatpush1.xpose.msra.mxu0 0.0
    %442 = vmatprep.subr.mxu0 0.0
    %443 = vmatpush1.xpose.msra.mxu0 0.0
    %444 = vmatprep.subr.mxu0 0.0
    %445 = vmatpush1.xpose.msra.mxu0 0.0
    %446 = vmatprep.subr.mxu0 0.0
    %447 = vmatpush1.xpose.msra.mxu0 0.0
    %448 = vmatprep.subr.mxu0 0.0
    %449 = vmatpush1.xpose.msra.mxu0 0.0
    %450 = vmatprep.subr.mxu0 0.0
    %451 = vmatpush1.xpose.msra.mxu0 0.0
    %452 = vmatprep.subr.mxu0 0.0
    %453 = vmatpush1.xpose.msra.mxu0 0.0
    %454 = vmatprep.subr.mxu0 0.0
    %455 = vmatpush1.xpose.msra.mxu0 0.0
    %456 = vmatprep.subr.mxu0 0.0
    %457 = vmatpush1.xpose.msra.mxu0 0.0
    %458 = vmatprep.subr.mxu0 0.0
    %459 = vmatpush1.xpose.msra.mxu0 0.0
    %460 = vmatprep.subr.mxu0 0.0
    %461 = vmatpush1.xpose.msra.mxu0 0.0
    %462 = vmatprep.subr.mxu0 0.0
    %463 = vmatpush1.xpose.msra.mxu0 0.0
    %464 = vmatprep.subr.mxu0 0.0
    %465 = vmatpush1.xpose.msra.mxu0 0.0
    %466 = vmatprep.subr.mxu0 0.0
    %467 = vmatpush1.xpose.msra.mxu0 0.0
    %468 = vmatprep.subr.mxu0 0.0
    %469 = vmatpush1.xpose.msra.mxu0 0.0
    %470 = vmatprep.subr.mxu0 0.0
    %471 = vmatpush1.xpose.msra.mxu0 0.0
    %472 = vmatprep.subr.mxu0 0.0
    %473 = vmatpush1.xpose.msra.mxu0 0.0
    %474 = vmatprep.subr.mxu0 0.0
    %475 = vmatpush1.xpose.msra.mxu0 0.0
    %476 = vmatprep.subr.mxu0 0.0
    %477 = vmatpush1.xpose.msra.mxu0 0.0
    %478 = vmatprep.subr.mxu0 0.0
    %479 = vmatpush1.xpose.msra.mxu0 0.0
    %480 = vmatprep.subr.mxu0 0.0
    %481 = vmatpush1.xpose.msra.mxu0 0.0
    %482 = vmatprep.subr.mxu0 0.0
    %483 = vmatpush1.xpose.msra.mxu0 0.0
    %484 = vmatprep.subr.mxu0 0.0
    %485 = vmatpush1.xpose.msra.mxu0 0.0
    %486 = vmatprep.subr.mxu0 0.0
    %487 = vmatpush1.xpose.msra.mxu0 0.0
    %488 = vmatprep.subr.mxu0 0.0
    %489 = vmatpush1.xpose.msra.mxu0 0.0
    %490 = vmatprep.subr.mxu0 0.0
    %491 = vmatpush1.xpose.msra.mxu0 0.0
    %492 = vmatprep.subr.mxu0 0.0
    %493 = vmatpush1.xpose.msra.mxu0 0.0
    %494 = vmatprep.subr.mxu0 0.0
    %495 = vmatpush1.xpose.msra.mxu0 0.0
    %496 = vmatprep.subr.mxu0 0.0
    %497 = vmatpush1.xpose.msra.mxu0 0.0
    %498 = vmatprep.subr.mxu0 0.0
    %499 = vmatpush1.xpose.msra.mxu0 0.0
    %500 = vmatprep.mubr.f32.mxu0 0.0
    %501 = vmatmul.mubr.f32.gmra.mrb[0].mxu0 %v431
    %v502 = vpop.f32.mrb[0].mxu0
    %v503 = vadd.f32 0.0, %v502
    %v504 = vpop.f32.mrb[0].mxu0
    %505 = vdwg.mxu0
    %v506 = vmul.f32 %v503, 0.17677669
    %v507 = vlaneseq
    %v508 = vshrl.u32 %v507, 7
    %v509 = vsub.s32 0, %v508
    %v510 = vrot.slane %v166, %v509
    %v511 = vadd.f32 %v506, %v510
    %vm512 = vcmask 64512
    %v513 = vsel %vm512, %v511, -inf
    %514 = vmax.xlane.f32.xlu0 %v513
    %v515 = vpop.xlane.xlu0 %514
    %v516 = vsub.f32 %v511, %v515
    %v517 = vmul.f32 %v516, 1.442695
    %v518 = vpow.pop %v517
    %v519 = vsel %vm512, %v518, 0.0
    %520 = vadd.xlane.f32.xlu0 %v519
    %v521 = vpop.xlane.xlu0 %520
    %v522 = vrcp.pop %v521
    %v523 = vmul.f32 %v518, %v522
    %v525 = vsel %vm512, %v523, 0
    %527 = vmatprep.subr.mxu0 0.0
    %528 = vmatpush1.msra.mxu0 %v423
    %529 = vmatprep.subr.mxu0 0.0
    %530 = vmatpush1.msra.mxu0 0.0
    %531 = vmatprep.subr.mxu0 0.0
    %532 = vmatpush1.msra.mxu0 0.0
    %533 = vmatprep.subr.mxu0 0.0
    %534 = vmatpush1.msra.mxu0 0.0
    %535 = vmatprep.subr.mxu0 0.0
    %536 = vmatpush1.msra.mxu0 0.0
    %537 = vmatprep.subr.mxu0 0.0
    %538 = vmatpush1.msra.mxu0 0.0
    %539 = vmatprep.subr.mxu0 0.0
    %540 = vmatpush1.msra.mxu0 0.0
    %541 = vmatprep.subr.mxu0 0.0
    %542 = vmatpush1.msra.mxu0 0.0
    %543 = vmatprep.subr.mxu0 0.0
    %544 = vmatpush1.msra.mxu0 0.0
    %545 = vmatprep.subr.mxu0 0.0
    %546 = vmatpush1.msra.mxu0 0.0
    %547 = vmatprep.subr.mxu0 0.0
    %548 = vmatpush1.msra.mxu0 0.0
    %549 = vmatprep.subr.mxu0 0.0
    %550 = vmatpush1.msra.mxu0 0.0
    %551 = vmatprep.subr.mxu0 0.0
    %552 = vmatpush1.msra.mxu0 0.0
    %553 = vmatprep.subr.mxu0 0.0
    %554 = vmatpush1.msra.mxu0 0.0
    %555 = vmatprep.subr.mxu0 0.0
    %556 = vmatpush1.msra.mxu0 0.0
    %557 = vmatprep.subr.mxu0 0.0
    %558 = vmatpush1.msra.mxu0 0.0
    %559 = vmatprep.subr.mxu0 0.0
    %560 = vmatpush1.msra.mxu0 0.0
    %561 = vmatprep.subr.mxu0 0.0
    %562 = vmatpush1.msra.mxu0 0.0
    %563 = vmatprep.subr.mxu0 0.0
    %564 = vmatpush1.msra.mxu0 0.0
    %565 = vmatprep.subr.mxu0 0.0
    %566 = vmatpush1.msra.mxu0 0.0
    %567 = vmatprep.subr.mxu0 0.0
    %568 = vmatpush1.msra.mxu0 0.0
    %569 = vmatprep.subr.mxu0 0.0
    %570 = vmatpush1.msra.mxu0 0.0
    %571 = vmatprep.subr.mxu0 0.0
    %572 = vmatpush1.msra.mxu0 0.0
    %573 = vmatprep.subr.mxu0 0.0
    %574 = vmatpush1.msra.mxu0 0.0
    %575 = vmatprep.subr.mxu0 0.0
    %576 = vmatpush1.msra.mxu0 0.0
    %577 = vmatprep.subr.mxu0 0.0
    %578 = vmatpush1.msra.mxu0 0.0
    %579 = vmatprep.subr.mxu0 0.0
    %580 = vmatpush1.msra.mxu0 0.0
    %581 = vmatprep.subr.mxu0 0.0
    %582 = vmatpush1.msra.mxu0 0.0
    %583 = vmatprep.subr.mxu0 0.0
    %584 = vmatpush1.msra.mxu0 0.0
    %585 = vmatprep.subr.mxu0 0.0
    %586 = vmatpush1.msra.mxu0 0.0
    %587 = vmatprep.subr.mxu0 0.0
    %588 = vmatpush1.msra.mxu0 0.0
    %589 = vmatprep.subr.mxu0 0.0
    %590 = vmatpush1.msra.mxu0 0.0
    %591 = vmatprep.mubr.f32.mxu0 0.0
    %592 = vmatmul.mubr.f32.gmra.mrb[0].mxu0 %v525
    %v593 = vpop.f32.mrb[0].mxu0
    %v594 = vadd.f32 0.0, %v593
    %v595 = vpop.f32.mrb[0].mxu0
    %596 = vdwg.mxu0
    %597 = vrot.lane.b32.xlu0 %v380, 96
    %v598 = vpop.permute.xlu0 %597
    %599 = vrot.lane.b32.xlu0 %v382, 96
    %v600 = vpop.permute.xlu0 %599
    %v601 = vsel %vm429, %v598, 0
    %v603 = vsel %vm429, %v600, 0
    %605 = vmatprep.subr.mxu0 0.0
    %606 = vmatpush1.xpose.msra.mxu0 %v603
    %607 = vmatprep.subr.mxu0 0.0
    %608 = vmatpush1.xpose.msra.mxu0 0.0
    %609 = vmatprep.subr.mxu0 0.0
    %610 = vmatpush1.xpose.msra.mxu0 0.0
    %611 = vmatprep.subr.mxu0 0.0
    %612 = vmatpush1.xpose.msra.mxu0 0.0
    %613 = vmatprep.subr.mxu0 0.0
    %614 = vmatpush1.xpose.msra.mxu0 0.0
    %615 = vmatprep.subr.mxu0 0.0
    %616 = vmatpush1.xpose.msra.mxu0 0.0
    %617 = vmatprep.subr.mxu0 0.0
    %618 = vmatpush1.xpose.msra.mxu0 0.0
    %619 = vmatprep.subr.mxu0 0.0
    %620 = vmatpush1.xpose.msra.mxu0 0.0
    %621 = vmatprep.subr.mxu0 0.0
    %622 = vmatpush1.xpose.msra.mxu0 0.0
    %623 = vmatprep.subr.mxu0 0.0
    %624 = vmatpush1.xpose.msra.mxu0 0.0
    %625 = vmatprep.subr.mxu0 0.0
    %626 = vmatpush1.xpose.msra.mxu0 0.0
    %627 = vmatprep.subr.mxu0 0.0
    %628 = vmatpush1.xpose.msra.mxu0 0.0
    %629 = vmatprep.subr.mxu0 0.0
    %630 = vmatpush1.xpose.msra.mxu0 0.0
    %631 = vmatprep.subr.mxu0 0.0
    %632 = vmatpush1.xpose.msra.mxu0 0.0
    %633 = vmatprep.subr.mxu0 0.0
    %634 = vmatpush1.xpose.msra.mxu0 0.0
    %635 = vmatprep.subr.mxu0 0.0
    %636 = vmatpush1.xpose.msra.mxu0 0.0
    %637 = vmatprep.subr.mxu0 0.0
    %638 = vmatpush1.xpose.msra.mxu0 0.0
    %639 = vmatprep.subr.mxu0 0.0
    %640 = vmatpush1.xpose.msra.mxu0 0.0
    %641 = vmatprep.subr.mxu0 0.0
    %642 = vmatpush1.xpose.msra.mxu0 0.0
    %643 = vmatprep.subr.mxu0 0.0
    %644 = vmatpush1.xpose.msra.mxu0 0.0
    %645 = vmatprep.subr.mxu0 0.0
    %646 = vmatpush1.xpose.msra.mxu0 0.0
    %647 = vmatprep.subr.mxu0 0.0
    %648 = vmatpush1.xpose.msra.mxu0 0.0
    %649 = vmatprep.subr.mxu0 0.0
    %650 = vmatpush1.xpose.msra.mxu0 0.0
    %651 = vmatprep.subr.mxu0 0.0
    %652 = vmatpush1.xpose.msra.mxu0 0.0
    %653 = vmatprep.subr.mxu0 0.0
    %654 = vmatpush1.xpose.msra.mxu0 0.0
    %655 = vmatprep.subr.mxu0 0.0
    %656 = vmatpush1.xpose.msra.mxu0 0.0
    %657 = vmatprep.subr.mxu0 0.0
    %658 = vmatpush1.xpose.msra.mxu0 0.0
    %659 = vmatprep.subr.mxu0 0.0
    %660 = vmatpush1.xpose.msra.mxu0 0.0
    %661 = vmatprep.subr.mxu0 0.0
    %662 = vmatpush1.xpose.msra.mxu0 0.0
    %663 = vmatprep.subr.mxu0 0.0
    %664 = vmatpush1.xpose.msra.mxu0 0.0
    %665 = vmatprep.subr.mxu0 0.0
    %666 = vmatpush1.xpose.msra.mxu0 0.0
    %667 = vmatprep.subr.mxu0 0.0
    %668 = vmatpush1.xpose.msra.mxu0 0.0
    %669 = vmatprep.mubr.f32.mxu0 0.0
    %670 = vmatmul.mubr.f32.gmra.mrb[0].mxu0 %v601
    %v671 = vpop.f32.mrb[0].mxu0
    %v672 = vadd.f32 0.0, %v671
    %v673 = vpop.f32.mrb[0].mxu0
    %674 = vdwg.mxu0
    %v675 = vmul.f32 %v672, 0.17677669
    %v676 = vadd.f32 %v675, %v510
    %v677 = vsel %vm512, %v676, -inf
    %678 = vmax.xlane.f32.xlu0 %v677
    %v679 = vpop.xlane.xlu0 %678
    %v680 = vsub.f32 %v676, %v679
    %v681 = vmul.f32 %v680, 1.442695
    %v682 = vpow.pop %v681
    %v683 = vsel %vm512, %v682, 0.0
    %684 = vadd.xlane.f32.xlu0 %v683
    %v685 = vpop.xlane.xlu0 %684
    %v686 = vrcp.pop %v685
    %v687 = vmul.f32 %v682, %v686
    %689 = vrot.lane.b32.xlu0 %v423, 96
    %v690 = vpop.permute.xlu0 %689
    %v693 = vsel %vm512, %v687, 0
    %695 = vmatprep.subr.mxu0 0.0
    %696 = vmatpush1.msra.mxu0 %v690
    %697 = vmatprep.subr.mxu0 0.0
    %698 = vmatpush1.msra.mxu0 0.0
    %699 = vmatprep.subr.mxu0 0.0
    %700 = vmatpush1.msra.mxu0 0.0
    %701 = vmatprep.subr.mxu0 0.0
    %702 = vmatpush1.msra.mxu0 0.0
    %703 = vmatprep.subr.mxu0 0.0
    %704 = vmatpush1.msra.mxu0 0.0
    %705 = vmatprep.subr.mxu0 0.0
    %706 = vmatpush1.msra.mxu0 0.0
    %707 = vmatprep.subr.mxu0 0.0
    %708 = vmatpush1.msra.mxu0 0.0
    %709 = vmatprep.subr.mxu0 0.0
    %710 = vmatpush1.msra.mxu0 0.0
    %711 = vmatprep.subr.mxu0 0.0
    %712 = vmatpush1.msra.mxu0 0.0
    %713 = vmatprep.subr.mxu0 0.0
    %714 = vmatpush1.msra.mxu0 0.0
    %715 = vmatprep.subr.mxu0 0.0
    %716 = vmatpush1.msra.mxu0 0.0
    %717 = vmatprep.subr.mxu0 0.0
    %718 = vmatpush1.msra.mxu0 0.0
    %719 = vmatprep.subr.mxu0 0.0
    %720 = vmatpush1.msra.mxu0 0.0
    %721 = vmatprep.subr.mxu0 0.0
    %722 = vmatpush1.msra.mxu0 0.0
    %723 = vmatprep.subr.mxu0 0.0
    %724 = vmatpush1.msra.mxu0 0.0
    %725 = vmatprep.subr.mxu0 0.0
    %726 = vmatpush1.msra.mxu0 0.0
    %727 = vmatprep.subr.mxu0 0.0
    %728 = vmatpush1.msra.mxu0 0.0
    %729 = vmatprep.subr.mxu0 0.0
    %730 = vmatpush1.msra.mxu0 0.0
    %731 = vmatprep.subr.mxu0 0.0
    %732 = vmatpush1.msra.mxu0 0.0
    %733 = vmatprep.subr.mxu0 0.0
    %734 = vmatpush1.msra.mxu0 0.0
    %735 = vmatprep.subr.mxu0 0.0
    %736 = vmatpush1.msra.mxu0 0.0
    %737 = vmatprep.subr.mxu0 0.0
    %738 = vmatpush1.msra.mxu0 0.0
    %739 = vmatprep.subr.mxu0 0.0
    %740 = vmatpush1.msra.mxu0 0.0
    %741 = vmatprep.subr.mxu0 0.0
    %742 = vmatpush1.msra.mxu0 0.0
    %743 = vmatprep.subr.mxu0 0.0
    %744 = vmatpush1.msra.mxu0 0.0
    %745 = vmatprep.subr.mxu0 0.0
    %746 = vmatpush1.msra.mxu0 0.0
    %747 = vmatprep.subr.mxu0 0.0
    %748 = vmatpush1.msra.mxu0 0.0
    %749 = vmatprep.subr.mxu0 0.0
    %750 = vmatpush1.msra.mxu0 0.0
    %751 = vmatprep.subr.mxu0 0.0
    %752 = vmatpush1.msra.mxu0 0.0
    %753 = vmatprep.subr.mxu0 0.0
    %754 = vmatpush1.msra.mxu0 0.0
    %755 = vmatprep.subr.mxu0 0.0
    %756 = vmatpush1.msra.mxu0 0.0
    %757 = vmatprep.subr.mxu0 0.0
    %758 = vmatpush1.msra.mxu0 0.0
    %759 = vmatprep.mubr.f32.mxu0 0.0
    %760 = vmatmul.mubr.f32.gmra.mrb[0].mxu0 %v693
    %v761 = vpop.f32.mrb[0].mxu0
    %v762 = vadd.f32 0.0, %v761
    %v763 = vpop.f32.mrb[0].mxu0
    %764 = vdwg.mxu0
    %765 = vrot.lane.b32.xlu0 %v380, 64
    %v766 = vpop.permute.xlu0 %765
    %767 = vrot.lane.b32.xlu0 %v382, 64
    %v768 = vpop.permute.xlu0 %767
    %v769 = vsel %vm429, %v766, 0
    %v771 = vsel %vm429, %v768, 0
    %773 = vmatprep.subr.mxu0 0.0
    %774 = vmatpush1.xpose.msra.mxu0 %v771
    %775 = vmatprep.subr.mxu0 0.0
    %776 = vmatpush1.xpose.msra.mxu0 0.0
    %777 = vmatprep.subr.mxu0 0.0
    %778 = vmatpush1.xpose.msra.mxu0 0.0
    %779 = vmatprep.subr.mxu0 0.0
    %780 = vmatpush1.xpose.msra.mxu0 0.0
    %781 = vmatprep.subr.mxu0 0.0
    %782 = vmatpush1.xpose.msra.mxu0 0.0
    %783 = vmatprep.subr.mxu0 0.0
    %784 = vmatpush1.xpose.msra.mxu0 0.0
    %785 = vmatprep.subr.mxu0 0.0
    %786 = vmatpush1.xpose.msra.mxu0 0.0
    %787 = vmatprep.subr.mxu0 0.0
    %788 = vmatpush1.xpose.msra.mxu0 0.0
    %789 = vmatprep.subr.mxu0 0.0
    %790 = vmatpush1.xpose.msra.mxu0 0.0
    %791 = vmatprep.subr.mxu0 0.0
    %792 = vmatpush1.xpose.msra.mxu0 0.0
    %793 = vmatprep.subr.mxu0 0.0
    %794 = vmatpush1.xpose.msra.mxu0 0.0
    %795 = vmatprep.subr.mxu0 0.0
    %796 = vmatpush1.xpose.msra.mxu0 0.0
    %797 = vmatprep.subr.mxu0 0.0
    %798 = vmatpush1.xpose.msra.mxu0 0.0
    %799 = vmatprep.subr.mxu0 0.0
    %800 = vmatpush1.xpose.msra.mxu0 0.0
    %801 = vmatprep.subr.mxu0 0.0
    %802 = vmatpush1.xpose.msra.mxu0 0.0
    %803 = vmatprep.subr.mxu0 0.0
    %804 = vmatpush1.xpose.msra.mxu0 0.0
    %805 = vmatprep.subr.mxu0 0.0
    %806 = vmatpush1.xpose.msra.mxu0 0.0
    %807 = vmatprep.subr.mxu0 0.0
    %808 = vmatpush1.xpose.msra.mxu0 0.0
    %809 = vmatprep.subr.mxu0 0.0
    %810 = vmatpush1.xpose.msra.mxu0 0.0
    %811 = vmatprep.subr.mxu0 0.0
    %812 = vmatpush1.xpose.msra.mxu0 0.0
    %813 = vmatprep.subr.mxu0 0.0
    %814 = vmatpush1.xpose.msra.mxu0 0.0
    %815 = vmatprep.subr.mxu0 0.0
    %816 = vmatpush1.xpose.msra.mxu0 0.0
    %817 = vmatprep.subr.mxu0 0.0
    %818 = vmatpush1.xpose.msra.mxu0 0.0
    %819 = vmatprep.subr.mxu0 0.0
    %820 = vmatpush1.xpose.msra.mxu0 0.0
    %821 = vmatprep.subr.mxu0 0.0
    %822 = vmatpush1.xpose.msra.mxu0 0.0
    %823 = vmatprep.subr.mxu0 0.0
    %824 = vmatpush1.xpose.msra.mxu0 0.0
    %825 = vmatprep.subr.mxu0 0.0
    %826 = vmatpush1.xpose.msra.mxu0 0.0
    %827 = vmatprep.subr.mxu0 0.0
    %828 = vmatpush1.xpose.msra.mxu0 0.0
    %829 = vmatprep.subr.mxu0 0.0
    %830 = vmatpush1.xpose.msra.mxu0 0.0
    %831 = vmatprep.subr.mxu0 0.0
    %832 = vmatpush1.xpose.msra.mxu0 0.0
    %833 = vmatprep.subr.mxu0 0.0
    %834 = vmatpush1.xpose.msra.mxu0 0.0
    %835 = vmatprep.subr.mxu0 0.0
    %836 = vmatpush1.xpose.msra.mxu0 0.0
    %837 = vmatprep.mubr.f32.mxu0 0.0
    %838 = vmatmul.mubr.f32.gmra.mrb[0].mxu0 %v769
    %v839 = vpop.f32.mrb[0].mxu0
    %v840 = vadd.f32 0.0, %v839
    %v841 = vpop.f32.mrb[0].mxu0
    %842 = vdwg.mxu0
    %v843 = vmul.f32 %v840, 0.17677669
    %v844 = vadd.f32 %v843, %v510
    %v845 = vsel %vm512, %v844, -inf
    %846 = vmax.xlane.f32.xlu0 %v845
    %v847 = vpop.xlane.xlu0 %846
    %v848 = vsub.f32 %v844, %v847
    %v849 = vmul.f32 %v848, 1.442695
    %v850 = vpow.pop %v849
    %v851 = vsel %vm512, %v850, 0.0
    %852 = vadd.xlane.f32.xlu0 %v851
    %v853 = vpop.xlane.xlu0 %852
    %v854 = vrcp.pop %v853
    %v855 = vmul.f32 %v850, %v854
    %856 = vrot.lane.b32.xlu0 %v423, 64
    %v857 = vpop.permute.xlu0 %856
    %v860 = vsel %vm512, %v855, 0
    %862 = vmatprep.subr.mxu0 0.0
    %863 = vmatpush1.msra.mxu0 %v857
    %864 = vmatprep.subr.mxu0 0.0
    %865 = vmatpush1.msra.mxu0 0.0
    %866 = vmatprep.subr.mxu0 0.0
    %867 = vmatpush1.msra.mxu0 0.0
    %868 = vmatprep.subr.mxu0 0.0
    %869 = vmatpush1.msra.mxu0 0.0
    %870 = vmatprep.subr.mxu0 0.0
    %871 = vmatpush1.msra.mxu0 0.0
    %872 = vmatprep.subr.mxu0 0.0
    %873 = vmatpush1.msra.mxu0 0.0
    %874 = vmatprep.subr.mxu0 0.0
    %875 = vmatpush1.msra.mxu0 0.0
    %876 = vmatprep.subr.mxu0 0.0
    %877 = vmatpush1.msra.mxu0 0.0
    %878 = vmatprep.subr.mxu0 0.0
    %879 = vmatpush1.msra.mxu0 0.0
    %880 = vmatprep.subr.mxu0 0.0
    %881 = vmatpush1.msra.mxu0 0.0
    %882 = vmatprep.subr.mxu0 0.0
    %883 = vmatpush1.msra.mxu0 0.0
    %884 = vmatprep.subr.mxu0 0.0
    %885 = vmatpush1.msra.mxu0 0.0
    %886 = vmatprep.subr.mxu0 0.0
    %887 = vmatpush1.msra.mxu0 0.0
    %888 = vmatprep.subr.mxu0 0.0
    %889 = vmatpush1.msra.mxu0 0.0
    %890 = vmatprep.subr.mxu0 0.0
    %891 = vmatpush1.msra.mxu0 0.0
    %892 = vmatprep.subr.mxu0 0.0
    %893 = vmatpush1.msra.mxu0 0.0
    %894 = vmatprep.subr.mxu0 0.0
    %895 = vmatpush1.msra.mxu0 0.0
    %896 = vmatprep.subr.mxu0 0.0
    %897 = vmatpush1.msra.mxu0 0.0
    %898 = vmatprep.subr.mxu0 0.0
    %899 = vmatpush1.msra.mxu0 0.0
    %900 = vmatprep.subr.mxu0 0.0
    %901 = vmatpush1.msra.mxu0 0.0
    %902 = vmatprep.subr.mxu0 0.0
    %903 = vmatpush1.msra.mxu0 0.0
    %904 = vmatprep.subr.mxu0 0.0
    %905 = vmatpush1.msra.mxu0 0.0
    %906 = vmatprep.subr.mxu0 0.0
    %907 = vmatpush1.msra.mxu0 0.0
    %908 = vmatprep.subr.mxu0 0.0
    %909 = vmatpush1.msra.mxu0 0.0
    %910 = vmatprep.subr.mxu0 0.0
    %911 = vmatpush1.msra.mxu0 0.0
    %912 = vmatprep.subr.mxu0 0.0
    %913 = vmatpush1.msra.mxu0 0.0
    %914 = vmatprep.subr.mxu0 0.0
    %915 = vmatpush1.msra.mxu0 0.0
    %916 = vmatprep.subr.mxu0 0.0
    %917 = vmatpush1.msra.mxu0 0.0
    %918 = vmatprep.subr.mxu0 0.0
    %919 = vmatpush1.msra.mxu0 0.0
    %920 = vmatprep.subr.mxu0 0.0
    %921 = vmatpush1.msra.mxu0 0.0
    %922 = vmatprep.subr.mxu0 0.0
    %923 = vmatpush1.msra.mxu0 0.0
    %924 = vmatprep.subr.mxu0 0.0
    %925 = vmatpush1.msra.mxu0 0.0
    %926 = vmatprep.mubr.f32.mxu0 0.0
    %927 = vmatmul.mubr.f32.gmra.mrb[0].mxu0 %v860
    %v928 = vpop.f32.mrb[0].mxu0
    %v929 = vadd.f32 0.0, %v928
    %v930 = vpop.f32.mrb[0].mxu0
    %931 = vdwg.mxu0
    %932 = vrot.lane.b32.xlu0 %v380, 32
    %v933 = vpop.permute.xlu0 %932
    %934 = vrot.lane.b32.xlu0 %v382, 32
    %v935 = vpop.permute.xlu0 %934
    %v936 = vsel %vm429, %v933, 0
    %v938 = vsel %vm429, %v935, 0
    %940 = vmatprep.subr.mxu0 0.0
    %941 = vmatpush1.xpose.msra.mxu0 %v938
    %942 = vmatprep.subr.mxu0 0.0
    %943 = vmatpush1.xpose.msra.mxu0 0.0
    %944 = vmatprep.subr.mxu0 0.0
    %945 = vmatpush1.xpose.msra.mxu0 0.0
    %946 = vmatprep.subr.mxu0 0.0
    %947 = vmatpush1.xpose.msra.mxu0 0.0
    %948 = vmatprep.subr.mxu0 0.0
    %949 = vmatpush1.xpose.msra.mxu0 0.0
    %950 = vmatprep.subr.mxu0 0.0
    %951 = vmatpush1.xpose.msra.mxu0 0.0
    %952 = vmatprep.subr.mxu0 0.0
    %953 = vmatpush1.xpose.msra.mxu0 0.0
    %954 = vmatprep.subr.mxu0 0.0
    %955 = vmatpush1.xpose.msra.mxu0 0.0
    %956 = vmatprep.subr.mxu0 0.0
    %957 = vmatpush1.xpose.msra.mxu0 0.0
    %958 = vmatprep.subr.mxu0 0.0
    %959 = vmatpush1.xpose.msra.mxu0 0.0
    %960 = vmatprep.subr.mxu0 0.0
    %961 = vmatpush1.xpose.msra.mxu0 0.0
    %962 = vmatprep.subr.mxu0 0.0
    %963 = vmatpush1.xpose.msra.mxu0 0.0
    %964 = vmatprep.subr.mxu0 0.0
    %965 = vmatpush1.xpose.msra.mxu0 0.0
    %966 = vmatprep.subr.mxu0 0.0
    %967 = vmatpush1.xpose.msra.mxu0 0.0
    %968 = vmatprep.subr.mxu0 0.0
    %969 = vmatpush1.xpose.msra.mxu0 0.0
    %970 = vmatprep.subr.mxu0 0.0
    %971 = vmatpush1.xpose.msra.mxu0 0.0
    %972 = vmatprep.subr.mxu0 0.0
    %973 = vmatpush1.xpose.msra.mxu0 0.0
    %974 = vmatprep.subr.mxu0 0.0
    %975 = vmatpush1.xpose.msra.mxu0 0.0
    %976 = vmatprep.subr.mxu0 0.0
    %977 = vmatpush1.xpose.msra.mxu0 0.0
    %978 = vmatprep.subr.mxu0 0.0
    %979 = vmatpush1.xpose.msra.mxu0 0.0
    %980 = vmatprep.subr.mxu0 0.0
    %981 = vmatpush1.xpose.msra.mxu0 0.0
    %982 = vmatprep.subr.mxu0 0.0
    %983 = vmatpush1.xpose.msra.mxu0 0.0
    %984 = vmatprep.subr.mxu0 0.0
    %985 = vmatpush1.xpose.msra.mxu0 0.0
    %986 = vmatprep.subr.mxu0 0.0
    %987 = vmatpush1.xpose.msra.mxu0 0.0
    %988 = vmatprep.subr.mxu0 0.0
    %989 = vmatpush1.xpose.msra.mxu0 0.0
    %990 = vmatprep.subr.mxu0 0.0
    %991 = vmatpush1.xpose.msra.mxu0 0.0
    %992 = vmatprep.subr.mxu0 0.0
    %993 = vmatpush1.xpose.msra.mxu0 0.0
    %994 = vmatprep.subr.mxu0 0.0
    %995 = vmatpush1.xpose.msra.mxu0 0.0
    %996 = vmatprep.subr.mxu0 0.0
    %997 = vmatpush1.xpose.msra.mxu0 0.0
    %998 = vmatprep.subr.mxu0 0.0
    %999 = vmatpush1.xpose.msra.mxu0 0.0
    %1000 = vmatprep.subr.mxu0 0.0
    %1001 = vmatpush1.xpose.msra.mxu0 0.0
    %1002 = vmatprep.subr.mxu0 0.0
    %1003 = vmatpush1.xpose.msra.mxu0 0.0
    %1004 = vmatprep.mubr.f32.mxu0 0.0
    %1005 = vmatmul.mubr.f32.gmra.mrb[0].mxu0 %v936
    %v1006 = vpop.f32.mrb[0].mxu0
    %v1007 = vadd.f32 0.0, %v1006
    %v1008 = vpop.f32.mrb[0].mxu0
    %1009 = vdwg.mxu0
    %v1010 = vmul.f32 %v1007, 0.17677669
    %v1011 = vadd.f32 %v1010, %v510
    %v1012 = vsel %vm512, %v1011, -inf
    %1013 = vmax.xlane.f32.xlu0 %v1012
    %v1014 = vpop.xlane.xlu0 %1013
    %v1015 = vsub.f32 %v1011, %v1014
    %v1016 = vmul.f32 %v1015, 1.442695
    %v1017 = vpow.pop %v1016
    %v1018 = vsel %vm512, %v1017, 0.0
    %1019 = vadd.xlane.f32.xlu0 %v1018
    %v1020 = vpop.xlane.xlu0 %1019
    %v1021 = vrcp.pop %v1020
    %v1022 = vmul.f32 %v1017, %v1021
    %1023 = vrot.lane.b32.xlu0 %v423, 32
    %v1024 = vpop.permute.xlu0 %1023
    %v1027 = vsel %vm512, %v1022, 0
    %1029 = vmatprep.subr.mxu0 0.0
    %1030 = vmatpush1.msra.mxu0 %v1024
    %1031 = vmatprep.subr.mxu0 0.0
    %1032 = vmatpush1.msra.mxu0 0.0
    %1033 = vmatprep.subr.mxu0 0.0
    %1034 = vmatpush1.msra.mxu0 0.0
    %1035 = vmatprep.subr.mxu0 0.0
    %1036 = vmatpush1.msra.mxu0 0.0
    %1037 = vmatprep.subr.mxu0 0.0
    %1038 = vmatpush1.msra.mxu0 0.0
    %1039 = vmatprep.subr.mxu0 0.0
    %1040 = vmatpush1.msra.mxu0 0.0
    %1041 = vmatprep.subr.mxu0 0.0
    %1042 = vmatpush1.msra.mxu0 0.0
    %1043 = vmatprep.subr.mxu0 0.0
    %1044 = vmatpush1.msra.mxu0 0.0
    %1045 = vmatprep.subr.mxu0 0.0
    %1046 = vmatpush1.msra.mxu0 0.0
    %1047 = vmatprep.subr.mxu0 0.0
    %1048 = vmatpush1.msra.mxu0 0.0
    %1049 = vmatprep.subr.mxu0 0.0
    %1050 = vmatpush1.msra.mxu0 0.0
    %1051 = vmatprep.subr.mxu0 0.0
    %1052 = vmatpush1.msra.mxu0 0.0
    %1053 = vmatprep.subr.mxu0 0.0
    %1054 = vmatpush1.msra.mxu0 0.0
    %1055 = vmatprep.subr.mxu0 0.0
    %1056 = vmatpush1.msra.mxu0 0.0
    %1057 = vmatprep.subr.mxu0 0.0
    %1058 = vmatpush1.msra.mxu0 0.0
    %1059 = vmatprep.subr.mxu0 0.0
    %1060 = vmatpush1.msra.mxu0 0.0
    %1061 = vmatprep.subr.mxu0 0.0
    %1062 = vmatpush1.msra.mxu0 0.0
    %1063 = vmatprep.subr.mxu0 0.0
    %1064 = vmatpush1.msra.mxu0 0.0
    %1065 = vmatprep.subr.mxu0 0.0
    %1066 = vmatpush1.msra.mxu0 0.0
    %1067 = vmatprep.subr.mxu0 0.0
    %1068 = vmatpush1.msra.mxu0 0.0
    %1069 = vmatprep.subr.mxu0 0.0
    %1070 = vmatpush1.msra.mxu0 0.0
    %1071 = vmatprep.subr.mxu0 0.0
    %1072 = vmatpush1.msra.mxu0 0.0
    %1073 = vmatprep.subr.mxu0 0.0
    %1074 = vmatpush1.msra.mxu0 0.0
    %1075 = vmatprep.subr.mxu0 0.0
    %1076 = vmatpush1.msra.mxu0 0.0
    %1077 = vmatprep.subr.mxu0 0.0
    %1078 = vmatpush1.msra.mxu0 0.0
    %1079 = vmatprep.subr.mxu0 0.0
    %1080 = vmatpush1.msra.mxu0 0.0
    %1081 = vmatprep.subr.mxu0 0.0
    %1082 = vmatpush1.msra.mxu0 0.0
    %1083 = vmatprep.subr.mxu0 0.0
    %1084 = vmatpush1.msra.mxu0 0.0
    %1085 = vmatprep.subr.mxu0 0.0
    %1086 = vmatpush1.msra.mxu0 0.0
    %1087 = vmatprep.subr.mxu0 0.0
    %1088 = vmatpush1.msra.mxu0 0.0
    %1089 = vmatprep.subr.mxu0 0.0
    %1090 = vmatpush1.msra.mxu0 0.0
    %1091 = vmatprep.subr.mxu0 0.0
    %1092 = vmatpush1.msra.mxu0 0.0
    %1093 = vmatprep.mubr.f32.mxu0 0.0
    %1094 = vmatmul.mubr.f32.gmra.mrb[0].mxu0 %v1027
    %v1095 = vpop.f32.mrb[0].mxu0
    %v1096 = vadd.f32 0.0, %v1095
    %v1097 = vpop.f32.mrb[0].mxu0
    %1098 = vdwg.mxu0
    %1100 = vrot.lane.b32.xlu0 %v762, 32
    %v1101 = vpop.permute.xlu0 %1100
    %1104 = vrot.lane.b32.xlu0 %v929, 64
    %v1105 = vpop.permute.xlu0 %1104
    %1108 = vrot.lane.b32.xlu0 %v1096, 96
    %v1109 = vpop.permute.xlu0 %1108
    %v1111 = vsel %vm429, %v594, %v1101
    %vm1112 = vcmask 523264
    %v1113 = vsel %vm1112, %v1111, %v1105
    %vm1114 = vcmask 785408
    %v1115 = vsel %vm1114, %v1113, %v1109
    %v1117 = vsel %vm429, %v384, 0
    %v1120 = vsel %vm429, %v386, 0
    %1122 = vmatprep.subr.mxu0 0.0
    %1123 = vmatpush1.xpose.msra.mxu0 %v1120
    %1124 = vmatprep.subr.mxu0 0.0
    %1125 = vmatpush1.xpose.msra.mxu0 0.0
    %1126 = vmatprep.subr.mxu0 0.0
    %1127 = vmatpush1.xpose.msra.mxu0 0.0
    %1128 = vmatprep.subr.mxu0 0.0
    %1129 = vmatpush1.xpose.msra.mxu0 0.0
    %1130 = vmatprep.subr.mxu0 0.0
    %1131 = vmatpush1.xpose.msra.mxu0 0.0
    %1132 = vmatprep.subr.mxu0 0.0
    %1133 = vmatpush1.xpose.msra.mxu0 0.0
    %1134 = vmatprep.subr.mxu0 0.0
    %1135 = vmatpush1.xpose.msra.mxu0 0.0
    %1136 = vmatprep.subr.mxu0 0.0
    %1137 = vmatpush1.xpose.msra.mxu0 0.0
    %1138 = vmatprep.subr.mxu0 0.0
    %1139 = vmatpush1.xpose.msra.mxu0 0.0
    %1140 = vmatprep.subr.mxu0 0.0
    %1141 = vmatpush1.xpose.msra.mxu0 0.0
    %1142 = vmatprep.subr.mxu0 0.0
    %1143 = vmatpush1.xpose.msra.mxu0 0.0
    %1144 = vmatprep.subr.mxu0 0.0
    %1145 = vmatpush1.xpose.msra.mxu0 0.0
    %1146 = vmatprep.subr.mxu0 0.0
    %1147 = vmatpush1.xpose.msra.mxu0 0.0
    %1148 = vmatprep.subr.mxu0 0.0
    %1149 = vmatpush1.xpose.msra.mxu0 0.0
    %1150 = vmatprep.subr.mxu0 0.0
    %1151 = vmatpush1.xpose.msra.mxu0 0.0
    %1152 = vmatprep.subr.mxu0 0.0
    %1153 = vmatpush1.xpose.msra.mxu0 0.0
    %1154 = vmatprep.subr.mxu0 0.0
    %1155 = vmatpush1.xpose.msra.mxu0 0.0
    %1156 = vmatprep.subr.mxu0 0.0
    %1157 = vmatpush1.xpose.msra.mxu0 0.0
    %1158 = vmatprep.subr.mxu0 0.0
    %1159 = vmatpush1.xpose.msra.mxu0 0.0
    %1160 = vmatprep.subr.mxu0 0.0
    %1161 = vmatpush1.xpose.msra.mxu0 0.0
    %1162 = vmatprep.subr.mxu0 0.0
    %1163 = vmatpush1.xpose.msra.mxu0 0.0
    %1164 = vmatprep.subr.mxu0 0.0
    %1165 = vmatpush1.xpose.msra.mxu0 0.0
    %1166 = vmatprep.subr.mxu0 0.0
    %1167 = vmatpush1.xpose.msra.mxu0 0.0
    %1168 = vmatprep.subr.mxu0 0.0
    %1169 = vmatpush1.xpose.msra.mxu0 0.0
    %1170 = vmatprep.subr.mxu0 0.0
    %1171 = vmatpush1.xpose.msra.mxu0 0.0
    %1172 = vmatprep.subr.mxu0 0.0
    %1173 = vmatpush1.xpose.msra.mxu0 0.0
    %1174 = vmatprep.subr.mxu0 0.0
    %1175 = vmatpush1.xpose.msra.mxu0 0.0
    %1176 = vmatprep.subr.mxu0 0.0
    %1177 = vmatpush1.xpose.msra.mxu0 0.0
    %1178 = vmatprep.subr.mxu0 0.0
    %1179 = vmatpush1.xpose.msra.mxu0 0.0
    %1180 = vmatprep.subr.mxu0 0.0
    %1181 = vmatpush1.xpose.msra.mxu0 0.0
    %1182 = vmatprep.subr.mxu0 0.0
    %1183 = vmatpush1.xpose.msra.mxu0 0.0
    %1184 = vmatprep.subr.mxu0 0.0
    %1185 = vmatpush1.xpose.msra.mxu0 0.0
    %1186 = vmatprep.mubr.f32.mxu0 0.0
    %1187 = vmatmul.mubr.f32.gmra.mrb[0].mxu0 %v1117
    %v1188 = vpop.f32.mrb[0].mxu0
    %v1189 = vadd.f32 0.0, %v1188
    %v1190 = vpop.f32.mrb[0].mxu0
    %1191 = vdwg.mxu0
    %v1192 = vmul.f32 %v1189, 0.17677669
    %v1193 = vlaneseq
    %v1194 = vshrl.u32 %v1193, 7
    %v1195 = vsub.s32 1, %v1194
    %v1196 = vrot.slane %v166, %v1195
    %v1197 = vadd.f32 %v1192, %v1196
    %v1198 = vsel %vm512, %v1197, -inf
    %1199 = vmax.xlane.f32.xlu0 %v1198
    %v1200 = vpop.xlane.xlu0 %1199
    %v1201 = vsub.f32 %v1197, %v1200
    %v1202 = vmul.f32 %v1201, 1.442695
    %v1203 = vpow.pop %v1202
    %v1204 = vsel %vm512, %v1203, 0.0
    %1205 = vadd.xlane.f32.xlu0 %v1204
    %v1206 = vpop.xlane.xlu0 %1205
    %v1207 = vrcp.pop %v1206
    %v1208 = vmul.f32 %v1203, %v1207
    %v1210 = vsel %vm512, %v1208, 0
    %1212 = vmatprep.subr.mxu0 0.0
    %1213 = vmatpush1.msra.mxu0 %v426
    %1214 = vmatprep.subr.mxu0 0.0
    %1215 = vmatpush1.msra.mxu0 0.0
    %1216 = vmatprep.subr.mxu0 0.0
    %1217 = vmatpush1.msra.mxu0 0.0
    %1218 = vmatprep.subr.mxu0 0.0
    %1219 = vmatpush1.msra.mxu0 0.0
    %1220 = vmatprep.subr.mxu0 0.0
    %1221 = vmatpush1.msra.mxu0 0.0
    %1222 = vmatprep.subr.mxu0 0.0
    %1223 = vmatpush1.msra.mxu0 0.0
    %1224 = vmatprep.subr.mxu0 0.0
    %1225 = vmatpush1.msra.mxu0 0.0
    %1226 = vmatprep.subr.mxu0 0.0
    %1227 = vmatpush1.msra.mxu0 0.0
    %1228 = vmatprep.subr.mxu0 0.0
    %1229 = vmatpush1.msra.mxu0 0.0
    %1230 = vmatprep.subr.mxu0 0.0
    %1231 = vmatpush1.msra.mxu0 0.0
    %1232 = vmatprep.subr.mxu0 0.0
    %1233 = vmatpush1.msra.mxu0 0.0
    %1234 = vmatprep.subr.mxu0 0.0
    %1235 = vmatpush1.msra.mxu0 0.0
    %1236 = vmatprep.subr.mxu0 0.0
    %1237 = vmatpush1.msra.mxu0 0.0
    %1238 = vmatprep.subr.mxu0 0.0
    %1239 = vmatpush1.msra.mxu0 0.0
    %1240 = vmatprep.subr.mxu0 0.0
    %1241 = vmatpush1.msra.mxu0 0.0
    %1242 = vmatprep.subr.mxu0 0.0
    %1243 = vmatpush1.msra.mxu0 0.0
    %1244 = vmatprep.subr.mxu0 0.0
    %1245 = vmatpush1.msra.mxu0 0.0
    %1246 = vmatprep.subr.mxu0 0.0
    %1247 = vmatpush1.msra.mxu0 0.0
    %1248 = vmatprep.subr.mxu0 0.0
    %1249 = vmatpush1.msra.mxu0 0.0
    %1250 = vmatprep.subr.mxu0 0.0
    %1251 = vmatpush1.msra.mxu0 0.0
    %1252 = vmatprep.subr.mxu0 0.0
    %1253 = vmatpush1.msra.mxu0 0.0
    %1254 = vmatprep.subr.mxu0 0.0
    %1255 = vmatpush1.msra.mxu0 0.0
    %1256 = vmatprep.subr.mxu0 0.0
    %1257 = vmatpush1.msra.mxu0 0.0
    %1258 = vmatprep.subr.mxu0 0.0
    %1259 = vmatpush1.msra.mxu0 0.0
    %1260 = vmatprep.subr.mxu0 0.0
    %1261 = vmatpush1.msra.mxu0 0.0
    %1262 = vmatprep.subr.mxu0 0.0
    %1263 = vmatpush1.msra.mxu0 0.0
    %1264 = vmatprep.subr.mxu0 0.0
    %1265 = vmatpush1.msra.mxu0 0.0
    %1266 = vmatprep.subr.mxu0 0.0
    %1267 = vmatpush1.msra.mxu0 0.0
    %1268 = vmatprep.subr.mxu0 0.0
    %1269 = vmatpush1.msra.mxu0 0.0
    %1270 = vmatprep.subr.mxu0 0.0
    %1271 = vmatpush1.msra.mxu0 0.0
    %1272 = vmatprep.subr.mxu0 0.0
    %1273 = vmatpush1.msra.mxu0 0.0
    %1274 = vmatprep.subr.mxu0 0.0
    %1275 = vmatpush1.msra.mxu0 0.0
    %1276 = vmatprep.mubr.f32.mxu0 0.0
    %1277 = vmatmul.mubr.f32.gmra.mrb[0].mxu0 %v1210
    %v1278 = vpop.f32.mrb[0].mxu0
    %v1279 = vadd.f32 0.0, %v1278
    %v1280 = vpop.f32.mrb[0].mxu0
    %1281 = vdwg.mxu0
    %1282 = vrot.lane.b32.xlu0 %v384, 96
    %v1283 = vpop.permute.xlu0 %1282
    %1284 = vrot.lane.b32.xlu0 %v386, 96
    %v1285 = vpop.permute.xlu0 %1284
    %v1286 = vsel %vm429, %v1283, 0
    %v1288 = vsel %vm429, %v1285, 0
    %1290 = vmatprep.subr.mxu0 0.0
    %1291 = vmatpush1.xpose.msra.mxu0 %v1288
    %1292 = vmatprep.subr.mxu0 0.0
    %1293 = vmatpush1.xpose.msra.mxu0 0.0
    %1294 = vmatprep.subr.mxu0 0.0
    %1295 = vmatpush1.xpose.msra.mxu0 0.0
    %1296 = vmatprep.subr.mxu0 0.0
    %1297 = vmatpush1.xpose.msra.mxu0 0.0
    %1298 = vmatprep.subr.mxu0 0.0
    %1299 = vmatpush1.xpose.msra.mxu0 0.0
    %1300 = vmatprep.subr.mxu0 0.0
    %1301 = vmatpush1.xpose.msra.mxu0 0.0
    %1302 = vmatprep.subr.mxu0 0.0
    %1303 = vmatpush1.xpose.msra.mxu0 0.0
    %1304 = vmatprep.subr.mxu0 0.0
    %1305 = vmatpush1.xpose.msra.mxu0 0.0
    %1306 = vmatprep.subr.mxu0 0.0
    %1307 = vmatpush1.xpose.msra.mxu0 0.0
    %1308 = vmatprep.subr.mxu0 0.0
    %1309 = vmatpush1.xpose.msra.mxu0 0.0
    %1310 = vmatprep.subr.mxu0 0.0
    %1311 = vmatpush1.xpose.msra.mxu0 0.0
    %1312 = vmatprep.subr.mxu0 0.0
    %1313 = vmatpush1.xpose.msra.mxu0 0.0
    %1314 = vmatprep.subr.mxu0 0.0
    %1315 = vmatpush1.xpose.msra.mxu0 0.0
    %1316 = vmatprep.subr.mxu0 0.0
    %1317 = vmatpush1.xpose.msra.mxu0 0.0
    %1318 = vmatprep.subr.mxu0 0.0
    %1319 = vmatpush1.xpose.msra.mxu0 0.0
    %1320 = vmatprep.subr.mxu0 0.0
    %1321 = vmatpush1.xpose.msra.mxu0 0.0
    %1322 = vmatprep.subr.mxu0 0.0
    %1323 = vmatpush1.xpose.msra.mxu0 0.0
    %1324 = vmatprep.subr.mxu0 0.0
    %1325 = vmatpush1.xpose.msra.mxu0 0.0
    %1326 = vmatprep.subr.mxu0 0.0
    %1327 = vmatpush1.xpose.msra.mxu0 0.0
    %1328 = vmatprep.subr.mxu0 0.0
    %1329 = vmatpush1.xpose.msra.mxu0 0.0
    %1330 = vmatprep.subr.mxu0 0.0
    %1331 = vmatpush1.xpose.msra.mxu0 0.0
    %1332 = vmatprep.subr.mxu0 0.0
    %1333 = vmatpush1.xpose.msra.mxu0 0.0
    %1334 = vmatprep.subr.mxu0 0.0
    %1335 = vmatpush1.xpose.msra.mxu0 0.0
    %1336 = vmatprep.subr.mxu0 0.0
    %1337 = vmatpush1.xpose.msra.mxu0 0.0
    %1338 = vmatprep.subr.mxu0 0.0
    %1339 = vmatpush1.xpose.msra.mxu0 0.0
    %1340 = vmatprep.subr.mxu0 0.0
    %1341 = vmatpush1.xpose.msra.mxu0 0.0
    %1342 = vmatprep.subr.mxu0 0.0
    %1343 = vmatpush1.xpose.msra.mxu0 0.0
    %1344 = vmatprep.subr.mxu0 0.0
    %1345 = vmatpush1.xpose.msra.mxu0 0.0
    %1346 = vmatprep.subr.mxu0 0.0
    %1347 = vmatpush1.xpose.msra.mxu0 0.0
    %1348 = vmatprep.subr.mxu0 0.0
    %1349 = vmatpush1.xpose.msra.mxu0 0.0
    %1350 = vmatprep.subr.mxu0 0.0
    %1351 = vmatpush1.xpose.msra.mxu0 0.0
    %1352 = vmatprep.subr.mxu0 0.0
    %1353 = vmatpush1.xpose.msra.mxu0 0.0
    %1354 = vmatprep.mubr.f32.mxu0 0.0
    %1355 = vmatmul.mubr.f32.gmra.mrb[0].mxu0 %v1286
    %v1356 = vpop.f32.mrb[0].mxu0
    %v1357 = vadd.f32 0.0, %v1356
    %v1358 = vpop.f32.mrb[0].mxu0
    %1359 = vdwg.mxu0
    %v1360 = vmul.f32 %v1357, 0.17677669
    %v1361 = vadd.f32 %v1360, %v1196
    %v1362 = vsel %vm512, %v1361, -inf
    %1363 = vmax.xlane.f32.xlu0 %v1362
    %v1364 = vpop.xlane.xlu0 %1363
    %v1365 = vsub.f32 %v1361, %v1364
    %v1366 = vmul.f32 %v1365, 1.442695
    %v1367 = vpow.pop %v1366
    %v1368 = vsel %vm512, %v1367, 0.0
    %1369 = vadd.xlane.f32.xlu0 %v1368
    %v1370 = vpop.xlane.xlu0 %1369
    %v1371 = vrcp.pop %v1370
    %v1372 = vmul.f32 %v1367, %v1371
    %1374 = vrot.lane.b32.xlu0 %v426, 96
    %v1375 = vpop.permute.xlu0 %1374
    %v1378 = vsel %vm512, %v1372, 0
    %1380 = vmatprep.subr.mxu0 0.0
    %1381 = vmatpush1.msra.mxu0 %v1375
    %1382 = vmatprep.subr.mxu0 0.0
    %1383 = vmatpush1.msra.mxu0 0.0
    %1384 = vmatprep.subr.mxu0 0.0
    %1385 = vmatpush1.msra.mxu0 0.0
    %1386 = vmatprep.subr.mxu0 0.0
    %1387 = vmatpush1.msra.mxu0 0.0
    %1388 = vmatprep.subr.mxu0 0.0
    %1389 = vmatpush1.msra.mxu0 0.0
    %1390 = vmatprep.subr.mxu0 0.0
    %1391 = vmatpush1.msra.mxu0 0.0
    %1392 = vmatprep.subr.mxu0 0.0
    %1393 = vmatpush1.msra.mxu0 0.0
    %1394 = vmatprep.subr.mxu0 0.0
    %1395 = vmatpush1.msra.mxu0 0.0
    %1396 = vmatprep.subr.mxu0 0.0
    %1397 = vmatpush1.msra.mxu0 0.0
    %1398 = vmatprep.subr.mxu0 0.0
    %1399 = vmatpush1.msra.mxu0 0.0
    %1400 = vmatprep.subr.mxu0 0.0
    %1401 = vmatpush1.msra.mxu0 0.0
    %1402 = vmatprep.subr.mxu0 0.0
    %1403 = vmatpush1.msra.mxu0 0.0
    %1404 = vmatprep.subr.mxu0 0.0
    %1405 = vmatpush1.msra.mxu0 0.0
    %1406 = vmatprep.subr.mxu0 0.0
    %1407 = vmatpush1.msra.mxu0 0.0
    %1408 = vmatprep.subr.mxu0 0.0
    %1409 = vmatpush1.msra.mxu0 0.0
    %1410 = vmatprep.subr.mxu0 0.0
    %1411 = vmatpush1.msra.mxu0 0.0
    %1412 = vmatprep.subr.mxu0 0.0
    %1413 = vmatpush1.msra.mxu0 0.0
    %1414 = vmatprep.subr.mxu0 0.0
    %1415 = vmatpush1.msra.mxu0 0.0
    %1416 = vmatprep.subr.mxu0 0.0
    %1417 = vmatpush1.msra.mxu0 0.0
    %1418 = vmatprep.subr.mxu0 0.0
    %1419 = vmatpush1.msra.mxu0 0.0
    %1420 = vmatprep.subr.mxu0 0.0
    %1421 = vmatpush1.msra.mxu0 0.0
    %1422 = vmatprep.subr.mxu0 0.0
    %1423 = vmatpush1.msra.mxu0 0.0
    %1424 = vmatprep.subr.mxu0 0.0
    %1425 = vmatpush1.msra.mxu0 0.0
    %1426 = vmatprep.subr.mxu0 0.0
    %1427 = vmatpush1.msra.mxu0 0.0
    %1428 = vmatprep.subr.mxu0 0.0
    %1429 = vmatpush1.msra.mxu0 0.0
    %1430 = vmatprep.subr.mxu0 0.0
    %1431 = vmatpush1.msra.mxu0 0.0
    %1432 = vmatprep.subr.mxu0 0.0
    %1433 = vmatpush1.msra.mxu0 0.0
    %1434 = vmatprep.subr.mxu0 0.0
    %1435 = vmatpush1.msra.mxu0 0.0
    %1436 = vmatprep.subr.mxu0 0.0
    %1437 = vmatpush1.msra.mxu0 0.0
    %1438 = vmatprep.subr.mxu0 0.0
    %1439 = vmatpush1.msra.mxu0 0.0
    %1440 = vmatprep.subr.mxu0 0.0
    %1441 = vmatpush1.msra.mxu0 0.0
    %1442 = vmatprep.subr.mxu0 0.0
    %1443 = vmatpush1.msra.mxu0 0.0
    %1444 = vmatprep.mubr.f32.mxu0 0.0
    %1445 = vmatmul.mubr.f32.gmra.mrb[0].mxu0 %v1378
    %v1446 = vpop.f32.mrb[0].mxu0
    %v1447 = vadd.f32 0.0, %v1446
    %v1448 = vpop.f32.mrb[0].mxu0
    %1449 = vdwg.mxu0
    %1450 = vrot.lane.b32.xlu0 %v384, 64
    %v1451 = vpop.permute.xlu0 %1450
    %1452 = vrot.lane.b32.xlu0 %v386, 64
    %v1453 = vpop.permute.xlu0 %1452
    %v1454 = vsel %vm429, %v1451, 0
    %v1456 = vsel %vm429, %v1453, 0
    %1458 = vmatprep.subr.mxu0 0.0
    %1459 = vmatpush1.xpose.msra.mxu0 %v1456
    %1460 = vmatprep.subr.mxu0 0.0
    %1461 = vmatpush1.xpose.msra.mxu0 0.0
    %1462 = vmatprep.subr.mxu0 0.0
    %1463 = vmatpush1.xpose.msra.mxu0 0.0
    %1464 = vmatprep.subr.mxu0 0.0
    %1465 = vmatpush1.xpose.msra.mxu0 0.0
    %1466 = vmatprep.subr.mxu0 0.0
    %1467 = vmatpush1.xpose.msra.mxu0 0.0
    %1468 = vmatprep.subr.mxu0 0.0
    %1469 = vmatpush1.xpose.msra.mxu0 0.0
    %1470 = vmatprep.subr.mxu0 0.0
    %1471 = vmatpush1.xpose.msra.mxu0 0.0
    %1472 = vmatprep.subr.mxu0 0.0
    %1473 = vmatpush1.xpose.msra.mxu0 0.0
    %1474 = vmatprep.subr.mxu0 0.0
    %1475 = vmatpush1.xpose.msra.mxu0 0.0
    %1476 = vmatprep.subr.mxu0 0.0
    %1477 = vmatpush1.xpose.msra.mxu0 0.0
    %1478 = vmatprep.subr.mxu0 0.0
    %1479 = vmatpush1.xpose.msra.mxu0 0.0
    %1480 = vmatprep.subr.mxu0 0.0
    %1481 = vmatpush1.xpose.msra.mxu0 0.0
    %1482 = vmatprep.subr.mxu0 0.0
    %1483 = vmatpush1.xpose.msra.mxu0 0.0
    %1484 = vmatprep.subr.mxu0 0.0
    %1485 = vmatpush1.xpose.msra.mxu0 0.0
    %1486 = vmatprep.subr.mxu0 0.0
    %1487 = vmatpush1.xpose.msra.mxu0 0.0
    %1488 = vmatprep.subr.mxu0 0.0
    %1489 = vmatpush1.xpose.msra.mxu0 0.0
    %1490 = vmatprep.subr.mxu0 0.0
    %1491 = vmatpush1.xpose.msra.mxu0 0.0
    %1492 = vmatprep.subr.mxu0 0.0
    %1493 = vmatpush1.xpose.msra.mxu0 0.0
    %1494 = vmatprep.subr.mxu0 0.0
    %1495 = vmatpush1.xpose.msra.mxu0 0.0
    %1496 = vmatprep.subr.mxu0 0.0
    %1497 = vmatpush1.xpose.msra.mxu0 0.0
    %1498 = vmatprep.subr.mxu0 0.0
    %1499 = vmatpush1.xpose.msra.mxu0 0.0
    %1500 = vmatprep.subr.mxu0 0.0
    %1501 = vmatpush1.xpose.msra.mxu0 0.0
    %1502 = vmatprep.subr.mxu0 0.0
    %1503 = vmatpush1.xpose.msra.mxu0 0.0
    %1504 = vmatprep.subr.mxu0 0.0
    %1505 = vmatpush1.xpose.msra.mxu0 0.0
    %1506 = vmatprep.subr.mxu0 0.0
    %1507 = vmatpush1.xpose.msra.mxu0 0.0
    %1508 = vmatprep.subr.mxu0 0.0
    %1509 = vmatpush1.xpose.msra.mxu0 0.0
    %1510 = vmatprep.subr.mxu0 0.0
    %1511 = vmatpush1.xpose.msra.mxu0 0.0
    %1512 = vmatprep.subr.mxu0 0.0
    %1513 = vmatpush1.xpose.msra.mxu0 0.0
    %1514 = vmatprep.subr.mxu0 0.0
    %1515 = vmatpush1.xpose.msra.mxu0 0.0
    %1516 = vmatprep.subr.mxu0 0.0
    %1517 = vmatpush1.xpose.msra.mxu0 0.0
    %1518 = vmatprep.subr.mxu0 0.0
    %1519 = vmatpush1.xpose.msra.mxu0 0.0
    %1520 = vmatprep.subr.mxu0 0.0
    %1521 = vmatpush1.xpose.msra.mxu0 0.0
    %1522 = vmatprep.mubr.f32.mxu0 0.0
    %1523 = vmatmul.mubr.f32.gmra.mrb[0].mxu0 %v1454
    %v1524 = vpop.f32.mrb[0].mxu0
    %v1525 = vadd.f32 0.0, %v1524
    %v1526 = vpop.f32.mrb[0].mxu0
    %1527 = vdwg.mxu0
    %v1528 = vmul.f32 %v1525, 0.17677669
    %v1529 = vadd.f32 %v1528, %v1196
    %v1530 = vsel %vm512, %v1529, -inf
    %1531 = vmax.xlane.f32.xlu0 %v1530
    %v1532 = vpop.xlane.xlu0 %1531
    %v1533 = vsub.f32 %v1529, %v1532
    %v1534 = vmul.f32 %v1533, 1.442695
    %v1535 = vpow.pop %v1534
    %v1536 = vsel %vm512, %v1535, 0.0
    %1537 = vadd.xlane.f32.xlu0 %v1536
    %v1538 = vpop.xlane.xlu0 %1537
    %v1539 = vrcp.pop %v1538
    %v1540 = vmul.f32 %v1535, %v1539
    %1541 = vrot.lane.b32.xlu0 %v426, 64
    %v1542 = vpop.permute.xlu0 %1541
    %v1545 = vsel %vm512, %v1540, 0
    %1547 = vmatprep.subr.mxu0 0.0
    %1548 = vmatpush1.msra.mxu0 %v1542
    %1549 = vmatprep.subr.mxu0 0.0
    %1550 = vmatpush1.msra.mxu0 0.0
    %1551 = vmatprep.subr.mxu0 0.0
    %1552 = vmatpush1.msra.mxu0 0.0
    %1553 = vmatprep.subr.mxu0 0.0
    %1554 = vmatpush1.msra.mxu0 0.0
    %1555 = vmatprep.subr.mxu0 0.0
    %1556 = vmatpush1.msra.mxu0 0.0
    %1557 = vmatprep.subr.mxu0 0.0
    %1558 = vmatpush1.msra.mxu0 0.0
    %1559 = vmatprep.subr.mxu0 0.0
    %1560 = vmatpush1.msra.mxu0 0.0
    %1561 = vmatprep.subr.mxu0 0.0
    %1562 = vmatpush1.msra.mxu0 0.0
    %1563 = vmatprep.subr.mxu0 0.0
    %1564 = vmatpush1.msra.mxu0 0.0
    %1565 = vmatprep.subr.mxu0 0.0
    %1566 = vmatpush1.msra.mxu0 0.0
    %1567 = vmatprep.subr.mxu0 0.0
    %1568 = vmatpush1.msra.mxu0 0.0
    %1569 = vmatprep.subr.mxu0 0.0
    %1570 = vmatpush1.msra.mxu0 0.0
    %1571 = vmatprep.subr.mxu0 0.0
    %1572 = vmatpush1.msra.mxu0 0.0
    %1573 = vmatprep.subr.mxu0 0.0
    %1574 = vmatpush1.msra.mxu0 0.0
    %1575 = vmatprep.subr.mxu0 0.0
    %1576 = vmatpush1.msra.mxu0 0.0
    %1577 = vmatprep.subr.mxu0 0.0
    %1578 = vmatpush1.msra.mxu0 0.0
    %1579 = vmatprep.subr.mxu0 0.0
    %1580 = vmatpush1.msra.mxu0 0.0
    %1581 = vmatprep.subr.mxu0 0.0
    %1582 = vmatpush1.msra.mxu0 0.0
    %1583 = vmatprep.subr.mxu0 0.0
    %1584 = vmatpush1.msra.mxu0 0.0
    %1585 = vmatprep.subr.mxu0 0.0
    %1586 = vmatpush1.msra.mxu0 0.0
    %1587 = vmatprep.subr.mxu0 0.0
    %1588 = vmatpush1.msra.mxu0 0.0
    %1589 = vmatprep.subr.mxu0 0.0
    %1590 = vmatpush1.msra.mxu0 0.0
    %1591 = vmatprep.subr.mxu0 0.0
    %1592 = vmatpush1.msra.mxu0 0.0
    %1593 = vmatprep.subr.mxu0 0.0
    %1594 = vmatpush1.msra.mxu0 0.0
    %1595 = vmatprep.subr.mxu0 0.0
    %1596 = vmatpush1.msra.mxu0 0.0
    %1597 = vmatprep.subr.mxu0 0.0
    %1598 = vmatpush1.msra.mxu0 0.0
    %1599 = vmatprep.subr.mxu0 0.0
    %1600 = vmatpush1.msra.mxu0 0.0
    %1601 = vmatprep.subr.mxu0 0.0
    %1602 = vmatpush1.msra.mxu0 0.0
    %1603 = vmatprep.subr.mxu0 0.0
    %1604 = vmatpush1.msra.mxu0 0.0
    %1605 = vmatprep.subr.mxu0 0.0
    %1606 = vmatpush1.msra.mxu0 0.0
    %1607 = vmatprep.subr.mxu0 0.0
    %1608 = vmatpush1.msra.mxu0 0.0
    %1609 = vmatprep.subr.mxu0 0.0
    %1610 = vmatpush1.msra.mxu0 0.0
    %1611 = vmatprep.mubr.f32.mxu0 0.0
    %1612 = vmatmul.mubr.f32.gmra.mrb[0].mxu0 %v1545
    %v1613 = vpop.f32.mrb[0].mxu0
    %v1614 = vadd.f32 0.0, %v1613
    %v1615 = vpop.f32.mrb[0].mxu0
    %1616 = vdwg.mxu0
    %1617 = vrot.lane.b32.xlu0 %v384, 32
    %v1618 = vpop.permute.xlu0 %1617
    %1619 = vrot.lane.b32.xlu0 %v386, 32
    %v1620 = vpop.permute.xlu0 %1619
    %v1621 = vsel %vm429, %v1618, 0
    %v1623 = vsel %vm429, %v1620, 0
    %1625 = vmatprep.subr.mxu0 0.0
    %1626 = vmatpush1.xpose.msra.mxu0 %v1623
    %1627 = vmatprep.subr.mxu0 0.0
    %1628 = vmatpush1.xpose.msra.mxu0 0.0
    %1629 = vmatprep.subr.mxu0 0.0
    %1630 = vmatpush1.xpose.msra.mxu0 0.0
    %1631 = vmatprep.subr.mxu0 0.0
    %1632 = vmatpush1.xpose.msra.mxu0 0.0
    %1633 = vmatprep.subr.mxu0 0.0
    %1634 = vmatpush1.xpose.msra.mxu0 0.0
    %1635 = vmatprep.subr.mxu0 0.0
    %1636 = vmatpush1.xpose.msra.mxu0 0.0
    %1637 = vmatprep.subr.mxu0 0.0
    %1638 = vmatpush1.xpose.msra.mxu0 0.0
    %1639 = vmatprep.subr.mxu0 0.0
    %1640 = vmatpush1.xpose.msra.mxu0 0.0
    %1641 = vmatprep.subr.mxu0 0.0
    %1642 = vmatpush1.xpose.msra.mxu0 0.0
    %1643 = vmatprep.subr.mxu0 0.0
    %1644 = vmatpush1.xpose.msra.mxu0 0.0
    %1645 = vmatprep.subr.mxu0 0.0
    %1646 = vmatpush1.xpose.msra.mxu0 0.0
    %1647 = vmatprep.subr.mxu0 0.0
    %1648 = vmatpush1.xpose.msra.mxu0 0.0
    %1649 = vmatprep.subr.mxu0 0.0
    %1650 = vmatpush1.xpose.msra.mxu0 0.0
    %1651 = vmatprep.subr.mxu0 0.0
    %1652 = vmatpush1.xpose.msra.mxu0 0.0
    %1653 = vmatprep.subr.mxu0 0.0
    %1654 = vmatpush1.xpose.msra.mxu0 0.0
    %1655 = vmatprep.subr.mxu0 0.0
    %1656 = vmatpush1.xpose.msra.mxu0 0.0
    %1657 = vmatprep.subr.mxu0 0.0
    %1658 = vmatpush1.xpose.msra.mxu0 0.0
    %1659 = vmatprep.subr.mxu0 0.0
    %1660 = vmatpush1.xpose.msra.mxu0 0.0
    %1661 = vmatprep.subr.mxu0 0.0
    %1662 = vmatpush1.xpose.msra.mxu0 0.0
    %1663 = vmatprep.subr.mxu0 0.0
    %1664 = vmatpush1.xpose.msra.mxu0 0.0
    %1665 = vmatprep.subr.mxu0 0.0
    %1666 = vmatpush1.xpose.msra.mxu0 0.0
    %1667 = vmatprep.subr.mxu0 0.0
    %1668 = vmatpush1.xpose.msra.mxu0 0.0
    %1669 = vmatprep.subr.mxu0 0.0
    %1670 = vmatpush1.xpose.msra.mxu0 0.0
    %1671 = vmatprep.subr.mxu0 0.0
    %1672 = vmatpush1.xpose.msra.mxu0 0.0
    %1673 = vmatprep.subr.mxu0 0.0
    %1674 = vmatpush1.xpose.msra.mxu0 0.0
    %1675 = vmatprep.subr.mxu0 0.0
    %1676 = vmatpush1.xpose.msra.mxu0 0.0
    %1677 = vmatprep.subr.mxu0 0.0
    %1678 = vmatpush1.xpose.msra.mxu0 0.0
    %1679 = vmatprep.subr.mxu0 0.0
    %1680 = vmatpush1.xpose.msra.mxu0 0.0
    %1681 = vmatprep.subr.mxu0 0.0
    %1682 = vmatpush1.xpose.msra.mxu0 0.0
    %1683 = vmatprep.subr.mxu0 0.0
    %1684 = vmatpush1.xpose.msra.mxu0 0.0
    %1685 = vmatprep.subr.mxu0 0.0
    %1686 = vmatpush1.xpose.msra.mxu0 0.0
    %1687 = vmatprep.subr.mxu0 0.0
    %1688 = vmatpush1.xpose.msra.mxu0 0.0
    %1689 = vmatprep.mubr.f32.mxu0 0.0
    %1690 = vmatmul.mubr.f32.gmra.mrb[0].mxu0 %v1621
    %v1691 = vpop.f32.mrb[0].mxu0
    %v1692 = vadd.f32 0.0, %v1691
    %v1693 = vpop.f32.mrb[0].mxu0
    %1694 = vdwg.mxu0
    %v1695 = vmul.f32 %v1692, 0.17677669
    %v1696 = vadd.f32 %v1695, %v1196
    %v1697 = vsel %vm512, %v1696, -inf
    %1698 = vmax.xlane.f32.xlu0 %v1697
    %v1699 = vpop.xlane.xlu0 %1698
    %v1700 = vsub.f32 %v1696, %v1699
    %v1701 = vmul.f32 %v1700, 1.442695
    %v1702 = vpow.pop %v1701
    %v1703 = vsel %vm512, %v1702, 0.0
    %1704 = vadd.xlane.f32.xlu0 %v1703
    %v1705 = vpop.xlane.xlu0 %1704
    %v1706 = vrcp.pop %v1705
    %v1707 = vmul.f32 %v1702, %v1706
    %1708 = vrot.lane.b32.xlu0 %v426, 32
    %v1709 = vpop.permute.xlu0 %1708
    %v1712 = vsel %vm512, %v1707, 0
    %1714 = vmatprep.subr.mxu0 0.0
    %1715 = vmatpush1.msra.mxu0 %v1709
    %1716 = vmatprep.subr.mxu0 0.0
    %1717 = vmatpush1.msra.mxu0 0.0
    %1718 = vmatprep.subr.mxu0 0.0
    %1719 = vmatpush1.msra.mxu0 0.0
    %1720 = vmatprep.subr.mxu0 0.0
    %1721 = vmatpush1.msra.mxu0 0.0
    %1722 = vmatprep.subr.mxu0 0.0
    %1723 = vmatpush1.msra.mxu0 0.0
    %1724 = vmatprep.subr.mxu0 0.0
    %1725 = vmatpush1.msra.mxu0 0.0
    %1726 = vmatprep.subr.mxu0 0.0
    %1727 = vmatpush1.msra.mxu0 0.0
    %1728 = vmatprep.subr.mxu0 0.0
    %1729 = vmatpush1.msra.mxu0 0.0
    %1730 = vmatprep.subr.mxu0 0.0
    %1731 = vmatpush1.msra.mxu0 0.0
    %1732 = vmatprep.subr.mxu0 0.0
    %1733 = vmatpush1.msra.mxu0 0.0
    %1734 = vmatprep.subr.mxu0 0.0
    %1735 = vmatpush1.msra.mxu0 0.0
    %1736 = vmatprep.subr.mxu0 0.0
    %1737 = vmatpush1.msra.mxu0 0.0
    %1738 = vmatprep.subr.mxu0 0.0
    %1739 = vmatpush1.msra.mxu0 0.0
    %1740 = vmatprep.subr.mxu0 0.0
    %1741 = vmatpush1.msra.mxu0 0.0
    %1742 = vmatprep.subr.mxu0 0.0
    %1743 = vmatpush1.msra.mxu0 0.0
    %1744 = vmatprep.subr.mxu0 0.0
    %1745 = vmatpush1.msra.mxu0 0.0
    %1746 = vmatprep.subr.mxu0 0.0
    %1747 = vmatpush1.msra.mxu0 0.0
    %1748 = vmatprep.subr.mxu0 0.0
    %1749 = vmatpush1.msra.mxu0 0.0
    %1750 = vmatprep.subr.mxu0 0.0
    %1751 = vmatpush1.msra.mxu0 0.0
    %1752 = vmatprep.subr.mxu0 0.0
    %1753 = vmatpush1.msra.mxu0 0.0
    %1754 = vmatprep.subr.mxu0 0.0
    %1755 = vmatpush1.msra.mxu0 0.0
    %1756 = vmatprep.subr.mxu0 0.0
    %1757 = vmatpush1.msra.mxu0 0.0
    %1758 = vmatprep.subr.mxu0 0.0
    %1759 = vmatpush1.msra.mxu0 0.0
    %1760 = vmatprep.subr.mxu0 0.0
    %1761 = vmatpush1.msra.mxu0 0.0
    %1762 = vmatprep.subr.mxu0 0.0
    %1763 = vmatpush1.msra.mxu0 0.0
    %1764 = vmatprep.subr.mxu0 0.0
    %1765 = vmatpush1.msra.mxu0 0.0
    %1766 = vmatprep.subr.mxu0 0.0
    %1767 = vmatpush1.msra.mxu0 0.0
    %1768 = vmatprep.subr.mxu0 0.0
    %1769 = vmatpush1.msra.mxu0 0.0
    %1770 = vmatprep.subr.mxu0 0.0
    %1771 = vmatpush1.msra.mxu0 0.0
    %1772 = vmatprep.subr.mxu0 0.0
    %1773 = vmatpush1.msra.mxu0 0.0
    %1774 = vmatprep.subr.mxu0 0.0
    %1775 = vmatpush1.msra.mxu0 0.0
    %1776 = vmatprep.subr.mxu0 0.0
    %1777 = vmatpush1.msra.mxu0 0.0
    %1778 = vmatprep.mubr.f32.mxu0 0.0
    %1779 = vmatmul.mubr.f32.gmra.mrb[0].mxu0 %v1712
    %v1780 = vpop.f32.mrb[0].mxu0
    %v1781 = vadd.f32 0.0, %v1780
    %v1782 = vpop.f32.mrb[0].mxu0
    %1783 = vdwg.mxu0
    %1785 = vrot.lane.b32.xlu0 %v1447, 32
    %v1786 = vpop.permute.xlu0 %1785
    %1789 = vrot.lane.b32.xlu0 %v1614, 64
    %v1790 = vpop.permute.xlu0 %1789
    %1793 = vrot.lane.b32.xlu0 %v1781, 96
    %v1794 = vpop.permute.xlu0 %1793
    %v1796 = vsel %vm429, %v1279, %v1786
    %v1797 = vsel %vm1112, %v1796, %v1790
    %v1798 = vsel %vm1114, %v1797, %v1794
    %v1799 = vld [vmem:[#allocation2] sm:$0xf]
    %v1800 = vld [vmem:[#allocation2 + $0x4] sm:$0xf]
    %v1801 = vld [vmem:[#allocation2 + $0x8] sm:$0xf]
    %v1802 = vld [vmem:[#allocation2 + $0xc] sm:$0xf]
    %v1803 = vld [vmem:[#allocation2 + $0x10] sm:$0xf]
    %v1804 = vld [vmem:[#allocation2 + $0x14] sm:$0xf]
    %v1805 = vld [vmem:[#allocation2 + $0x18] sm:$0xf]
    %v1806 = vld [vmem:[#allocation2 + $0x1c] sm:$0xf]
    %v1807 = vld [vmem:[#allocation2 + $0x20] sm:$0xf]
    %v1808 = vld [vmem:[#allocation2 + $0x24] sm:$0xf]
    %v1809 = vld [vmem:[#allocation2 + $0x28] sm:$0xf]
    %v1810 = vld [vmem:[#allocation2 + $0x2c] sm:$0xf]
    %v1811 = vld [vmem:[#allocation2 + $0x30] sm:$0xf]
    %v1812 = vld [vmem:[#allocation2 + $0x34] sm:$0xf]
    %v1813 = vld [vmem:[#allocation2 + $0x38] sm:$0xf]
    %v1814 = vld [vmem:[#allocation2 + $0x3c] sm:$0xf]
    %v1815 = vld [vmem:[%s7] sm:$0x1]
    %v1816 = vpack.c.bf16 %v1798, %v1115
    %v1818 = vlaneseq
    %v1819 = vshrl.u32 %v1818, 7
    %v1820 = vsub.s32 0, %v1819
    %v1821 = vrot.slane %v1815, %v1820
    %v1839 = vunpack.c.l.b16 %v1799
    %v1840 = vunpack.c.l.b16 %v1800
    %v1841 = vunpack.c.l.b16 %v1801
    %v1842 = vunpack.c.l.b16 %v1802
    %v1843 = vunpack.c.l.b16 %v1803
    %v1844 = vunpack.c.l.b16 %v1804
    %v1845 = vunpack.c.l.b16 %v1805
    %v1846 = vunpack.c.l.b16 %v1806
    %v1847 = vunpack.c.l.b16 %v1807
    %v1848 = vunpack.c.l.b16 %v1808
    %v1849 = vunpack.c.l.b16 %v1809
    %v1850 = vunpack.c.l.b16 %v1810
    %v1851 = vunpack.c.l.b16 %v1811
    %v1852 = vunpack.c.l.b16 %v1812
    %v1853 = vunpack.c.l.b16 %v1813
    %v1854 = vunpack.c.l.b16 %v1814
    %v1855 = vpack.c.b16 %v1840, %v1839
    %v1856 = vpack.c.b16 %v1842, %v1841
    %v1857 = vpack.c.b16 %v1844, %v1843
    %v1858 = vpack.c.b16 %v1846, %v1845
    %v1859 = vpack.c.b16 %v1848, %v1847
    %v1860 = vpack.c.b16 %v1850, %v1849
    %v1861 = vpack.c.b16 %v1852, %v1851
    %v1862 = vpack.c.b16 %v1854, %v1853
    %1871 = vmatprep.subr.bf16.mxu0 0
    %1872 = vmatpush1.bf16.msra.mxu0 %v1855
    %1873 = vmatprep.subr.bf16.mxu0 0
    %1874 = vmatpush1.bf16.msra.mxu0 %v1856
    %1875 = vmatprep.subr.bf16.mxu0 0
    %1876 = vmatpush1.bf16.msra.mxu0 %v1857
    %1877 = vmatprep.subr.bf16.mxu0 0
    %1878 = vmatpush1.bf16.msra.mxu0 %v1858
    %1879 = vmatprep.subr.bf16.mxu0 0
    %1880 = vmatpush1.bf16.msra.mxu0 %v1859
    %1881 = vmatprep.subr.bf16.mxu0 0
    %1882 = vmatpush1.bf16.msra.mxu0 %v1860
    %1883 = vmatprep.subr.bf16.mxu0 0
    %1884 = vmatpush1.bf16.msra.mxu0 %v1861
    %1885 = vmatprep.subr.bf16.mxu0 0
    %1886 = vmatpush1.bf16.msra.mxu0 %v1862
    %1887 = vmatprep.subr.bf16.mxu0 0
    %1888 = vmatpush1.bf16.msra.mxu0 0
    %1889 = vmatprep.subr.bf16.mxu0 0
    %1890 = vmatpush1.bf16.msra.mxu0 0
    %1891 = vmatprep.subr.bf16.mxu0 0
    %1892 = vmatpush1.bf16.msra.mxu0 0
    %1893 = vmatprep.subr.bf16.mxu0 0
    %1894 = vmatpush1.bf16.msra.mxu0 0
    %1895 = vmatprep.subr.bf16.mxu0 0
    %1896 = vmatpush1.bf16.msra.mxu0 0
    %1897 = vmatprep.subr.bf16.mxu0 0
    %1898 = vmatpush1.bf16.msra.mxu0 0
    %1899 = vmatprep.subr.bf16.mxu0 0
    %1900 = vmatpush1.bf16.msra.mxu0 0
    %1901 = vmatprep.subr.bf16.mxu0 0
    %1902 = vmatpush1.bf16.msra.mxu0 0
    %1903 = vmatprep.mubr.bf16.mxu0 0
    %1904 = vmatmul.mubr.bf16.gmra.mrb[0].mxu0 %v1816
    %v1905 = vpop.f32.mrb[0].mxu0
    %v1906 = vadd.f32 %v1821, %v1905
    %v1907 = vpop.f32.mrb[0].mxu0
    %v1908 = vpop.f32.mrb[0].mxu0
    %v1909 = vadd.f32 %v1821, %v1908
    %v1910 = vpop.f32.mrb[0].mxu0
    %1911 = vdwg.mxu0
    %v1912 = vadd.f32 %v1906, %v162
    %v1913 = vadd.f32 %v1909, %v163
    %v1914 = vld [vmem:[%s8] sm:$0x1]
    %v1915 = vld [vmem:[%s9] sm:$0x1]
    %1916 = vadd.xlane.f32.xlu0 %v1912
    %v1917 = vpop.xlane.xlu0 %1916
    %1918 = vadd.xlane.f32.xlu0 %v1913
    %v1919 = vpop.xlane.xlu0 %1918
    %v1920 = vmul.f32 %v1917, %v129
    %v1921 = vmul.f32 %v1919, %v129
    %v1922 = vsub.f32 %v1912, %v1920
    %v1923 = vsub.f32 %v1913, %v1921
    %v1924 = vmul.f32 %v1922, %v1922
    %v1925 = vmul.f32 %v1923, %v1923
    %1926 = vadd.xlane.f32.xlu0 %v1924
    %v1927 = vpop.xlane.xlu0 %1926
    %1928 = vadd.xlane.f32.xlu0 %v1925
    %v1929 = vpop.xlane.xlu0 %1928
    %v1930 = vmul.f32 %v1927, %v129
    %v1931 = vmul.f32 %v1929, %v129
    %v1932 = vadd.f32 %v1930, 1e-12
    %v1933 = vadd.f32 %v1931, 1e-12
    %v1934 = vrsqrt.pop %v1932
    %v1935 = vrsqrt.pop %v1933
    %v1936 = vmul.f32 %v1922, %v1934
    %v1937 = vmul.f32 %v1923, %v1935
    %v1939 = vlaneseq
    %v1940 = vshrl.u32 %v1939, 7
    %v1941 = vsub.s32 0, %v1940
    %v1942 = vrot.slane %v1914, %v1941
    %v1944 = vmul.f32 %v1936, %v1942
    %v1945 = vmul.f32 %v1937, %v1942
    %v1947 = vlaneseq
    %v1948 = vshrl.u32 %v1947, 7
    %v1949 = vsub.s32 0, %v1948
    %v1950 = vrot.slane %v1915, %v1949
    %v1952 = vadd.f32 %v1944, %v1950
    %v1953 = vadd.f32 %v1945, %v1950
    %v1954 = vld [vmem:[#allocation4] sm:$0xff]
    %v1955 = vld [vmem:[#allocation4 + $0x8] sm:$0xff]
    %v1956 = vld [vmem:[#allocation4 + $0x10] sm:$0xff]
    %v1957 = vld [vmem:[#allocation4 + $0x18] sm:$0xff]
    %v1958 = vld [vmem:[#allocation4 + $0x20] sm:$0xff]
    %v1959 = vld [vmem:[#allocation4 + $0x28] sm:$0xff]
    %v1960 = vld [vmem:[#allocation4 + $0x30] sm:$0xff]
    %v1961 = vld [vmem:[#allocation4 + $0x38] sm:$0xff]
    %v1962 = vld [vmem:[#allocation4 + $0x40] sm:$0xff]
    %v1963 = vld [vmem:[#allocation4 + $0x48] sm:$0xff]
    %v1964 = vld [vmem:[#allocation4 + $0x50] sm:$0xff]
    %v1965 = vld [vmem:[#allocation4 + $0x58] sm:$0xff]
    %v1966 = vld [vmem:[#allocation4 + $0x60] sm:$0xff]
    %v1967 = vld [vmem:[#allocation4 + $0x68] sm:$0xff]
    %v1968 = vld [vmem:[#allocation4 + $0x70] sm:$0xff]
    %v1969 = vld [vmem:[#allocation4 + $0x78] sm:$0xff]
    %v1970 = vld [vmem:[#allocation4 + $0x80] sm:$0xff]
    %v1971 = vld [vmem:[#allocation4 + $0x88] sm:$0xff]
    %v1972 = vld [vmem:[#allocation4 + $0x90] sm:$0xff]
    %v1973 = vld [vmem:[#allocation4 + $0x98] sm:$0xff]
    %v1974 = vld [vmem:[#allocation4 + $0xa0] sm:$0xff]
    %v1975 = vld [vmem:[#allocation4 + $0xa8] sm:$0xff]
    %v1976 = vld [vmem:[#allocation4 + $0xb0] sm:$0xff]
    %v1977 = vld [vmem:[#allocation4 + $0xb8] sm:$0xff]
    %v1978 = vld [vmem:[#allocation4 + $0xc0] sm:$0xff]
    %v1979 = vld [vmem:[#allocation4 + $0xc8] sm:$0xff]
    %v1980 = vld [vmem:[#allocation4 + $0xd0] sm:$0xff]
    %v1981 = vld [vmem:[#allocation4 + $0xd8] sm:$0xff]
    %v1982 = vld [vmem:[#allocation4 + $0xe0] sm:$0xff]
    %v1983 = vld [vmem:[#allocation4 + $0xe8] sm:$0xff]
    %v1984 = vld [vmem:[#allocation4 + $0xf0] sm:$0xff]
    %v1985 = vld [vmem:[#allocation4 + $0xf8] sm:$0xff]
    %v1986 = vld [vmem:[%s11] sm:$0xf]
    %v1987 = vpack.c.bf16 %v1953, %v1952
    %v1989 = vlaneseq
    %v1990 = vshrl.u32 %v1989, 7
    %v1991 = vsub.s32 0, %v1990
    %v1992 = vrot.slane %v1986, %v1991
    %v1993 = vlaneseq
    %v1994 = vshrl.u32 %v1993, 7
    %v1995 = vsub.s32 1, %v1994
    %v1996 = vrot.slane %v1986, %v1995
    %v1997 = vlaneseq
    %v1998 = vshrl.u32 %v1997, 7
    %v1999 = vsub.s32 2, %v1998
    %v2000 = vrot.slane %v1986, %v1999
    %v2001 = vlaneseq
    %v2002 = vshrl.u32 %v2001, 7
    %v2003 = vsub.s32 3, %v2002
    %v2004 = vrot.slane %v1986, %v2003
    %v2041 = vunpack.c.l.b16 %v1954
    %v2042 = vunpack.c.h.b16 %v1954
    %v2043 = vunpack.c.l.b16 %v1955
    %v2044 = vunpack.c.h.b16 %v1955
    %v2045 = vunpack.c.l.b16 %v1956
    %v2046 = vunpack.c.h.b16 %v1956
    %v2047 = vunpack.c.l.b16 %v1957
    %v2048 = vunpack.c.h.b16 %v1957
    %v2049 = vunpack.c.l.b16 %v1958
    %v2050 = vunpack.c.h.b16 %v1958
    %v2051 = vunpack.c.l.b16 %v1959
    %v2052 = vunpack.c.h.b16 %v1959
    %v2053 = vunpack.c.l.b16 %v1960
    %v2054 = vunpack.c.h.b16 %v1960
    %v2055 = vunpack.c.l.b16 %v1961
    %v2056 = vunpack.c.h.b16 %v1961
    %v2057 = vunpack.c.l.b16 %v1962
    %v2058 = vunpack.c.h.b16 %v1962
    %v2059 = vunpack.c.l.b16 %v1963
    %v2060 = vunpack.c.h.b16 %v1963
    %v2061 = vunpack.c.l.b16 %v1964
    %v2062 = vunpack.c.h.b16 %v1964
    %v2063 = vunpack.c.l.b16 %v1965
    %v2064 = vunpack.c.h.b16 %v1965
    %v2065 = vunpack.c.l.b16 %v1966
    %v2066 = vunpack.c.h.b16 %v1966
    %v2067 = vunpack.c.l.b16 %v1967
    %v2068 = vunpack.c.h.b16 %v1967
    %v2069 = vunpack.c.l.b16 %v1968
    %v2070 = vunpack.c.h.b16 %v1968
    %v2071 = vunpack.c.l.b16 %v1969
    %v2072 = vunpack.c.h.b16 %v1969
    %v2073 = vunpack.c.l.b16 %v1970
    %v2074 = vunpack.c.h.b16 %v1970
    %v2075 = vunpack.c.l.b16 %v1971
    %v2076 = vunpack.c.h.b16 %v1971
    %v2077 = vunpack.c.l.b16 %v1972
    %v2078 = vunpack.c.h.b16 %v1972
    %v2079 = vunpack.c.l.b16 %v1973
    %v2080 = vunpack.c.h.b16 %v1973
    %v2081 = vunpack.c.l.b16 %v1974
    %v2082 = vunpack.c.h.b16 %v1974
    %v2083 = vunpack.c.l.b16 %v1975
    %v2084 = vunpack.c.h.b16 %v1975
    %v2085 = vunpack.c.l.b16 %v1976
    %v2086 = vunpack.c.h.b16 %v1976
    %v2087 = vunpack.c.l.b16 %v1977
    %v2088 = vunpack.c.h.b16 %v1977
    %v2089 = vunpack.c.l.b16 %v1978
    %v2090 = vunpack.c.h.b16 %v1978
    %v2091 = vunpack.c.l.b16 %v1979
    %v2092 = vunpack.c.h.b16 %v1979
    %v2093 = vunpack.c.l.b16 %v1980
    %v2094 = vunpack.c.h.b16 %v1980
    %v2095 = vunpack.c.l.b16 %v1981
    %v2096 = vunpack.c.h.b16 %v1981
    %v2097 = vunpack.c.l.b16 %v1982
    %v2098 = vunpack.c.h.b16 %v1982
    %v2099 = vunpack.c.l.b16 %v1983
    %v2100 = vunpack.c.h.b16 %v1983
    %v2101 = vunpack.c.l.b16 %v1984
    %v2102 = vunpack.c.h.b16 %v1984
    %v2103 = vunpack.c.l.b16 %v1985
    %v2104 = vunpack.c.h.b16 %v1985
    %v2105 = vpack.c.b16 %v2045, %v2041
    %v2106 = vpack.c.b16 %v2046, %v2042
    %v2107 = vpack.c.b16 %v2047, %v2043
    %v2108 = vpack.c.b16 %v2048, %v2044
    %v2109 = vpack.c.b16 %v2053, %v2049
    %v2110 = vpack.c.b16 %v2054, %v2050
    %v2111 = vpack.c.b16 %v2055, %v2051
    %v2112 = vpack.c.b16 %v2056, %v2052
    %v2113 = vpack.c.b16 %v2061, %v2057
    %v2114 = vpack.c.b16 %v2062, %v2058
    %v2115 = vpack.c.b16 %v2063, %v2059
    %v2116 = vpack.c.b16 %v2064, %v2060
    %v2117 = vpack.c.b16 %v2069, %v2065
    %v2118 = vpack.c.b16 %v2070, %v2066
    %v2119 = vpack.c.b16 %v2071, %v2067
    %v2120 = vpack.c.b16 %v2072, %v2068
    %v2121 = vpack.c.b16 %v2077, %v2073
    %v2122 = vpack.c.b16 %v2078, %v2074
    %v2123 = vpack.c.b16 %v2079, %v2075
    %v2124 = vpack.c.b16 %v2080, %v2076
    %v2125 = vpack.c.b16 %v2085, %v2081
    %v2126 = vpack.c.b16 %v2086, %v2082
    %v2127 = vpack.c.b16 %v2087, %v2083
    %v2128 = vpack.c.b16 %v2088, %v2084
    %v2129 = vpack.c.b16 %v2093, %v2089
    %v2130 = vpack.c.b16 %v2094, %v2090
    %v2131 = vpack.c.b16 %v2095, %v2091
    %v2132 = vpack.c.b16 %v2096, %v2092
    %v2133 = vpack.c.b16 %v2101, %v2097
    %v2134 = vpack.c.b16 %v2102, %v2098
    %v2135 = vpack.c.b16 %v2103, %v2099
    %v2136 = vpack.c.b16 %v2104, %v2100
    %2169 = vmatprep.subr.bf16.mxu0 %v2106
    %2170 = vmatpush1.bf16.msra.mxu0 %v2105
    %2171 = vmatprep.subr.bf16.mxu0 %v2110
    %2172 = vmatpush1.bf16.msra.mxu0 %v2109
    %2173 = vmatprep.subr.bf16.mxu0 %v2114
    %2174 = vmatpush1.bf16.msra.mxu0 %v2113
    %2175 = vmatprep.subr.bf16.mxu0 %v2118
    %2176 = vmatpush1.bf16.msra.mxu0 %v2117
    %2177 = vmatprep.subr.bf16.mxu0 %v2122
    %2178 = vmatpush1.bf16.msra.mxu0 %v2121
    %2179 = vmatprep.subr.bf16.mxu0 %v2126
    %2180 = vmatpush1.bf16.msra.mxu0 %v2125
    %2181 = vmatprep.subr.bf16.mxu0 %v2130
    %2182 = vmatpush1.bf16.msra.mxu0 %v2129
    %2183 = vmatprep.subr.bf16.mxu0 %v2134
    %2184 = vmatpush1.bf16.msra.mxu0 %v2133
    %2185 = vmatprep.subr.bf16.mxu0 0
    %2186 = vmatpush1.bf16.msra.mxu0 0
    %2187 = vmatprep.subr.bf16.mxu0 0
    %2188 = vmatpush1.bf16.msra.mxu0 0
    %2189 = vmatprep.subr.bf16.mxu0 0
    %2190 = vmatpush1.bf16.msra.mxu0 0
    %2191 = vmatprep.subr.bf16.mxu0 0
    %2192 = vmatpush1.bf16.msra.mxu0 0
    %2193 = vmatprep.subr.bf16.mxu0 0
    %2194 = vmatpush1.bf16.msra.mxu0 0
    %2195 = vmatprep.subr.bf16.mxu0 0
    %2196 = vmatpush1.bf16.msra.mxu0 0
    %2197 = vmatprep.subr.bf16.mxu0 0
    %2198 = vmatpush1.bf16.msra.mxu0 0
    %2199 = vmatprep.subr.bf16.mxu0 0
    %2200 = vmatpush1.bf16.msra.mxu0 0
    %2201 = vmatprep.mubr.bf16.mxu0 0
    %2202 = vmatmul.mubr.bf16.gmra.mrb[0].mxu0 %v1987
    %v2203 = vpop.f32.mrb[0].mxu0
    %v2204 = vadd.f32 %v1992, %v2203
    %v2205 = vpop.f32.mrb[0].mxu0
    %v2206 = vadd.f32 %v1996, %v2205
    %v2207 = vpop.f32.mrb[0].mxu0
    %v2208 = vadd.f32 %v1992, %v2207
    %v2209 = vpop.f32.mrb[0].mxu0
    %v2210 = vadd.f32 %v1996, %v2209
    %2211 = vdwg.mxu0
    %2212 = vmatprep.subr.bf16.mxu0 %v2108
    %2213 = vmatpush1.bf16.msra.mxu0 %v2107
    %2214 = vmatprep.subr.bf16.mxu0 %v2112
    %2215 = vmatpush1.bf16.msra.mxu0 %v2111
    %2216 = vmatprep.subr.bf16.mxu0 %v2116
    %2217 = vmatpush1.bf16.msra.mxu0 %v2115
    %2218 = vmatprep.subr.bf16.mxu0 %v2120
    %2219 = vmatpush1.bf16.msra.mxu0 %v2119
    %2220 = vmatprep.subr.bf16.mxu0 %v2124
    %2221 = vmatpush1.bf16.msra.mxu0 %v2123
    %2222 = vmatprep.subr.bf16.mxu0 %v2128
    %2223 = vmatpush1.bf16.msra.mxu0 %v2127
    %2224 = vmatprep.subr.bf16.mxu0 %v2132
    %2225 = vmatpush1.bf16.msra.mxu0 %v2131
    %2226 = vmatprep.subr.bf16.mxu0 %v2136
    %2227 = vmatpush1.bf16.msra.mxu0 %v2135
    %2228 = vmatprep.subr.bf16.mxu0 0
    %2229 = vmatpush1.bf16.msra.mxu0 0
    %2230 = vmatprep.subr.bf16.mxu0 0
    %2231 = vmatpush1.bf16.msra.mxu0 0
    %2232 = vmatprep.subr.bf16.mxu0 0
    %2233 = vmatpush1.bf16.msra.mxu0 0
    %2234 = vmatprep.subr.bf16.mxu0 0
    %2235 = vmatpush1.bf16.msra.mxu0 0
    %2236 = vmatprep.subr.bf16.mxu0 0
    %2237 = vmatpush1.bf16.msra.mxu0 0
    %2238 = vmatprep.subr.bf16.mxu0 0
    %2239 = vmatpush1.bf16.msra.mxu0 0
    %2240 = vmatprep.subr.bf16.mxu0 0
    %2241 = vmatpush1.bf16.msra.mxu0 0
    %2242 = vmatprep.subr.bf16.mxu0 0
    %2243 = vmatpush1.bf16.msra.mxu0 0
    %2244 = vmatprep.mubr.bf16.mxu0 0
    %2245 = vmatmul.mubr.bf16.gmra.mrb[0].mxu0 %v1987
    %v2246 = vpop.f32.mrb[0].mxu0
    %v2247 = vadd.f32 %v2000, %v2246
    %v2248 = vpop.f32.mrb[0].mxu0
    %v2249 = vadd.f32 %v2004, %v2248
    %v2250 = vpop.f32.mrb[0].mxu0
    %v2251 = vadd.f32 %v2000, %v2250
    %v2252 = vpop.f32.mrb[0].mxu0
    %v2253 = vadd.f32 %v2004, %v2252
    %2254 = vdwg.mxu0
    %v2255 = vmul.f32 %v2204, 0.5
    %v2256 = vmul.f32 %v2206, 0.5
    %v2257 = vmul.f32 %v2247, 0.5
    %v2258 = vmul.f32 %v2249, 0.5
    %v2259 = vmul.f32 %v2208, 0.5
    %v2260 = vmul.f32 %v2210, 0.5
    %v2261 = vmul.f32 %v2251, 0.5
    %v2262 = vmul.f32 %v2253, 0.5
    %v2263 = vmul.f32 %v2204, 0.044715
    %v2264 = vmul.f32 %v2206, 0.044715
    %v2265 = vmul.f32 %v2247, 0.044715
    %v2266 = vmul.f32 %v2249, 0.044715
    %v2267 = vmul.f32 %v2208, 0.044715
    %v2268 = vmul.f32 %v2210, 0.044715
    %v2269 = vmul.f32 %v2251, 0.044715
    %v2270 = vmul.f32 %v2253, 0.044715
    %v2271 = vmul.f32 %v2263, %v2204
    %v2272 = vmul.f32 %v2264, %v2206
    %v2273 = vmul.f32 %v2265, %v2247
    %v2274 = vmul.f32 %v2266, %v2249
    %v2275 = vmul.f32 %v2267, %v2208
    %v2276 = vmul.f32 %v2268, %v2210
    %v2277 = vmul.f32 %v2269, %v2251
    %v2278 = vmul.f32 %v2270, %v2253
    %v2279 = vmul.f32 %v2271, %v2204
    %v2280 = vmul.f32 %v2272, %v2206
    %v2281 = vmul.f32 %v2273, %v2247
    %v2282 = vmul.f32 %v2274, %v2249
    %v2283 = vmul.f32 %v2275, %v2208
    %v2284 = vmul.f32 %v2276, %v2210
    %v2285 = vmul.f32 %v2277, %v2251
    %v2286 = vmul.f32 %v2278, %v2253
    %v2287 = vadd.f32 %v2204, %v2279
    %v2288 = vadd.f32 %v2206, %v2280
    %v2289 = vadd.f32 %v2247, %v2281
    %v2290 = vadd.f32 %v2249, %v2282
    %v2291 = vadd.f32 %v2208, %v2283
    %v2292 = vadd.f32 %v2210, %v2284
    %v2293 = vadd.f32 %v2251, %v2285
    %v2294 = vadd.f32 %v2253, %v2286
    %v2295 = vmul.f32 %v2287, 0.7978846
    %v2296 = vmul.f32 %v2288, 0.7978846
    %v2297 = vmul.f32 %v2289, 0.7978846
    %v2298 = vmul.f32 %v2290, 0.7978846
    %v2299 = vmul.f32 %v2291, 0.7978846
    %v2300 = vmul.f32 %v2292, 0.7978846
    %v2301 = vmul.f32 %v2293, 0.7978846
    %v2302 = vmul.f32 %v2294, 0.7978846
    %v2303 = vtanh.pop %v2295
    %v2304 = vtanh.pop %v2296
    %v2305 = vtanh.pop %v2297
    %v2306 = vtanh.pop %v2298
    %v2307 = vtanh.pop %v2299
    %v2308 = vtanh.pop %v2300
    %v2309 = vtanh.pop %v2301
    %v2310 = vtanh.pop %v2302
    %v2311 = vadd.f32 %v2303, 1.0
    %v2312 = vadd.f32 %v2304, 1.0
    %v2313 = vadd.f32 %v2305, 1.0
    %v2314 = vadd.f32 %v2306, 1.0
    %v2315 = vadd.f32 %v2307, 1.0
    %v2316 = vadd.f32 %v2308, 1.0
    %v2317 = vadd.f32 %v2309, 1.0
    %v2318 = vadd.f32 %v2310, 1.0
    %v2319 = vmul.f32 %v2255, %v2311
    %v2320 = vmul.f32 %v2256, %v2312
    %v2321 = vmul.f32 %v2257, %v2313
    %v2322 = vmul.f32 %v2258, %v2314
    %v2323 = vmul.f32 %v2259, %v2315
    %v2324 = vmul.f32 %v2260, %v2316
    %v2325 = vmul.f32 %v2261, %v2317
    %v2326 = vmul.f32 %v2262, %v2318
    %v2327 = vld [vmem:[#allocation6] sm:$0xf]
    %v2328 = vld [vmem:[#allocation6 + $0x4] sm:$0xf]
    %v2329 = vld [vmem:[#allocation6 + $0x8] sm:$0xf]
    %v2330 = vld [vmem:[#allocation6 + $0xc] sm:$0xf]
    %v2331 = vld [vmem:[#allocation6 + $0x10] sm:$0xf]
    %v2332 = vld [vmem:[#allocation6 + $0x14] sm:$0xf]
    %v2333 = vld [vmem:[#allocation6 + $0x18] sm:$0xf]
    %v2334 = vld [vmem:[#allocation6 + $0x1c] sm:$0xf]
    %v2335 = vld [vmem:[#allocation6 + $0x20] sm:$0xf]
    %v2336 = vld [vmem:[#allocation6 + $0x24] sm:$0xf]
    %v2337 = vld [vmem:[#allocation6 + $0x28] sm:$0xf]
    %v2338 = vld [vmem:[#allocation6 + $0x2c] sm:$0xf]
    %v2339 = vld [vmem:[#allocation6 + $0x30] sm:$0xf]
    %v2340 = vld [vmem:[#allocation6 + $0x34] sm:$0xf]
    %v2341 = vld [vmem:[#allocation6 + $0x38] sm:$0xf]
    %v2342 = vld [vmem:[#allocation6 + $0x3c] sm:$0xf]
    %v2343 = vld [vmem:[#allocation6 + $0x40] sm:$0xf]
    %v2344 = vld [vmem:[#allocation6 + $0x44] sm:$0xf]
    %v2345 = vld [vmem:[#allocation6 + $0x48] sm:$0xf]
    %v2346 = vld [vmem:[#allocation6 + $0x4c] sm:$0xf]
    %v2347 = vld [vmem:[#allocation6 + $0x50] sm:$0xf]
    %v2348 = vld [vmem:[#allocation6 + $0x54] sm:$0xf]
    %v2349 = vld [vmem:[#allocation6 + $0x58] sm:$0xf]
    %v2350 = vld [vmem:[#allocation6 + $0x5c] sm:$0xf]
    %v2351 = vld [vmem:[#allocation6 + $0x60] sm:$0xf]
    %v2352 = vld [vmem:[#allocation6 + $0x64] sm:$0xf]
    %v2353 = vld [vmem:[#allocation6 + $0x68] sm:$0xf]
    %v2354 = vld [vmem:[#allocation6 + $0x6c] sm:$0xf]
    %v2355 = vld [vmem:[#allocation6 + $0x70] sm:$0xf]
    %v2356 = vld [vmem:[#allocation6 + $0x74] sm:$0xf]
    %v2357 = vld [vmem:[#allocation6 + $0x78] sm:$0xf]
    %v2358 = vld [vmem:[#allocation6 + $0x7c] sm:$0xf]
    %v2359 = vld [vmem:[#allocation6 + $0x80] sm:$0xf]
    %v2360 = vld [vmem:[#allocation6 + $0x84] sm:$0xf]
    %v2361 = vld [vmem:[#allocation6 + $0x88] sm:$0xf]
    %v2362 = vld [vmem:[#allocation6 + $0x8c] sm:$0xf]
    %v2363 = vld [vmem:[#allocation6 + $0x90] sm:$0xf]
    %v2364 = vld [vmem:[#allocation6 + $0x94] sm:$0xf]
    %v2365 = vld [vmem:[#allocation6 + $0x98] sm:$0xf]
    %v2366 = vld [vmem:[#allocation6 + $0x9c] sm:$0xf]
    %v2367 = vld [vmem:[#allocation6 + $0xa0] sm:$0xf]
    %v2368 = vld [vmem:[#allocation6 + $0xa4] sm:$0xf]
    %v2369 = vld [vmem:[#allocation6 + $0xa8] sm:$0xf]
    %v2370 = vld [vmem:[#allocation6 + $0xac] sm:$0xf]
    %v2371 = vld [vmem:[#allocation6 + $0xb0] sm:$0xf]
    %v2372 = vld [vmem:[#allocation6 + $0xb4] sm:$0xf]
    %v2373 = vld [vmem:[#allocation6 + $0xb8] sm:$0xf]
    %v2374 = vld [vmem:[#allocation6 + $0xbc] sm:$0xf]
    %v2375 = vld [vmem:[#allocation6 + $0xc0] sm:$0xf]
    %v2376 = vld [vmem:[#allocation6 + $0xc4] sm:$0xf]
    %v2377 = vld [vmem:[#allocation6 + $0xc8] sm:$0xf]
    %v2378 = vld [vmem:[#allocation6 + $0xcc] sm:$0xf]
    %v2379 = vld [vmem:[#allocation6 + $0xd0] sm:$0xf]
    %v2380 = vld [vmem:[#allocation6 + $0xd4] sm:$0xf]
    %v2381 = vld [vmem:[#allocation6 + $0xd8] sm:$0xf]
    %v2382 = vld [vmem:[#allocation6 + $0xdc] sm:$0xf]
    %v2383 = vld [vmem:[#allocation6 + $0xe0] sm:$0xf]
    %v2384 = vld [vmem:[#allocation6 + $0xe4] sm:$0xf]
    %v2385 = vld [vmem:[#allocation6 + $0xe8] sm:$0xf]
    %v2386 = vld [vmem:[#allocation6 + $0xec] sm:$0xf]
    %v2387 = vld [vmem:[#allocation6 + $0xf0] sm:$0xf]
    %v2388 = vld [vmem:[#allocation6 + $0xf4] sm:$0xf]
    %v2389 = vld [vmem:[#allocation6 + $0xf8] sm:$0xf]
    %v2390 = vld [vmem:[#allocation6 + $0xfc] sm:$0xf]
    %v2391 = vld [vmem:[%s13] sm:$0x1]
    %v2392 = vpack.c.bf16 %v2323, %v2319
    %v2393 = vpack.c.bf16 %v2324, %v2320
    %v2394 = vpack.c.bf16 %v2325, %v2321
    %v2395 = vpack.c.bf16 %v2326, %v2322
    %v2397 = vlaneseq
    %v2398 = vshrl.u32 %v2397, 7
    %v2399 = vsub.s32 0, %v2398
    %v2400 = vrot.slane %v2391, %v2399
    %v2466 = vunpack.c.l.b16 %v2327
    %v2467 = vunpack.c.l.b16 %v2328
    %v2468 = vunpack.c.l.b16 %v2329
    %v2469 = vunpack.c.l.b16 %v2330
    %v2470 = vunpack.c.l.b16 %v2331
    %v2471 = vunpack.c.l.b16 %v2332
    %v2472 = vunpack.c.l.b16 %v2333
    %v2473 = vunpack.c.l.b16 %v2334
    %v2474 = vunpack.c.l.b16 %v2335
    %v2475 = vunpack.c.l.b16 %v2336
    %v2476 = vunpack.c.l.b16 %v2337
    %v2477 = vunpack.c.l.b16 %v2338
    %v2478 = vunpack.c.l.b16 %v2339
    %v2479 = vunpack.c.l.b16 %v2340
    %v2480 = vunpack.c.l.b16 %v2341
    %v2481 = vunpack.c.l.b16 %v2342
    %v2482 = vunpack.c.l.b16 %v2343
    %v2483 = vunpack.c.l.b16 %v2344
    %v2484 = vunpack.c.l.b16 %v2345
    %v2485 = vunpack.c.l.b16 %v2346
    %v2486 = vunpack.c.l.b16 %v2347
    %v2487 = vunpack.c.l.b16 %v2348
    %v2488 = vunpack.c.l.b16 %v2349
    %v2489 = vunpack.c.l.b16 %v2350
    %v2490 = vunpack.c.l.b16 %v2351
    %v2491 = vunpack.c.l.b16 %v2352
    %v2492 = vunpack.c.l.b16 %v2353
    %v2493 = vunpack.c.l.b16 %v2354
    %v2494 = vunpack.c.l.b16 %v2355
    %v2495 = vunpack.c.l.b16 %v2356
    %v2496 = vunpack.c.l.b16 %v2357
    %v2497 = vunpack.c.l.b16 %v2358
    %v2498 = vunpack.c.l.b16 %v2359
    %v2499 = vunpack.c.l.b16 %v2360
    %v2500 = vunpack.c.l.b16 %v2361
    %v2501 = vunpack.c.l.b16 %v2362
    %v2502 = vunpack.c.l.b16 %v2363
    %v2503 = vunpack.c.l.b16 %v2364
    %v2504 = vunpack.c.l.b16 %v2365
    %v2505 = vunpack.c.l.b16 %v2366
    %v2506 = vunpack.c.l.b16 %v2367
    %v2507 = vunpack.c.l.b16 %v2368
    %v2508 = vunpack.c.l.b16 %v2369
    %v2509 = vunpack.c.l.b16 %v2370
    %v2510 = vunpack.c.l.b16 %v2371
    %v2511 = vunpack.c.l.b16 %v2372
    %v2512 = vunpack.c.l.b16 %v2373
    %v2513 = vunpack.c.l.b16 %v2374
    %v2514 = vunpack.c.l.b16 %v2375
    %v2515 = vunpack.c.l.b16 %v2376
    %v2516 = vunpack.c.l.b16 %v2377
    %v2517 = vunpack.c.l.b16 %v2378
    %v2518 = vunpack.c.l.b16 %v2379
    %v2519 = vunpack.c.l.b16 %v2380
    %v2520 = vunpack.c.l.b16 %v2381
    %v2521 = vunpack.c.l.b16 %v2382
    %v2522 = vunpack.c.l.b16 %v2383
    %v2523 = vunpack.c.l.b16 %v2384
    %v2524 = vunpack.c.l.b16 %v2385
    %v2525 = vunpack.c.l.b16 %v2386
    %v2526 = vunpack.c.l.b16 %v2387
    %v2527 = vunpack.c.l.b16 %v2388
    %v2528 = vunpack.c.l.b16 %v2389
    %v2529 = vunpack.c.l.b16 %v2390
    %v2530 = vpack.c.b16 %v2467, %v2466
    %v2531 = vpack.c.b16 %v2469, %v2468
    %v2532 = vpack.c.b16 %v2471, %v2470
    %v2533 = vpack.c.b16 %v2473, %v2472
    %v2534 = vpack.c.b16 %v2475, %v2474
    %v2535 = vpack.c.b16 %v2477, %v2476
    %v2536 = vpack.c.b16 %v2479, %v2478
    %v2537 = vpack.c.b16 %v2481, %v2480
    %v2538 = vpack.c.b16 %v2483, %v2482
    %v2539 = vpack.c.b16 %v2485, %v2484
    %v2540 = vpack.c.b16 %v2487, %v2486
    %v2541 = vpack.c.b16 %v2489, %v2488
    %v2542 = vpack.c.b16 %v2491, %v2490
    %v2543 = vpack.c.b16 %v2493, %v2492
    %v2544 = vpack.c.b16 %v2495, %v2494
    %v2545 = vpack.c.b16 %v2497, %v2496
    %v2546 = vpack.c.b16 %v2499, %v2498
    %v2547 = vpack.c.b16 %v2501, %v2500
    %v2548 = vpack.c.b16 %v2503, %v2502
    %v2549 = vpack.c.b16 %v2505, %v2504
    %v2550 = vpack.c.b16 %v2507, %v2506
    %v2551 = vpack.c.b16 %v2509, %v2508
    %v2552 = vpack.c.b16 %v2511, %v2510
    %v2553 = vpack.c.b16 %v2513, %v2512
    %v2554 = vpack.c.b16 %v2515, %v2514
    %v2555 = vpack.c.b16 %v2517, %v2516
    %v2556 = vpack.c.b16 %v2519, %v2518
    %v2557 = vpack.c.b16 %v2521, %v2520
    %v2558 = vpack.c.b16 %v2523, %v2522
    %v2559 = vpack.c.b16 %v2525, %v2524
    %v2560 = vpack.c.b16 %v2527, %v2526
    %v2561 = vpack.c.b16 %v2529, %v2528
    %2594 = vmatprep.subr.bf16.mxu0 0
    %2595 = vmatpush1.bf16.msra.mxu0 %v2530
    %2596 = vmatprep.subr.bf16.mxu0 0
    %2597 = vmatpush1.bf16.msra.mxu0 %v2531
    %2598 = vmatprep.subr.bf16.mxu0 0
    %2599 = vmatpush1.bf16.msra.mxu0 %v2532
    %2600 = vmatprep.subr.bf16.mxu0 0
    %2601 = vmatpush1.bf16.msra.mxu0 %v2533
    %2602 = vmatprep.subr.bf16.mxu0 0
    %2603 = vmatpush1.bf16.msra.mxu0 %v2534
    %2604 = vmatprep.subr.bf16.mxu0 0
    %2605 = vmatpush1.bf16.msra.mxu0 %v2535
    %2606 = vmatprep.subr.bf16.mxu0 0
    %2607 = vmatpush1.bf16.msra.mxu0 %v2536
    %2608 = vmatprep.subr.bf16.mxu0 0
    %2609 = vmatpush1.bf16.msra.mxu0 %v2537
    %2610 = vmatprep.subr.bf16.mxu0 0
    %2611 = vmatpush1.bf16.msra.mxu0 %v2538
    %2612 = vmatprep.subr.bf16.mxu0 0
    %2613 = vmatpush1.bf16.msra.mxu0 %v2539
    %2614 = vmatprep.subr.bf16.mxu0 0
    %2615 = vmatpush1.bf16.msra.mxu0 %v2540
    %2616 = vmatprep.subr.bf16.mxu0 0
    %2617 = vmatpush1.bf16.msra.mxu0 %v2541
    %2618 = vmatprep.subr.bf16.mxu0 0
    %2619 = vmatpush1.bf16.msra.mxu0 %v2542
    %2620 = vmatprep.subr.bf16.mxu0 0
    %2621 = vmatpush1.bf16.msra.mxu0 %v2543
    %2622 = vmatprep.subr.bf16.mxu0 0
    %2623 = vmatpush1.bf16.msra.mxu0 %v2544
    %2624 = vmatprep.subr.bf16.mxu0 0
    %2625 = vmatpush1.bf16.msra.mxu0 %v2545
    %2626 = vmatprep.mubr.bf16.mxu0 %v2393
    %2627 = vmatmul.mubr.bf16.gmra.mrb[0].mxu0 %v2392
    %v2628 = vpop.f32.mrb[0].mxu0
    %v2629 = vadd.f32 %v2400, %v2628
    %v2630 = vpop.f32.mrb[0].mxu0
    %v2631 = vpop.f32.mrb[0].mxu0
    %v2632 = vadd.f32 %v2400, %v2631
    %v2633 = vpop.f32.mrb[0].mxu0
    %2634 = vdwg.mxu0
    %2635 = vmatprep.subr.bf16.mxu0 0
    %2636 = vmatpush1.bf16.msra.mxu0 %v2546
    %2637 = vmatprep.subr.bf16.mxu0 0
    %2638 = vmatpush1.bf16.msra.mxu0 %v2547
    %2639 = vmatprep.subr.bf16.mxu0 0
    %2640 = vmatpush1.bf16.msra.mxu0 %v2548
    %2641 = vmatprep.subr.bf16.mxu0 0
    %2642 = vmatpush1.bf16.msra.mxu0 %v2549
    %2643 = vmatprep.subr.bf16.mxu0 0
    %2644 = vmatpush1.bf16.msra.mxu0 %v2550
    %2645 = vmatprep.subr.bf16.mxu0 0
    %2646 = vmatpush1.bf16.msra.mxu0 %v2551
    %2647 = vmatprep.subr.bf16.mxu0 0
    %2648 = vmatpush1.bf16.msra.mxu0 %v2552
    %2649 = vmatprep.subr.bf16.mxu0 0
    %2650 = vmatpush1.bf16.msra.mxu0 %v2553
    %2651 = vmatprep.subr.bf16.mxu0 0
    %2652 = vmatpush1.bf16.msra.mxu0 %v2554
    %2653 = vmatprep.subr.bf16.mxu0 0
    %2654 = vmatpush1.bf16.msra.mxu0 %v2555
    %2655 = vmatprep.subr.bf16.mxu0 0
    %2656 = vmatpush1.bf16.msra.mxu0 %v2556
    %2657 = vmatprep.subr.bf16.mxu0 0
    %2658 = vmatpush1.bf16.msra.mxu0 %v2557
    %2659 = vmatprep.subr.bf16.mxu0 0
    %2660 = vmatpush1.bf16.msra.mxu0 %v2558
    %2661 = vmatprep.subr.bf16.mxu0 0
    %2662 = vmatpush1.bf16.msra.mxu0 %v2559
    %2663 = vmatprep.subr.bf16.mxu0 0
    %2664 = vmatpush1.bf16.msra.mxu0 %v2560
    %2665 = vmatprep.subr.bf16.mxu0 0
    %2666 = vmatpush1.bf16.msra.mxu0 %v2561
    %2667 = vmatprep.mubr.bf16.mxu0 %v2395
    %2668 = vmatmul.mubr.bf16.gmra.mrb[0].mxu0 %v2394
    %v2669 = vpop.f32.mrb[0].mxu0
    %v2670 = vadd.f32 %v2629, %v2669
    %v2671 = vpop.f32.mrb[0].mxu0
    %v2672 = vpop.f32.mrb[0].mxu0
    %v2673 = vadd.f32 %v2632, %v2672
    %v2674 = vpop.f32.mrb[0].mxu0
    %2675 = vdwg.mxu0
    %v2676 = vadd.f32 %v2670, %v1952
    %v2677 = vadd.f32 %v2673, %v1953
    %v2678 = vld [vmem:[%s14] sm:$0x1]
    %v2679 = vld [vmem:[%s15] sm:$0x1]
    %2680 = vadd.xlane.f32.xlu0 %v2676
    %v2681 = vpop.xlane.xlu0 %2680
    %2682 = vadd.xlane.f32.xlu0 %v2677
    %v2683 = vpop.xlane.xlu0 %2682
    %v2684 = vmul.f32 %v2681, %v129
    %v2685 = vmul.f32 %v2683, %v129
    %v2686 = vsub.f32 %v2676, %v2684
    %v2687 = vsub.f32 %v2677, %v2685
    %v2688 = vmul.f32 %v2686, %v2686
    %v2689 = vmul.f32 %v2687, %v2687
    %2690 = vadd.xlane.f32.xlu0 %v2688
    %v2691 = vpop.xlane.xlu0 %2690
    %2692 = vadd.xlane.f32.xlu0 %v2689
    %v2693 = vpop.xlane.xlu0 %2692
    %v2694 = vmul.f32 %v2691, %v129
    %v2695 = vmul.f32 %v2693, %v129
    %v2696 = vadd.f32 %v2694, 1e-12
    %v2697 = vadd.f32 %v2695, 1e-12
    %v2698 = vrsqrt.pop %v2696
    %v2699 = vrsqrt.pop %v2697
    %v2700 = vmul.f32 %v2686, %v2698
    %v2701 = vmul.f32 %v2687, %v2699
    %v2703 = vlaneseq
    %v2704 = vshrl.u32 %v2703, 7
    %v2705 = vsub.s32 0, %v2704
    %v2706 = vrot.slane %v2678, %v2705
    %v2708 = vmul.f32 %v2700, %v2706
    %v2709 = vmul.f32 %v2701, %v2706
    %v2711 = vlaneseq
    %v2712 = vshrl.u32 %v2711, 7
    %v2713 = vsub.s32 0, %v2712
    %v2714 = vrot.slane %v2679, %v2713
    %v2716 = vadd.f32 %v2708, %v2714
    %v2717 = vadd.f32 %v2709, %v2714
    %s2718 = scalar_lea.vmem %s4, 192
    %v2719 = vld [vmem:[%s2718] sm:$0xff]
    %v2720 = vld [vmem:[%s2718 + $0x8] sm:$0xf]
    %v2721 = vld [vmem:[%s2718 + $0xc] sm:$0xff]
    %v2722 = vld [vmem:[%s2718 + $0x14] sm:$0xf]
    %v2723 = vld [vmem:[%s2718 + $0x18] sm:$0xff]
    %v2724 = vld [vmem:[%s2718 + $0x20] sm:$0xf]
    %v2725 = vld [vmem:[%s2718 + $0x24] sm:$0xff]
    %v2726 = vld [vmem:[%s2718 + $0x2c] sm:$0xf]
    %v2727 = vld [vmem:[%s2718 + $0x30] sm:$0xff]
    %v2728 = vld [vmem:[%s2718 + $0x38] sm:$0xf]
    %v2729 = vld [vmem:[%s2718 + $0x3c] sm:$0xff]
    %v2730 = vld [vmem:[%s2718 + $0x44] sm:$0xf]
    %v2731 = vld [vmem:[%s2718 + $0x48] sm:$0xff]
    %v2732 = vld [vmem:[%s2718 + $0x50] sm:$0xf]
    %v2733 = vld [vmem:[%s2718 + $0x54] sm:$0xff]
    %v2734 = vld [vmem:[%s2718 + $0x5c] sm:$0xf]
    %v2735 = vld [vmem:[%s2718 + $0x60] sm:$0xff]
    %v2736 = vld [vmem:[%s2718 + $0x68] sm:$0xf]
    %v2737 = vld [vmem:[%s2718 + $0x6c] sm:$0xff]
    %v2738 = vld [vmem:[%s2718 + $0x74] sm:$0xf]
    %v2739 = vld [vmem:[%s2718 + $0x78] sm:$0xff]
    %v2740 = vld [vmem:[%s2718 + $0x80] sm:$0xf]
    %v2741 = vld [vmem:[%s2718 + $0x84] sm:$0xff]
    %v2742 = vld [vmem:[%s2718 + $0x8c] sm:$0xf]
    %v2743 = vld [vmem:[%s2718 + $0x90] sm:$0xff]
    %v2744 = vld [vmem:[%s2718 + $0x98] sm:$0xf]
    %v2745 = vld [vmem:[%s2718 + $0x9c] sm:$0xff]
    %v2746 = vld [vmem:[%s2718 + $0xa4] sm:$0xf]
    %v2747 = vld [vmem:[%s2718 + $0xa8] sm:$0xff]
    %v2748 = vld [vmem:[%s2718 + $0xb0] sm:$0xf]
    %v2749 = vld [vmem:[%s2718 + $0xb4] sm:$0xff]
    %v2750 = vld [vmem:[%s2718 + $0xbc] sm:$0xf]
    %s2751 = scalar_lea.vmem %s5, 3
    %v2752 = vld [vmem:[%s2751] sm:$0x7]
    %v2753 = vpack.c.bf16 %v2717, %v2716
    %v2755 = vlaneseq
    %v2756 = vshrl.u32 %v2755, 7
    %v2757 = vsub.s32 0, %v2756
    %v2758 = vrot.slane %v2752, %v2757
    %v2759 = vlaneseq
    %v2760 = vshrl.u32 %v2759, 7
    %v2761 = vsub.s32 1, %v2760
    %v2762 = vrot.slane %v2752, %v2761
    %v2763 = vlaneseq
    %v2764 = vshrl.u32 %v2763, 7
    %v2765 = vsub.s32 2, %v2764
    %v2766 = vrot.slane %v2752, %v2765
    %v2802 = vunpack.c.l.b16 %v2719
    %v2803 = vunpack.c.h.b16 %v2719
    %v2804 = vunpack.c.l.b16 %v2720
    %v2805 = vunpack.c.l.b16 %v2721
    %v2806 = vunpack.c.h.b16 %v2721
    %v2807 = vunpack.c.l.b16 %v2722
    %v2808 = vunpack.c.l.b16 %v2723
    %v2809 = vunpack.c.h.b16 %v2723
    %v2810 = vunpack.c.l.b16 %v2724
    %v2811 = vunpack.c.l.b16 %v2725
    %v2812 = vunpack.c.h.b16 %v2725
    %v2813 = vunpack.c.l.b16 %v2726
    %v2814 = vunpack.c.l.b16 %v2727
    %v2815 = vunpack.c.h.b16 %v2727
    %v2816 = vunpack.c.l.b16 %v2728
    %v2817 = vunpack.c.l.b16 %v2729
    %v2818 = vunpack.c.h.b16 %v2729
    %v2819 = vunpack.c.l.b16 %v2730
    %v2820 = vunpack.c.l.b16 %v2731
    %v2821 = vunpack.c.h.b16 %v2731
    %v2822 = vunpack.c.l.b16 %v2732
    %v2823 = vunpack.c.l.b16 %v2733
    %v2824 = vunpack.c.h.b16 %v2733
    %v2825 = vunpack.c.l.b16 %v2734
    %v2826 = vunpack.c.l.b16 %v2735
    %v2827 = vunpack.c.h.b16 %v2735
    %v2828 = vunpack.c.l.b16 %v2736
    %v2829 = vunpack.c.l.b16 %v2737
    %v2830 = vunpack.c.h.b16 %v2737
    %v2831 = vunpack.c.l.b16 %v2738
    %v2832 = vunpack.c.l.b16 %v2739
    %v2833 = vunpack.c.h.b16 %v2739
    %v2834 = vunpack.c.l.b16 %v2740
    %v2835 = vunpack.c.l.b16 %v2741
    %v2836 = vunpack.c.h.b16 %v2741
    %v2837 = vunpack.c.l.b16 %v2742
    %v2838 = vunpack.c.l.b16 %v2743
    %v2839 = vunpack.c.h.b16 %v2743
    %v2840 = vunpack.c.l.b16 %v2744
    %v2841 = vunpack.c.l.b16 %v2745
    %v2842 = vunpack.c.h.b16 %v2745
    %v2843 = vunpack.c.l.b16 %v2746
    %v2844 = vunpack.c.l.b16 %v2747
    %v2845 = vunpack.c.h.b16 %v2747
    %v2846 = vunpack.c.l.b16 %v2748
    %v2847 = vunpack.c.l.b16 %v2749
    %v2848 = vunpack.c.h.b16 %v2749
    %v2849 = vunpack.c.l.b16 %v2750
    %v2850 = vpack.c.b16 %v2805, %v2802
    %v2851 = vpack.c.b16 %v2806, %v2803
    %v2852 = vpack.c.b16 %v2807, %v2804
    %v2853 = vpack.c.b16 %v2811, %v2808
    %v2854 = vpack.c.b16 %v2812, %v2809
    %v2855 = vpack.c.b16 %v2813, %v2810
    %v2856 = vpack.c.b16 %v2817, %v2814
    %v2857 = vpack.c.b16 %v2818, %v2815
    %v2858 = vpack.c.b16 %v2819, %v2816
    %v2859 = vpack.c.b16 %v2823, %v2820
    %v2860 = vpack.c.b16 %v2824, %v2821
    %v2861 = vpack.c.b16 %v2825, %v2822
    %v2862 = vpack.c.b16 %v2829, %v2826
    %v2863 = vpack.c.b16 %v2830, %v2827
    %v2864 = vpack.c.b16 %v2831, %v2828
    %v2865 = vpack.c.b16 %v2835, %v2832
    %v2866 = vpack.c.b16 %v2836, %v2833
    %v2867 = vpack.c.b16 %v2837, %v2834
    %v2868 = vpack.c.b16 %v2841, %v2838
    %v2869 = vpack.c.b16 %v2842, %v2839
    %v2870 = vpack.c.b16 %v2843, %v2840
    %v2871 = vpack.c.b16 %v2847, %v2844
    %v2872 = vpack.c.b16 %v2848, %v2845
    %v2873 = vpack.c.b16 %v2849, %v2846
    %2898 = vmatprep.subr.bf16.mxu0 %v2851
    %2899 = vmatpush1.bf16.msra.mxu0 %v2850
    %2900 = vmatprep.subr.bf16.mxu0 %v2854
    %2901 = vmatpush1.bf16.msra.mxu0 %v2853
    %2902 = vmatprep.subr.bf16.mxu0 %v2857
    %2903 = vmatpush1.bf16.msra.mxu0 %v2856
    %2904 = vmatprep.subr.bf16.mxu0 %v2860
    %2905 = vmatpush1.bf16.msra.mxu0 %v2859
    %2906 = vmatprep.subr.bf16.mxu0 %v2863
    %2907 = vmatpush1.bf16.msra.mxu0 %v2862
    %2908 = vmatprep.subr.bf16.mxu0 %v2866
    %2909 = vmatpush1.bf16.msra.mxu0 %v2865
    %2910 = vmatprep.subr.bf16.mxu0 %v2869
    %2911 = vmatpush1.bf16.msra.mxu0 %v2868
    %2912 = vmatprep.subr.bf16.mxu0 %v2872
    %2913 = vmatpush1.bf16.msra.mxu0 %v2871
    %2914 = vmatprep.subr.bf16.mxu0 0
    %2915 = vmatpush1.bf16.msra.mxu0 0
    %2916 = vmatprep.subr.bf16.mxu0 0
    %2917 = vmatpush1.bf16.msra.mxu0 0
    %2918 = vmatprep.subr.bf16.mxu0 0
    %2919 = vmatpush1.bf16.msra.mxu0 0
    %2920 = vmatprep.subr.bf16.mxu0 0
    %2921 = vmatpush1.bf16.msra.mxu0 0
    %2922 = vmatprep.subr.bf16.mxu0 0
    %2923 = vmatpush1.bf16.msra.mxu0 0
    %2924 = vmatprep.subr.bf16.mxu0 0
    %2925 = vmatpush1.bf16.msra.mxu0 0
    %2926 = vmatprep.subr.bf16.mxu0 0
    %2927 = vmatpush1.bf16.msra.mxu0 0
    %2928 = vmatprep.subr.bf16.mxu0 0
    %2929 = vmatpush1.bf16.msra.mxu0 0
    %2930 = vmatprep.mubr.bf16.mxu0 0
    %2931 = vmatmul.mubr.bf16.gmra.mrb[0].mxu0 %v2753
    %v2932 = vpop.f32.mrb[0].mxu0
    %v2933 = vadd.f32 %v2758, %v2932
    %v2934 = vpop.f32.mrb[0].mxu0
    %v2935 = vadd.f32 %v2762, %v2934
    %v2936 = vpop.f32.mrb[0].mxu0
    %v2937 = vadd.f32 %v2758, %v2936
    %v2938 = vpop.f32.mrb[0].mxu0
    %v2939 = vadd.f32 %v2762, %v2938
    %2940 = vdwg.mxu0
    %2941 = vmatprep.subr.bf16.mxu0 0
    %2942 = vmatpush1.bf16.msra.mxu0 %v2852
    %2943 = vmatprep.subr.bf16.mxu0 0
    %2944 = vmatpush1.bf16.msra.mxu0 %v2855
    %2945 = vmatprep.subr.bf16.mxu0 0
    %2946 = vmatpush1.bf16.msra.mxu0 %v2858
    %2947 = vmatprep.subr.bf16.mxu0 0
    %2948 = vmatpush1.bf16.msra.mxu0 %v2861
    %2949 = vmatprep.subr.bf16.mxu0 0
    %2950 = vmatpush1.bf16.msra.mxu0 %v2864
    %2951 = vmatprep.subr.bf16.mxu0 0
    %2952 = vmatpush1.bf16.msra.mxu0 %v2867
    %2953 = vmatprep.subr.bf16.mxu0 0
    %2954 = vmatpush1.bf16.msra.mxu0 %v2870
    %2955 = vmatprep.subr.bf16.mxu0 0
    %2956 = vmatpush1.bf16.msra.mxu0 %v2873
    %2957 = vmatprep.subr.bf16.mxu0 0
    %2958 = vmatpush1.bf16.msra.mxu0 0
    %2959 = vmatprep.subr.bf16.mxu0 0
    %2960 = vmatpush1.bf16.msra.mxu0 0
    %2961 = vmatprep.subr.bf16.mxu0 0
    %2962 = vmatpush1.bf16.msra.mxu0 0
    %2963 = vmatprep.subr.bf16.mxu0 0
    %2964 = vmatpush1.bf16.msra.mxu0 0
    %2965 = vmatprep.subr.bf16.mxu0 0
    %2966 = vmatpush1.bf16.msra.mxu0 0
    %2967 = vmatprep.subr.bf16.mxu0 0
    %2968 = vmatpush1.bf16.msra.mxu0 0
    %2969 = vmatprep.subr.bf16.mxu0 0
    %2970 = vmatpush1.bf16.msra.mxu0 0
    %2971 = vmatprep.subr.bf16.mxu0 0
    %2972 = vmatpush1.bf16.msra.mxu0 0
    %2973 = vmatprep.mubr.bf16.mxu0 0
    %2974 = vmatmul.mubr.bf16.gmra.mrb[0].mxu0 %v2753
    %v2975 = vpop.f32.mrb[0].mxu0
    %v2976 = vadd.f32 %v2766, %v2975
    %v2977 = vpop.f32.mrb[0].mxu0
    %v2978 = vpop.f32.mrb[0].mxu0
    %v2979 = vadd.f32 %v2766, %v2978
    %v2980 = vpop.f32.mrb[0].mxu0
    %2981 = vdwg.mxu0
    %v2983 = vsel %vm429, %v2933, 0
    %v2986 = vsel %vm429, %v2935, 0
    %2988 = vmatprep.subr.mxu0 0.0
    %2989 = vmatpush1.xpose.msra.mxu0 %v2986
    %2990 = vmatprep.subr.mxu0 0.0
    %2991 = vmatpush1.xpose.msra.mxu0 0.0
    %2992 = vmatprep.subr.mxu0 0.0
    %2993 = vmatpush1.xpose.msra.mxu0 0.0
    %2994 = vmatprep.subr.mxu0 0.0
    %2995 = vmatpush1.xpose.msra.mxu0 0.0
    %2996 = vmatprep.subr.mxu0 0.0
    %2997 = vmatpush1.xpose.msra.mxu0 0.0
    %2998 = vmatprep.subr.mxu0 0.0
    %2999 = vmatpush1.xpose.msra.mxu0 0.0
    %3000 = vmatprep.subr.mxu0 0.0
    %3001 = vmatpush1.xpose.msra.mxu0 0.0
    %3002 = vmatprep.subr.mxu0 0.0
    %3003 = vmatpush1.xpose.msra.mxu0 0.0
    %3004 = vmatprep.subr.mxu0 0.0
    %3005 = vmatpush1.xpose.msra.mxu0 0.0
    %3006 = vmatprep.subr.mxu0 0.0
    %3007 = vmatpush1.xpose.msra.mxu0 0.0
    %3008 = vmatprep.subr.mxu0 0.0
    %3009 = vmatpush1.xpose.msra.mxu0 0.0
    %3010 = vmatprep.subr.mxu0 0.0
    %3011 = vmatpush1.xpose.msra.mxu0 0.0
    %3012 = vmatprep.subr.mxu0 0.0
    %3013 = vmatpush1.xpose.msra.mxu0 0.0
    %3014 = vmatprep.subr.mxu0 0.0
    %3015 = vmatpush1.xpose.msra.mxu0 0.0
    %3016 = vmatprep.subr.mxu0 0.0
    %3017 = vmatpush1.xpose.msra.mxu0 0.0
    %3018 = vmatprep.subr.mxu0 0.0
    %3019 = vmatpush1.xpose.msra.mxu0 0.0
    %3020 = vmatprep.subr.mxu0 0.0
    %3021 = vmatpush1.xpose.msra.mxu0 0.0
    %3022 = vmatprep.subr.mxu0 0.0
    %3023 = vmatpush1.xpose.msra.mxu0 0.0
    %3024 = vmatprep.subr.mxu0 0.0
    %3025 = vmatpush1.xpose.msra.mxu0 0.0
    %3026 = vmatprep.subr.mxu0 0.0
    %3027 = vmatpush1.xpose.msra.mxu0 0.0
    %3028 = vmatprep.subr.mxu0 0.0
    %3029 = vmatpush1.xpose.msra.mxu0 0.0
    %3030 = vmatprep.subr.mxu0 0.0
    %3031 = vmatpush1.xpose.msra.mxu0 0.0
    %3032 = vmatprep.subr.mxu0 0.0
    %3033 = vmatpush1.xpose.msra.mxu0 0.0
    %3034 = vmatprep.subr.mxu0 0.0
    %3035 = vmatpush1.xpose.msra.mxu0 0.0
    %3036 = vmatprep.subr.mxu0 0.0
    %3037 = vmatpush1.xpose.msra.mxu0 0.0
    %3038 = vmatprep.subr.mxu0 0.0
    %3039 = vmatpush1.xpose.msra.mxu0 0.0
    %3040 = vmatprep.subr.mxu0 0.0
    %3041 = vmatpush1.xpose.msra.mxu0 0.0
    %3042 = vmatprep.subr.mxu0 0.0
    %3043 = vmatpush1.xpose.msra.mxu0 0.0
    %3044 = vmatprep.subr.mxu0 0.0
    %3045 = vmatpush1.xpose.msra.mxu0 0.0
    %3046 = vmatprep.subr.mxu0 0.0
    %3047 = vmatpush1.xpose.msra.mxu0 0.0
    %3048 = vmatprep.subr.mxu0 0.0
    %3049 = vmatpush1.xpose.msra.mxu0 0.0
    %3050 = vmatprep.subr.mxu0 0.0
    %3051 = vmatpush1.xpose.msra.mxu0 0.0
    %3052 = vmatprep.mubr.f32.mxu0 0.0
    %3053 = vmatmul.mubr.f32.gmra.mrb[0].mxu0 %v2983
    %v3054 = vpop.f32.mrb[0].mxu0
    %v3055 = vadd.f32 0.0, %v3054
    %v3056 = vpop.f32.mrb[0].mxu0
    %3057 = vdwg.mxu0
    %v3058 = vmul.f32 %v3055, 0.17677669
    %v3059 = vadd.f32 %v3058, %v510
    %v3060 = vsel %vm512, %v3059, -inf
    %3061 = vmax.xlane.f32.xlu0 %v3060
    %v3062 = vpop.xlane.xlu0 %3061
    %v3063 = vsub.f32 %v3059, %v3062
    %v3064 = vmul.f32 %v3063, 1.442695
    %v3065 = vpow.pop %v3064
    %v3066 = vsel %vm512, %v3065, 0.0
    %3067 = vadd.xlane.f32.xlu0 %v3066
    %v3068 = vpop.xlane.xlu0 %3067
    %v3069 = vrcp.pop %v3068
    %v3070 = vmul.f32 %v3065, %v3069
    %v3072 = vsel %vm512, %v3070, 0
    %3074 = vmatprep.subr.mxu0 0.0
    %3075 = vmatpush1.msra.mxu0 %v2976
    %3076 = vmatprep.subr.mxu0 0.0
    %3077 = vmatpush1.msra.mxu0 0.0
    %3078 = vmatprep.subr.mxu0 0.0
    %3079 = vmatpush1.msra.mxu0 0.0
    %3080 = vmatprep.subr.mxu0 0.0
    %3081 = vmatpush1.msra.mxu0 0.0
    %3082 = vmatprep.subr.mxu0 0.0
    %3083 = vmatpush1.msra.mxu0 0.0
    %3084 = vmatprep.subr.mxu0 0.0
    %3085 = vmatpush1.msra.mxu0 0.0
    %3086 = vmatprep.subr.mxu0 0.0
    %3087 = vmatpush1.msra.mxu0 0.0
    %3088 = vmatprep.subr.mxu0 0.0
    %3089 = vmatpush1.msra.mxu0 0.0
    %3090 = vmatprep.subr.mxu0 0.0
    %3091 = vmatpush1.msra.mxu0 0.0
    %3092 = vmatprep.subr.mxu0 0.0
    %3093 = vmatpush1.msra.mxu0 0.0
    %3094 = vmatprep.subr.mxu0 0.0
    %3095 = vmatpush1.msra.mxu0 0.0
    %3096 = vmatprep.subr.mxu0 0.0
    %3097 = vmatpush1.msra.mxu0 0.0
    %3098 = vmatprep.subr.mxu0 0.0
    %3099 = vmatpush1.msra.mxu0 0.0
    %3100 = vmatprep.subr.mxu0 0.0
    %3101 = vmatpush1.msra.mxu0 0.0
    %3102 = vmatprep.subr.mxu0 0.0
    %3103 = vmatpush1.msra.mxu0 0.0
    %3104 = vmatprep.subr.mxu0 0.0
    %3105 = vmatpush1.msra.mxu0 0.0
    %3106 = vmatprep.subr.mxu0 0.0
    %3107 = vmatpush1.msra.mxu0 0.0
    %3108 = vmatprep.subr.mxu0 0.0
    %3109 = vmatpush1.msra.mxu0 0.0
    %3110 = vmatprep.subr.mxu0 0.0
    %3111 = vmatpush1.msra.mxu0 0.0
    %3112 = vmatprep.subr.mxu0 0.0
    %3113 = vmatpush1.msra.mxu0 0.0
    %3114 = vmatprep.subr.mxu0 0.0
    %3115 = vmatpush1.msra.mxu0 0.0
    %3116 = vmatprep.subr.mxu0 0.0
    %3117 = vmatpush1.msra.mxu0 0.0
    %3118 = vmatprep.subr.mxu0 0.0
    %3119 = vmatpush1.msra.mxu0 0.0
    %3120 = vmatprep.subr.mxu0 0.0
    %3121 = vmatpush1.msra.mxu0 0.0
    %3122 = vmatprep.subr.mxu0 0.0
    %3123 = vmatpush1.msra.mxu0 0.0
    %3124 = vmatprep.subr.mxu0 0.0
    %3125 = vmatpush1.msra.mxu0 0.0
    %3126 = vmatprep.subr.mxu0 0.0
    %3127 = vmatpush1.msra.mxu0 0.0
    %3128 = vmatprep.subr.mxu0 0.0
    %3129 = vmatpush1.msra.mxu0 0.0
    %3130 = vmatprep.subr.mxu0 0.0
    %3131 = vmatpush1.msra.mxu0 0.0
    %3132 = vmatprep.subr.mxu0 0.0
    %3133 = vmatpush1.msra.mxu0 0.0
    %3134 = vmatprep.subr.mxu0 0.0
    %3135 = vmatpush1.msra.mxu0 0.0
    %3136 = vmatprep.subr.mxu0 0.0
    %3137 = vmatpush1.msra.mxu0 0.0
    %3138 = vmatprep.mubr.f32.mxu0 0.0
    %3139 = vmatmul.mubr.f32.gmra.mrb[0].mxu0 %v3072
    %v3140 = vpop.f32.mrb[0].mxu0
    %v3141 = vadd.f32 0.0, %v3140
    %v3142 = vpop.f32.mrb[0].mxu0
    %3143 = vdwg.mxu0
    %3144 = vrot.lane.b32.xlu0 %v2933, 96
    %v3145 = vpop.permute.xlu0 %3144
    %3146 = vrot.lane.b32.xlu0 %v2935, 96
    %v3147 = vpop.permute.xlu0 %3146
    %v3148 = vsel %vm429, %v3145, 0
    %v3150 = vsel %vm429, %v3147, 0
    %3152 = vmatprep.subr.mxu0 0.0
    %3153 = vmatpush1.xpose.msra.mxu0 %v3150
    %3154 = vmatprep.subr.mxu0 0.0
    %3155 = vmatpush1.xpose.msra.mxu0 0.0
    %3156 = vmatprep.subr.mxu0 0.0
    %3157 = vmatpush1.xpose.msra.mxu0 0.0
    %3158 = vmatprep.subr.mxu0 0.0
    %3159 = vmatpush1.xpose.msra.mxu0 0.0
    %3160 = vmatprep.subr.mxu0 0.0
    %3161 = vmatpush1.xpose.msra.mxu0 0.0
    %3162 = vmatprep.subr.mxu0 0.0
    %3163 = vmatpush1.xpose.msra.mxu0 0.0
    %3164 = vmatprep.subr.mxu0 0.0
    %3165 = vmatpush1.xpose.msra.mxu0 0.0
    %3166 = vmatprep.subr.mxu0 0.0
    %3167 = vmatpush1.xpose.msra.mxu0 0.0
    %3168 = vmatprep.subr.mxu0 0.0
    %3169 = vmatpush1.xpose.msra.mxu0 0.0
    %3170 = vmatprep.subr.mxu0 0.0
    %3171 = vmatpush1.xpose.msra.mxu0 0.0
    %3172 = vmatprep.subr.mxu0 0.0
    %3173 = vmatpush1.xpose.msra.mxu0 0.0
    %3174 = vmatprep.subr.mxu0 0.0
    %3175 = vmatpush1.xpose.msra.mxu0 0.0
    %3176 = vmatprep.subr.mxu0 0.0
    %3177 = vmatpush1.xpose.msra.mxu0 0.0
    %3178 = vmatprep.subr.mxu0 0.0
    %3179 = vmatpush1.xpose.msra.mxu0 0.0
    %3180 = vmatprep.subr.mxu0 0.0
    %3181 = vmatpush1.xpose.msra.mxu0 0.0
    %3182 = vmatprep.subr.mxu0 0.0
    %3183 = vmatpush1.xpose.msra.mxu0 0.0
    %3184 = vmatprep.subr.mxu0 0.0
    %3185 = vmatpush1.xpose.msra.mxu0 0.0
    %3186 = vmatprep.subr.mxu0 0.0
    %3187 = vmatpush1.xpose.msra.mxu0 0.0
    %3188 = vmatprep.subr.mxu0 0.0
    %3189 = vmatpush1.xpose.msra.mxu0 0.0
    %3190 = vmatprep.subr.mxu0 0.0
    %3191 = vmatpush1.xpose.msra.mxu0 0.0
    %3192 = vmatprep.subr.mxu0 0.0
    %3193 = vmatpush1.xpose.msra.mxu0 0.0
    %3194 = vmatprep.subr.mxu0 0.0
    %3195 = vmatpush1.xpose.msra.mxu0 0.0
    %3196 = vmatprep.subr.mxu0 0.0
    %3197 = vmatpush1.xpose.msra.mxu0 0.0
    %3198 = vmatprep.subr.mxu0 0.0
    %3199 = vmatpush1.xpose.msra.mxu0 0.0
    %3200 = vmatprep.subr.mxu0 0.0
    %3201 = vmatpush1.xpose.msra.mxu0 0.0
    %3202 = vmatprep.subr.mxu0 0.0
    %3203 = vmatpush1.xpose.msra.mxu0 0.0
    %3204 = vmatprep.subr.mxu0 0.0
    %3205 = vmatpush1.xpose.msra.mxu0 0.0
    %3206 = vmatprep.subr.mxu0 0.0
    %3207 = vmatpush1.xpose.msra.mxu0 0.0
    %3208 = vmatprep.subr.mxu0 0.0
    %3209 = vmatpush1.xpose.msra.mxu0 0.0
    %3210 = vmatprep.subr.mxu0 0.0
    %3211 = vmatpush1.xpose.msra.mxu0 0.0
    %3212 = vmatprep.subr.mxu0 0.0
    %3213 = vmatpush1.xpose.msra.mxu0 0.0
    %3214 = vmatprep.subr.mxu0 0.0
    %3215 = vmatpush1.xpose.msra.mxu0 0.0
    %3216 = vmatprep.mubr.f32.mxu0 0.0
    %3217 = vmatmul.mubr.f32.gmra.mrb[0].mxu0 %v3148
    %v3218 = vpop.f32.mrb[0].mxu0
    %v3219 = vadd.f32 0.0, %v3218
    %v3220 = vpop.f32.mrb[0].mxu0
    %3221 = vdwg.mxu0
    %v3222 = vmul.f32 %v3219, 0.17677669
    %v3223 = vadd.f32 %v3222, %v510
    %v3224 = vsel %vm512, %v3223, -inf
    %3225 = vmax.xlane.f32.xlu0 %v3224
    %v3226 = vpop.xlane.xlu0 %3225
    %v3227 = vsub.f32 %v3223, %v3226
    %v3228 = vmul.f32 %v3227, 1.442695
    %v3229 = vpow.pop %v3228
    %v3230 = vsel %vm512, %v3229, 0.0
    %3231 = vadd.xlane.f32.xlu0 %v3230
    %v3232 = vpop.xlane.xlu0 %3231
    %v3233 = vrcp.pop %v3232
    %v3234 = vmul.f32 %v3229, %v3233
    %3236 = vrot.lane.b32.xlu0 %v2976, 96
    %v3237 = vpop.permute.xlu0 %3236
    %v3240 = vsel %vm512, %v3234, 0
    %3242 = vmatprep.subr.mxu0 0.0
    %3243 = vmatpush1.msra.mxu0 %v3237
    %3244 = vmatprep.subr.mxu0 0.0
    %3245 = vmatpush1.msra.mxu0 0.0
    %3246 = vmatprep.subr.mxu0 0.0
    %3247 = vmatpush1.msra.mxu0 0.0
    %3248 = vmatprep.subr.mxu0 0.0
    %3249 = vmatpush1.msra.mxu0 0.0
    %3250 = vmatprep.subr.mxu0 0.0
    %3251 = vmatpush1.msra.mxu0 0.0
    %3252 = vmatprep.subr.mxu0 0.0
    %3253 = vmatpush1.msra.mxu0 0.0
    %3254 = vmatprep.subr.mxu0 0.0
    %3255 = vmatpush1.msra.mxu0 0.0
    %3256 = vmatprep.subr.mxu0 0.0
    %3257 = vmatpush1.msra.mxu0 0.0
    %3258 = vmatprep.subr.mxu0 0.0
    %3259 = vmatpush1.msra.mxu0 0.0
    %3260 = vmatprep.subr.mxu0 0.0
    %3261 = vmatpush1.msra.mxu0 0.0
    %3262 = vmatprep.subr.mxu0 0.0
    %3263 = vmatpush1.msra.mxu0 0.0
    %3264 = vmatprep.subr.mxu0 0.0
    %3265 = vmatpush1.msra.mxu0 0.0
    %3266 = vmatprep.subr.mxu0 0.0
    %3267 = vmatpush1.msra.mxu0 0.0
    %3268 = vmatprep.subr.mxu0 0.0
    %3269 = vmatpush1.msra.mxu0 0.0
    %3270 = vmatprep.subr.mxu0 0.0
    %3271 = vmatpush1.msra.mxu0 0.0
    %3272 = vmatprep.subr.mxu0 0.0
    %3273 = vmatpush1.msra.mxu0 0.0
    %3274 = vmatprep.subr.mxu0 0.0
    %3275 = vmatpush1.msra.mxu0 0.0
    %3276 = vmatprep.subr.mxu0 0.0
    %3277 = vmatpush1.msra.mxu0 0.0
    %3278 = vmatprep.subr.mxu0 0.0
    %3279 = vmatpush1.msra.mxu0 0.0
    %3280 = vmatprep.subr.mxu0 0.0
    %3281 = vmatpush1.msra.mxu0 0.0
    %3282 = vmatprep.subr.mxu0 0.0
    %3283 = vmatpush1.msra.mxu0 0.0
    %3284 = vmatprep.subr.mxu0 0.0
    %3285 = vmatpush1.msra.mxu0 0.0
    %3286 = vmatprep.subr.mxu0 0.0
    %3287 = vmatpush1.msra.mxu0 0.0
    %3288 = vmatprep.subr.mxu0 0.0
    %3289 = vmatpush1.msra.mxu0 0.0
    %3290 = vmatprep.subr.mxu0 0.0
    %3291 = vmatpush1.msra.mxu0 0.0
    %3292 = vmatprep.subr.mxu0 0.0
    %3293 = vmatpush1.msra.mxu0 0.0
    %3294 = vmatprep.subr.mxu0 0.0
    %3295 = vmatpush1.msra.mxu0 0.0
    %3296 = vmatprep.subr.mxu0 0.0
    %3297 = vmatpush1.msra.mxu0 0.0
    %3298 = vmatprep.subr.mxu0 0.0
    %3299 = vmatpush1.msra.mxu0 0.0
    %3300 = vmatprep.subr.mxu0 0.0
    %3301 = vmatpush1.msra.mxu0 0.0
    %3302 = vmatprep.subr.mxu0 0.0
    %3303 = vmatpush1.msra.mxu0 0.0
    %3304 = vmatprep.subr.mxu0 0.0
    %3305 = vmatpush1.msra.mxu0 0.0
    %3306 = vmatprep.mubr.f32.mxu0 0.0
    %3307 = vmatmul.mubr.f32.gmra.mrb[0].mxu0 %v3240
    %v3308 = vpop.f32.mrb[0].mxu0
    %v3309 = vadd.f32 0.0, %v3308
    %v3310 = vpop.f32.mrb[0].mxu0
    %3311 = vdwg.mxu0
    %3312 = vrot.lane.b32.xlu0 %v2933, 64
    %v3313 = vpop.permute.xlu0 %3312
    %3314 = vrot.lane.b32.xlu0 %v2935, 64
    %v3315 = vpop.permute.xlu0 %3314
    %v3316 = vsel %vm429, %v3313, 0
    %v3318 = vsel %vm429, %v3315, 0
    %3320 = vmatprep.subr.mxu0 0.0
    %3321 = vmatpush1.xpose.msra.mxu0 %v3318
    %3322 = vmatprep.subr.mxu0 0.0
    %3323 = vmatpush1.xpose.msra.mxu0 0.0
    %3324 = vmatprep.subr.mxu0 0.0
    %3325 = vmatpush1.xpose.msra.mxu0 0.0
    %3326 = vmatprep.subr.mxu0 0.0
    %3327 = vmatpush1.xpose.msra.mxu0 0.0
    %3328 = vmatprep.subr.mxu0 0.0
    %3329 = vmatpush1.xpose.msra.mxu0 0.0
    %3330 = vmatprep.subr.mxu0 0.0
    %3331 = vmatpush1.xpose.msra.mxu0 0.0
    %3332 = vmatprep.subr.mxu0 0.0
    %3333 = vmatpush1.xpose.msra.mxu0 0.0
    %3334 = vmatprep.subr.mxu0 0.0
    %3335 = vmatpush1.xpose.msra.mxu0 0.0
    %3336 = vmatprep.subr.mxu0 0.0
    %3337 = vmatpush1.xpose.msra.mxu0 0.0
    %3338 = vmatprep.subr.mxu0 0.0
    %3339 = vmatpush1.xpose.msra.mxu0 0.0
    %3340 = vmatprep.subr.mxu0 0.0
    %3341 = vmatpush1.xpose.msra.mxu0 0.0
    %3342 = vmatprep.subr.mxu0 0.0
    %3343 = vmatpush1.xpose.msra.mxu0 0.0
    %3344 = vmatprep.subr.mxu0 0.0
    %3345 = vmatpush1.xpose.msra.mxu0 0.0
    %3346 = vmatprep.subr.mxu0 0.0
    %3347 = vmatpush1.xpose.msra.mxu0 0.0
    %3348 = vmatprep.subr.mxu0 0.0
    %3349 = vmatpush1.xpose.msra.mxu0 0.0
    %3350 = vmatprep.subr.mxu0 0.0
    %3351 = vmatpush1.xpose.msra.mxu0 0.0
    %3352 = vmatprep.subr.mxu0 0.0
    %3353 = vmatpush1.xpose.msra.mxu0 0.0
    %3354 = vmatprep.subr.mxu0 0.0
    %3355 = vmatpush1.xpose.msra.mxu0 0.0
    %3356 = vmatprep.subr.mxu0 0.0
    %3357 = vmatpush1.xpose.msra.mxu0 0.0
    %3358 = vmatprep.subr.mxu0 0.0
    %3359 = vmatpush1.xpose.msra.mxu0 0.0
    %3360 = vmatprep.subr.mxu0 0.0
    %3361 = vmatpush1.xpose.msra.mxu0 0.0
    %3362 = vmatprep.subr.mxu0 0.0
    %3363 = vmatpush1.xpose.msra.mxu0 0.0
    %3364 = vmatprep.subr.mxu0 0.0
    %3365 = vmatpush1.xpose.msra.mxu0 0.0
    %3366 = vmatprep.subr.mxu0 0.0
    %3367 = vmatpush1.xpose.msra.mxu0 0.0
    %3368 = vmatprep.subr.mxu0 0.0
    %3369 = vmatpush1.xpose.msra.mxu0 0.0
    %3370 = vmatprep.subr.mxu0 0.0
    %3371 = vmatpush1.xpose.msra.mxu0 0.0
    %3372 = vmatprep.subr.mxu0 0.0
    %3373 = vmatpush1.xpose.msra.mxu0 0.0
    %3374 = vmatprep.subr.mxu0 0.0
    %3375 = vmatpush1.xpose.msra.mxu0 0.0
    %3376 = vmatprep.subr.mxu0 0.0
    %3377 = vmatpush1.xpose.msra.mxu0 0.0
    %3378 = vmatprep.subr.mxu0 0.0
    %3379 = vmatpush1.xpose.msra.mxu0 0.0
    %3380 = vmatprep.subr.mxu0 0.0
    %3381 = vmatpush1.xpose.msra.mxu0 0.0
    %3382 = vmatprep.subr.mxu0 0.0
    %3383 = vmatpush1.xpose.msra.mxu0 0.0
    %3384 = vmatprep.mubr.f32.mxu0 0.0
    %3385 = vmatmul.mubr.f32.gmra.mrb[0].mxu0 %v3316
    %v3386 = vpop.f32.mrb[0].mxu0
    %v3387 = vadd.f32 0.0, %v3386
    %v3388 = vpop.f32.mrb[0].mxu0
    %3389 = vdwg.mxu0
    %v3390 = vmul.f32 %v3387, 0.17677669
    %v3391 = vadd.f32 %v3390, %v510
    %v3392 = vsel %vm512, %v3391, -inf
    %3393 = vmax.xlane.f32.xlu0 %v3392
    %v3394 = vpop.xlane.xlu0 %3393
    %v3395 = vsub.f32 %v3391, %v3394
    %v3396 = vmul.f32 %v3395, 1.442695
    %v3397 = vpow.pop %v3396
    %v3398 = vsel %vm512, %v3397, 0.0
    %3399 = vadd.xlane.f32.xlu0 %v3398
    %v3400 = vpop.xlane.xlu0 %3399
    %v3401 = vrcp.pop %v3400
    %v3402 = vmul.f32 %v3397, %v3401
    %3403 = vrot.lane.b32.xlu0 %v2976, 64
    %v3404 = vpop.permute.xlu0 %3403
    %v3407 = vsel %vm512, %v3402, 0
    %3409 = vmatprep.subr.mxu0 0.0
    %3410 = vmatpush1.msra.mxu0 %v3404
    %3411 = vmatprep.subr.mxu0 0.0
    %3412 = vmatpush1.msra.mxu0 0.0
    %3413 = vmatprep.subr.mxu0 0.0
    %3414 = vmatpush1.msra.mxu0 0.0
    %3415 = vmatprep.subr.mxu0 0.0
    %3416 = vmatpush1.msra.mxu0 0.0
    %3417 = vmatprep.subr.mxu0 0.0
    %3418 = vmatpush1.msra.mxu0 0.0
    %3419 = vmatprep.subr.mxu0 0.0
    %3420 = vmatpush1.msra.mxu0 0.0
    %3421 = vmatprep.subr.mxu0 0.0
    %3422 = vmatpush1.msra.mxu0 0.0
    %3423 = vmatprep.subr.mxu0 0.0
    %3424 = vmatpush1.msra.mxu0 0.0
    %3425 = vmatprep.subr.mxu0 0.0
    %3426 = vmatpush1.msra.mxu0 0.0
    %3427 = vmatprep.subr.mxu0 0.0
    %3428 = vmatpush1.msra.mxu0 0.0
    %3429 = vmatprep.subr.mxu0 0.0
    %3430 = vmatpush1.msra.mxu0 0.0
    %3431 = vmatprep.subr.mxu0 0.0
    %3432 = vmatpush1.msra.mxu0 0.0
    %3433 = vmatprep.subr.mxu0 0.0
    %3434 = vmatpush1.msra.mxu0 0.0
    %3435 = vmatprep.subr.mxu0 0.0
    %3436 = vmatpush1.msra.mxu0 0.0
    %3437 = vmatprep.subr.mxu0 0.0
    %3438 = vmatpush1.msra.mxu0 0.0
    %3439 = vmatprep.subr.mxu0 0.0
    %3440 = vmatpush1.msra.mxu0 0.0
    %3441 = vmatprep.subr.mxu0 0.0
    %3442 = vmatpush1.msra.mxu0 0.0
    %3443 = vmatprep.subr.mxu0 0.0
    %3444 = vmatpush1.msra.mxu0 0.0
    %3445 = vmatprep.subr.mxu0 0.0
    %3446 = vmatpush1.msra.mxu0 0.0
    %3447 = vmatprep.subr.mxu0 0.0
    %3448 = vmatpush1.msra.mxu0 0.0
    %3449 = vmatprep.subr.mxu0 0.0
    %3450 = vmatpush1.msra.mxu0 0.0
    %3451 = vmatprep.subr.mxu0 0.0
    %3452 = vmatpush1.msra.mxu0 0.0
    %3453 = vmatprep.subr.mxu0 0.0
    %3454 = vmatpush1.msra.mxu0 0.0
    %3455 = vmatprep.subr.mxu0 0.0
    %3456 = vmatpush1.msra.mxu0 0.0
    %3457 = vmatprep.subr.mxu0 0.0
    %3458 = vmatpush1.msra.mxu0 0.0
    %3459 = vmatprep.subr.mxu0 0.0
    %3460 = vmatpush1.msra.mxu0 0.0
    %3461 = vmatprep.subr.mxu0 0.0
    %3462 = vmatpush1.msra.mxu0 0.0
    %3463 = vmatprep.subr.mxu0 0.0
    %3464 = vmatpush1.msra.mxu0 0.0
    %3465 = vmatprep.subr.mxu0 0.0
    %3466 = vmatpush1.msra.mxu0 0.0
    %3467 = vmatprep.subr.mxu0 0.0
    %3468 = vmatpush1.msra.mxu0 0.0
    %3469 = vmatprep.subr.mxu0 0.0
    %3470 = vmatpush1.msra.mxu0 0.0
    %3471 = vmatprep.subr.mxu0 0.0
    %3472 = vmatpush1.msra.mxu0 0.0
    %3473 = vmatprep.mubr.f32.mxu0 0.0
    %3474 = vmatmul.mubr.f32.gmra.mrb[0].mxu0 %v3407
    %v3475 = vpop.f32.mrb[0].mxu0
    %v3476 = vadd.f32 0.0, %v3475
    %v3477 = vpop.f32.mrb[0].mxu0
    %3478 = vdwg.mxu0
    %3479 = vrot.lane.b32.xlu0 %v2933, 32
    %v3480 = vpop.permute.xlu0 %3479
    %3481 = vrot.lane.b32.xlu0 %v2935, 32
    %v3482 = vpop.permute.xlu0 %3481
    %v3483 = vsel %vm429, %v3480, 0
    %v3485 = vsel %vm429, %v3482, 0
    %3487 = vmatprep.subr.mxu0 0.0
    %3488 = vmatpush1.xpose.msra.mxu0 %v3485
    %3489 = vmatprep.subr.mxu0 0.0
    %3490 = vmatpush1.xpose.msra.mxu0 0.0
    %3491 = vmatprep.subr.mxu0 0.0
    %3492 = vmatpush1.xpose.msra.mxu0 0.0
    %3493 = vmatprep.subr.mxu0 0.0
    %3494 = vmatpush1.xpose.msra.mxu0 0.0
    %3495 = vmatprep.subr.mxu0 0.0
    %3496 = vmatpush1.xpose.msra.mxu0 0.0
    %3497 = vmatprep.subr.mxu0 0.0
    %3498 = vmatpush1.xpose.msra.mxu0 0.0
    %3499 = vmatprep.subr.mxu0 0.0
    %3500 = vmatpush1.xpose.msra.mxu0 0.0
    %3501 = vmatprep.subr.mxu0 0.0
    %3502 = vmatpush1.xpose.msra.mxu0 0.0
    %3503 = vmatprep.subr.mxu0 0.0
    %3504 = vmatpush1.xpose.msra.mxu0 0.0
    %3505 = vmatprep.subr.mxu0 0.0
    %3506 = vmatpush1.xpose.msra.mxu0 0.0
    %3507 = vmatprep.subr.mxu0 0.0
    %3508 = vmatpush1.xpose.msra.mxu0 0.0
    %3509 = vmatprep.subr.mxu0 0.0
    %3510 = vmatpush1.xpose.msra.mxu0 0.0
    %3511 = vmatprep.subr.mxu0 0.0
    %3512 = vmatpush1.xpose.msra.mxu0 0.0
    %3513 = vmatprep.subr.mxu0 0.0
    %3514 = vmatpush1.xpose.msra.mxu0 0.0
    %3515 = vmatprep.subr.mxu0 0.0
    %3516 = vmatpush1.xpose.msra.mxu0 0.0
    %3517 = vmatprep.subr.mxu0 0.0
    %3518 = vmatpush1.xpose.msra.mxu0 0.0
    %3519 = vmatprep.subr.mxu0 0.0
    %3520 = vmatpush1.xpose.msra.mxu0 0.0
    %3521 = vmatprep.subr.mxu0 0.0
    %3522 = vmatpush1.xpose.msra.mxu0 0.0
    %3523 = vmatprep.subr.mxu0 0.0
    %3524 = vmatpush1.xpose.msra.mxu0 0.0
    %3525 = vmatprep.subr.mxu0 0.0
    %3526 = vmatpush1.xpose.msra.mxu0 0.0
    %3527 = vmatprep.subr.mxu0 0.0
    %3528 = vmatpush1.xpose.msra.mxu0 0.0
    %3529 = vmatprep.subr.mxu0 0.0
    %3530 = vmatpush1.xpose.msra.mxu0 0.0
    %3531 = vmatprep.subr.mxu0 0.0
    %3532 = vmatpush1.xpose.msra.mxu0 0.0
    %3533 = vmatprep.subr.mxu0 0.0
    %3534 = vmatpush1.xpose.msra.mxu0 0.0
    %3535 = vmatprep.subr.mxu0 0.0
    %3536 = vmatpush1.xpose.msra.mxu0 0.0
    %3537 = vmatprep.subr.mxu0 0.0
    %3538 = vmatpush1.xpose.msra.mxu0 0.0
    %3539 = vmatprep.subr.mxu0 0.0
    %3540 = vmatpush1.xpose.msra.mxu0 0.0
    %3541 = vmatprep.subr.mxu0 0.0
    %3542 = vmatpush1.xpose.msra.mxu0 0.0
    %3543 = vmatprep.subr.mxu0 0.0
    %3544 = vmatpush1.xpose.msra.mxu0 0.0
    %3545 = vmatprep.subr.mxu0 0.0
    %3546 = vmatpush1.xpose.msra.mxu0 0.0
    %3547 = vmatprep.subr.mxu0 0.0
    %3548 = vmatpush1.xpose.msra.mxu0 0.0
    %3549 = vmatprep.subr.mxu0 0.0
    %3550 = vmatpush1.xpose.msra.mxu0 0.0
    %3551 = vmatprep.mubr.f32.mxu0 0.0
    %3552 = vmatmul.mubr.f32.gmra.mrb[0].mxu0 %v3483
    %v3553 = vpop.f32.mrb[0].mxu0
    %v3554 = vadd.f32 0.0, %v3553
    %v3555 = vpop.f32.mrb[0].mxu0
    %3556 = vdwg.mxu0
    %v3557 = vmul.f32 %v3554, 0.17677669
    %v3558 = vadd.f32 %v3557, %v510
    %v3559 = vsel %vm512, %v3558, -inf
    %3560 = vmax.xlane.f32.xlu0 %v3559
    %v3561 = vpop.xlane.xlu0 %3560
    %v3562 = vsub.f32 %v3558, %v3561
    %v3563 = vmul.f32 %v3562, 1.442695
    %v3564 = vpow.pop %v3563
    %v3565 = vsel %vm512, %v3564, 0.0
    %3566 = vadd.xlane.f32.xlu0 %v3565
    %v3567 = vpop.xlane.xlu0 %3566
    %v3568 = vrcp.pop %v3567
    %v3569 = vmul.f32 %v3564, %v3568
    %3570 = vrot.lane.b32.xlu0 %v2976, 32
    %v3571 = vpop.permute.xlu0 %3570
    %v3574 = vsel %vm512, %v3569, 0
    %3576 = vmatprep.subr.mxu0 0.0
    %3577 = vmatpush1.msra.mxu0 %v3571
    %3578 = vmatprep.subr.mxu0 0.0
    %3579 = vmatpush1.msra.mxu0 0.0
    %3580 = vmatprep.subr.mxu0 0.0
    %3581 = vmatpush1.msra.mxu0 0.0
    %3582 = vmatprep.subr.mxu0 0.0
    %3583 = vmatpush1.msra.mxu0 0.0
    %3584 = vmatprep.subr.mxu0 0.0
    %3585 = vmatpush1.msra.mxu0 0.0
    %3586 = vmatprep.subr.mxu0 0.0
    %3587 = vmatpush1.msra.mxu0 0.0
    %3588 = vmatprep.subr.mxu0 0.0
    %3589 = vmatpush1.msra.mxu0 0.0
    %3590 = vmatprep.subr.mxu0 0.0
    %3591 = vmatpush1.msra.mxu0 0.0
    %3592 = vmatprep.subr.mxu0 0.0
    %3593 = vmatpush1.msra.mxu0 0.0
    %3594 = vmatprep.subr.mxu0 0.0
    %3595 = vmatpush1.msra.mxu0 0.0
    %3596 = vmatprep.subr.mxu0 0.0
    %3597 = vmatpush1.msra.mxu0 0.0
    %3598 = vmatprep.subr.mxu0 0.0
    %3599 = vmatpush1.msra.mxu0 0.0
    %3600 = vmatprep.subr.mxu0 0.0
    %3601 = vmatpush1.msra.mxu0 0.0
    %3602 = vmatprep.subr.mxu0 0.0
    %3603 = vmatpush1.msra.mxu0 0.0
    %3604 = vmatprep.subr.mxu0 0.0
    %3605 = vmatpush1.msra.mxu0 0.0
    %3606 = vmatprep.subr.mxu0 0.0
    %3607 = vmatpush1.msra.mxu0 0.0
    %3608 = vmatprep.subr.mxu0 0.0
    %3609 = vmatpush1.msra.mxu0 0.0
    %3610 = vmatprep.subr.mxu0 0.0
    %3611 = vmatpush1.msra.mxu0 0.0
    %3612 = vmatprep.subr.mxu0 0.0
    %3613 = vmatpush1.msra.mxu0 0.0
    %3614 = vmatprep.subr.mxu0 0.0
    %3615 = vmatpush1.msra.mxu0 0.0
    %3616 = vmatprep.subr.mxu0 0.0
    %3617 = vmatpush1.msra.mxu0 0.0
    %3618 = vmatprep.subr.mxu0 0.0
    %3619 = vmatpush1.msra.mxu0 0.0
    %3620 = vmatprep.subr.mxu0 0.0
    %3621 = vmatpush1.msra.mxu0 0.0
    %3622 = vmatprep.subr.mxu0 0.0
    %3623 = vmatpush1.msra.mxu0 0.0
    %3624 = vmatprep.subr.mxu0 0.0
    %3625 = vmatpush1.msra.mxu0 0.0
    %3626 = vmatprep.subr.mxu0 0.0
    %3627 = vmatpush1.msra.mxu0 0.0
    %3628 = vmatprep.subr.mxu0 0.0
    %3629 = vmatpush1.msra.mxu0 0.0
    %3630 = vmatprep.subr.mxu0 0.0
    %3631 = vmatpush1.msra.mxu0 0.0
    %3632 = vmatprep.subr.mxu0 0.0
    %3633 = vmatpush1.msra.mxu0 0.0
    %3634 = vmatprep.subr.mxu0 0.0
    %3635 = vmatpush1.msra.mxu0 0.0
    %3636 = vmatprep.subr.mxu0 0.0
    %3637 = vmatpush1.msra.mxu0 0.0
    %3638 = vmatprep.subr.mxu0 0.0
    %3639 = vmatpush1.msra.mxu0 0.0
    %3640 = vmatprep.mubr.f32.mxu0 0.0
    %3641 = vmatmul.mubr.f32.gmra.mrb[0].mxu0 %v3574
    %v3642 = vpop.f32.mrb[0].mxu0
    %v3643 = vadd.f32 0.0, %v3642
    %v3644 = vpop.f32.mrb[0].mxu0
    %3645 = vdwg.mxu0
    %3647 = vrot.lane.b32.xlu0 %v3309, 32
    %v3648 = vpop.permute.xlu0 %3647
    %3651 = vrot.lane.b32.xlu0 %v3476, 64
    %v3652 = vpop.permute.xlu0 %3651
    %3655 = vrot.lane.b32.xlu0 %v3643, 96
    %v3656 = vpop.permute.xlu0 %3655
    %v3658 = vsel %vm429, %v3141, %v3648
    %v3659 = vsel %vm1112, %v3658, %v3652
    %v3660 = vsel %vm1114, %v3659, %v3656
    %v3662 = vsel %vm429, %v2937, 0
    %v3665 = vsel %vm429, %v2939, 0
    %3667 = vmatprep.subr.mxu0 0.0
    %3668 = vmatpush1.xpose.msra.mxu0 %v3665
    %3669 = vmatprep.subr.mxu0 0.0
    %3670 = vmatpush1.xpose.msra.mxu0 0.0
    %3671 = vmatprep.subr.mxu0 0.0
    %3672 = vmatpush1.xpose.msra.mxu0 0.0
    %3673 = vmatprep.subr.mxu0 0.0
    %3674 = vmatpush1.xpose.msra.mxu0 0.0
    %3675 = vmatprep.subr.mxu0 0.0
    %3676 = vmatpush1.xpose.msra.mxu0 0.0
    %3677 = vmatprep.subr.mxu0 0.0
    %3678 = vmatpush1.xpose.msra.mxu0 0.0
    %3679 = vmatprep.subr.mxu0 0.0
    %3680 = vmatpush1.xpose.msra.mxu0 0.0
    %3681 = vmatprep.subr.mxu0 0.0
    %3682 = vmatpush1.xpose.msra.mxu0 0.0
    %3683 = vmatprep.subr.mxu0 0.0
    %3684 = vmatpush1.xpose.msra.mxu0 0.0
    %3685 = vmatprep.subr.mxu0 0.0
    %3686 = vmatpush1.xpose.msra.mxu0 0.0
    %3687 = vmatprep.subr.mxu0 0.0
    %3688 = vmatpush1.xpose.msra.mxu0 0.0
    %3689 = vmatprep.subr.mxu0 0.0
    %3690 = vmatpush1.xpose.msra.mxu0 0.0
    %3691 = vmatprep.subr.mxu0 0.0
    %3692 = vmatpush1.xpose.msra.mxu0 0.0
    %3693 = vmatprep.subr.mxu0 0.0
    %3694 = vmatpush1.xpose.msra.mxu0 0.0
    %3695 = vmatprep.subr.mxu0 0.0
    %3696 = vmatpush1.xpose.msra.mxu0 0.0
    %3697 = vmatprep.subr.mxu0 0.0
    %3698 = vmatpush1.xpose.msra.mxu0 0.0
    %3699 = vmatprep.subr.mxu0 0.0
    %3700 = vmatpush1.xpose.msra.mxu0 0.0
    %3701 = vmatprep.subr.mxu0 0.0
    %3702 = vmatpush1.xpose.msra.mxu0 0.0
    %3703 = vmatprep.subr.mxu0 0.0
    %3704 = vmatpush1.xpose.msra.mxu0 0.0
    %3705 = vmatprep.subr.mxu0 0.0
    %3706 = vmatpush1.xpose.msra.mxu0 0.0
    %3707 = vmatprep.subr.mxu0 0.0
    %3708 = vmatpush1.xpose.msra.mxu0 0.0
    %3709 = vmatprep.subr.mxu0 0.0
    %3710 = vmatpush1.xpose.msra.mxu0 0.0
    %3711 = vmatprep.subr.mxu0 0.0
    %3712 = vmatpush1.xpose.msra.mxu0 0.0
    %3713 = vmatprep.subr.mxu0 0.0
    %3714 = vmatpush1.xpose.msra.mxu0 0.0
    %3715 = vmatprep.subr.mxu0 0.0
    %3716 = vmatpush1.xpose.msra.mxu0 0.0
    %3717 = vmatprep.subr.mxu0 0.0
    %3718 = vmatpush1.xpose.msra.mxu0 0.0
    %3719 = vmatprep.subr.mxu0 0.0
    %3720 = vmatpush1.xpose.msra.mxu0 0.0
    %3721 = vmatprep.subr.mxu0 0.0
    %3722 = vmatpush1.xpose.msra.mxu0 0.0
    %3723 = vmatprep.subr.mxu0 0.0
    %3724 = vmatpush1.xpose.msra.mxu0 0.0
    %3725 = vmatprep.subr.mxu0 0.0
    %3726 = vmatpush1.xpose.msra.mxu0 0.0
    %3727 = vmatprep.subr.mxu0 0.0
    %3728 = vmatpush1.xpose.msra.mxu0 0.0
    %3729 = vmatprep.subr.mxu0 0.0
    %3730 = vmatpush1.xpose.msra.mxu0 0.0
    %3731 = vmatprep.mubr.f32.mxu0 0.0
    %3732 = vmatmul.mubr.f32.gmra.mrb[0].mxu0 %v3662
    %v3733 = vpop.f32.mrb[0].mxu0
    %v3734 = vadd.f32 0.0, %v3733
    %v3735 = vpop.f32.mrb[0].mxu0
    %3736 = vdwg.mxu0
    %v3737 = vmul.f32 %v3734, 0.17677669
    %v3738 = vadd.f32 %v3737, %v1196
    %v3739 = vsel %vm512, %v3738, -inf
    %3740 = vmax.xlane.f32.xlu0 %v3739
    %v3741 = vpop.xlane.xlu0 %3740
    %v3742 = vsub.f32 %v3738, %v3741
    %v3743 = vmul.f32 %v3742, 1.442695
    %v3744 = vpow.pop %v3743
    %v3745 = vsel %vm512, %v3744, 0.0
    %3746 = vadd.xlane.f32.xlu0 %v3745
    %v3747 = vpop.xlane.xlu0 %3746
    %v3748 = vrcp.pop %v3747
    %v3749 = vmul.f32 %v3744, %v3748
    %v3751 = vsel %vm512, %v3749, 0
    %3753 = vmatprep.subr.mxu0 0.0
    %3754 = vmatpush1.msra.mxu0 %v2979
    %3755 = vmatprep.subr.mxu0 0.0
    %3756 = vmatpush1.msra.mxu0 0.0
    %3757 = vmatprep.subr.mxu0 0.0
    %3758 = vmatpush1.msra.mxu0 0.0
    %3759 = vmatprep.subr.mxu0 0.0
    %3760 = vmatpush1.msra.mxu0 0.0
    %3761 = vmatprep.subr.mxu0 0.0
    %3762 = vmatpush1.msra.mxu0 0.0
    %3763 = vmatprep.subr.mxu0 0.0
    %3764 = vmatpush1.msra.mxu0 0.0
    %3765 = vmatprep.subr.mxu0 0.0
    %3766 = vmatpush1.msra.mxu0 0.0
    %3767 = vmatprep.subr.mxu0 0.0
    %3768 = vmatpush1.msra.mxu0 0.0
    %3769 = vmatprep.subr.mxu0 0.0
    %3770 = vmatpush1.msra.mxu0 0.0
    %3771 = vmatprep.subr.mxu0 0.0
    %3772 = vmatpush1.msra.mxu0 0.0
    %3773 = vmatprep.subr.mxu0 0.0
    %3774 = vmatpush1.msra.mxu0 0.0
    %3775 = vmatprep.subr.mxu0 0.0
    %3776 = vmatpush1.msra.mxu0 0.0
    %3777 = vmatprep.subr.mxu0 0.0
    %3778 = vmatpush1.msra.mxu0 0.0
    %3779 = vmatprep.subr.mxu0 0.0
    %3780 = vmatpush1.msra.mxu0 0.0
    %3781 = vmatprep.subr.mxu0 0.0
    %3782 = vmatpush1.msra.mxu0 0.0
    %3783 = vmatprep.subr.mxu0 0.0
    %3784 = vmatpush1.msra.mxu0 0.0
    %3785 = vmatprep.subr.mxu0 0.0
    %3786 = vmatpush1.msra.mxu0 0.0
    %3787 = vmatprep.subr.mxu0 0.0
    %3788 = vmatpush1.msra.mxu0 0.0
    %3789 = vmatprep.subr.mxu0 0.0
    %3790 = vmatpush1.msra.mxu0 0.0
    %3791 = vmatprep.subr.mxu0 0.0
    %3792 = vmatpush1.msra.mxu0 0.0
    %3793 = vmatprep.subr.mxu0 0.0
    %3794 = vmatpush1.msra.mxu0 0.0
    %3795 = vmatprep.subr.mxu0 0.0
    %3796 = vmatpush1.msra.mxu0 0.0
    %3797 = vmatprep.subr.mxu0 0.0
    %3798 = vmatpush1.msra.mxu0 0.0
    %3799 = vmatprep.subr.mxu0 0.0
    %3800 = vmatpush1.msra.mxu0 0.0
    %3801 = vmatprep.subr.mxu0 0.0
    %3802 = vmatpush1.msra.mxu0 0.0
    %3803 = vmatprep.subr.mxu0 0.0
    %3804 = vmatpush1.msra.mxu0 0.0
    %3805 = vmatprep.subr.mxu0 0.0
    %3806 = vmatpush1.msra.mxu0 0.0
    %3807 = vmatprep.subr.mxu0 0.0
    %3808 = vmatpush1.msra.mxu0 0.0
    %3809 = vmatprep.subr.mxu0 0.0
    %3810 = vmatpush1.msra.mxu0 0.0
    %3811 = vmatprep.subr.mxu0 0.0
    %3812 = vmatpush1.msra.mxu0 0.0
    %3813 = vmatprep.subr.mxu0 0.0
    %3814 = vmatpush1.msra.mxu0 0.0
    %3815 = vmatprep.subr.mxu0 0.0
    %3816 = vmatpush1.msra.mxu0 0.0
    %3817 = vmatprep.mubr.f32.mxu0 0.0
    %3818 = vmatmul.mubr.f32.gmra.mrb[0].mxu0 %v3751
    %v3819 = vpop.f32.mrb[0].mxu0
    %v3820 = vadd.f32 0.0, %v3819
    %v3821 = vpop.f32.mrb[0].mxu0
    %3822 = vdwg.mxu0
    %3823 = vrot.lane.b32.xlu0 %v2937, 96
    %v3824 = vpop.permute.xlu0 %3823
    %3825 = vrot.lane.b32.xlu0 %v2939, 96
    %v3826 = vpop.permute.xlu0 %3825
    %v3827 = vsel %vm429, %v3824, 0
    %v3829 = vsel %vm429, %v3826, 0
    %3831 = vmatprep.subr.mxu0 0.0
    %3832 = vmatpush1.xpose.msra.mxu0 %v3829
    %3833 = vmatprep.subr.mxu0 0.0
    %3834 = vmatpush1.xpose.msra.mxu0 0.0
    %3835 = vmatprep.subr.mxu0 0.0
    %3836 = vmatpush1.xpose.msra.mxu0 0.0
    %3837 = vmatprep.subr.mxu0 0.0
    %3838 = vmatpush1.xpose.msra.mxu0 0.0
    %3839 = vmatprep.subr.mxu0 0.0
    %3840 = vmatpush1.xpose.msra.mxu0 0.0
    %3841 = vmatprep.subr.mxu0 0.0
    %3842 = vmatpush1.xpose.msra.mxu0 0.0
    %3843 = vmatprep.subr.mxu0 0.0
    %3844 = vmatpush1.xpose.msra.mxu0 0.0
    %3845 = vmatprep.subr.mxu0 0.0
    %3846 = vmatpush1.xpose.msra.mxu0 0.0
    %3847 = vmatprep.subr.mxu0 0.0
    %3848 = vmatpush1.xpose.msra.mxu0 0.0
    %3849 = vmatprep.subr.mxu0 0.0
    %3850 = vmatpush1.xpose.msra.mxu0 0.0
    %3851 = vmatprep.subr.mxu0 0.0
    %3852 = vmatpush1.xpose.msra.mxu0 0.0
    %3853 = vmatprep.subr.mxu0 0.0
    %3854 = vmatpush1.xpose.msra.mxu0 0.0
    %3855 = vmatprep.subr.mxu0 0.0
    %3856 = vmatpush1.xpose.msra.mxu0 0.0
    %3857 = vmatprep.subr.mxu0 0.0
    %3858 = vmatpush1.xpose.msra.mxu0 0.0
    %3859 = vmatprep.subr.mxu0 0.0
    %3860 = vmatpush1.xpose.msra.mxu0 0.0
    %3861 = vmatprep.subr.mxu0 0.0
    %3862 = vmatpush1.xpose.msra.mxu0 0.0
    %3863 = vmatprep.subr.mxu0 0.0
    %3864 = vmatpush1.xpose.msra.mxu0 0.0
    %3865 = vmatprep.subr.mxu0 0.0
    %3866 = vmatpush1.xpose.msra.mxu0 0.0
    %3867 = vmatprep.subr.mxu0 0.0
    %3868 = vmatpush1.xpose.msra.mxu0 0.0
    %3869 = vmatprep.subr.mxu0 0.0
    %3870 = vmatpush1.xpose.msra.mxu0 0.0
    %3871 = vmatprep.subr.mxu0 0.0
    %3872 = vmatpush1.xpose.msra.mxu0 0.0
    %3873 = vmatprep.subr.mxu0 0.0
    %3874 = vmatpush1.xpose.msra.mxu0 0.0
    %3875 = vmatprep.subr.mxu0 0.0
    %3876 = vmatpush1.xpose.msra.mxu0 0.0
    %3877 = vmatprep.subr.mxu0 0.0
    %3878 = vmatpush1.xpose.msra.mxu0 0.0
    %3879 = vmatprep.subr.mxu0 0.0
    %3880 = vmatpush1.xpose.msra.mxu0 0.0
    %3881 = vmatprep.subr.mxu0 0.0
    %3882 = vmatpush1.xpose.msra.mxu0 0.0
    %3883 = vmatprep.subr.mxu0 0.0
    %3884 = vmatpush1.xpose.msra.mxu0 0.0
    %3885 = vmatprep.subr.mxu0 0.0
    %3886 = vmatpush1.xpose.msra.mxu0 0.0
    %3887 = vmatprep.subr.mxu0 0.0
    %3888 = vmatpush1.xpose.msra.mxu0 0.0
    %3889 = vmatprep.subr.mxu0 0.0
    %3890 = vmatpush1.xpose.msra.mxu0 0.0
    %3891 = vmatprep.subr.mxu0 0.0
    %3892 = vmatpush1.xpose.msra.mxu0 0.0
    %3893 = vmatprep.subr.mxu0 0.0
    %3894 = vmatpush1.xpose.msra.mxu0 0.0
    %3895 = vmatprep.mubr.f32.mxu0 0.0
    %3896 = vmatmul.mubr.f32.gmra.mrb[0].mxu0 %v3827
    %v3897 = vpop.f32.mrb[0].mxu0
    %v3898 = vadd.f32 0.0, %v3897
    %v3899 = vpop.f32.mrb[0].mxu0
    %3900 = vdwg.mxu0
    %v3901 = vmul.f32 %v3898, 0.17677669
    %v3902 = vadd.f32 %v3901, %v1196
    %v3903 = vsel %vm512, %v3902, -inf
    %3904 = vmax.xlane.f32.xlu0 %v3903
    %v3905 = vpop.xlane.xlu0 %3904
    %v3906 = vsub.f32 %v3902, %v3905
    %v3907 = vmul.f32 %v3906, 1.442695
    %v3908 = vpow.pop %v3907
    %v3909 = vsel %vm512, %v3908, 0.0
    %3910 = vadd.xlane.f32.xlu0 %v3909
    %v3911 = vpop.xlane.xlu0 %3910
    %v3912 = vrcp.pop %v3911
    %v3913 = vmul.f32 %v3908, %v3912
    %3915 = vrot.lane.b32.xlu0 %v2979, 96
    %v3916 = vpop.permute.xlu0 %3915
    %v3919 = vsel %vm512, %v3913, 0
    %3921 = vmatprep.subr.mxu0 0.0
    %3922 = vmatpush1.msra.mxu0 %v3916
    %3923 = vmatprep.subr.mxu0 0.0
    %3924 = vmatpush1.msra.mxu0 0.0
    %3925 = vmatprep.subr.mxu0 0.0
    %3926 = vmatpush1.msra.mxu0 0.0
    %3927 = vmatprep.subr.mxu0 0.0
    %3928 = vmatpush1.msra.mxu0 0.0
    %3929 = vmatprep.subr.mxu0 0.0
    %3930 = vmatpush1.msra.mxu0 0.0
    %3931 = vmatprep.subr.mxu0 0.0
    %3932 = vmatpush1.msra.mxu0 0.0
    %3933 = vmatprep.subr.mxu0 0.0
    %3934 = vmatpush1.msra.mxu0 0.0
    %3935 = vmatprep.subr.mxu0 0.0
    %3936 = vmatpush1.msra.mxu0 0.0
    %3937 = vmatprep.subr.mxu0 0.0
    %3938 = vmatpush1.msra.mxu0 0.0
    %3939 = vmatprep.subr.mxu0 0.0
    %3940 = vmatpush1.msra.mxu0 0.0
    %3941 = vmatprep.subr.mxu0 0.0
    %3942 = vmatpush1.msra.mxu0 0.0
    %3943 = vmatprep.subr.mxu0 0.0
    %3944 = vmatpush1.msra.mxu0 0.0
    %3945 = vmatprep.subr.mxu0 0.0
    %3946 = vmatpush1.msra.mxu0 0.0
    %3947 = vmatprep.subr.mxu0 0.0
    %3948 = vmatpush1.msra.mxu0 0.0
    %3949 = vmatprep.subr.mxu0 0.0
    %3950 = vmatpush1.msra.mxu0 0.0
    %3951 = vmatprep.subr.mxu0 0.0
    %3952 = vmatpush1.msra.mxu0 0.0
    %3953 = vmatprep.subr.mxu0 0.0
    %3954 = vmatpush1.msra.mxu0 0.0
    %3955 = vmatprep.subr.mxu0 0.0
    %3956 = vmatpush1.msra.mxu0 0.0
    %3957 = vmatprep.subr.mxu0 0.0
    %3958 = vmatpush1.msra.mxu0 0.0
    %3959 = vmatprep.subr.mxu0 0.0
    %3960 = vmatpush1.msra.mxu0 0.0
    %3961 = vmatprep.subr.mxu0 0.0
    %3962 = vmatpush1.msra.mxu0 0.0
    %3963 = vmatprep.subr.mxu0 0.0
    %3964 = vmatpush1.msra.mxu0 0.0
    %3965 = vmatprep.subr.mxu0 0.0
    %3966 = vmatpush1.msra.mxu0 0.0
    %3967 = vmatprep.subr.mxu0 0.0
    %3968 = vmatpush1.msra.mxu0 0.0
    %3969 = vmatprep.subr.mxu0 0.0
    %3970 = vmatpush1.msra.mxu0 0.0
    %3971 = vmatprep.subr.mxu0 0.0
    %3972 = vmatpush1.msra.mxu0 0.0
    %3973 = vmatprep.subr.mxu0 0.0
    %3974 = vmatpush1.msra.mxu0 0.0
    %3975 = vmatprep.subr.mxu0 0.0
    %3976 = vmatpush1.msra.mxu0 0.0
    %3977 = vmatprep.subr.mxu0 0.0
    %3978 = vmatpush1.msra.mxu0 0.0
    %3979 = vmatprep.subr.mxu0 0.0
    %3980 = vmatpush1.msra.mxu0 0.0
    %3981 = vmatprep.subr.mxu0 0.0
    %3982 = vmatpush1.msra.mxu0 0.0
    %3983 = vmatprep.subr.mxu0 0.0
    %3984 = vmatpush1.msra.mxu0 0.0
    %3985 = vmatprep.mubr.f32.mxu0 0.0
    %3986 = vmatmul.mubr.f32.gmra.mrb[0].mxu0 %v3919
    %v3987 = vpop.f32.mrb[0].mxu0
    %v3988 = vadd.f32 0.0, %v3987
    %v3989 = vpop.f32.mrb[0].mxu0
    %3990 = vdwg.mxu0
    %3991 = vrot.lane.b32.xlu0 %v2937, 64
    %v3992 = vpop.permute.xlu0 %3991
    %3993 = vrot.lane.b32.xlu0 %v2939, 64
    %v3994 = vpop.permute.xlu0 %3993
    %v3995 = vsel %vm429, %v3992, 0
    %v3997 = vsel %vm429, %v3994, 0
    %3999 = vmatprep.subr.mxu0 0.0
    %4000 = vmatpush1.xpose.msra.mxu0 %v3997
    %4001 = vmatprep.subr.mxu0 0.0
    %4002 = vmatpush1.xpose.msra.mxu0 0.0
    %4003 = vmatprep.subr.mxu0 0.0
    %4004 = vmatpush1.xpose.msra.mxu0 0.0
    %4005 = vmatprep.subr.mxu0 0.0
    %4006 = vmatpush1.xpose.msra.mxu0 0.0
    %4007 = vmatprep.subr.mxu0 0.0
    %4008 = vmatpush1.xpose.msra.mxu0 0.0
    %4009 = vmatprep.subr.mxu0 0.0
    %4010 = vmatpush1.xpose.msra.mxu0 0.0
    %4011 = vmatprep.subr.mxu0 0.0
    %4012 = vmatpush1.xpose.msra.mxu0 0.0
    %4013 = vmatprep.subr.mxu0 0.0
    %4014 = vmatpush1.xpose.msra.mxu0 0.0
    %4015 = vmatprep.subr.mxu0 0.0
    %4016 = vmatpush1.xpose.msra.mxu0 0.0
    %4017 = vmatprep.subr.mxu0 0.0
    %4018 = vmatpush1.xpose.msra.mxu0 0.0
    %4019 = vmatprep.subr.mxu0 0.0
    %4020 = vmatpush1.xpose.msra.mxu0 0.0
    %4021 = vmatprep.subr.mxu0 0.0
    %4022 = vmatpush1.xpose.msra.mxu0 0.0
    %4023 = vmatprep.subr.mxu0 0.0
    %4024 = vmatpush1.xpose.msra.mxu0 0.0
    %4025 = vmatprep.subr.mxu0 0.0
    %4026 = vmatpush1.xpose.msra.mxu0 0.0
    %4027 = vmatprep.subr.mxu0 0.0
    %4028 = vmatpush1.xpose.msra.mxu0 0.0
    %4029 = vmatprep.subr.mxu0 0.0
    %4030 = vmatpush1.xpose.msra.mxu0 0.0
    %4031 = vmatprep.subr.mxu0 0.0
    %4032 = vmatpush1.xpose.msra.mxu0 0.0
    %4033 = vmatprep.subr.mxu0 0.0
    %4034 = vmatpush1.xpose.msra.mxu0 0.0
    %4035 = vmatprep.subr.mxu0 0.0
    %4036 = vmatpush1.xpose.msra.mxu0 0.0
    %4037 = vmatprep.subr.mxu0 0.0
    %4038 = vmatpush1.xpose.msra.mxu0 0.0
    %4039 = vmatprep.subr.mxu0 0.0
    %4040 = vmatpush1.xpose.msra.mxu0 0.0
    %4041 = vmatprep.subr.mxu0 0.0
    %4042 = vmatpush1.xpose.msra.mxu0 0.0
    %4043 = vmatprep.subr.mxu0 0.0
    %4044 = vmatpush1.xpose.msra.mxu0 0.0
    %4045 = vmatprep.subr.mxu0 0.0
    %4046 = vmatpush1.xpose.msra.mxu0 0.0
    %4047 = vmatprep.subr.mxu0 0.0
    %4048 = vmatpush1.xpose.msra.mxu0 0.0
    %4049 = vmatprep.subr.mxu0 0.0
    %4050 = vmatpush1.xpose.msra.mxu0 0.0
    %4051 = vmatprep.subr.mxu0 0.0
    %4052 = vmatpush1.xpose.msra.mxu0 0.0
    %4053 = vmatprep.subr.mxu0 0.0
    %4054 = vmatpush1.xpose.msra.mxu0 0.0
    %4055 = vmatprep.subr.mxu0 0.0
    %4056 = vmatpush1.xpose.msra.mxu0 0.0
    %4057 = vmatprep.subr.mxu0 0.0
    %4058 = vmatpush1.xpose.msra.mxu0 0.0
    %4059 = vmatprep.subr.mxu0 0.0
    %4060 = vmatpush1.xpose.msra.mxu0 0.0
    %4061 = vmatprep.subr.mxu0 0.0
    %4062 = vmatpush1.xpose.msra.mxu0 0.0
    %4063 = vmatprep.mubr.f32.mxu0 0.0
    %4064 = vmatmul.mubr.f32.gmra.mrb[0].mxu0 %v3995
    %v4065 = vpop.f32.mrb[0].mxu0
    %v4066 = vadd.f32 0.0, %v4065
    %v4067 = vpop.f32.mrb[0].mxu0
    %4068 = vdwg.mxu0
    %v4069 = vmul.f32 %v4066, 0.17677669
    %v4070 = vadd.f32 %v4069, %v1196
    %v4071 = vsel %vm512, %v4070, -inf
    %4072 = vmax.xlane.f32.xlu0 %v4071
    %v4073 = vpop.xlane.xlu0 %4072
    %v4074 = vsub.f32 %v4070, %v4073
    %v4075 = vmul.f32 %v4074, 1.442695
    %v4076 = vpow.pop %v4075
    %v4077 = vsel %vm512, %v4076, 0.0
    %4078 = vadd.xlane.f32.xlu0 %v4077
    %v4079 = vpop.xlane.xlu0 %4078
    %v4080 = vrcp.pop %v4079
    %v4081 = vmul.f32 %v4076, %v4080
    %4082 = vrot.lane.b32.xlu0 %v2979, 64
    %v4083 = vpop.permute.xlu0 %4082
    %v4086 = vsel %vm512, %v4081, 0
    %4088 = vmatprep.subr.mxu0 0.0
    %4089 = vmatpush1.msra.mxu0 %v4083
    %4090 = vmatprep.subr.mxu0 0.0
    %4091 = vmatpush1.msra.mxu0 0.0
    %4092 = vmatprep.subr.mxu0 0.0
    %4093 = vmatpush1.msra.mxu0 0.0
    %4094 = vmatprep.subr.mxu0 0.0
    %4095 = vmatpush1.msra.mxu0 0.0
    %4096 = vmatprep.subr.mxu0 0.0
    %4097 = vmatpush1.msra.mxu0 0.0
    %4098 = vmatprep.subr.mxu0 0.0
    %4099 = vmatpush1.msra.mxu0 0.0
    %4100 = vmatprep.subr.mxu0 0.0
    %4101 = vmatpush1.msra.mxu0 0.0
    %4102 = vmatprep.subr.mxu0 0.0
    %4103 = vmatpush1.msra.mxu0 0.0
    %4104 = vmatprep.subr.mxu0 0.0
    %4105 = vmatpush1.msra.mxu0 0.0
    %4106 = vmatprep.subr.mxu0 0.0
    %4107 = vmatpush1.msra.mxu0 0.0
    %4108 = vmatprep.subr.mxu0 0.0
    %4109 = vmatpush1.msra.mxu0 0.0
    %4110 = vmatprep.subr.mxu0 0.0
    %4111 = vmatpush1.msra.mxu0 0.0
    %4112 = vmatprep.subr.mxu0 0.0
    %4113 = vmatpush1.msra.mxu0 0.0
    %4114 = vmatprep.subr.mxu0 0.0
    %4115 = vmatpush1.msra.mxu0 0.0
    %4116 = vmatprep.subr.mxu0 0.0
    %4117 = vmatpush1.msra.mxu0 0.0
    %4118 = vmatprep.subr.mxu0 0.0
    %4119 = vmatpush1.msra.mxu0 0.0
    %4120 = vmatprep.subr.mxu0 0.0
    %4121 = vmatpush1.msra.mxu0 0.0
    %4122 = vmatprep.subr.mxu0 0.0
    %4123 = vmatpush1.msra.mxu0 0.0
    %4124 = vmatprep.subr.mxu0 0.0
    %4125 = vmatpush1.msra.mxu0 0.0
    %4126 = vmatprep.subr.mxu0 0.0
    %4127 = vmatpush1.msra.mxu0 0.0
    %4128 = vmatprep.subr.mxu0 0.0
    %4129 = vmatpush1.msra.mxu0 0.0
    %4130 = vmatprep.subr.mxu0 0.0
    %4131 = vmatpush1.msra.mxu0 0.0
    %4132 = vmatprep.subr.mxu0 0.0
    %4133 = vmatpush1.msra.mxu0 0.0
    %4134 = vmatprep.subr.mxu0 0.0
    %4135 = vmatpush1.msra.mxu0 0.0
    %4136 = vmatprep.subr.mxu0 0.0
    %4137 = vmatpush1.msra.mxu0 0.0
    %4138 = vmatprep.subr.mxu0 0.0
    %4139 = vmatpush1.msra.mxu0 0.0
    %4140 = vmatprep.subr.mxu0 0.0
    %4141 = vmatpush1.msra.mxu0 0.0
    %4142 = vmatprep.subr.mxu0 0.0
    %4143 = vmatpush1.msra.mxu0 0.0
    %4144 = vmatprep.subr.mxu0 0.0
    %4145 = vmatpush1.msra.mxu0 0.0
    %4146 = vmatprep.subr.mxu0 0.0
    %4147 = vmatpush1.msra.mxu0 0.0
    %4148 = vmatprep.subr.mxu0 0.0
    %4149 = vmatpush1.msra.mxu0 0.0
    %4150 = vmatprep.subr.mxu0 0.0
    %4151 = vmatpush1.msra.mxu0 0.0
    %4152 = vmatprep.mubr.f32.mxu0 0.0
    %4153 = vmatmul.mubr.f32.gmra.mrb[0].mxu0 %v4086
    %v4154 = vpop.f32.mrb[0].mxu0
    %v4155 = vadd.f32 0.0, %v4154
    %v4156 = vpop.f32.mrb[0].mxu0
    %4157 = vdwg.mxu0
    %4158 = vrot.lane.b32.xlu0 %v2937, 32
    %v4159 = vpop.permute.xlu0 %4158
    %4160 = vrot.lane.b32.xlu0 %v2939, 32
    %v4161 = vpop.permute.xlu0 %4160
    %v4162 = vsel %vm429, %v4159, 0
    %v4164 = vsel %vm429, %v4161, 0
    %4166 = vmatprep.subr.mxu0 0.0
    %4167 = vmatpush1.xpose.msra.mxu0 %v4164
    %4168 = vmatprep.subr.mxu0 0.0
    %4169 = vmatpush1.xpose.msra.mxu0 0.0
    %4170 = vmatprep.subr.mxu0 0.0
    %4171 = vmatpush1.xpose.msra.mxu0 0.0
    %4172 = vmatprep.subr.mxu0 0.0
    %4173 = vmatpush1.xpose.msra.mxu0 0.0
    %4174 = vmatprep.subr.mxu0 0.0
    %4175 = vmatpush1.xpose.msra.mxu0 0.0
    %4176 = vmatprep.subr.mxu0 0.0
    %4177 = vmatpush1.xpose.msra.mxu0 0.0
    %4178 = vmatprep.subr.mxu0 0.0
    %4179 = vmatpush1.xpose.msra.mxu0 0.0
    %4180 = vmatprep.subr.mxu0 0.0
    %4181 = vmatpush1.xpose.msra.mxu0 0.0
    %4182 = vmatprep.subr.mxu0 0.0
    %4183 = vmatpush1.xpose.msra.mxu0 0.0
    %4184 = vmatprep.subr.mxu0 0.0
    %4185 = vmatpush1.xpose.msra.mxu0 0.0
    %4186 = vmatprep.subr.mxu0 0.0
    %4187 = vmatpush1.xpose.msra.mxu0 0.0
    %4188 = vmatprep.subr.mxu0 0.0
    %4189 = vmatpush1.xpose.msra.mxu0 0.0
    %4190 = vmatprep.subr.mxu0 0.0
    %4191 = vmatpush1.xpose.msra.mxu0 0.0
    %4192 = vmatprep.subr.mxu0 0.0
    %4193 = vmatpush1.xpose.msra.mxu0 0.0
    %4194 = vmatprep.subr.mxu0 0.0
    %4195 = vmatpush1.xpose.msra.mxu0 0.0
    %4196 = vmatprep.subr.mxu0 0.0
    %4197 = vmatpush1.xpose.msra.mxu0 0.0
    %4198 = vmatprep.subr.mxu0 0.0
    %4199 = vmatpush1.xpose.msra.mxu0 0.0
    %4200 = vmatprep.subr.mxu0 0.0
    %4201 = vmatpush1.xpose.msra.mxu0 0.0
    %4202 = vmatprep.subr.mxu0 0.0
    %4203 = vmatpush1.xpose.msra.mxu0 0.0
    %4204 = vmatprep.subr.mxu0 0.0
    %4205 = vmatpush1.xpose.msra.mxu0 0.0
    %4206 = vmatprep.subr.mxu0 0.0
    %4207 = vmatpush1.xpose.msra.mxu0 0.0
    %4208 = vmatprep.subr.mxu0 0.0
    %4209 = vmatpush1.xpose.msra.mxu0 0.0
    %4210 = vmatprep.subr.mxu0 0.0
    %4211 = vmatpush1.xpose.msra.mxu0 0.0
    %4212 = vmatprep.subr.mxu0 0.0
    %4213 = vmatpush1.xpose.msra.mxu0 0.0
    %4214 = vmatprep.subr.mxu0 0.0
    %4215 = vmatpush1.xpose.msra.mxu0 0.0
    %4216 = vmatprep.subr.mxu0 0.0
    %4217 = vmatpush1.xpose.msra.mxu0 0.0
    %4218 = vmatprep.subr.mxu0 0.0
    %4219 = vmatpush1.xpose.msra.mxu0 0.0
    %4220 = vmatprep.subr.mxu0 0.0
    %4221 = vmatpush1.xpose.msra.mxu0 0.0
    %4222 = vmatprep.subr.mxu0 0.0
    %4223 = vmatpush1.xpose.msra.mxu0 0.0
    %4224 = vmatprep.subr.mxu0 0.0
    %4225 = vmatpush1.xpose.msra.mxu0 0.0
    %4226 = vmatprep.subr.mxu0 0.0
    %4227 = vmatpush1.xpose.msra.mxu0 0.0
    %4228 = vmatprep.subr.mxu0 0.0
    %4229 = vmatpush1.xpose.msra.mxu0 0.0
    %4230 = vmatprep.mubr.f32.mxu0 0.0
    %4231 = vmatmul.mubr.f32.gmra.mrb[0].mxu0 %v4162
    %v4232 = vpop.f32.mrb[0].mxu0
    %v4233 = vadd.f32 0.0, %v4232
    %v4234 = vpop.f32.mrb[0].mxu0
    %4235 = vdwg.mxu0
    %v4236 = vmul.f32 %v4233, 0.17677669
    %v4237 = vadd.f32 %v4236, %v1196
    %v4238 = vsel %vm512, %v4237, -inf
    %4239 = vmax.xlane.f32.xlu0 %v4238
    %v4240 = vpop.xlane.xlu0 %4239
    %v4241 = vsub.f32 %v4237, %v4240
    %v4242 = vmul.f32 %v4241, 1.442695
    %v4243 = vpow.pop %v4242
    %v4244 = vsel %vm512, %v4243, 0.0
    %4245 = vadd.xlane.f32.xlu0 %v4244
    %v4246 = vpop.xlane.xlu0 %4245
    %v4247 = vrcp.pop %v4246
    %v4248 = vmul.f32 %v4243, %v4247
    %4249 = vrot.lane.b32.xlu0 %v2979, 32
    %v4250 = vpop.permute.xlu0 %4249
    %v4253 = vsel %vm512, %v4248, 0
    %4255 = vmatprep.subr.mxu0 0.0
    %4256 = vmatpush1.msra.mxu0 %v4250
    %4257 = vmatprep.subr.mxu0 0.0
    %4258 = vmatpush1.msra.mxu0 0.0
    %4259 = vmatprep.subr.mxu0 0.0
    %4260 = vmatpush1.msra.mxu0 0.0
    %4261 = vmatprep.subr.mxu0 0.0
    %4262 = vmatpush1.msra.mxu0 0.0
    %4263 = vmatprep.subr.mxu0 0.0
    %4264 = vmatpush1.msra.mxu0 0.0
    %4265 = vmatprep.subr.mxu0 0.0
    %4266 = vmatpush1.msra.mxu0 0.0
    %4267 = vmatprep.subr.mxu0 0.0
    %4268 = vmatpush1.msra.mxu0 0.0
    %4269 = vmatprep.subr.mxu0 0.0
    %4270 = vmatpush1.msra.mxu0 0.0
    %4271 = vmatprep.subr.mxu0 0.0
    %4272 = vmatpush1.msra.mxu0 0.0
    %4273 = vmatprep.subr.mxu0 0.0
    %4274 = vmatpush1.msra.mxu0 0.0
    %4275 = vmatprep.subr.mxu0 0.0
    %4276 = vmatpush1.msra.mxu0 0.0
    %4277 = vmatprep.subr.mxu0 0.0
    %4278 = vmatpush1.msra.mxu0 0.0
    %4279 = vmatprep.subr.mxu0 0.0
    %4280 = vmatpush1.msra.mxu0 0.0
    %4281 = vmatprep.subr.mxu0 0.0
    %4282 = vmatpush1.msra.mxu0 0.0
    %4283 = vmatprep.subr.mxu0 0.0
    %4284 = vmatpush1.msra.mxu0 0.0
    %4285 = vmatprep.subr.mxu0 0.0
    %4286 = vmatpush1.msra.mxu0 0.0
    %4287 = vmatprep.subr.mxu0 0.0
    %4288 = vmatpush1.msra.mxu0 0.0
    %4289 = vmatprep.subr.mxu0 0.0
    %4290 = vmatpush1.msra.mxu0 0.0
    %4291 = vmatprep.subr.mxu0 0.0
    %4292 = vmatpush1.msra.mxu0 0.0
    %4293 = vmatprep.subr.mxu0 0.0
    %4294 = vmatpush1.msra.mxu0 0.0
    %4295 = vmatprep.subr.mxu0 0.0
    %4296 = vmatpush1.msra.mxu0 0.0
    %4297 = vmatprep.subr.mxu0 0.0
    %4298 = vmatpush1.msra.mxu0 0.0
    %4299 = vmatprep.subr.mxu0 0.0
    %4300 = vmatpush1.msra.mxu0 0.0
    %4301 = vmatprep.subr.mxu0 0.0
    %4302 = vmatpush1.msra.mxu0 0.0
    %4303 = vmatprep.subr.mxu0 0.0
    %4304 = vmatpush1.msra.mxu0 0.0
    %4305 = vmatprep.subr.mxu0 0.0
    %4306 = vmatpush1.msra.mxu0 0.0
    %4307 = vmatprep.subr.mxu0 0.0
    %4308 = vmatpush1.msra.mxu0 0.0
    %4309 = vmatprep.subr.mxu0 0.0
    %4310 = vmatpush1.msra.mxu0 0.0
    %4311 = vmatprep.subr.mxu0 0.0
    %4312 = vmatpush1.msra.mxu0 0.0
    %4313 = vmatprep.subr.mxu0 0.0
    %4314 = vmatpush1.msra.mxu0 0.0
    %4315 = vmatprep.subr.mxu0 0.0
    %4316 = vmatpush1.msra.mxu0 0.0
    %4317 = vmatprep.subr.mxu0 0.0
    %4318 = vmatpush1.msra.mxu0 0.0
    %4319 = vmatprep.mubr.f32.mxu0 0.0
    %4320 = vmatmul.mubr.f32.gmra.mrb[0].mxu0 %v4253
    %v4321 = vpop.f32.mrb[0].mxu0
    %v4322 = vadd.f32 0.0, %v4321
    %v4323 = vpop.f32.mrb[0].mxu0
    %4324 = vdwg.mxu0
    %4326 = vrot.lane.b32.xlu0 %v3988, 32
    %v4327 = vpop.permute.xlu0 %4326
    %4330 = vrot.lane.b32.xlu0 %v4155, 64
    %v4331 = vpop.permute.xlu0 %4330
    %4334 = vrot.lane.b32.xlu0 %v4322, 96
    %v4335 = vpop.permute.xlu0 %4334
    %v4337 = vsel %vm429, %v3820, %v4327
    %v4338 = vsel %vm1112, %v4337, %v4331
    %v4339 = vsel %vm1114, %v4338, %v4335
    %s4340 = scalar_lea.vmem [#allocation2], 64
    %v4341 = vld [vmem:[%s4340] sm:$0xf]
    %v4342 = vld [vmem:[%s4340 + $0x4] sm:$0xf]
    %v4343 = vld [vmem:[%s4340 + $0x8] sm:$0xf]
    %v4344 = vld [vmem:[%s4340 + $0xc] sm:$0xf]
    %v4345 = vld [vmem:[%s4340 + $0x10] sm:$0xf]
    %v4346 = vld [vmem:[%s4340 + $0x14] sm:$0xf]
    %v4347 = vld [vmem:[%s4340 + $0x18] sm:$0xf]
    %v4348 = vld [vmem:[%s4340 + $0x1c] sm:$0xf]
    %v4349 = vld [vmem:[%s4340 + $0x20] sm:$0xf]
    %v4350 = vld [vmem:[%s4340 + $0x24] sm:$0xf]
    %v4351 = vld [vmem:[%s4340 + $0x28] sm:$0xf]
    %v4352 = vld [vmem:[%s4340 + $0x2c] sm:$0xf]
    %v4353 = vld [vmem:[%s4340 + $0x30] sm:$0xf]
    %v4354 = vld [vmem:[%s4340 + $0x34] sm:$0xf]
    %v4355 = vld [vmem:[%s4340 + $0x38] sm:$0xf]
    %v4356 = vld [vmem:[%s4340 + $0x3c] sm:$0xf]
    %s4357 = scalar_lea.vmem %s7, 1
    %v4358 = vld [vmem:[%s4357] sm:$0x1]
    %v4359 = vpack.c.bf16 %v4339, %v3660
    %v4361 = vlaneseq
    %v4362 = vshrl.u32 %v4361, 7
    %v4363 = vsub.s32 0, %v4362
    %v4364 = vrot.slane %v4358, %v4363
    %v4382 = vunpack.c.l.b16 %v4341
    %v4383 = vunpack.c.l.b16 %v4342
    %v4384 = vunpack.c.l.b16 %v4343
    %v4385 = vunpack.c.l.b16 %v4344
    %v4386 = vunpack.c.l.b16 %v4345
    %v4387 = vunpack.c.l.b16 %v4346
    %v4388 = vunpack.c.l.b16 %v4347
    %v4389 = vunpack.c.l.b16 %v4348
    %v4390 = vunpack.c.l.b16 %v4349
    %v4391 = vunpack.c.l.b16 %v4350
    %v4392 = vunpack.c.l.b16 %v4351
    %v4393 = vunpack.c.l.b16 %v4352
    %v4394 = vunpack.c.l.b16 %v4353
    %v4395 = vunpack.c.l.b16 %v4354
    %v4396 = vunpack.c.l.b16 %v4355
    %v4397 = vunpack.c.l.b16 %v4356
    %v4398 = vpack.c.b16 %v4383, %v4382
    %v4399 = vpack.c.b16 %v4385, %v4384
    %v4400 = vpack.c.b16 %v4387, %v4386
    %v4401 = vpack.c.b16 %v4389, %v4388
    %v4402 = vpack.c.b16 %v4391, %v4390
    %v4403 = vpack.c.b16 %v4393, %v4392
    %v4404 = vpack.c.b16 %v4395, %v4394
    %v4405 = vpack.c.b16 %v4397, %v4396
    %4414 = vmatprep.subr.bf16.mxu0 0
    %4415 = vmatpush1.bf16.msra.mxu0 %v4398
    %4416 = vmatprep.subr.bf16.mxu0 0
    %4417 = vmatpush1.bf16.msra.mxu0 %v4399
    %4418 = vmatprep.subr.bf16.mxu0 0
    %4419 = vmatpush1.bf16.msra.mxu0 %v4400
    %4420 = vmatprep.subr.bf16.mxu0 0
    %4421 = vmatpush1.bf16.msra.mxu0 %v4401
    %4422 = vmatprep.subr.bf16.mxu0 0
    %4423 = vmatpush1.bf16.msra.mxu0 %v4402
    %4424 = vmatprep.subr.bf16.mxu0 0
    %4425 = vmatpush1.bf16.msra.mxu0 %v4403
    %4426 = vmatprep.subr.bf16.mxu0 0
    %4427 = vmatpush1.bf16.msra.mxu0 %v4404
    %4428 = vmatprep.subr.bf16.mxu0 0
    %4429 = vmatpush1.bf16.msra.mxu0 %v4405
    %4430 = vmatprep.subr.bf16.mxu0 0
    %4431 = vmatpush1.bf16.msra.mxu0 0
    %4432 = vmatprep.subr.bf16.mxu0 0
    %4433 = vmatpush1.bf16.msra.mxu0 0
    %4434 = vmatprep.subr.bf16.mxu0 0
    %4435 = vmatpush1.bf16.msra.mxu0 0
    %4436 = vmatprep.subr.bf16.mxu0 0
    %4437 = vmatpush1.bf16.msra.mxu0 0
    %4438 = vmatprep.subr.bf16.mxu0 0
    %4439 = vmatpush1.bf16.msra.mxu0 0
    %4440 = vmatprep.subr.bf16.mxu0 0
    %4441 = vmatpush1.bf16.msra.mxu0 0
    %4442 = vmatprep.subr.bf16.mxu0 0
    %4443 = vmatpush1.bf16.msra.mxu0 0
    %4444 = vmatprep.subr.bf16.mxu0 0
    %4445 = vmatpush1.bf16.msra.mxu0 0
    %4446 = vmatprep.mubr.bf16.mxu0 0
    %4447 = vmatmul.mubr.bf16.gmra.mrb[0].mxu0 %v4359
    %v4448 = vpop.f32.mrb[0].mxu0
    %v4449 = vadd.f32 %v4364, %v4448
    %v4450 = vpop.f32.mrb[0].mxu0
    %v4451 = vpop.f32.mrb[0].mxu0
    %v4452 = vadd.f32 %v4364, %v4451
    %v4453 = vpop.f32.mrb[0].mxu0
    %4454 = vdwg.mxu0
    %v4455 = vadd.f32 %v4449, %v2716
    %v4456 = vadd.f32 %v4452, %v2717
    %s4457 = scalar_lea.vmem %s8, 1
    %v4458 = vld [vmem:[%s4457] sm:$0x1]
    %s4459 = scalar_lea.vmem %s9, 1
    %v4460 = vld [vmem:[%s4459] sm:$0x1]
    %4461 = vadd.xlane.f32.xlu0 %v4455
    %v4462 = vpop.xlane.xlu0 %4461
    %4463 = vadd.xlane.f32.xlu0 %v4456
    %v4464 = vpop.xlane.xlu0 %4463
    %v4465 = vmul.f32 %v4462, %v129
    %v4466 = vmul.f32 %v4464, %v129
    %v4467 = vsub.f32 %v4455, %v4465
    %v4468 = vsub.f32 %v4456, %v4466
    %v4469 = vmul.f32 %v4467, %v4467
    %v4470 = vmul.f32 %v4468, %v4468
    %4471 = vadd.xlane.f32.xlu0 %v4469
    %v4472 = vpop.xlane.xlu0 %4471
    %4473 = vadd.xlane.f32.xlu0 %v4470
    %v4474 = vpop.xlane.xlu0 %4473
    %v4475 = vmul.f32 %v4472, %v129
    %v4476 = vmul.f32 %v4474, %v129
    %v4477 = vadd.f32 %v4475, 1e-12
    %v4478 = vadd.f32 %v4476, 1e-12
    %v4479 = vrsqrt.pop %v4477
    %v4480 = vrsqrt.pop %v4478
    %v4481 = vmul.f32 %v4467, %v4479
    %v4482 = vmul.f32 %v4468, %v4480
    %v4484 = vlaneseq
    %v4485 = vshrl.u32 %v4484, 7
    %v4486 = vsub.s32 0, %v4485
    %v4487 = vrot.slane %v4458, %v4486
    %v4489 = vmul.f32 %v4481, %v4487
    %v4490 = vmul.f32 %v4482, %v4487
    %v4492 = vlaneseq
    %v4493 = vshrl.u32 %v4492, 7
    %v4494 = vsub.s32 0, %v4493
    %v4495 = vrot.slane %v4460, %v4494
    %v4497 = vadd.f32 %v4489, %v4495
    %v4498 = vadd.f32 %v4490, %v4495
    %s4499 = scalar_lea.vmem [#allocation4], 256
    %v4500 = vld [vmem:[%s4499] sm:$0xff]
    %v4501 = vld [vmem:[%s4499 + $0x8] sm:$0xff]
    %v4502 = vld [vmem:[%s4499 + $0x10] sm:$0xff]
    %v4503 = vld [vmem:[%s4499 + $0x18] sm:$0xff]
    %v4504 = vld [vmem:[%s4499 + $0x20] sm:$0xff]
    %v4505 = vld [vmem:[%s4499 + $0x28] sm:$0xff]
    %v4506 = vld [vmem:[%s4499 + $0x30] sm:$0xff]
    %v4507 = vld [vmem:[%s4499 + $0x38] sm:$0xff]
    %v4508 = vld [vmem:[%s4499 + $0x40] sm:$0xff]
    %v4509 = vld [vmem:[%s4499 + $0x48] sm:$0xff]
    %v4510 = vld [vmem:[%s4499 + $0x50] sm:$0xff]
    %v4511 = vld [vmem:[%s4499 + $0x58] sm:$0xff]
    %v4512 = vld [vmem:[%s4499 + $0x60] sm:$0xff]
    %v4513 = vld [vmem:[%s4499 + $0x68] sm:$0xff]
    %v4514 = vld [vmem:[%s4499 + $0x70] sm:$0xff]
    %v4515 = vld [vmem:[%s4499 + $0x78] sm:$0xff]
    %v4516 = vld [vmem:[%s4499 + $0x80] sm:$0xff]
    %v4517 = vld [vmem:[%s4499 + $0x88] sm:$0xff]
    %v4518 = vld [vmem:[%s4499 + $0x90] sm:$0xff]
    %v4519 = vld [vmem:[%s4499 + $0x98] sm:$0xff]
    %v4520 = vld [vmem:[%s4499 + $0xa0] sm:$0xff]
    %v4521 = vld [vmem:[%s4499 + $0xa8] sm:$0xff]
    %v4522 = vld [vmem:[%s4499 + $0xb0] sm:$0xff]
    %v4523 = vld [vmem:[%s4499 + $0xb8] sm:$0xff]
    %v4524 = vld [vmem:[%s4499 + $0xc0] sm:$0xff]
    %v4525 = vld [vmem:[%s4499 + $0xc8] sm:$0xff]
    %v4526 = vld [vmem:[%s4499 + $0xd0] sm:$0xff]
    %v4527 = vld [vmem:[%s4499 + $0xd8] sm:$0xff]
    %v4528 = vld [vmem:[%s4499 + $0xe0] sm:$0xff]
    %v4529 = vld [vmem:[%s4499 + $0xe8] sm:$0xff]
    %v4530 = vld [vmem:[%s4499 + $0xf0] sm:$0xff]
    %v4531 = vld [vmem:[%s4499 + $0xf8] sm:$0xff]
    %s4532 = scalar_lea.vmem %s11, 4
    %v4533 = vld [vmem:[%s4532] sm:$0xf]
    %v4534 = vpack.c.bf16 %v4498, %v4497
    %v4536 = vlaneseq
    %v4537 = vshrl.u32 %v4536, 7
    %v4538 = vsub.s32 0, %v4537
    %v4539 = vrot.slane %v4533, %v4538
    %v4540 = vlaneseq
    %v4541 = vshrl.u32 %v4540, 7
    %v4542 = vsub.s32 1, %v4541
    %v4543 = vrot.slane %v4533, %v4542
    %v4544 = vlaneseq
    %v4545 = vshrl.u32 %v4544, 7
    %v4546 = vsub.s32 2, %v4545
    %v4547 = vrot.slane %v4533, %v4546
    %v4548 = vlaneseq
    %v4549 = vshrl.u32 %v4548, 7
    %v4550 = vsub.s32 3, %v4549
    %v4551 = vrot.slane %v4533, %v4550
    %v4588 = vunpack.c.l.b16 %v4500
    %v4589 = vunpack.c.h.b16 %v4500
    %v4590 = vunpack.c.l.b16 %v4501
    %v4591 = vunpack.c.h.b16 %v4501
    %v4592 = vunpack.c.l.b16 %v4502
    %v4593 = vunpack.c.h.b16 %v4502
    %v4594 = vunpack.c.l.b16 %v4503
    %v4595 = vunpack.c.h.b16 %v4503
    %v4596 = vunpack.c.l.b16 %v4504
    %v4597 = vunpack.c.h.b16 %v4504
    %v4598 = vunpack.c.l.b16 %v4505
    %v4599 = vunpack.c.h.b16 %v4505
    %v4600 = vunpack.c.l.b16 %v4506
    %v4601 = vunpack.c.h.b16 %v4506
    %v4602 = vunpack.c.l.b16 %v4507
    %v4603 = vunpack.c.h.b16 %v4507
    %v4604 = vunpack.c.l.b16 %v4508
    %v4605 = vunpack.c.h.b16 %v4508
    %v4606 = vunpack.c.l.b16 %v4509
    %v4607 = vunpack.c.h.b16 %v4509
    %v4608 = vunpack.c.l.b16 %v4510
    %v4609 = vunpack.c.h.b16 %v4510
    %v4610 = vunpack.c.l.b16 %v4511
    %v4611 = vunpack.c.h.b16 %v4511
    %v4612 = vunpack.c.l.b16 %v4512
    %v4613 = vunpack.c.h.b16 %v4512
    %v4614 = vunpack.c.l.b16 %v4513
    %v4615 = vunpack.c.h.b16 %v4513
    %v4616 = vunpack.c.l.b16 %v4514
    %v4617 = vunpack.c.h.b16 %v4514
    %v4618 = vunpack.c.l.b16 %v4515
    %v4619 = vunpack.c.h.b16 %v4515
    %v4620 = vunpack.c.l.b16 %v4516
    %v4621 = vunpack.c.h.b16 %v4516
    %v4622 = vunpack.c.l.b16 %v4517
    %v4623 = vunpack.c.h.b16 %v4517
    %v4624 = vunpack.c.l.b16 %v4518
    %v4625 = vunpack.c.h.b16 %v4518
    %v4626 = vunpack.c.l.b16 %v4519
    %v4627 = vunpack.c.h.b16 %v4519
    %v4628 = vunpack.c.l.b16 %v4520
    %v4629 = vunpack.c.h.b16 %v4520
    %v4630 = vunpack.c.l.b16 %v4521
    %v4631 = vunpack.c.h.b16 %v4521
    %v4632 = vunpack.c.l.b16 %v4522
    %v4633 = vunpack.c.h.b16 %v4522
    %v4634 = vunpack.c.l.b16 %v4523
    %v4635 = vunpack.c.h.b16 %v4523
    %v4636 = vunpack.c.l.b16 %v4524
    %v4637 = vunpack.c.h.b16 %v4524
    %v4638 = vunpack.c.l.b16 %v4525
    %v4639 = vunpack.c.h.b16 %v4525
    %v4640 = vunpack.c.l.b16 %v4526
    %v4641 = vunpack.c.h.b16 %v4526
    %v4642 = vunpack.c.l.b16 %v4527
    %v4643 = vunpack.c.h.b16 %v4527
    %v4644 = vunpack.c.l.b16 %v4528
    %v4645 = vunpack.c.h.b16 %v4528
    %v4646 = vunpack.c.l.b16 %v4529
    %v4647 = vunpack.c.h.b16 %v4529
    %v4648 = vunpack.c.l.b16 %v4530
    %v4649 = vunpack.c.h.b16 %v4530
    %v4650 = vunpack.c.l.b16 %v4531
    %v4651 = vunpack.c.h.b16 %v4531
    %v4652 = vpack.c.b16 %v4592, %v4588
    %v4653 = vpack.c.b16 %v4593, %v4589
    %v4654 = vpack.c.b16 %v4594, %v4590
    %v4655 = vpack.c.b16 %v4595, %v4591
    %v4656 = vpack.c.b16 %v4600, %v4596
    %v4657 = vpack.c.b16 %v4601, %v4597
    %v4658 = vpack.c.b16 %v4602, %v4598
    %v4659 = vpack.c.b16 %v4603, %v4599
    %v4660 = vpack.c.b16 %v4608, %v4604
    %v4661 = vpack.c.b16 %v4609, %v4605
    %v4662 = vpack.c.b16 %v4610, %v4606
    %v4663 = vpack.c.b16 %v4611, %v4607
    %v4664 = vpack.c.b16 %v4616, %v4612
    %v4665 = vpack.c.b16 %v4617, %v4613
    %v4666 = vpack.c.b16 %v4618, %v4614
    %v4667 = vpack.c.b16 %v4619, %v4615
    %v4668 = vpack.c.b16 %v4624, %v4620
    %v4669 = vpack.c.b16 %v4625, %v4621
    %v4670 = vpack.c.b16 %v4626, %v4622
    %v4671 = vpack.c.b16 %v4627, %v4623
    %v4672 = vpack.c.b16 %v4632, %v4628
    %v4673 = vpack.c.b16 %v4633, %v4629
    %v4674 = vpack.c.b16 %v4634, %v4630
    %v4675 = vpack.c.b16 %v4635, %v4631
    %v4676 = vpack.c.b16 %v4640, %v4636
    %v4677 = vpack.c.b16 %v4641, %v4637
    %v4678 = vpack.c.b16 %v4642, %v4638
    %v4679 = vpack.c.b16 %v4643, %v4639
    %v4680 = vpack.c.b16 %v4648, %v4644
    %v4681 = vpack.c.b16 %v4649, %v4645
    %v4682 = vpack.c.b16 %v4650, %v4646
    %v4683 = vpack.c.b16 %v4651, %v4647
    %4716 = vmatprep.subr.bf16.mxu0 %v4653
    %4717 = vmatpush1.bf16.msra.mxu0 %v4652
    %4718 = vmatprep.subr.bf16.mxu0 %v4657
    %4719 = vmatpush1.bf16.msra.mxu0 %v4656
    %4720 = vmatprep.subr.bf16.mxu0 %v4661
    %4721 = vmatpush1.bf16.msra.mxu0 %v4660
    %4722 = vmatprep.subr.bf16.mxu0 %v4665
    %4723 = vmatpush1.bf16.msra.mxu0 %v4664
    %4724 = vmatprep.subr.bf16.mxu0 %v4669
    %4725 = vmatpush1.bf16.msra.mxu0 %v4668
    %4726 = vmatprep.subr.bf16.mxu0 %v4673
    %4727 = vmatpush1.bf16.msra.mxu0 %v4672
    %4728 = vmatprep.subr.bf16.mxu0 %v4677
    %4729 = vmatpush1.bf16.msra.mxu0 %v4676
    %4730 = vmatprep.subr.bf16.mxu0 %v4681
    %4731 = vmatpush1.bf16.msra.mxu0 %v4680
    %4732 = vmatprep.subr.bf16.mxu0 0
    %4733 = vmatpush1.bf16.msra.mxu0 0
    %4734 = vmatprep.subr.bf16.mxu0 0
    %4735 = vmatpush1.bf16.msra.mxu0 0
    %4736 = vmatprep.subr.bf16.mxu0 0
    %4737 = vmatpush1.bf16.msra.mxu0 0
    %4738 = vmatprep.subr.bf16.mxu0 0
    %4739 = vmatpush1.bf16.msra.mxu0 0
    %4740 = vmatprep.subr.bf16.mxu0 0
    %4741 = vmatpush1.bf16.msra.mxu0 0
    %4742 = vmatprep.subr.bf16.mxu0 0
    %4743 = vmatpush1.bf16.msra.mxu0 0
    %4744 = vmatprep.subr.bf16.mxu0 0
    %4745 = vmatpush1.bf16.msra.mxu0 0
    %4746 = vmatprep.subr.bf16.mxu0 0
    %4747 = vmatpush1.bf16.msra.mxu0 0
    %4748 = vmatprep.mubr.bf16.mxu0 0
    %4749 = vmatmul.mubr.bf16.gmra.mrb[0].mxu0 %v4534
    %v4750 = vpop.f32.mrb[0].mxu0
    %v4751 = vadd.f32 %v4539, %v4750
    %v4752 = vpop.f32.mrb[0].mxu0
    %v4753 = vadd.f32 %v4543, %v4752
    %v4754 = vpop.f32.mrb[0].mxu0
    %v4755 = vadd.f32 %v4539, %v4754
    %v4756 = vpop.f32.mrb[0].mxu0
    %v4757 = vadd.f32 %v4543, %v4756
    %4758 = vdwg.mxu0
    %4759 = vmatprep.subr.bf16.mxu0 %v4655
    %4760 = vmatpush1.bf16.msra.mxu0 %v4654
    %4761 = vmatprep.subr.bf16.mxu0 %v4659
    %4762 = vmatpush1.bf16.msra.mxu0 %v4658
    %4763 = vmatprep.subr.bf16.mxu0 %v4663
    %4764 = vmatpush1.bf16.msra.mxu0 %v4662
    %4765 = vmatprep.subr.bf16.mxu0 %v4667
    %4766 = vmatpush1.bf16.msra.mxu0 %v4666
    %4767 = vmatprep.subr.bf16.mxu0 %v4671
    %4768 = vmatpush1.bf16.msra.mxu0 %v4670
    %4769 = vmatprep.subr.bf16.mxu0 %v4675
    %4770 = vmatpush1.bf16.msra.mxu0 %v4674
    %4771 = vmatprep.subr.bf16.mxu0 %v4679
    %4772 = vmatpush1.bf16.msra.mxu0 %v4678
    %4773 = vmatprep.subr.bf16.mxu0 %v4683
    %4774 = vmatpush1.bf16.msra.mxu0 %v4682
    %4775 = vmatprep.subr.bf16.mxu0 0
    %4776 = vmatpush1.bf16.msra.mxu0 0
    %4777 = vmatprep.subr.bf16.mxu0 0
    %4778 = vmatpush1.bf16.msra.mxu0 0
    %4779 = vmatprep.subr.bf16.mxu0 0
    %4780 = vmatpush1.bf16.msra.mxu0 0
    %4781 = vmatprep.subr.bf16.mxu0 0
    %4782 = vmatpush1.bf16.msra.mxu0 0
    %4783 = vmatprep.subr.bf16.mxu0 0
    %4784 = vmatpush1.bf16.msra.mxu0 0
    %4785 = vmatprep.subr.bf16.mxu0 0
    %4786 = vmatpush1.bf16.msra.mxu0 0
    %4787 = vmatprep.subr.bf16.mxu0 0
    %4788 = vmatpush1.bf16.msra.mxu0 0
    %4789 = vmatprep.subr.bf16.mxu0 0
    %4790 = vmatpush1.bf16.msra.mxu0 0
    %4791 = vmatprep.mubr.bf16.mxu0 0
    %4792 = vmatmul.mubr.bf16.gmra.mrb[0].mxu0 %v4534
    %v4793 = vpop.f32.mrb[0].mxu0
    %v4794 = vadd.f32 %v4547, %v4793
    %v4795 = vpop.f32.mrb[0].mxu0
    %v4796 = vadd.f32 %v4551, %v4795
    %v4797 = vpop.f32.mrb[0].mxu0
    %v4798 = vadd.f32 %v4547, %v4797
    %v4799 = vpop.f32.mrb[0].mxu0
    %v4800 = vadd.f32 %v4551, %v4799
    %4801 = vdwg.mxu0
    %v4802 = vmul.f32 %v4751, 0.5
    %v4803 = vmul.f32 %v4753, 0.5
    %v4804 = vmul.f32 %v4794, 0.5
    %v4805 = vmul.f32 %v4796, 0.5
    %v4806 = vmul.f32 %v4755, 0.5
    %v4807 = vmul.f32 %v4757, 0.5
    %v4808 = vmul.f32 %v4798, 0.5
    %v4809 = vmul.f32 %v4800, 0.5
    %v4810 = vmul.f32 %v4751, 0.044715
    %v4811 = vmul.f32 %v4753, 0.044715
    %v4812 = vmul.f32 %v4794, 0.044715
    %v4813 = vmul.f32 %v4796, 0.044715
    %v4814 = vmul.f32 %v4755, 0.044715
    %v4815 = vmul.f32 %v4757, 0.044715
    %v4816 = vmul.f32 %v4798, 0.044715
    %v4817 = vmul.f32 %v4800, 0.044715
    %v4818 = vmul.f32 %v4810, %v4751
    %v4819 = vmul.f32 %v4811, %v4753
    %v4820 = vmul.f32 %v4812, %v4794
    %v4821 = vmul.f32 %v4813, %v4796
    %v4822 = vmul.f32 %v4814, %v4755
    %v4823 = vmul.f32 %v4815, %v4757
    %v4824 = vmul.f32 %v4816, %v4798
    %v4825 = vmul.f32 %v4817, %v4800
    %v4826 = vmul.f32 %v4818, %v4751
    %v4827 = vmul.f32 %v4819, %v4753
    %v4828 = vmul.f32 %v4820, %v4794
    %v4829 = vmul.f32 %v4821, %v4796
    %v4830 = vmul.f32 %v4822, %v4755
    %v4831 = vmul.f32 %v4823, %v4757
    %v4832 = vmul.f32 %v4824, %v4798
    %v4833 = vmul.f32 %v4825, %v4800
    %v4834 = vadd.f32 %v4751, %v4826
    %v4835 = vadd.f32 %v4753, %v4827
    %v4836 = vadd.f32 %v4794, %v4828
    %v4837 = vadd.f32 %v4796, %v4829
    %v4838 = vadd.f32 %v4755, %v4830
    %v4839 = vadd.f32 %v4757, %v4831
    %v4840 = vadd.f32 %v4798, %v4832
    %v4841 = vadd.f32 %v4800, %v4833
    %v4842 = vmul.f32 %v4834, 0.7978846
    %v4843 = vmul.f32 %v4835, 0.7978846
    %v4844 = vmul.f32 %v4836, 0.7978846
    %v4845 = vmul.f32 %v4837, 0.7978846
    %v4846 = vmul.f32 %v4838, 0.7978846
    %v4847 = vmul.f32 %v4839, 0.7978846
    %v4848 = vmul.f32 %v4840, 0.7978846
    %v4849 = vmul.f32 %v4841, 0.7978846
    %v4850 = vtanh.pop %v4842
    %v4851 = vtanh.pop %v4843
    %v4852 = vtanh.pop %v4844
    %v4853 = vtanh.pop %v4845
    %v4854 = vtanh.pop %v4846
    %v4855 = vtanh.pop %v4847
    %v4856 = vtanh.pop %v4848
    %v4857 = vtanh.pop %v4849
    %v4858 = vadd.f32 %v4850, 1.0
    %v4859 = vadd.f32 %v4851, 1.0
    %v4860 = vadd.f32 %v4852, 1.0
    %v4861 = vadd.f32 %v4853, 1.0
    %v4862 = vadd.f32 %v4854, 1.0
    %v4863 = vadd.f32 %v4855, 1.0
    %v4864 = vadd.f32 %v4856, 1.0
    %v4865 = vadd.f32 %v4857, 1.0
    %v4866 = vmul.f32 %v4802, %v4858
    %v4867 = vmul.f32 %v4803, %v4859
    %v4868 = vmul.f32 %v4804, %v4860
    %v4869 = vmul.f32 %v4805, %v4861
    %v4870 = vmul.f32 %v4806, %v4862
    %v4871 = vmul.f32 %v4807, %v4863
    %v4872 = vmul.f32 %v4808, %v4864
    %v4873 = vmul.f32 %v4809, %v4865
    %s4874 = scalar_lea.vmem [#allocation6], 256
    %v4875 = vld [vmem:[%s4874] sm:$0xf]
    %v4876 = vld [vmem:[%s4874 + $0x4] sm:$0xf]
    %v4877 = vld [vmem:[%s4874 + $0x8] sm:$0xf]
    %v4878 = vld [vmem:[%s4874 + $0xc] sm:$0xf]
    %v4879 = vld [vmem:[%s4874 + $0x10] sm:$0xf]
    %v4880 = vld [vmem:[%s4874 + $0x14] sm:$0xf]
    %v4881 = vld [vmem:[%s4874 + $0x18] sm:$0xf]
    %v4882 = vld [vmem:[%s4874 + $0x1c] sm:$0xf]
    %v4883 = vld [vmem:[%s4874 + $0x20] sm:$0xf]
    %v4884 = vld [vmem:[%s4874 + $0x24] sm:$0xf]
    %v4885 = vld [vmem:[%s4874 + $0x28] sm:$0xf]
    %v4886 = vld [vmem:[%s4874 + $0x2c] sm:$0xf]
    %v4887 = vld [vmem:[%s4874 + $0x30] sm:$0xf]
    %v4888 = vld [vmem:[%s4874 + $0x34] sm:$0xf]
    %v4889 = vld [vmem:[%s4874 + $0x38] sm:$0xf]
    %v4890 = vld [vmem:[%s4874 + $0x3c] sm:$0xf]
    %v4891 = vld [vmem:[%s4874 + $0x40] sm:$0xf]
    %v4892 = vld [vmem:[%s4874 + $0x44] sm:$0xf]
    %v4893 = vld [vmem:[%s4874 + $0x48] sm:$0xf]
    %v4894 = vld [vmem:[%s4874 + $0x4c] sm:$0xf]
    %v4895 = vld [vmem:[%s4874 + $0x50] sm:$0xf]
    %v4896 = vld [vmem:[%s4874 + $0x54] sm:$0xf]
    %v4897 = vld [vmem:[%s4874 + $0x58] sm:$0xf]
    %v4898 = vld [vmem:[%s4874 + $0x5c] sm:$0xf]
    %v4899 = vld [vmem:[%s4874 + $0x60] sm:$0xf]
    %v4900 = vld [vmem:[%s4874 + $0x64] sm:$0xf]
    %v4901 = vld [vmem:[%s4874 + $0x68] sm:$0xf]
    %v4902 = vld [vmem:[%s4874 + $0x6c] sm:$0xf]
    %v4903 = vld [vmem:[%s4874 + $0x70] sm:$0xf]
    %v4904 = vld [vmem:[%s4874 + $0x74] sm:$0xf]
    %v4905 = vld [vmem:[%s4874 + $0x78] sm:$0xf]
    %v4906 = vld [vmem:[%s4874 + $0x7c] sm:$0xf]
    %v4907 = vld [vmem:[%s4874 + $0x80] sm:$0xf]
    %v4908 = vld [vmem:[%s4874 + $0x84] sm:$0xf]
    %v4909 = vld [vmem:[%s4874 + $0x88] sm:$0xf]
    %v4910 = vld [vmem:[%s4874 + $0x8c] sm:$0xf]
    %v4911 = vld [vmem:[%s4874 + $0x90] sm:$0xf]
    %v4912 = vld [vmem:[%s4874 + $0x94] sm:$0xf]
    %v4913 = vld [vmem:[%s4874 + $0x98] sm:$0xf]
    %v4914 = vld [vmem:[%s4874 + $0x9c] sm:$0xf]
    %v4915 = vld [vmem:[%s4874 + $0xa0] sm:$0xf]
    %v4916 = vld [vmem:[%s4874 + $0xa4] sm:$0xf]
    %v4917 = vld [vmem:[%s4874 + $0xa8] sm:$0xf]
    %v4918 = vld [vmem:[%s4874 + $0xac] sm:$0xf]
    %v4919 = vld [vmem:[%s4874 + $0xb0] sm:$0xf]
    %v4920 = vld [vmem:[%s4874 + $0xb4] sm:$0xf]
    %v4921 = vld [vmem:[%s4874 + $0xb8] sm:$0xf]
    %v4922 = vld [vmem:[%s4874 + $0xbc] sm:$0xf]
    %v4923 = vld [vmem:[%s4874 + $0xc0] sm:$0xf]
    %v4924 = vld [vmem:[%s4874 + $0xc4] sm:$0xf]
    %v4925 = vld [vmem:[%s4874 + $0xc8] sm:$0xf]
    %v4926 = vld [vmem:[%s4874 + $0xcc] sm:$0xf]
    %v4927 = vld [vmem:[%s4874 + $0xd0] sm:$0xf]
    %v4928 = vld [vmem:[%s4874 + $0xd4] sm:$0xf]
    %v4929 = vld [vmem:[%s4874 + $0xd8] sm:$0xf]
    %v4930 = vld [vmem:[%s4874 + $0xdc] sm:$0xf]
    %v4931 = vld [vmem:[%s4874 + $0xe0] sm:$0xf]
    %v4932 = vld [vmem:[%s4874 + $0xe4] sm:$0xf]
    %v4933 = vld [vmem:[%s4874 + $0xe8] sm:$0xf]
    %v4934 = vld [vmem:[%s4874 + $0xec] sm:$0xf]
    %v4935 = vld [vmem:[%s4874 + $0xf0] sm:$0xf]
    %v4936 = vld [vmem:[%s4874 + $0xf4] sm:$0xf]
    %v4937 = vld [vmem:[%s4874 + $0xf8] sm:$0xf]
    %v4938 = vld [vmem:[%s4874 + $0xfc] sm:$0xf]
    %s4939 = scalar_lea.vmem %s13, 1
    %v4940 = vld [vmem:[%s4939] sm:$0x1]
    %v4941 = vpack.c.bf16 %v4870, %v4866
    %v4942 = vpack.c.bf16 %v4871, %v4867
    %v4943 = vpack.c.bf16 %v4872, %v4868
    %v4944 = vpack.c.bf16 %v4873, %v4869
    %v4946 = vlaneseq
    %v4947 = vshrl.u32 %v4946, 7
    %v4948 = vsub.s32 0, %v4947
    %v4949 = vrot.slane %v4940, %v4948
    %v5015 = vunpack.c.l.b16 %v4875
    %v5016 = vunpack.c.l.b16 %v4876
    %v5017 = vunpack.c.l.b16 %v4877
    %v5018 = vunpack.c.l.b16 %v4878
    %v5019 = vunpack.c.l.b16 %v4879
    %v5020 = vunpack.c.l.b16 %v4880
    %v5021 = vunpack.c.l.b16 %v4881
    %v5022 = vunpack.c.l.b16 %v4882
    %v5023 = vunpack.c.l.b16 %v4883
    %v5024 = vunpack.c.l.b16 %v4884
    %v5025 = vunpack.c.l.b16 %v4885
    %v5026 = vunpack.c.l.b16 %v4886
    %v5027 = vunpack.c.l.b16 %v4887
    %v5028 = vunpack.c.l.b16 %v4888
    %v5029 = vunpack.c.l.b16 %v4889
    %v5030 = vunpack.c.l.b16 %v4890
    %v5031 = vunpack.c.l.b16 %v4891
    %v5032 = vunpack.c.l.b16 %v4892
    %v5033 = vunpack.c.l.b16 %v4893
    %v5034 = vunpack.c.l.b16 %v4894
    %v5035 = vunpack.c.l.b16 %v4895
    %v5036 = vunpack.c.l.b16 %v4896
    %v5037 = vunpack.c.l.b16 %v4897
    %v5038 = vunpack.c.l.b16 %v4898
    %v5039 = vunpack.c.l.b16 %v4899
    %v5040 = vunpack.c.l.b16 %v4900
    %v5041 = vunpack.c.l.b16 %v4901
    %v5042 = vunpack.c.l.b16 %v4902
    %v5043 = vunpack.c.l.b16 %v4903
    %v5044 = vunpack.c.l.b16 %v4904
    %v5045 = vunpack.c.l.b16 %v4905
    %v5046 = vunpack.c.l.b16 %v4906
    %v5047 = vunpack.c.l.b16 %v4907
    %v5048 = vunpack.c.l.b16 %v4908
    %v5049 = vunpack.c.l.b16 %v4909
    %v5050 = vunpack.c.l.b16 %v4910
    %v5051 = vunpack.c.l.b16 %v4911
    %v5052 = vunpack.c.l.b16 %v4912
    %v5053 = vunpack.c.l.b16 %v4913
    %v5054 = vunpack.c.l.b16 %v4914
    %v5055 = vunpack.c.l.b16 %v4915
    %v5056 = vunpack.c.l.b16 %v4916
    %v5057 = vunpack.c.l.b16 %v4917
    %v5058 = vunpack.c.l.b16 %v4918
    %v5059 = vunpack.c.l.b16 %v4919
    %v5060 = vunpack.c.l.b16 %v4920
    %v5061 = vunpack.c.l.b16 %v4921
    %v5062 = vunpack.c.l.b16 %v4922
    %v5063 = vunpack.c.l.b16 %v4923
    %v5064 = vunpack.c.l.b16 %v4924
    %v5065 = vunpack.c.l.b16 %v4925
    %v5066 = vunpack.c.l.b16 %v4926
    %v5067 = vunpack.c.l.b16 %v4927
    %v5068 = vunpack.c.l.b16 %v4928
    %v5069 = vunpack.c.l.b16 %v4929
    %v5070 = vunpack.c.l.b16 %v4930
    %v5071 = vunpack.c.l.b16 %v4931
    %v5072 = vunpack.c.l.b16 %v4932
    %v5073 = vunpack.c.l.b16 %v4933
    %v5074 = vunpack.c.l.b16 %v4934
    %v5075 = vunpack.c.l.b16 %v4935
    %v5076 = vunpack.c.l.b16 %v4936
    %v5077 = vunpack.c.l.b16 %v4937
    %v5078 = vunpack.c.l.b16 %v4938
    %v5079 = vpack.c.b16 %v5016, %v5015
    %v5080 = vpack.c.b16 %v5018, %v5017
    %v5081 = vpack.c.b16 %v5020, %v5019
    %v5082 = vpack.c.b16 %v5022, %v5021
    %v5083 = vpack.c.b16 %v5024, %v5023
    %v5084 = vpack.c.b16 %v5026, %v5025
    %v5085 = vpack.c.b16 %v5028, %v5027
    %v5086 = vpack.c.b16 %v5030, %v5029
    %v5087 = vpack.c.b16 %v5032, %v5031
    %v5088 = vpack.c.b16 %v5034, %v5033
    %v5089 = vpack.c.b16 %v5036, %v5035
    %v5090 = vpack.c.b16 %v5038, %v5037
    %v5091 = vpack.c.b16 %v5040, %v5039
    %v5092 = vpack.c.b16 %v5042, %v5041
    %v5093 = vpack.c.b16 %v5044, %v5043
    %v5094 = vpack.c.b16 %v5046, %v5045
    %v5095 = vpack.c.b16 %v5048, %v5047
    %v5096 = vpack.c.b16 %v5050, %v5049
    %v5097 = vpack.c.b16 %v5052, %v5051
    %v5098 = vpack.c.b16 %v5054, %v5053
    %v5099 = vpack.c.b16 %v5056, %v5055
    %v5100 = vpack.c.b16 %v5058, %v5057
    %v5101 = vpack.c.b16 %v5060, %v5059
    %v5102 = vpack.c.b16 %v5062, %v5061
    %v5103 = vpack.c.b16 %v5064, %v5063
    %v5104 = vpack.c.b16 %v5066, %v5065
    %v5105 = vpack.c.b16 %v5068, %v5067
    %v5106 = vpack.c.b16 %v5070, %v5069
    %v5107 = vpack.c.b16 %v5072, %v5071
    %v5108 = vpack.c.b16 %v5074, %v5073
    %v5109 = vpack.c.b16 %v5076, %v5075
    %v5110 = vpack.c.b16 %v5078, %v5077
    %5143 = vmatprep.subr.bf16.mxu0 0
    %5144 = vmatpush1.bf16.msra.mxu0 %v5079
    %5145 = vmatprep.subr.bf16.mxu0 0
    %5146 = vmatpush1.bf16.msra.mxu0 %v5080
    %5147 = vmatprep.subr.bf16.mxu0 0
    %5148 = vmatpush1.bf16.msra.mxu0 %v5081
    %5149 = vmatprep.subr.bf16.mxu0 0
    %5150 = vmatpush1.bf16.msra.mxu0 %v5082
    %5151 = vmatprep.subr.bf16.mxu0 0
    %5152 = vmatpush1.bf16.msra.mxu0 %v5083
    %5153 = vmatprep.subr.bf16.mxu0 0
    %5154 = vmatpush1.bf16.msra.mxu0 %v5084
    %5155 = vmatprep.subr.bf16.mxu0 0
    %5156 = vmatpush1.bf16.msra.mxu0 %v5085
    %5157 = vmatprep.subr.bf16.mxu0 0
    %5158 = vmatpush1.bf16.msra.mxu0 %v5086
    %5159 = vmatprep.subr.bf16.mxu0 0
    %5160 = vmatpush1.bf16.msra.mxu0 %v5087
    %5161 = vmatprep.subr.bf16.mxu0 0
    %5162 = vmatpush1.bf16.msra.mxu0 %v5088
    %5163 = vmatprep.subr.bf16.mxu0 0
    %5164 = vmatpush1.bf16.msra.mxu0 %v5089
    %5165 = vmatprep.subr.bf16.mxu0 0
    %5166 = vmatpush1.bf16.msra.mxu0 %v5090
    %5167 = vmatprep.subr.bf16.mxu0 0
    %5168 = vmatpush1.bf16.msra.mxu0 %v5091
    %5169 = vmatprep.subr.bf16.mxu0 0
    %5170 = vmatpush1.bf16.msra.mxu0 %v5092
    %5171 = vmatprep.subr.bf16.mxu0 0
    %5172 = vmatpush1.bf16.msra.mxu0 %v5093
    %5173 = vmatprep.subr.bf16.mxu0 0
    %5174 = vmatpush1.bf16.msra.mxu0 %v5094
    %5175 = vmatprep.mubr.bf16.mxu0 %v4942
    %5176 = vmatmul.mubr.bf16.gmra.mrb[0].mxu0 %v4941
    %v5177 = vpop.f32.mrb[0].mxu0
    %v5178 = vadd.f32 %v4949, %v5177
    %v5179 = vpop.f32.mrb[0].mxu0
    %v5180 = vpop.f32.mrb[0].mxu0
    %v5181 = vadd.f32 %v4949, %v5180
    %v5182 = vpop.f32.mrb[0].mxu0
    %5183 = vdwg.mxu0
    %5184 = vmatprep.subr.bf16.mxu0 0
    %5185 = vmatpush1.bf16.msra.mxu0 %v5095
    %5186 = vmatprep.subr.bf16.mxu0 0
    %5187 = vmatpush1.bf16.msra.mxu0 %v5096
    %5188 = vmatprep.subr.bf16.mxu0 0
    %5189 = vmatpush1.bf16.msra.mxu0 %v5097
    %5190 = vmatprep.subr.bf16.mxu0 0
    %5191 = vmatpush1.bf16.msra.mxu0 %v5098
    %5192 = vmatprep.subr.bf16.mxu0 0
    %5193 = vmatpush1.bf16.msra.mxu0 %v5099
    %5194 = vmatprep.subr.bf16.mxu0 0
    %5195 = vmatpush1.bf16.msra.mxu0 %v5100
    %5196 = vmatprep.subr.bf16.mxu0 0
    %5197 = vmatpush1.bf16.msra.mxu0 %v5101
    %5198 = vmatprep.subr.bf16.mxu0 0
    %5199 = vmatpush1.bf16.msra.mxu0 %v5102
    %5200 = vmatprep.subr.bf16.mxu0 0
    %5201 = vmatpush1.bf16.msra.mxu0 %v5103
    %5202 = vmatprep.subr.bf16.mxu0 0
    %5203 = vmatpush1.bf16.msra.mxu0 %v5104
    %5204 = vmatprep.subr.bf16.mxu0 0
    %5205 = vmatpush1.bf16.msra.mxu0 %v5105
    %5206 = vmatprep.subr.bf16.mxu0 0
    %5207 = vmatpush1.bf16.msra.mxu0 %v5106
    %5208 = vmatprep.subr.bf16.mxu0 0
    %5209 = vmatpush1.bf16.msra.mxu0 %v5107
    %5210 = vmatprep.subr.bf16.mxu0 0
    %5211 = vmatpush1.bf16.msra.mxu0 %v5108
    %5212 = vmatprep.subr.bf16.mxu0 0
    %5213 = vmatpush1.bf16.msra.mxu0 %v5109
    %5214 = vmatprep.subr.bf16.mxu0 0
    %5215 = vmatpush1.bf16.msra.mxu0 %v5110
    %5216 = vmatprep.mubr.bf16.mxu0 %v4944
    %5217 = vmatmul.mubr.bf16.gmra.mrb[0].mxu0 %v4943
    %v5218 = vpop.f32.mrb[0].mxu0
    %v5219 = vadd.f32 %v5178, %v5218
    %v5220 = vpop.f32.mrb[0].mxu0
    %v5221 = vpop.f32.mrb[0].mxu0
    %v5222 = vadd.f32 %v5181, %v5221
    %v5223 = vpop.f32.mrb[0].mxu0
    %5224 = vdwg.mxu0
    %v5225 = vadd.f32 %v5219, %v4497
    %v5226 = vadd.f32 %v5222, %v4498
    %s5227 = scalar_lea.vmem %s14, 1
    %v5228 = vld [vmem:[%s5227] sm:$0x1]
    %s5229 = scalar_lea.vmem %s15, 1
    %v5230 = vld [vmem:[%s5229] sm:$0x1]
    %5231 = vadd.xlane.f32.xlu0 %v5225
    %v5232 = vpop.xlane.xlu0 %5231
    %5233 = vadd.xlane.f32.xlu0 %v5226
    %v5234 = vpop.xlane.xlu0 %5233
    %v5235 = vmul.f32 %v5232, %v129
    %v5236 = vmul.f32 %v5234, %v129
    %v5237 = vsub.f32 %v5225, %v5235
    %v5238 = vsub.f32 %v5226, %v5236
    %v5239 = vmul.f32 %v5237, %v5237
    %v5240 = vmul.f32 %v5238, %v5238
    %5241 = vadd.xlane.f32.xlu0 %v5239
    %v5242 = vpop.xlane.xlu0 %5241
    %5243 = vadd.xlane.f32.xlu0 %v5240
    %v5244 = vpop.xlane.xlu0 %5243
    %v5245 = vmul.f32 %v5242, %v129
    %v5246 = vmul.f32 %v5244, %v129
    %v5247 = vadd.f32 %v5245, 1e-12
    %v5248 = vadd.f32 %v5246, 1e-12
    %v5249 = vrsqrt.pop %v5247
    %v5250 = vrsqrt.pop %v5248
    %v5251 = vmul.f32 %v5237, %v5249
    %v5252 = vmul.f32 %v5238, %v5250
    %v5254 = vlaneseq
    %v5255 = vshrl.u32 %v5254, 7
    %v5256 = vsub.s32 0, %v5255
    %v5257 = vrot.slane %v5228, %v5256
    %v5259 = vmul.f32 %v5251, %v5257
    %v5260 = vmul.f32 %v5252, %v5257
    %v5262 = vlaneseq
    %v5263 = vshrl.u32 %v5262, 7
    %v5264 = vsub.s32 0, %v5263
    %v5265 = vrot.slane %v5230, %v5264
    %v5267 = vadd.f32 %v5259, %v5265
    %v5268 = vadd.f32 %v5260, %v5265
    %v5269 = vld [vmem:[#allocation7] sm:$0xff]
    %v5270 = vld [vmem:[#allocation7 + $0x8] sm:$0xff]
    %v5271 = vld [vmem:[#allocation7 + $0x10] sm:$0xff]
    %v5272 = vld [vmem:[#allocation7 + $0x18] sm:$0xff]
    %v5273 = vld [vmem:[#allocation7 + $0x20] sm:$0xff]
    %v5274 = vld [vmem:[#allocation7 + $0x28] sm:$0xff]
    %v5275 = vld [vmem:[#allocation7 + $0x30] sm:$0xff]
    %v5276 = vld [vmem:[#allocation7 + $0x38] sm:$0xff]
    %v5277 = vld [vmem:[#allocation7 + $0x40] sm:$0xff]
    %v5278 = vld [vmem:[#allocation7 + $0x48] sm:$0xff]
    %v5279 = vld [vmem:[#allocation7 + $0x50] sm:$0xff]
    %v5280 = vld [vmem:[#allocation7 + $0x58] sm:$0xff]
    %v5281 = vld [vmem:[#allocation7 + $0x60] sm:$0xff]
    %v5282 = vld [vmem:[#allocation7 + $0x68] sm:$0xff]
    %v5283 = vld [vmem:[#allocation7 + $0x70] sm:$0xff]
    %v5284 = vld [vmem:[#allocation7 + $0x78] sm:$0xff]
    %v5285 = vld [vmem:[%s17] sm:$0x3]
    %v5286 = vpack.c.bf16 %v5268, %v5267
    %v5288 = vlaneseq
    %v5289 = vshrl.u32 %v5288, 7
    %v5290 = vsub.s32 0, %v5289
    %v5291 = vrot.slane %v5285, %v5290
    %v5292 = vlaneseq
    %v5293 = vshrl.u32 %v5292, 7
    %v5294 = vsub.s32 1, %v5293
    %v5295 = vrot.slane %v5285, %v5294
    %v5314 = vunpack.c.l.b16 %v5269
    %v5315 = vunpack.c.h.b16 %v5269
    %v5316 = vunpack.c.l.b16 %v5270
    %v5317 = vunpack.c.h.b16 %v5270
    %v5318 = vunpack.c.l.b16 %v5271
    %v5319 = vunpack.c.h.b16 %v5271
    %v5320 = vunpack.c.l.b16 %v5272
    %v5321 = vunpack.c.h.b16 %v5272
    %v5322 = vunpack.c.l.b16 %v5273
    %v5323 = vunpack.c.h.b16 %v5273
    %v5324 = vunpack.c.l.b16 %v5274
    %v5325 = vunpack.c.h.b16 %v5274
    %v5326 = vunpack.c.l.b16 %v5275
    %v5327 = vunpack.c.h.b16 %v5275
    %v5328 = vunpack.c.l.b16 %v5276
    %v5329 = vunpack.c.h.b16 %v5276
    %v5330 = vunpack.c.l.b16 %v5277
    %v5331 = vunpack.c.h.b16 %v5277
    %v5332 = vunpack.c.l.b16 %v5278
    %v5333 = vunpack.c.h.b16 %v5278
    %v5334 = vunpack.c.l.b16 %v5279
    %v5335 = vunpack.c.h.b16 %v5279
    %v5336 = vunpack.c.l.b16 %v5280
    %v5337 = vunpack.c.h.b16 %v5280
    %v5338 = vunpack.c.l.b16 %v5281
    %v5339 = vunpack.c.h.b16 %v5281
    %v5340 = vunpack.c.l.b16 %v5282
    %v5341 = vunpack.c.h.b16 %v5282
    %v5342 = vunpack.c.l.b16 %v5283
    %v5343 = vunpack.c.h.b16 %v5283
    %v5344 = vunpack.c.l.b16 %v5284
    %v5345 = vunpack.c.h.b16 %v5284
    %v5346 = vpack.c.b16 %v5316, %v5314
    %v5347 = vpack.c.b16 %v5317, %v5315
    %v5348 = vpack.c.b16 %v5320, %v5318
    %v5349 = vpack.c.b16 %v5321, %v5319
    %v5350 = vpack.c.b16 %v5324, %v5322
    %v5351 = vpack.c.b16 %v5325, %v5323
    %v5352 = vpack.c.b16 %v5328, %v5326
    %v5353 = vpack.c.b16 %v5329, %v5327
    %v5354 = vpack.c.b16 %v5332, %v5330
    %v5355 = vpack.c.b16 %v5333, %v5331
    %v5356 = vpack.c.b16 %v5336, %v5334
    %v5357 = vpack.c.b16 %v5337, %v5335
    %v5358 = vpack.c.b16 %v5340, %v5338
    %v5359 = vpack.c.b16 %v5341, %v5339
    %v5360 = vpack.c.b16 %v5344, %v5342
    %v5361 = vpack.c.b16 %v5345, %v5343
    %5378 = vmatprep.subr.bf16.mxu0 %v5347
    %5379 = vmatpush1.bf16.msra.mxu0 %v5346
    %5380 = vmatprep.subr.bf16.mxu0 %v5349
    %5381 = vmatpush1.bf16.msra.mxu0 %v5348
    %5382 = vmatprep.subr.bf16.mxu0 %v5351
    %5383 = vmatpush1.bf16.msra.mxu0 %v5350
    %5384 = vmatprep.subr.bf16.mxu0 %v5353
    %5385 = vmatpush1.bf16.msra.mxu0 %v5352
    %5386 = vmatprep.subr.bf16.mxu0 %v5355
    %5387 = vmatpush1.bf16.msra.mxu0 %v5354
    %5388 = vmatprep.subr.bf16.mxu0 %v5357
    %5389 = vmatpush1.bf16.msra.mxu0 %v5356
    %5390 = vmatprep.subr.bf16.mxu0 %v5359
    %5391 = vmatpush1.bf16.msra.mxu0 %v5358
    %5392 = vmatprep.subr.bf16.mxu0 %v5361
    %5393 = vmatpush1.bf16.msra.mxu0 %v5360
    %5394 = vmatprep.subr.bf16.mxu0 0
    %5395 = vmatpush1.bf16.msra.mxu0 0
    %5396 = vmatprep.subr.bf16.mxu0 0
    %5397 = vmatpush1.bf16.msra.mxu0 0
    %5398 = vmatprep.subr.bf16.mxu0 0
    %5399 = vmatpush1.bf16.msra.mxu0 0
    %5400 = vmatprep.subr.bf16.mxu0 0
    %5401 = vmatpush1.bf16.msra.mxu0 0
    %5402 = vmatprep.subr.bf16.mxu0 0
    %5403 = vmatpush1.bf16.msra.mxu0 0
    %5404 = vmatprep.subr.bf16.mxu0 0
    %5405 = vmatpush1.bf16.msra.mxu0 0
    %5406 = vmatprep.subr.bf16.mxu0 0
    %5407 = vmatpush1.bf16.msra.mxu0 0
    %5408 = vmatprep.subr.bf16.mxu0 0
    %5409 = vmatpush1.bf16.msra.mxu0 0
    %5410 = vmatprep.mubr.bf16.mxu0 0
    %5411 = vmatmul.mubr.bf16.gmra.mrb[0].mxu0 %v200
    %v5412 = vpop.f32.mrb[0].mxu0
    %v5413 = vadd.f32 %v5291, %v5412
    %v5414 = vpop.f32.mrb[0].mxu0
    %v5415 = vadd.f32 %v5295, %v5414
    %v5416 = vpop.f32.mrb[0].mxu0
    %v5417 = vadd.f32 %v5291, %v5416
    %v5418 = vpop.f32.mrb[0].mxu0
    %v5419 = vadd.f32 %v5295, %v5418
    %5420 = vmatprep.mubr.bf16.mxu0 0
    %5421 = vmatmul.mubr.bf16.gmra.mrb[0].mxu0 %v2753
    %v5422 = vpop.f32.mrb[0].mxu0
    %v5423 = vadd.f32 %v5291, %v5422
    %v5424 = vpop.f32.mrb[0].mxu0
    %v5425 = vadd.f32 %v5295, %v5424
    %v5426 = vpop.f32.mrb[0].mxu0
    %v5427 = vadd.f32 %v5291, %v5426
    %v5428 = vpop.f32.mrb[0].mxu0
    %v5429 = vadd.f32 %v5295, %v5428
    %5430 = vmatprep.mubr.bf16.mxu0 0
    %5431 = vmatmul.mubr.bf16.gmra.mrb[0].mxu0 %v5286
    %v5432 = vpop.f32.mrb[0].mxu0
    %v5433 = vadd.f32 %v5291, %v5432
    %v5434 = vpop.f32.mrb[0].mxu0
    %v5435 = vadd.f32 %v5295, %v5434
    %v5436 = vpop.f32.mrb[0].mxu0
    %v5437 = vadd.f32 %v5291, %v5436
    %v5438 = vpop.f32.mrb[0].mxu0
    %v5439 = vadd.f32 %v5295, %v5438
    %5440 = vdwg.mxu0
    %v5441 = vld [vmem:[%s18] sm:$0xf]
    %v5442 = vld [vmem:[%s18 + $0x4] sm:$0xf]
    %v5443 = vld [vmem:[%s18 + $0x8] sm:$0xf]
    %v5444 = vld [vmem:[%s18 + $0xc] sm:$0xf]
    %v5445 = vld [vmem:[%s18 + $0x10] sm:$0xf]
    %v5446 = vld [vmem:[%s18 + $0x14] sm:$0xf]
    %v5447 = vld [vmem:[%s18 + $0x18] sm:$0xf]
    %v5448 = vld [vmem:[%s18 + $0x1c] sm:$0xf]
    %v5449 = vld [vmem:[%s18 + $0x20] sm:$0xf]
    %v5450 = vld [vmem:[%s18 + $0x24] sm:$0xf]
    %v5451 = vld [vmem:[%s18 + $0x28] sm:$0xf]
    %v5452 = vld [vmem:[%s18 + $0x2c] sm:$0xf]
    %v5453 = vld [vmem:[%s18 + $0x30] sm:$0xf]
    %v5454 = vld [vmem:[%s18 + $0x34] sm:$0xf]
    %v5455 = vld [vmem:[%s18 + $0x38] sm:$0xf]
    %v5456 = vld [vmem:[%s18 + $0x3c] sm:$0xf]
    %v5457 = vld [vmem:[%s18 + $0x40] sm:$0xf]
    %v5458 = vld [vmem:[%s18 + $0x44] sm:$0xf]
    %v5459 = vld [vmem:[%s18 + $0x48] sm:$0xf]
    %v5460 = vld [vmem:[%s18 + $0x4c] sm:$0xf]
    %v5461 = vld [vmem:[%s18 + $0x50] sm:$0xf]
    %v5462 = vld [vmem:[%s18 + $0x54] sm:$0xf]
    %v5463 = vld [vmem:[%s18 + $0x58] sm:$0xf]
    %v5464 = vld [vmem:[%s18 + $0x5c] sm:$0xf]
    %v5465 = vld [vmem:[%s18 + $0x60] sm:$0xf]
    %v5466 = vld [vmem:[%s18 + $0x64] sm:$0xf]
    %v5467 = vld [vmem:[%s18 + $0x68] sm:$0xf]
    %v5468 = vld [vmem:[%s18 + $0x6c] sm:$0xf]
    %v5469 = vld [vmem:[%s18 + $0x70] sm:$0xf]
    %v5470 = vld [vmem:[%s18 + $0x74] sm:$0xf]
    %v5471 = vld [vmem:[%s18 + $0x78] sm:$0xf]
    %v5472 = vld [vmem:[%s18 + $0x7c] sm:$0xf]
    %v5473 = vld [vmem:[%s19] sm:$0x1]
    %v5474 = vpack.c.bf16 %v5417, %v5413
    %v5475 = vpack.c.bf16 %v5419, %v5415
    %v5476 = vpack.c.bf16 %v5427, %v5423
    %v5477 = vpack.c.bf16 %v5429, %v5425
    %v5478 = vpack.c.bf16 %v5437, %v5433
    %v5479 = vpack.c.bf16 %v5439, %v5435
    %v5481 = vlaneseq
    %v5482 = vshrl.u32 %v5481, 7
    %v5483 = vsub.s32 0, %v5482
    %v5484 = vrot.slane %v5473, %v5483
    %v5518 = vunpack.c.l.b16 %v5441
    %v5519 = vunpack.c.l.b16 %v5442
    %v5520 = vunpack.c.l.b16 %v5443
    %v5521 = vunpack.c.l.b16 %v5444
    %v5522 = vunpack.c.l.b16 %v5445
    %v5523 = vunpack.c.l.b16 %v5446
    %v5524 = vunpack.c.l.b16 %v5447
    %v5525 = vunpack.c.l.b16 %v5448
    %v5526 = vunpack.c.l.b16 %v5449
    %v5527 = vunpack.c.l.b16 %v5450
    %v5528 = vunpack.c.l.b16 %v5451
    %v5529 = vunpack.c.l.b16 %v5452
    %v5530 = vunpack.c.l.b16 %v5453
    %v5531 = vunpack.c.l.b16 %v5454
    %v5532 = vunpack.c.l.b16 %v5455
    %v5533 = vunpack.c.l.b16 %v5456
    %v5534 = vunpack.c.l.b16 %v5457
    %v5535 = vunpack.c.l.b16 %v5458
    %v5536 = vunpack.c.l.b16 %v5459
    %v5537 = vunpack.c.l.b16 %v5460
    %v5538 = vunpack.c.l.b16 %v5461
    %v5539 = vunpack.c.l.b16 %v5462
    %v5540 = vunpack.c.l.b16 %v5463
    %v5541 = vunpack.c.l.b16 %v5464
    %v5542 = vunpack.c.l.b16 %v5465
    %v5543 = vunpack.c.l.b16 %v5466
    %v5544 = vunpack.c.l.b16 %v5467
    %v5545 = vunpack.c.l.b16 %v5468
    %v5546 = vunpack.c.l.b16 %v5469
    %v5547 = vunpack.c.l.b16 %v5470
    %v5548 = vunpack.c.l.b16 %v5471
    %v5549 = vunpack.c.l.b16 %v5472
    %v5550 = vpack.c.b16 %v5519, %v5518
    %v5551 = vpack.c.b16 %v5521, %v5520
    %v5552 = vpack.c.b16 %v5523, %v5522
    %v5553 = vpack.c.b16 %v5525, %v5524
    %v5554 = vpack.c.b16 %v5527, %v5526
    %v5555 = vpack.c.b16 %v5529, %v5528
    %v5556 = vpack.c.b16 %v5531, %v5530
    %v5557 = vpack.c.b16 %v5533, %v5532
    %v5558 = vpack.c.b16 %v5535, %v5534
    %v5559 = vpack.c.b16 %v5537, %v5536
    %v5560 = vpack.c.b16 %v5539, %v5538
    %v5561 = vpack.c.b16 %v5541, %v5540
    %v5562 = vpack.c.b16 %v5543, %v5542
    %v5563 = vpack.c.b16 %v5545, %v5544
    %v5564 = vpack.c.b16 %v5547, %v5546
    %v5565 = vpack.c.b16 %v5549, %v5548
    %5582 = vmatprep.subr.bf16.mxu0 0
    %5583 = vmatpush1.bf16.msra.mxu0 %v5550
    %5584 = vmatprep.subr.bf16.mxu0 0
    %5585 = vmatpush1.bf16.msra.mxu0 %v5551
    %5586 = vmatprep.subr.bf16.mxu0 0
    %5587 = vmatpush1.bf16.msra.mxu0 %v5552
    %5588 = vmatprep.subr.bf16.mxu0 0
    %5589 = vmatpush1.bf16.msra.mxu0 %v5553
    %5590 = vmatprep.subr.bf16.mxu0 0
    %5591 = vmatpush1.bf16.msra.mxu0 %v5554
    %5592 = vmatprep.subr.bf16.mxu0 0
    %5593 = vmatpush1.bf16.msra.mxu0 %v5555
    %5594 = vmatprep.subr.bf16.mxu0 0
    %5595 = vmatpush1.bf16.msra.mxu0 %v5556
    %5596 = vmatprep.subr.bf16.mxu0 0
    %5597 = vmatpush1.bf16.msra.mxu0 %v5557
    %5598 = vmatprep.subr.bf16.mxu0 0
    %5599 = vmatpush1.bf16.msra.mxu0 %v5558
    %5600 = vmatprep.subr.bf16.mxu0 0
    %5601 = vmatpush1.bf16.msra.mxu0 %v5559
    %5602 = vmatprep.subr.bf16.mxu0 0
    %5603 = vmatpush1.bf16.msra.mxu0 %v5560
    %5604 = vmatprep.subr.bf16.mxu0 0
    %5605 = vmatpush1.bf16.msra.mxu0 %v5561
    %5606 = vmatprep.subr.bf16.mxu0 0
    %5607 = vmatpush1.bf16.msra.mxu0 %v5562
    %5608 = vmatprep.subr.bf16.mxu0 0
    %5609 = vmatpush1.bf16.msra.mxu0 %v5563
    %5610 = vmatprep.subr.bf16.mxu0 0
    %5611 = vmatpush1.bf16.msra.mxu0 %v5564
    %5612 = vmatprep.subr.bf16.mxu0 0
    %5613 = vmatpush1.bf16.msra.mxu0 %v5565
    %5614 = vmatprep.mubr.bf16.mxu0 %v5475
    %5615 = vmatmul.mubr.bf16.gmra.mrb[0].mxu0 %v5474
    %v5616 = vpop.f32.mrb[0].mxu0
    %v5617 = vadd.f32 %v5484, %v5616
    %v5618 = vpop.f32.mrb[0].mxu0
    %v5619 = vpop.f32.mrb[0].mxu0
    %v5620 = vadd.f32 %v5484, %v5619
    %v5621 = vpop.f32.mrb[0].mxu0
    %5622 = vmatprep.mubr.bf16.mxu0 %v5477
    %5623 = vmatmul.mubr.bf16.gmra.mrb[0].mxu0 %v5476
    %v5624 = vpop.f32.mrb[0].mxu0
    %v5625 = vadd.f32 %v5484, %v5624
    %v5626 = vpop.f32.mrb[0].mxu0
    %v5627 = vpop.f32.mrb[0].mxu0
    %v5628 = vadd.f32 %v5484, %v5627
    %v5629 = vpop.f32.mrb[0].mxu0
    %5630 = vmatprep.mubr.bf16.mxu0 %v5479
    %5631 = vmatmul.mubr.bf16.gmra.mrb[0].mxu0 %v5478
    %v5632 = vpop.f32.mrb[0].mxu0
    %v5633 = vadd.f32 %v5484, %v5632
    %v5634 = vpop.f32.mrb[0].mxu0
    %v5635 = vpop.f32.mrb[0].mxu0
    %v5636 = vadd.f32 %v5484, %v5635
    %v5637 = vpop.f32.mrb[0].mxu0
    %5638 = vdwg.mxu0
    %vm5639 = vcmask 15360
    %5640 = vst.msk [vmem:[%s20] sm:$0xff] %vm5639, %v5617
    %5641 = vst.msk [vmem:[%s20 + $0x8] sm:$0xff] %vm5639, %v5620
    %5642 = vst.msk [vmem:[%s20 + $0x10] sm:$0xff] %vm5639, %v5625
    %5643 = vst.msk [vmem:[%s20 + $0x18] sm:$0xff] %vm5639, %v5628
    %5644 = vst.msk [vmem:[%s20 + $0x20] sm:$0xff] %vm5639, %v5633
    %5645 = vst.msk [vmem:[%s20 + $0x28] sm:$0xff] %vm5639, %v5636
    // Predicated region
    $region98: #{bert_for_classification.1} parent=1 // pred_check
      _
    $region99: #{bert_for_classification.1} parent=1 // pred_check_branch
      %5647 = sbr.rel (0) target = $region101
    $region100: #{bert_for_classification.1} parent=1 // pred_region
      _
    $region101: #{bert_for_classification.1} parent=1 // pred_fallthru
      _
    // Predicated region
    $region102: #{bert_for_classification.1} parent=1 // pred_check
      _
    $region103: #{bert_for_classification.1} parent=1 // pred_check_branch
      %5649 = sbr.rel (0) target = $region105
    $region104: #{bert_for_classification.1} parent=1 // pred_region
      _
    $region105: #{bert_for_classification.1} parent=1 // pred_fallthru
      _
    %5650 = vsyncpa [#allocation3], 1
    %5651 = vsyncpa [#allocation5], 1
    %5652 = vsyncpa [#allocation8], 1

</llo_original>
